<compile_context>
chip_gen: v7x
topology: tpu7x:2x2x1
jax: 0.10.0
libtpu: 0.0.40
codegen_flags: <defaults>
</compile_context>

<pallas_src>
import functools

import jax
import jax.numpy as jnp
from jax.experimental import pallas as pl
from jax.experimental.pallas import tpu as pltpu

_LN_EPS = 1e-5


def _layer_norm(v, w, b, eps=_LN_EPS):
    mu = jnp.mean(v, axis=-1, keepdims=True)
    c = v - mu
    var = jnp.mean(c * c, axis=-1, keepdims=True)
    return c * jax.lax.rsqrt(var + eps) * w + b


def _encoder_layer_kernel(x_ref,
                          wq_ref, bq_ref, wk_ref, bk_ref, wv_ref, bv_ref,
                          wo_ref, bo_ref,
                          w1_ref, b1_ref, w2_ref, b2_ref,
                          ln1w_ref, ln1b_ref, ln2w_ref, ln2b_ref,
                          o_ref, *, n_heads):
    # x_ref: (N, D) — one batch element (variate "tokens" x d_model).
    x = x_ref[...].astype(jnp.float32)
    N, D = x.shape
    dh = D // n_heads
    scale = 1.0 / (dh ** 0.5)

    # ---- multi-head self-attention --------------------------------------
    # Static per-head slices of the resident weight refs (narrow loads); the
    # output projection is accumulated per head, so heads never need to be
    # concatenated or reshaped inside the kernel.
    acc = jnp.zeros((N, D), jnp.float32)
    for h in range(n_heads):
        lo, hi = h * dh, (h + 1) * dh
        q = (jnp.dot(x, wq_ref[:, lo:hi], preferred_element_type=jnp.float32)
             + bq_ref[:, lo:hi])
        k = (jnp.dot(x, wk_ref[:, lo:hi], preferred_element_type=jnp.float32)
             + bk_ref[:, lo:hi])
        v = (jnp.dot(x, wv_ref[:, lo:hi], preferred_element_type=jnp.float32)
             + bv_ref[:, lo:hi])
        # scores = q @ k^T  (contract the head dim of both operands)
        s = jax.lax.dot_general(q, k, (((1,), (1,)), ((), ())),
                                preferred_element_type=jnp.float32) * scale
        s = s - jnp.max(s, axis=-1, keepdims=True)
        p = jnp.exp(s)
        a = p / jnp.sum(p, axis=-1, keepdims=True)
        oh = jnp.dot(a, v, preferred_element_type=jnp.float32)
        acc = acc + jnp.dot(oh, wo_ref[lo:hi, :],
                            preferred_element_type=jnp.float32)
    attn_out = acc + bo_ref[...]

    # ---- residual + norm1 + FFN + residual + norm2 -----------------------
    # TODO(synk): training-mode dropout (p>0) not applied (eval semantics).
    x1 = _layer_norm(x + attn_out, ln1w_ref[...], ln1b_ref[...])
    hdn = jnp.dot(x1, w1_ref[...], preferred_element_type=jnp.float32) + b1_ref[...]
    hdn = jnp.maximum(hdn, 0.0)          # ReLU (EncoderLayer default activation)
    ffn = jnp.dot(hdn, w2_ref[...], preferred_element_type=jnp.float32) + b2_ref[...]
    o_ref[...] = _layer_norm(x1 + ffn, ln2w_ref[...],
                             ln2b_ref[...]).astype(o_ref.dtype)


def _encoder_layer(x, p, *, n_heads):
    B, N, D = x.shape
    d_ff = p["w1"].shape[1]

    def resident(shape):
        ndim = len(shape)
        return pl.BlockSpec(shape, lambda b: (0,) * ndim)   # fetched once, reused

    cost = pl.CostEstimate(
        flops=2 * B * N * (4 * D * D + 2 * N * D + 2 * D * d_ff),
        transcendentals=B * n_heads * N * N,
        bytes_accessed=(2 * B * N * D + 4 * D * D + 2 * D * d_ff
                        + 8 * D + 2 * d_ff) * x.dtype.itemsize,
    )

    return pl.pallas_call(
        functools.partial(_encoder_layer_kernel, n_heads=n_heads),
        out_shape=jax.ShapeDtypeStruct((B, N, D), x.dtype),
        grid=(B,),
        in_specs=[
            pl.BlockSpec((None, N, D), lambda b: (b, 0, 0)),  # x, streamed per batch
            resident((D, D)), resident((1, D)),               # Wq, bq
            resident((D, D)), resident((1, D)),               # Wk, bk
            resident((D, D)), resident((1, D)),               # Wv, bv
            resident((D, D)), resident((1, D)),               # Wo, bo
            resident((D, d_ff)), resident((1, d_ff)),         # W1, b1
            resident((d_ff, D)), resident((1, D)),            # W2, b2
            resident((1, D)), resident((1, D)),                # LN1 gamma, beta
            resident((1, D)), resident((1, D)),                # LN2 gamma, beta
        ],
        out_specs=pl.BlockSpec((None, N, D), lambda b: (b, 0, 0)),
        compiler_params=pltpu.CompilerParams(
            dimension_semantics=("parallel",),   # shards batch over v7x's 2 TCs
            vmem_limit_bytes=32 << 20,           # safe on v5e/v6e/v7x
        ),
        cost_estimate=cost,
    )(x, p["wq"], p["bq"], p["wk"], p["bk"], p["wv"], p["bv"],
      p["wo"], p["bo"], p["w1"], p["b1"], p["w2"], p["b2"],
      p["ln1w"], p["ln1b"], p["ln2w"], p["ln2b"])


def _layernorm_kernel(x_ref, w_ref, b_ref, o_ref):
    x = x_ref[...].astype(jnp.float32)
    o_ref[...] = _layer_norm(x, w_ref[...], b_ref[...]).astype(o_ref.dtype)


def _final_norm(x, w, b):
    B, N, D = x.shape
    return pl.pallas_call(
        _layernorm_kernel,
        out_shape=jax.ShapeDtypeStruct((B, N, D), x.dtype),
        grid=(B,),
        in_specs=[
            pl.BlockSpec((None, N, D), lambda i: (i, 0, 0)),
            pl.BlockSpec((1, D), lambda i: (0, 0)),
            pl.BlockSpec((1, D), lambda i: (0, 0)),
        ],
        out_specs=pl.BlockSpec((None, N, D), lambda i: (i, 0, 0)),
        compiler_params=pltpu.CompilerParams(
            dimension_semantics=("parallel",),
            vmem_limit_bytes=32 << 20,
        ),
    )(x, w, b)


def encoder_forward(x, layer_params, norm_params=None,
                    attn_mask=None, tau=None, delta=None, *, n_heads):
    """Pallas forward of the iTransformer Encoder (conv_layers=None path).

    x: [B, N_variates, d_model].  Returns (x, attns) like the PyTorch module.
    """
    # TODO(synk): conv_layers (distilling) branch and attn_mask/tau/delta are
    # not implemented; iTransformer's encoder uses conv_layers=None and
    # FullAttention(mask_flag=False), which ignores them.  Dropout = identity.
    del attn_mask, tau, delta
    attns = []
    for p in layer_params:
        x = _encoder_layer(x, p, n_heads=n_heads)
        attns.append(None)   # FullAttention(output_attention=False) -> None
    if norm_params is not None:
        x = _final_norm(x, norm_params["w"], norm_params["b"])
    return x, attns


# ----------------------------- test harness --------------------------------

def _init_linear(key, fan_in, fan_out, dtype=jnp.float32):
    bound = 1.0 / (fan_in ** 0.5)
    kw, kb = jax.random.split(key)
    w = jax.random.uniform(kw, (fan_in, fan_out), dtype, -bound, bound)  # [in, out]
    b = jax.random.uniform(kb, (1, fan_out), dtype, -bound, bound)
    return w, b


def _init_layer(key, d_model, d_ff, dtype=jnp.float32):
    ks = jax.random.split(key, 10)
    wq, bq = _init_linear(ks[0], d_model, d_model, dtype)
    wk, bk = _init_linear(ks[1], d_model, d_model, dtype)
    wv, bv = _init_linear(ks[2], d_model, d_model, dtype)
    wo, bo = _init_linear(ks[3], d_model, d_model, dtype)
    w1, b1 = _init_linear(ks[4], d_model, d_ff, dtype)
    w2, b2 = _init_linear(ks[5], d_ff, d_model, dtype)
    ln1w = 1.0 + 0.1 * jax.random.normal(ks[6], (1, d_model), dtype)
    ln1b = 0.1 * jax.random.normal(ks[7], (1, d_model), dtype)
    ln2w = 1.0 + 0.1 * jax.random.normal(ks[8], (1, d_model), dtype)
    ln2b = 0.1 * jax.random.normal(ks[9], (1, d_model), dtype)
    return dict(wq=wq, bq=bq, wk=wk, bk=bk, wv=wv, bv=bv, wo=wo, bo=bo,
                w1=w1, b1=b1, w2=w2, b2=b2,
                ln1w=ln1w, ln1b=ln1b, ln2w=ln2w, ln2b=ln2b)


def _ref_encoder(x, layer_params, norm_params, n_heads):
    B, N, D = x.shape
    dh = D // n_heads
    for p in layer_params:
        q = (x @ p["wq"] + p["bq"]).reshape(B, N, n_heads, dh)
        k = (x @ p["wk"] + p["bk"]).reshape(B, N, n_heads, dh)
        v = (x @ p["wv"] + p["bv"]).reshape(B, N, n_heads, dh)
        s = jnp.einsum("bnhe,bmhe->bhnm", q, k) / (dh ** 0.5)
        a = jax.nn.softmax(s, axis=-1)
        o = jnp.einsum("bhnm,bmhe->bnhe", a, v).reshape(B, N, D)
        o = o @ p["wo"] + p["bo"]
        x1 = _layer_norm(x + o, p["ln1w"], p["ln1b"])
        f = jax.nn.relu(x1 @ p["w1"] + p["b1"]) @ p["w2"] + p["b2"]
        x = _layer_norm(x1 + f, p["ln2w"], p["ln2b"])
    if norm_params is not None:
        x = _layer_norm(x, norm_params["w"], norm_params["b"])
    return x


if __name__ == "__main__":
    key = jax.random.PRNGKey(0)
    # Small shapes: batch=2, variate tokens=8, d_model=32, heads=4, d_ff=64, 2 layers.
    B, N, D_MODEL, N_HEADS, D_FF, N_LAYERS = 2, 8, 32, 4, 64, 2

    k_x, k_norm, *k_layers = jax.random.split(key, 2 + N_LAYERS)
    x = jax.random.normal(k_x, (B, N, D_MODEL), jnp.float32)
    layer_params = [_init_layer(k, D_MODEL, D_FF) for k in k_layers]
    kw, kb = jax.random.split(k_norm)
    norm_params = dict(
        w=1.0 + 0.1 * jax.random.normal(kw, (1, D_MODEL), jnp.float32),
        b=0.1 * jax.random.normal(kb, (1, D_MODEL), jnp.float32),
    )

    fwd = jax.jit(functools.partial(encoder_forward, n_heads=N_HEADS))
    out, attns = fwd(x, layer_params, norm_params)
    out = jax.block_until_ready(out)

    ref = _ref_encoder(x, layer_params, norm_params, N_HEADS)
    assert out.shape == (B, N, D_MODEL)
    assert len(attns) == N_LAYERS
    assert jnp.allclose(out, ref, atol=1e-4, rtol=1e-4), (
        "max abs err = %s" % float(jnp.max(jnp.abs(out - ref))))

    print("KERNEL_OK")
</pallas_src>

<mosaic_0001>
module attributes {stable_mosaic.version = 11 : i64} {
  func.func @_encoder_layer_kernel(%arg0: i32, %arg1: memref<1x8x32xf32, #tpu.memory_space<vmem>>, %arg2: memref<32x32xf32, #tpu.memory_space<vmem>>, %arg3: memref<1x32xf32, #tpu.memory_space<vmem>>, %arg4: memref<32x32xf32, #tpu.memory_space<vmem>>, %arg5: memref<1x32xf32, #tpu.memory_space<vmem>>, %arg6: memref<32x32xf32, #tpu.memory_space<vmem>>, %arg7: memref<1x32xf32, #tpu.memory_space<vmem>>, %arg8: memref<32x32xf32, #tpu.memory_space<vmem>>, %arg9: memref<1x32xf32, #tpu.memory_space<vmem>>, %arg10: memref<32x64xf32, #tpu.memory_space<vmem>>, %arg11: memref<1x64xf32, #tpu.memory_space<vmem>>, %arg12: memref<64x32xf32, #tpu.memory_space<vmem>>, %arg13: memref<1x32xf32, #tpu.memory_space<vmem>>, %arg14: memref<1x32xf32, #tpu.memory_space<vmem>>, %arg15: memref<1x32xf32, #tpu.memory_space<vmem>>, %arg16: memref<1x32xf32, #tpu.memory_space<vmem>>, %arg17: memref<1x32xf32, #tpu.memory_space<vmem>>, %arg18: memref<1x8x32xf32, #tpu.memory_space<vmem>>) attributes {dimension_semantics = [#tpu.dimension_semantics<parallel>], iteration_bounds = array<i64: 2>, scalar_prefetch = 0 : i64, scratch_operands = 0 : i64, tpu.core_type = #tpu.core_type<tc>, window_params = [{transform_indices = @transform_0, window_bounds = array<i64: 1, 8, 32>}, {pipeline_mode = #tpu.pipeline_mode<synchronous>, transform_indices = @transform_1, window_bounds = array<i64: 32, 32>}, {pipeline_mode = #tpu.pipeline_mode<synchronous>, transform_indices = @transform_2, window_bounds = array<i64: 1, 32>}, {pipeline_mode = #tpu.pipeline_mode<synchronous>, transform_indices = @transform_3, window_bounds = array<i64: 32, 32>}, {pipeline_mode = #tpu.pipeline_mode<synchronous>, transform_indices = @transform_4, window_bounds = array<i64: 1, 32>}, {pipeline_mode = #tpu.pipeline_mode<synchronous>, transform_indices = @transform_5, window_bounds = array<i64: 32, 32>}, {pipeline_mode = #tpu.pipeline_mode<synchronous>, transform_indices = @transform_6, window_bounds = array<i64: 1, 32>}, {pipeline_mode = #tpu.pipeline_mode<synchronous>, transform_indices = @transform_7, window_bounds = array<i64: 32, 32>}, {pipeline_mode = #tpu.pipeline_mode<synchronous>, transform_indices = @transform_8, window_bounds = array<i64: 1, 32>}, {pipeline_mode = #tpu.pipeline_mode<synchronous>, transform_indices = @transform_9, window_bounds = array<i64: 32, 64>}, {pipeline_mode = #tpu.pipeline_mode<synchronous>, transform_indices = @transform_10, window_bounds = array<i64: 1, 64>}, {pipeline_mode = #tpu.pipeline_mode<synchronous>, transform_indices = @transform_11, window_bounds = array<i64: 64, 32>}, {pipeline_mode = #tpu.pipeline_mode<synchronous>, transform_indices = @transform_12, window_bounds = array<i64: 1, 32>}, {pipeline_mode = #tpu.pipeline_mode<synchronous>, transform_indices = @transform_13, window_bounds = array<i64: 1, 32>}, {pipeline_mode = #tpu.pipeline_mode<synchronous>, transform_indices = @transform_14, window_bounds = array<i64: 1, 32>}, {pipeline_mode = #tpu.pipeline_mode<synchronous>, transform_indices = @transform_15, window_bounds = array<i64: 1, 32>}, {pipeline_mode = #tpu.pipeline_mode<synchronous>, transform_indices = @transform_16, window_bounds = array<i64: 1, 32>}, {transform_indices = @transform_17, window_bounds = array<i64: 1, 8, 32>}]} {
    %c0 = arith.constant 0 : index
    %c0_0 = arith.constant 0 : index
    %c0_1 = arith.constant 0 : index
    %0 = vector.load %arg1[%c0, %c0_0, %c0_1] : memref<1x8x32xf32, #tpu.memory_space<vmem>>, vector<1x8x32xf32>
    %1 = vector.shape_cast %0 : vector<1x8x32xf32> to vector<8x32xf32>
    %cst = arith.constant 0.000000e+00 : f32
    %2 = vector.broadcast %cst : f32 to vector<8x32xf32>
    %c0_2 = arith.constant 0 : index
    %c0_3 = arith.constant 0 : index
    %3 = vector.load %arg2[%c0_2, %c0_3] : memref<32x32xf32, #tpu.memory_space<vmem>>, vector<32x8xf32>
    %cst_4 = arith.constant dense<0.000000e+00> : vector<8x8xf32>
    %4 = tpu.matmul %1, %3, %cst_4 {dimension_numbers = #tpu.dot_dimension_numbers<[1], [0], [0], [1], [0, 0, 1, 1], [], []>} : vector<8x32xf32>, vector<32x8xf32>, vector<8x8xf32> -> vector<8x8xf32>
    %c0_5 = arith.constant 0 : index
    %c0_6 = arith.constant 0 : index
    %5 = vector.load %arg3[%c0_5, %c0_6] : memref<1x32xf32, #tpu.memory_space<vmem>>, vector<1x8xf32>
    %6 = vector.broadcast %5 : vector<1x8xf32> to vector<8x8xf32>
    %7 = arith.addf %4, %6 : vector<8x8xf32>
    %c0_7 = arith.constant 0 : index
    %c0_8 = arith.constant 0 : index
    %8 = vector.load %arg4[%c0_7, %c0_8] : memref<32x32xf32, #tpu.memory_space<vmem>>, vector<32x8xf32>
    %cst_9 = arith.constant dense<0.000000e+00> : vector<8x8xf32>
    %9 = tpu.matmul %1, %8, %cst_9 {dimension_numbers = #tpu.dot_dimension_numbers<[1], [0], [0], [1], [0, 0, 1, 1], [], []>} : vector<8x32xf32>, vector<32x8xf32>, vector<8x8xf32> -> vector<8x8xf32>
    %c0_10 = arith.constant 0 : index
    %c0_11 = arith.constant 0 : index
    %10 = vector.load %arg5[%c0_10, %c0_11] : memref<1x32xf32, #tpu.memory_space<vmem>>, vector<1x8xf32>
    %11 = vector.broadcast %10 : vector<1x8xf32> to vector<8x8xf32>
    %12 = arith.addf %9, %11 : vector<8x8xf32>
    %c0_12 = arith.constant 0 : index
    %c0_13 = arith.constant 0 : index
    %13 = vector.load %arg6[%c0_12, %c0_13] : memref<32x32xf32, #tpu.memory_space<vmem>>, vector<32x8xf32>
    %cst_14 = arith.constant dense<0.000000e+00> : vector<8x8xf32>
    %14 = tpu.matmul %1, %13, %cst_14 {dimension_numbers = #tpu.dot_dimension_numbers<[1], [0], [0], [1], [0, 0, 1, 1], [], []>} : vector<8x32xf32>, vector<32x8xf32>, vector<8x8xf32> -> vector<8x8xf32>
    %c0_15 = arith.constant 0 : index
    %c0_16 = arith.constant 0 : index
    %15 = vector.load %arg7[%c0_15, %c0_16] : memref<1x32xf32, #tpu.memory_space<vmem>>, vector<1x8xf32>
    %16 = vector.broadcast %15 : vector<1x8xf32> to vector<8x8xf32>
    %17 = arith.addf %14, %16 : vector<8x8xf32>
    %cst_17 = arith.constant dense<0.000000e+00> : vector<8x8xf32>
    %18 = tpu.matmul %7, %12, %cst_17 {dimension_numbers = #tpu.dot_dimension_numbers<[1], [1], [0], [0], [0, 0, 1, 0], [], []>} : vector<8x8xf32>, vector<8x8xf32>, vector<8x8xf32> -> vector<8x8xf32>
    %cst_18 = arith.constant 0.353553385 : f32
    %19 = vector.broadcast %cst_18 : f32 to vector<8x8xf32>
    %20 = arith.mulf %18, %19 : vector<8x8xf32>
    %cst_19 = arith.constant dense<0xFF800000> : vector<8xf32>
    %21 = vector.multi_reduction <maximumf>, %20, %cst_19 [1] : vector<8x8xf32> to vector<8xf32>
    %22 = vector.shape_cast %21 : vector<8xf32> to vector<8x1xf32>
    %23 = vector.broadcast %22 : vector<8x1xf32> to vector<8x8xf32>
    %24 = arith.subf %20, %23 : vector<8x8xf32>
    %25 = math.exp %24 : vector<8x8xf32>
    %cst_20 = arith.constant dense<0.000000e+00> : vector<8xf32>
    %26 = vector.multi_reduction <add>, %25, %cst_20 [1] : vector<8x8xf32> to vector<8xf32>
    %27 = vector.shape_cast %26 : vector<8xf32> to vector<8x1xf32>
    %28 = vector.broadcast %27 : vector<8x1xf32> to vector<8x8xf32>
    %29 = arith.divf %25, %28 : vector<8x8xf32>
    %cst_21 = arith.constant dense<0.000000e+00> : vector<8x8xf32>
    %30 = tpu.matmul %29, %17, %cst_21 {dimension_numbers = #tpu.dot_dimension_numbers<[1], [0], [0], [1], [0, 0, 1, 1], [], []>} : vector<8x8xf32>, vector<8x8xf32>, vector<8x8xf32> -> vector<8x8xf32>
    %c0_22 = arith.constant 0 : index
    %c0_23 = arith.constant 0 : index
    %31 = vector.load %arg8[%c0_22, %c0_23] : memref<32x32xf32, #tpu.memory_space<vmem>>, vector<8x32xf32>
    %cst_24 = arith.constant dense<0.000000e+00> : vector<8x32xf32>
    %32 = tpu.matmul %30, %31, %cst_24 {dimension_numbers = #tpu.dot_dimension_numbers<[1], [0], [0], [1], [0, 0, 1, 1], [], []>} : vector<8x8xf32>, vector<8x32xf32>, vector<8x32xf32> -> vector<8x32xf32>
    %33 = arith.addf %2, %32 : vector<8x32xf32>
    %c0_25 = arith.constant 0 : index
    %c8 = arith.constant 8 : index
    %34 = vector.load %arg2[%c0_25, %c8] : memref<32x32xf32, #tpu.memory_space<vmem>>, vector<32x8xf32>
    %cst_26 = arith.constant dense<0.000000e+00> : vector<8x8xf32>
    %35 = tpu.matmul %1, %34, %cst_26 {dimension_numbers = #tpu.dot_dimension_numbers<[1], [0], [0], [1], [0, 0, 1, 1], [], []>} : vector<8x32xf32>, vector<32x8xf32>, vector<8x8xf32> -> vector<8x8xf32>
    %c0_27 = arith.constant 0 : index
    %c8_28 = arith.constant 8 : index
    %36 = vector.load %arg3[%c0_27, %c8_28] : memref<1x32xf32, #tpu.memory_space<vmem>>, vector<1x8xf32>
    %37 = vector.broadcast %36 : vector<1x8xf32> to vector<8x8xf32>
    %38 = arith.addf %35, %37 : vector<8x8xf32>
    %c0_29 = arith.constant 0 : index
    %c8_30 = arith.constant 8 : index
    %39 = vector.load %arg4[%c0_29, %c8_30] : memref<32x32xf32, #tpu.memory_space<vmem>>, vector<32x8xf32>
    %cst_31 = arith.constant dense<0.000000e+00> : vector<8x8xf32>
    %40 = tpu.matmul %1, %39, %cst_31 {dimension_numbers = #tpu.dot_dimension_numbers<[1], [0], [0], [1], [0, 0, 1, 1], [], []>} : vector<8x32xf32>, vector<32x8xf32>, vector<8x8xf32> -> vector<8x8xf32>
    %c0_32 = arith.constant 0 : index
    %c8_33 = arith.constant 8 : index
    %41 = vector.load %arg5[%c0_32, %c8_33] : memref<1x32xf32, #tpu.memory_space<vmem>>, vector<1x8xf32>
    %42 = vector.broadcast %41 : vector<1x8xf32> to vector<8x8xf32>
    %43 = arith.addf %40, %42 : vector<8x8xf32>
    %c0_34 = arith.constant 0 : index
    %c8_35 = arith.constant 8 : index
    %44 = vector.load %arg6[%c0_34, %c8_35] : memref<32x32xf32, #tpu.memory_space<vmem>>, vector<32x8xf32>
    %cst_36 = arith.constant dense<0.000000e+00> : vector<8x8xf32>
    %45 = tpu.matmul %1, %44, %cst_36 {dimension_numbers = #tpu.dot_dimension_numbers<[1], [0], [0], [1], [0, 0, 1, 1], [], []>} : vector<8x32xf32>, vector<32x8xf32>, vector<8x8xf32> -> vector<8x8xf32>
    %c0_37 = arith.constant 0 : index
    %c8_38 = arith.constant 8 : index
    %46 = vector.load %arg7[%c0_37, %c8_38] : memref<1x32xf32, #tpu.memory_space<vmem>>, vector<1x8xf32>
    %47 = vector.broadcast %46 : vector<1x8xf32> to vector<8x8xf32>
    %48 = arith.addf %45, %47 : vector<8x8xf32>
    %cst_39 = arith.constant dense<0.000000e+00> : vector<8x8xf32>
    %49 = tpu.matmul %38, %43, %cst_39 {dimension_numbers = #tpu.dot_dimension_numbers<[1], [1], [0], [0], [0, 0, 1, 0], [], []>} : vector<8x8xf32>, vector<8x8xf32>, vector<8x8xf32> -> vector<8x8xf32>
    %cst_40 = arith.constant 0.353553385 : f32
    %50 = vector.broadcast %cst_40 : f32 to vector<8x8xf32>
    %51 = arith.mulf %49, %50 : vector<8x8xf32>
    %cst_41 = arith.constant dense<0xFF800000> : vector<8xf32>
    %52 = vector.multi_reduction <maximumf>, %51, %cst_41 [1] : vector<8x8xf32> to vector<8xf32>
    %53 = vector.shape_cast %52 : vector<8xf32> to vector<8x1xf32>
    %54 = vector.broadcast %53 : vector<8x1xf32> to vector<8x8xf32>
    %55 = arith.subf %51, %54 : vector<8x8xf32>
    %56 = math.exp %55 : vector<8x8xf32>
    %cst_42 = arith.constant dense<0.000000e+00> : vector<8xf32>
    %57 = vector.multi_reduction <add>, %56, %cst_42 [1] : vector<8x8xf32> to vector<8xf32>
    %58 = vector.shape_cast %57 : vector<8xf32> to vector<8x1xf32>
    %59 = vector.broadcast %58 : vector<8x1xf32> to vector<8x8xf32>
    %60 = arith.divf %56, %59 : vector<8x8xf32>
    %cst_43 = arith.constant dense<0.000000e+00> : vector<8x8xf32>
    %61 = tpu.matmul %60, %48, %cst_43 {dimension_numbers = #tpu.dot_dimension_numbers<[1], [0], [0], [1], [0, 0, 1, 1], [], []>} : vector<8x8xf32>, vector<8x8xf32>, vector<8x8xf32> -> vector<8x8xf32>
    %c8_44 = arith.constant 8 : index
    %c0_45 = arith.constant 0 : index
    %62 = vector.load %arg8[%c8_44, %c0_45] : memref<32x32xf32, #tpu.memory_space<vmem>>, vector<8x32xf32>
    %cst_46 = arith.constant dense<0.000000e+00> : vector<8x32xf32>
    %63 = tpu.matmul %61, %62, %cst_46 {dimension_numbers = #tpu.dot_dimension_numbers<[1], [0], [0], [1], [0, 0, 1, 1], [], []>} : vector<8x8xf32>, vector<8x32xf32>, vector<8x32xf32> -> vector<8x32xf32>
    %64 = arith.addf %33, %63 : vector<8x32xf32>
    %c0_47 = arith.constant 0 : index
    %c16 = arith.constant 16 : index
    %65 = vector.load %arg2[%c0_47, %c16] : memref<32x32xf32, #tpu.memory_space<vmem>>, vector<32x8xf32>
    %cst_48 = arith.constant dense<0.000000e+00> : vector<8x8xf32>
    %66 = tpu.matmul %1, %65, %cst_48 {dimension_numbers = #tpu.dot_dimension_numbers<[1], [0], [0], [1], [0, 0, 1, 1], [], []>} : vector<8x32xf32>, vector<32x8xf32>, vector<8x8xf32> -> vector<8x8xf32>
    %c0_49 = arith.constant 0 : index
    %c16_50 = arith.constant 16 : index
    %67 = vector.load %arg3[%c0_49, %c16_50] : memref<1x32xf32, #tpu.memory_space<vmem>>, vector<1x8xf32>
    %68 = vector.broadcast %67 : vector<1x8xf32> to vector<8x8xf32>
    %69 = arith.addf %66, %68 : vector<8x8xf32>
    %c0_51 = arith.constant 0 : index
    %c16_52 = arith.constant 16 : index
    %70 = vector.load %arg4[%c0_51, %c16_52] : memref<32x32xf32, #tpu.memory_space<vmem>>, vector<32x8xf32>
    %cst_53 = arith.constant dense<0.000000e+00> : vector<8x8xf32>
    %71 = tpu.matmul %1, %70, %cst_53 {dimension_numbers = #tpu.dot_dimension_numbers<[1], [0], [0], [1], [0, 0, 1, 1], [], []>} : vector<8x32xf32>, vector<32x8xf32>, vector<8x8xf32> -> vector<8x8xf32>
    %c0_54 = arith.constant 0 : index
    %c16_55 = arith.constant 16 : index
    %72 = vector.load %arg5[%c0_54, %c16_55] : memref<1x32xf32, #tpu.memory_space<vmem>>, vector<1x8xf32>
    %73 = vector.broadcast %72 : vector<1x8xf32> to vector<8x8xf32>
    %74 = arith.addf %71, %73 : vector<8x8xf32>
    %c0_56 = arith.constant 0 : index
    %c16_57 = arith.constant 16 : index
    %75 = vector.load %arg6[%c0_56, %c16_57] : memref<32x32xf32, #tpu.memory_space<vmem>>, vector<32x8xf32>
    %cst_58 = arith.constant dense<0.000000e+00> : vector<8x8xf32>
    %76 = tpu.matmul %1, %75, %cst_58 {dimension_numbers = #tpu.dot_dimension_numbers<[1], [0], [0], [1], [0, 0, 1, 1], [], []>} : vector<8x32xf32>, vector<32x8xf32>, vector<8x8xf32> -> vector<8x8xf32>
    %c0_59 = arith.constant 0 : index
    %c16_60 = arith.constant 16 : index
    %77 = vector.load %arg7[%c0_59, %c16_60] : memref<1x32xf32, #tpu.memory_space<vmem>>, vector<1x8xf32>
    %78 = vector.broadcast %77 : vector<1x8xf32> to vector<8x8xf32>
    %79 = arith.addf %76, %78 : vector<8x8xf32>
    %cst_61 = arith.constant dense<0.000000e+00> : vector<8x8xf32>
    %80 = tpu.matmul %69, %74, %cst_61 {dimension_numbers = #tpu.dot_dimension_numbers<[1], [1], [0], [0], [0, 0, 1, 0], [], []>} : vector<8x8xf32>, vector<8x8xf32>, vector<8x8xf32> -> vector<8x8xf32>
    %cst_62 = arith.constant 0.353553385 : f32
    %81 = vector.broadcast %cst_62 : f32 to vector<8x8xf32>
    %82 = arith.mulf %80, %81 : vector<8x8xf32>
    %cst_63 = arith.constant dense<0xFF800000> : vector<8xf32>
    %83 = vector.multi_reduction <maximumf>, %82, %cst_63 [1] : vector<8x8xf32> to vector<8xf32>
    %84 = vector.shape_cast %83 : vector<8xf32> to vector<8x1xf32>
    %85 = vector.broadcast %84 : vector<8x1xf32> to vector<8x8xf32>
    %86 = arith.subf %82, %85 : vector<8x8xf32>
    %87 = math.exp %86 : vector<8x8xf32>
    %cst_64 = arith.constant dense<0.000000e+00> : vector<8xf32>
    %88 = vector.multi_reduction <add>, %87, %cst_64 [1] : vector<8x8xf32> to vector<8xf32>
    %89 = vector.shape_cast %88 : vector<8xf32> to vector<8x1xf32>
    %90 = vector.broadcast %89 : vector<8x1xf32> to vector<8x8xf32>
    %91 = arith.divf %87, %90 : vector<8x8xf32>
    %cst_65 = arith.constant dense<0.000000e+00> : vector<8x8xf32>
    %92 = tpu.matmul %91, %79, %cst_65 {dimension_numbers = #tpu.dot_dimension_numbers<[1], [0], [0], [1], [0, 0, 1, 1], [], []>} : vector<8x8xf32>, vector<8x8xf32>, vector<8x8xf32> -> vector<8x8xf32>
    %c16_66 = arith.constant 16 : index
    %c0_67 = arith.constant 0 : index
    %93 = vector.load %arg8[%c16_66, %c0_67] : memref<32x32xf32, #tpu.memory_space<vmem>>, vector<8x32xf32>
    %cst_68 = arith.constant dense<0.000000e+00> : vector<8x32xf32>
    %94 = tpu.matmul %92, %93, %cst_68 {dimension_numbers = #tpu.dot_dimension_numbers<[1], [0], [0], [1], [0, 0, 1, 1], [], []>} : vector<8x8xf32>, vector<8x32xf32>, vector<8x32xf32> -> vector<8x32xf32>
    %95 = arith.addf %64, %94 : vector<8x32xf32>
    %c0_69 = arith.constant 0 : index
    %c24 = arith.constant 24 : index
    %96 = vector.load %arg2[%c0_69, %c24] : memref<32x32xf32, #tpu.memory_space<vmem>>, vector<32x8xf32>
    %cst_70 = arith.constant dense<0.000000e+00> : vector<8x8xf32>
    %97 = tpu.matmul %1, %96, %cst_70 {dimension_numbers = #tpu.dot_dimension_numbers<[1], [0], [0], [1], [0, 0, 1, 1], [], []>} : vector<8x32xf32>, vector<32x8xf32>, vector<8x8xf32> -> vector<8x8xf32>
    %c0_71 = arith.constant 0 : index
    %c24_72 = arith.constant 24 : index
    %98 = vector.load %arg3[%c0_71, %c24_72] : memref<1x32xf32, #tpu.memory_space<vmem>>, vector<1x8xf32>
    %99 = vector.broadcast %98 : vector<1x8xf32> to vector<8x8xf32>
    %100 = arith.addf %97, %99 : vector<8x8xf32>
    %c0_73 = arith.constant 0 : index
    %c24_74 = arith.constant 24 : index
    %101 = vector.load %arg4[%c0_73, %c24_74] : memref<32x32xf32, #tpu.memory_space<vmem>>, vector<32x8xf32>
    %cst_75 = arith.constant dense<0.000000e+00> : vector<8x8xf32>
    %102 = tpu.matmul %1, %101, %cst_75 {dimension_numbers = #tpu.dot_dimension_numbers<[1], [0], [0], [1], [0, 0, 1, 1], [], []>} : vector<8x32xf32>, vector<32x8xf32>, vector<8x8xf32> -> vector<8x8xf32>
    %c0_76 = arith.constant 0 : index
    %c24_77 = arith.constant 24 : index
    %103 = vector.load %arg5[%c0_76, %c24_77] : memref<1x32xf32, #tpu.memory_space<vmem>>, vector<1x8xf32>
    %104 = vector.broadcast %103 : vector<1x8xf32> to vector<8x8xf32>
    %105 = arith.addf %102, %104 : vector<8x8xf32>
    %c0_78 = arith.constant 0 : index
    %c24_79 = arith.constant 24 : index
    %106 = vector.load %arg6[%c0_78, %c24_79] : memref<32x32xf32, #tpu.memory_space<vmem>>, vector<32x8xf32>
    %cst_80 = arith.constant dense<0.000000e+00> : vector<8x8xf32>
    %107 = tpu.matmul %1, %106, %cst_80 {dimension_numbers = #tpu.dot_dimension_numbers<[1], [0], [0], [1], [0, 0, 1, 1], [], []>} : vector<8x32xf32>, vector<32x8xf32>, vector<8x8xf32> -> vector<8x8xf32>
    %c0_81 = arith.constant 0 : index
    %c24_82 = arith.constant 24 : index
    %108 = vector.load %arg7[%c0_81, %c24_82] : memref<1x32xf32, #tpu.memory_space<vmem>>, vector<1x8xf32>
    %109 = vector.broadcast %108 : vector<1x8xf32> to vector<8x8xf32>
    %110 = arith.addf %107, %109 : vector<8x8xf32>
    %cst_83 = arith.constant dense<0.000000e+00> : vector<8x8xf32>
    %111 = tpu.matmul %100, %105, %cst_83 {dimension_numbers = #tpu.dot_dimension_numbers<[1], [1], [0], [0], [0, 0, 1, 0], [], []>} : vector<8x8xf32>, vector<8x8xf32>, vector<8x8xf32> -> vector<8x8xf32>
    %cst_84 = arith.constant 0.353553385 : f32
    %112 = vector.broadcast %cst_84 : f32 to vector<8x8xf32>
    %113 = arith.mulf %111, %112 : vector<8x8xf32>
    %cst_85 = arith.constant dense<0xFF800000> : vector<8xf32>
    %114 = vector.multi_reduction <maximumf>, %113, %cst_85 [1] : vector<8x8xf32> to vector<8xf32>
    %115 = vector.shape_cast %114 : vector<8xf32> to vector<8x1xf32>
    %116 = vector.broadcast %115 : vector<8x1xf32> to vector<8x8xf32>
    %117 = arith.subf %113, %116 : vector<8x8xf32>
    %118 = math.exp %117 : vector<8x8xf32>
    %cst_86 = arith.constant dense<0.000000e+00> : vector<8xf32>
    %119 = vector.multi_reduction <add>, %118, %cst_86 [1] : vector<8x8xf32> to vector<8xf32>
    %120 = vector.shape_cast %119 : vector<8xf32> to vector<8x1xf32>
    %121 = vector.broadcast %120 : vector<8x1xf32> to vector<8x8xf32>
    %122 = arith.divf %118, %121 : vector<8x8xf32>
    %cst_87 = arith.constant dense<0.000000e+00> : vector<8x8xf32>
    %123 = tpu.matmul %122, %110, %cst_87 {dimension_numbers = #tpu.dot_dimension_numbers<[1], [0], [0], [1], [0, 0, 1, 1], [], []>} : vector<8x8xf32>, vector<8x8xf32>, vector<8x8xf32> -> vector<8x8xf32>
    %c24_88 = arith.constant 24 : index
    %c0_89 = arith.constant 0 : index
    %124 = vector.load %arg8[%c24_88, %c0_89] : memref<32x32xf32, #tpu.memory_space<vmem>>, vector<8x32xf32>
    %cst_90 = arith.constant dense<0.000000e+00> : vector<8x32xf32>
    %125 = tpu.matmul %123, %124, %cst_90 {dimension_numbers = #tpu.dot_dimension_numbers<[1], [0], [0], [1], [0, 0, 1, 1], [], []>} : vector<8x8xf32>, vector<8x32xf32>, vector<8x32xf32> -> vector<8x32xf32>
    %126 = arith.addf %95, %125 : vector<8x32xf32>
    %c0_91 = arith.constant 0 : index
    %c0_92 = arith.constant 0 : index
    %127 = vector.load %arg9[%c0_91, %c0_92] : memref<1x32xf32, #tpu.memory_space<vmem>>, vector<1x32xf32>
    %128 = vector.broadcast %127 : vector<1x32xf32> to vector<8x32xf32>
    %129 = arith.addf %126, %128 : vector<8x32xf32>
    %130 = arith.addf %1, %129 : vector<8x32xf32>
    %c0_93 = arith.constant 0 : index
    %c0_94 = arith.constant 0 : index
    %131 = vector.load %arg14[%c0_93, %c0_94] : memref<1x32xf32, #tpu.memory_space<vmem>>, vector<1x32xf32>
    %c0_95 = arith.constant 0 : index
    %c0_96 = arith.constant 0 : index
    %132 = vector.load %arg15[%c0_95, %c0_96] : memref<1x32xf32, #tpu.memory_space<vmem>>, vector<1x32xf32>
    %cst_97 = arith.constant dense<0.000000e+00> : vector<8xf32>
    %133 = vector.multi_reduction <add>, %130, %cst_97 [1] : vector<8x32xf32> to vector<8xf32>
    %134 = vector.shape_cast %133 : vector<8xf32> to vector<8x1xf32>
    %cst_98 = arith.constant 3.200000e+01 : f32
    %135 = vector.broadcast %cst_98 : f32 to vector<8x1xf32>
    %136 = arith.divf %134, %135 : vector<8x1xf32>
    %137 = vector.broadcast %136 : vector<8x1xf32> to vector<8x32xf32>
    %138 = arith.subf %130, %137 : vector<8x32xf32>
    %139 = arith.mulf %138, %138 : vector<8x32xf32>
    %cst_99 = arith.constant dense<0.000000e+00> : vector<8xf32>
    %140 = vector.multi_reduction <add>, %139, %cst_99 [1] : vector<8x32xf32> to vector<8xf32>
    %141 = vector.shape_cast %140 : vector<8xf32> to vector<8x1xf32>
    %cst_100 = arith.constant 3.200000e+01 : f32
    %142 = vector.broadcast %cst_100 : f32 to vector<8x1xf32>
    %143 = arith.divf %141, %142 : vector<8x1xf32>
    %cst_101 = arith.constant 9.99999974E-6 : f32
    %144 = vector.broadcast %cst_101 : f32 to vector<8x1xf32>
    %145 = arith.addf %143, %144 : vector<8x1xf32>
    %146 = math.rsqrt %145 : vector<8x1xf32>
    %147 = vector.broadcast %146 : vector<8x1xf32> to vector<8x32xf32>
    %148 = arith.mulf %138, %147 : vector<8x32xf32>
    %149 = vector.broadcast %131 : vector<1x32xf32> to vector<8x32xf32>
    %150 = arith.mulf %148, %149 : vector<8x32xf32>
    %151 = vector.broadcast %132 : vector<1x32xf32> to vector<8x32xf32>
    %152 = arith.addf %150, %151 : vector<8x32xf32>
    %c0_102 = arith.constant 0 : index
    %c0_103 = arith.constant 0 : index
    %153 = vector.load %arg10[%c0_102, %c0_103] : memref<32x64xf32, #tpu.memory_space<vmem>>, vector<32x64xf32>
    %cst_104 = arith.constant dense<0.000000e+00> : vector<8x64xf32>
    %154 = tpu.matmul %152, %153, %cst_104 {dimension_numbers = #tpu.dot_dimension_numbers<[1], [0], [0], [1], [0, 0, 1, 1], [], []>} : vector<8x32xf32>, vector<32x64xf32>, vector<8x64xf32> -> vector<8x64xf32>
    %c0_105 = arith.constant 0 : index
    %c0_106 = arith.constant 0 : index
    %155 = vector.load %arg11[%c0_105, %c0_106] : memref<1x64xf32, #tpu.memory_space<vmem>>, vector<1x64xf32>
    %156 = vector.broadcast %155 : vector<1x64xf32> to vector<8x64xf32>
    %157 = arith.addf %154, %156 : vector<8x64xf32>
    %cst_107 = arith.constant 0.000000e+00 : f32
    %158 = vector.broadcast %cst_107 : f32 to vector<8x64xf32>
    %159 = arith.maximumf %157, %158 : vector<8x64xf32>
    %c0_108 = arith.constant 0 : index
    %c0_109 = arith.constant 0 : index
    %160 = vector.load %arg12[%c0_108, %c0_109] : memref<64x32xf32, #tpu.memory_space<vmem>>, vector<64x32xf32>
    %cst_110 = arith.constant dense<0.000000e+00> : vector<8x32xf32>
    %161 = tpu.matmul %159, %160, %cst_110 {dimension_numbers = #tpu.dot_dimension_numbers<[1], [0], [0], [1], [0, 0, 1, 1], [], []>} : vector<8x64xf32>, vector<64x32xf32>, vector<8x32xf32> -> vector<8x32xf32>
    %c0_111 = arith.constant 0 : index
    %c0_112 = arith.constant 0 : index
    %162 = vector.load %arg13[%c0_111, %c0_112] : memref<1x32xf32, #tpu.memory_space<vmem>>, vector<1x32xf32>
    %163 = vector.broadcast %162 : vector<1x32xf32> to vector<8x32xf32>
    %164 = arith.addf %161, %163 : vector<8x32xf32>
    %165 = arith.addf %152, %164 : vector<8x32xf32>
    %c0_113 = arith.constant 0 : index
    %c0_114 = arith.constant 0 : index
    %166 = vector.load %arg16[%c0_113, %c0_114] : memref<1x32xf32, #tpu.memory_space<vmem>>, vector<1x32xf32>
    %c0_115 = arith.constant 0 : index
    %c0_116 = arith.constant 0 : index
    %167 = vector.load %arg17[%c0_115, %c0_116] : memref<1x32xf32, #tpu.memory_space<vmem>>, vector<1x32xf32>
    %cst_117 = arith.constant dense<0.000000e+00> : vector<8xf32>
    %168 = vector.multi_reduction <add>, %165, %cst_117 [1] : vector<8x32xf32> to vector<8xf32>
    %169 = vector.shape_cast %168 : vector<8xf32> to vector<8x1xf32>
    %cst_118 = arith.constant 3.200000e+01 : f32
    %170 = vector.broadcast %cst_118 : f32 to vector<8x1xf32>
    %171 = arith.divf %169, %170 : vector<8x1xf32>
    %172 = vector.broadcast %171 : vector<8x1xf32> to vector<8x32xf32>
    %173 = arith.subf %165, %172 : vector<8x32xf32>
    %174 = arith.mulf %173, %173 : vector<8x32xf32>
    %cst_119 = arith.constant dense<0.000000e+00> : vector<8xf32>
    %175 = vector.multi_reduction <add>, %174, %cst_119 [1] : vector<8x32xf32> to vector<8xf32>
    %176 = vector.shape_cast %175 : vector<8xf32> to vector<8x1xf32>
    %cst_120 = arith.constant 3.200000e+01 : f32
    %177 = vector.broadcast %cst_120 : f32 to vector<8x1xf32>
    %178 = arith.divf %176, %177 : vector<8x1xf32>
    %cst_121 = arith.constant 9.99999974E-6 : f32
    %179 = vector.broadcast %cst_121 : f32 to vector<8x1xf32>
    %180 = arith.addf %178, %179 : vector<8x1xf32>
    %181 = math.rsqrt %180 : vector<8x1xf32>
    %182 = vector.broadcast %181 : vector<8x1xf32> to vector<8x32xf32>
    %183 = arith.mulf %173, %182 : vector<8x32xf32>
    %184 = vector.broadcast %166 : vector<1x32xf32> to vector<8x32xf32>
    %185 = arith.mulf %183, %184 : vector<8x32xf32>
    %186 = vector.broadcast %167 : vector<1x32xf32> to vector<8x32xf32>
    %187 = arith.addf %185, %186 : vector<8x32xf32>
    %c0_122 = arith.constant 0 : index
    %c0_123 = arith.constant 0 : index
    %c0_124 = arith.constant 0 : index
    %188 = vector.load %arg18[%c0_122, %c0_123, %c0_124] : memref<1x8x32xf32, #tpu.memory_space<vmem>>, vector<1x8x32xf32>
    %189 = vector.shape_cast %188 : vector<1x8x32xf32> to vector<8x32xf32>
    %190 = vector.shape_cast %187 : vector<8x32xf32> to vector<1x8x32xf32>
    tpu.vector_store %arg18[%c0_122, %c0_123, %c0_124], %190 {strides = array<i32>} : memref<1x8x32xf32, #tpu.memory_space<vmem>>, vector<1x8x32xf32>,
    return
  }
  func.func @transform_0(%arg0: i32) -> (i32, i32, i32) {
    %c0_i32 = arith.constant 0 : i32
    %c0_i32_0 = arith.constant 0 : i32
    %c0_i32_1 = arith.constant 0 : i32
    return %arg0, %c0_i32, %c0_i32_0 : i32, i32, i32
  }
  func.func @transform_1(%arg0: i32) -> (i32, i32) {
    %c0_i32 = arith.constant 0 : i32
    %c0_i32_0 = arith.constant 0 : i32
    %c0_i32_1 = arith.constant 0 : i32
    return %c0_i32, %c0_i32_0 : i32, i32
  }
  func.func @transform_2(%arg0: i32) -> (i32, i32) {
    %c0_i32 = arith.constant 0 : i32
    %c0_i32_0 = arith.constant 0 : i32
    %c0_i32_1 = arith.constant 0 : i32
    return %c0_i32, %c0_i32_0 : i32, i32
  }
  func.func @transform_3(%arg0: i32) -> (i32, i32) {
    %c0_i32 = arith.constant 0 : i32
    %c0_i32_0 = arith.constant 0 : i32
    %c0_i32_1 = arith.constant 0 : i32
    return %c0_i32, %c0_i32_0 : i32, i32
  }
  func.func @transform_4(%arg0: i32) -> (i32, i32) {
    %c0_i32 = arith.constant 0 : i32
    %c0_i32_0 = arith.constant 0 : i32
    %c0_i32_1 = arith.constant 0 : i32
    return %c0_i32, %c0_i32_0 : i32, i32
  }
  func.func @transform_5(%arg0: i32) -> (i32, i32) {
    %c0_i32 = arith.constant 0 : i32
    %c0_i32_0 = arith.constant 0 : i32
    %c0_i32_1 = arith.constant 0 : i32
    return %c0_i32, %c0_i32_0 : i32, i32
  }
  func.func @transform_6(%arg0: i32) -> (i32, i32) {
    %c0_i32 = arith.constant 0 : i32
    %c0_i32_0 = arith.constant 0 : i32
    %c0_i32_1 = arith.constant 0 : i32
    return %c0_i32, %c0_i32_0 : i32, i32
  }
  func.func @transform_7(%arg0: i32) -> (i32, i32) {
    %c0_i32 = arith.constant 0 : i32
    %c0_i32_0 = arith.constant 0 : i32
    %c0_i32_1 = arith.constant 0 : i32
    return %c0_i32, %c0_i32_0 : i32, i32
  }
  func.func @transform_8(%arg0: i32) -> (i32, i32) {
    %c0_i32 = arith.constant 0 : i32
    %c0_i32_0 = arith.constant 0 : i32
    %c0_i32_1 = arith.constant 0 : i32
    return %c0_i32, %c0_i32_0 : i32, i32
  }
  func.func @transform_9(%arg0: i32) -> (i32, i32) {
    %c0_i32 = arith.constant 0 : i32
    %c0_i32_0 = arith.constant 0 : i32
    %c0_i32_1 = arith.constant 0 : i32
    return %c0_i32, %c0_i32_0 : i32, i32
  }
  func.func @transform_10(%arg0: i32) -> (i32, i32) {
    %c0_i32 = arith.constant 0 : i32
    %c0_i32_0 = arith.constant 0 : i32
    %c0_i32_1 = arith.constant 0 : i32
    return %c0_i32, %c0_i32_0 : i32, i32
  }
  func.func @transform_11(%arg0: i32) -> (i32, i32) {
    %c0_i32 = arith.constant 0 : i32
    %c0_i32_0 = arith.constant 0 : i32
    %c0_i32_1 = arith.constant 0 : i32
    return %c0_i32, %c0_i32_0 : i32, i32
  }
  func.func @transform_12(%arg0: i32) -> (i32, i32) {
    %c0_i32 = arith.constant 0 : i32
    %c0_i32_0 = arith.constant 0 : i32
    %c0_i32_1 = arith.constant 0 : i32
    return %c0_i32, %c0_i32_0 : i32, i32
  }
  func.func @transform_13(%arg0: i32) -> (i32, i32) {
    %c0_i32 = arith.constant 0 : i32
    %c0_i32_0 = arith.constant 0 : i32
    %c0_i32_1 = arith.constant 0 : i32
    return %c0_i32, %c0_i32_0 : i32, i32
  }
  func.func @transform_14(%arg0: i32) -> (i32, i32) {
    %c0_i32 = arith.constant 0 : i32
    %c0_i32_0 = arith.constant 0 : i32
    %c0_i32_1 = arith.constant 0 : i32
    return %c0_i32, %c0_i32_0 : i32, i32
  }
  func.func @transform_15(%arg0: i32) -> (i32, i32) {
    %c0_i32 = arith.constant 0 : i32
    %c0_i32_0 = arith.constant 0 : i32
    %c0_i32_1 = arith.constant 0 : i32
    return %c0_i32, %c0_i32_0 : i32, i32
  }
  func.func @transform_16(%arg0: i32) -> (i32, i32) {
    %c0_i32 = arith.constant 0 : i32
    %c0_i32_0 = arith.constant 0 : i32
    %c0_i32_1 = arith.constant 0 : i32
    return %c0_i32, %c0_i32_0 : i32, i32
  }
  func.func @transform_17(%arg0: i32) -> (i32, i32, i32) {
    %c0_i32 = arith.constant 0 : i32
    %c0_i32_0 = arith.constant 0 : i32
    %c0_i32_1 = arith.constant 0 : i32
    return %arg0, %c0_i32, %c0_i32_0 : i32, i32, i32
  }
}

module attributes {stable_mosaic.version = 11 : i64} {
  func.func @_layernorm_kernel(%arg0: i32, %arg1: memref<1x8x32xf32, #tpu.memory_space<vmem>>, %arg2: memref<1x32xf32, #tpu.memory_space<vmem>>, %arg3: memref<1x32xf32, #tpu.memory_space<vmem>>, %arg4: memref<1x8x32xf32, #tpu.memory_space<vmem>>) attributes {dimension_semantics = [#tpu.dimension_semantics<parallel>], iteration_bounds = array<i64: 2>, scalar_prefetch = 0 : i64, scratch_operands = 0 : i64, tpu.core_type = #tpu.core_type<tc>, window_params = [{transform_indices = @transform_0, window_bounds = array<i64: 1, 8, 32>}, {pipeline_mode = #tpu.pipeline_mode<synchronous>, transform_indices = @transform_1, window_bounds = array<i64: 1, 32>}, {pipeline_mode = #tpu.pipeline_mode<synchronous>, transform_indices = @transform_2, window_bounds = array<i64: 1, 32>}, {transform_indices = @transform_3, window_bounds = array<i64: 1, 8, 32>}]} {
    %c0 = arith.constant 0 : index
    %c0_0 = arith.constant 0 : index
    %c0_1 = arith.constant 0 : index
    %0 = vector.load %arg1[%c0, %c0_0, %c0_1] : memref<1x8x32xf32, #tpu.memory_space<vmem>>, vector<1x8x32xf32>
    %1 = vector.shape_cast %0 : vector<1x8x32xf32> to vector<8x32xf32>
    %c0_2 = arith.constant 0 : index
    %c0_3 = arith.constant 0 : index
    %2 = vector.load %arg2[%c0_2, %c0_3] : memref<1x32xf32, #tpu.memory_space<vmem>>, vector<1x32xf32>
    %c0_4 = arith.constant 0 : index
    %c0_5 = arith.constant 0 : index
    %3 = vector.load %arg3[%c0_4, %c0_5] : memref<1x32xf32, #tpu.memory_space<vmem>>, vector<1x32xf32>
    %cst = arith.constant dense<0.000000e+00> : vector<8xf32>
    %4 = vector.multi_reduction <add>, %1, %cst [1] : vector<8x32xf32> to vector<8xf32>
    %5 = vector.shape_cast %4 : vector<8xf32> to vector<8x1xf32>
    %cst_6 = arith.constant 3.200000e+01 : f32
    %6 = vector.broadcast %cst_6 : f32 to vector<8x1xf32>
    %7 = arith.divf %5, %6 : vector<8x1xf32>
    %8 = vector.broadcast %7 : vector<8x1xf32> to vector<8x32xf32>
    %9 = arith.subf %1, %8 : vector<8x32xf32>
    %10 = arith.mulf %9, %9 : vector<8x32xf32>
    %cst_7 = arith.constant dense<0.000000e+00> : vector<8xf32>
    %11 = vector.multi_reduction <add>, %10, %cst_7 [1] : vector<8x32xf32> to vector<8xf32>
    %12 = vector.shape_cast %11 : vector<8xf32> to vector<8x1xf32>
    %cst_8 = arith.constant 3.200000e+01 : f32
    %13 = vector.broadcast %cst_8 : f32 to vector<8x1xf32>
    %14 = arith.divf %12, %13 : vector<8x1xf32>
    %cst_9 = arith.constant 9.99999974E-6 : f32
    %15 = vector.broadcast %cst_9 : f32 to vector<8x1xf32>
    %16 = arith.addf %14, %15 : vector<8x1xf32>
    %17 = math.rsqrt %16 : vector<8x1xf32>
    %18 = vector.broadcast %17 : vector<8x1xf32> to vector<8x32xf32>
    %19 = arith.mulf %9, %18 : vector<8x32xf32>
    %20 = vector.broadcast %2 : vector<1x32xf32> to vector<8x32xf32>
    %21 = arith.mulf %19, %20 : vector<8x32xf32>
    %22 = vector.broadcast %3 : vector<1x32xf32> to vector<8x32xf32>
    %23 = arith.addf %21, %22 : vector<8x32xf32>
    %c0_10 = arith.constant 0 : index
    %c0_11 = arith.constant 0 : index
    %c0_12 = arith.constant 0 : index
    %24 = vector.load %arg4[%c0_10, %c0_11, %c0_12] : memref<1x8x32xf32, #tpu.memory_space<vmem>>, vector<1x8x32xf32>
    %25 = vector.shape_cast %24 : vector<1x8x32xf32> to vector<8x32xf32>
    %26 = vector.shape_cast %23 : vector<8x32xf32> to vector<1x8x32xf32>
    tpu.vector_store %arg4[%c0_10, %c0_11, %c0_12], %26 {strides = array<i32>} : memref<1x8x32xf32, #tpu.memory_space<vmem>>, vector<1x8x32xf32>,
    return
  }
  func.func @transform_0(%arg0: i32) -> (i32, i32, i32) {
    %c0_i32 = arith.constant 0 : i32
    %c0_i32_0 = arith.constant 0 : i32
    %c0_i32_1 = arith.constant 0 : i32
    return %arg0, %c0_i32, %c0_i32_0 : i32, i32, i32
  }
  func.func @transform_1(%arg0: i32) -> (i32, i32) {
    %c0_i32 = arith.constant 0 : i32
    %c0_i32_0 = arith.constant 0 : i32
    %c0_i32_1 = arith.constant 0 : i32
    return %c0_i32, %c0_i32_0 : i32, i32
  }
  func.func @transform_2(%arg0: i32) -> (i32, i32) {
    %c0_i32 = arith.constant 0 : i32
    %c0_i32_0 = arith.constant 0 : i32
    %c0_i32_1 = arith.constant 0 : i32
    return %c0_i32, %c0_i32_0 : i32, i32
  }
  func.func @transform_3(%arg0: i32) -> (i32, i32, i32) {
    %c0_i32 = arith.constant 0 : i32
    %c0_i32_0 = arith.constant 0 : i32
    %c0_i32_1 = arith.constant 0 : i32
    return %arg0, %c0_i32, %c0_i32_0 : i32, i32, i32
  }
}

module attributes {stable_mosaic.version = 11 : i64} {
  func.func @_encoder_layer_kernel(%arg0: i32, %arg1: memref<1x8x32xf32, #tpu.memory_space<vmem>>, %arg2: memref<32x32xf32, #tpu.memory_space<vmem>>, %arg3: memref<1x32xf32, #tpu.memory_space<vmem>>, %arg4: memref<32x32xf32, #tpu.memory_space<vmem>>, %arg5: memref<1x32xf32, #tpu.memory_space<vmem>>, %arg6: memref<32x32xf32, #tpu.memory_space<vmem>>, %arg7: memref<1x32xf32, #tpu.memory_space<vmem>>, %arg8: memref<32x32xf32, #tpu.memory_space<vmem>>, %arg9: memref<1x32xf32, #tpu.memory_space<vmem>>, %arg10: memref<32x64xf32, #tpu.memory_space<vmem>>, %arg11: memref<1x64xf32, #tpu.memory_space<vmem>>, %arg12: memref<64x32xf32, #tpu.memory_space<vmem>>, %arg13: memref<1x32xf32, #tpu.memory_space<vmem>>, %arg14: memref<1x32xf32, #tpu.memory_space<vmem>>, %arg15: memref<1x32xf32, #tpu.memory_space<vmem>>, %arg16: memref<1x32xf32, #tpu.memory_space<vmem>>, %arg17: memref<1x32xf32, #tpu.memory_space<vmem>>, %arg18: memref<1x8x32xf32, #tpu.memory_space<vmem>>) attributes {dimension_semantics = [#tpu.dimension_semantics<parallel>], iteration_bounds = array<i64: 2>, scalar_prefetch = 0 : i64, scratch_operands = 0 : i64, tpu.core_type = #tpu.core_type<tc>, window_params = [{transform_indices = @transform_0, window_bounds = array<i64: 1, 8, 32>}, {pipeline_mode = #tpu.pipeline_mode<synchronous>, transform_indices = @transform_1, window_bounds = array<i64: 32, 32>}, {pipeline_mode = #tpu.pipeline_mode<synchronous>, transform_indices = @transform_2, window_bounds = array<i64: 1, 32>}, {pipeline_mode = #tpu.pipeline_mode<synchronous>, transform_indices = @transform_3, window_bounds = array<i64: 32, 32>}, {pipeline_mode = #tpu.pipeline_mode<synchronous>, transform_indices = @transform_4, window_bounds = array<i64: 1, 32>}, {pipeline_mode = #tpu.pipeline_mode<synchronous>, transform_indices = @transform_5, window_bounds = array<i64: 32, 32>}, {pipeline_mode = #tpu.pipeline_mode<synchronous>, transform_indices = @transform_6, window_bounds = array<i64: 1, 32>}, {pipeline_mode = #tpu.pipeline_mode<synchronous>, transform_indices = @transform_7, window_bounds = array<i64: 32, 32>}, {pipeline_mode = #tpu.pipeline_mode<synchronous>, transform_indices = @transform_8, window_bounds = array<i64: 1, 32>}, {pipeline_mode = #tpu.pipeline_mode<synchronous>, transform_indices = @transform_9, window_bounds = array<i64: 32, 64>}, {pipeline_mode = #tpu.pipeline_mode<synchronous>, transform_indices = @transform_10, window_bounds = array<i64: 1, 64>}, {pipeline_mode = #tpu.pipeline_mode<synchronous>, transform_indices = @transform_11, window_bounds = array<i64: 64, 32>}, {pipeline_mode = #tpu.pipeline_mode<synchronous>, transform_indices = @transform_12, window_bounds = array<i64: 1, 32>}, {pipeline_mode = #tpu.pipeline_mode<synchronous>, transform_indices = @transform_13, window_bounds = array<i64: 1, 32>}, {pipeline_mode = #tpu.pipeline_mode<synchronous>, transform_indices = @transform_14, window_bounds = array<i64: 1, 32>}, {pipeline_mode = #tpu.pipeline_mode<synchronous>, transform_indices = @transform_15, window_bounds = array<i64: 1, 32>}, {pipeline_mode = #tpu.pipeline_mode<synchronous>, transform_indices = @transform_16, window_bounds = array<i64: 1, 32>}, {transform_indices = @transform_17, window_bounds = array<i64: 1, 8, 32>}]} {
    %c0 = arith.constant 0 : index
    %c0_0 = arith.constant 0 : index
    %c0_1 = arith.constant 0 : index
    %0 = vector.load %arg1[%c0, %c0_0, %c0_1] : memref<1x8x32xf32, #tpu.memory_space<vmem>>, vector<1x8x32xf32>
    %1 = vector.shape_cast %0 : vector<1x8x32xf32> to vector<8x32xf32>
    %cst = arith.constant 0.000000e+00 : f32
    %2 = vector.broadcast %cst : f32 to vector<8x32xf32>
    %c0_2 = arith.constant 0 : index
    %c0_3 = arith.constant 0 : index
    %3 = vector.load %arg2[%c0_2, %c0_3] : memref<32x32xf32, #tpu.memory_space<vmem>>, vector<32x8xf32>
    %cst_4 = arith.constant dense<0.000000e+00> : vector<8x8xf32>
    %4 = tpu.matmul %1, %3, %cst_4 {dimension_numbers = #tpu.dot_dimension_numbers<[1], [0], [0], [1], [0, 0, 1, 1], [], []>} : vector<8x32xf32>, vector<32x8xf32>, vector<8x8xf32> -> vector<8x8xf32>
    %c0_5 = arith.constant 0 : index
    %c0_6 = arith.constant 0 : index
    %5 = vector.load %arg3[%c0_5, %c0_6] : memref<1x32xf32, #tpu.memory_space<vmem>>, vector<1x8xf32>
    %6 = vector.broadcast %5 : vector<1x8xf32> to vector<8x8xf32>
    %7 = arith.addf %4, %6 : vector<8x8xf32>
    %c0_7 = arith.constant 0 : index
    %c0_8 = arith.constant 0 : index
    %8 = vector.load %arg4[%c0_7, %c0_8] : memref<32x32xf32, #tpu.memory_space<vmem>>, vector<32x8xf32>
    %cst_9 = arith.constant dense<0.000000e+00> : vector<8x8xf32>
    %9 = tpu.matmul %1, %8, %cst_9 {dimension_numbers = #tpu.dot_dimension_numbers<[1], [0], [0], [1], [0, 0, 1, 1], [], []>} : vector<8x32xf32>, vector<32x8xf32>, vector<8x8xf32> -> vector<8x8xf32>
    %c0_10 = arith.constant 0 : index
    %c0_11 = arith.constant 0 : index
    %10 = vector.load %arg5[%c0_10, %c0_11] : memref<1x32xf32, #tpu.memory_space<vmem>>, vector<1x8xf32>
    %11 = vector.broadcast %10 : vector<1x8xf32> to vector<8x8xf32>
    %12 = arith.addf %9, %11 : vector<8x8xf32>
    %c0_12 = arith.constant 0 : index
    %c0_13 = arith.constant 0 : index
    %13 = vector.load %arg6[%c0_12, %c0_13] : memref<32x32xf32, #tpu.memory_space<vmem>>, vector<32x8xf32>
    %cst_14 = arith.constant dense<0.000000e+00> : vector<8x8xf32>
    %14 = tpu.matmul %1, %13, %cst_14 {dimension_numbers = #tpu.dot_dimension_numbers<[1], [0], [0], [1], [0, 0, 1, 1], [], []>} : vector<8x32xf32>, vector<32x8xf32>, vector<8x8xf32> -> vector<8x8xf32>
    %c0_15 = arith.constant 0 : index
    %c0_16 = arith.constant 0 : index
    %15 = vector.load %arg7[%c0_15, %c0_16] : memref<1x32xf32, #tpu.memory_space<vmem>>, vector<1x8xf32>
    %16 = vector.broadcast %15 : vector<1x8xf32> to vector<8x8xf32>
    %17 = arith.addf %14, %16 : vector<8x8xf32>
    %cst_17 = arith.constant dense<0.000000e+00> : vector<8x8xf32>
    %18 = tpu.matmul %7, %12, %cst_17 {dimension_numbers = #tpu.dot_dimension_numbers<[1], [1], [0], [0], [0, 0, 1, 0], [], []>} : vector<8x8xf32>, vector<8x8xf32>, vector<8x8xf32> -> vector<8x8xf32>
    %cst_18 = arith.constant 0.353553385 : f32
    %19 = vector.broadcast %cst_18 : f32 to vector<8x8xf32>
    %20 = arith.mulf %18, %19 : vector<8x8xf32>
    %cst_19 = arith.constant dense<0xFF800000> : vector<8xf32>
    %21 = vector.multi_reduction <maximumf>, %20, %cst_19 [1] : vector<8x8xf32> to vector<8xf32>
    %22 = vector.shape_cast %21 : vector<8xf32> to vector<8x1xf32>
    %23 = vector.broadcast %22 : vector<8x1xf32> to vector<8x8xf32>
    %24 = arith.subf %20, %23 : vector<8x8xf32>
    %25 = math.exp %24 : vector<8x8xf32>
    %cst_20 = arith.constant dense<0.000000e+00> : vector<8xf32>
    %26 = vector.multi_reduction <add>, %25, %cst_20 [1] : vector<8x8xf32> to vector<8xf32>
    %27 = vector.shape_cast %26 : vector<8xf32> to vector<8x1xf32>
    %28 = vector.broadcast %27 : vector<8x1xf32> to vector<8x8xf32>
    %29 = arith.divf %25, %28 : vector<8x8xf32>
    %cst_21 = arith.constant dense<0.000000e+00> : vector<8x8xf32>
    %30 = tpu.matmul %29, %17, %cst_21 {dimension_numbers = #tpu.dot_dimension_numbers<[1], [0], [0], [1], [0, 0, 1, 1], [], []>} : vector<8x8xf32>, vector<8x8xf32>, vector<8x8xf32> -> vector<8x8xf32>
    %c0_22 = arith.constant 0 : index
    %c0_23 = arith.constant 0 : index
    %31 = vector.load %arg8[%c0_22, %c0_23] : memref<32x32xf32, #tpu.memory_space<vmem>>, vector<8x32xf32>
    %cst_24 = arith.constant dense<0.000000e+00> : vector<8x32xf32>
    %32 = tpu.matmul %30, %31, %cst_24 {dimension_numbers = #tpu.dot_dimension_numbers<[1], [0], [0], [1], [0, 0, 1, 1], [], []>} : vector<8x8xf32>, vector<8x32xf32>, vector<8x32xf32> -> vector<8x32xf32>
    %33 = arith.addf %2, %32 : vector<8x32xf32>
    %c0_25 = arith.constant 0 : index
    %c8 = arith.constant 8 : index
    %34 = vector.load %arg2[%c0_25, %c8] : memref<32x32xf32, #tpu.memory_space<vmem>>, vector<32x8xf32>
    %cst_26 = arith.constant dense<0.000000e+00> : vector<8x8xf32>
    %35 = tpu.matmul %1, %34, %cst_26 {dimension_numbers = #tpu.dot_dimension_numbers<[1], [0], [0], [1], [0, 0, 1, 1], [], []>} : vector<8x32xf32>, vector<32x8xf32>, vector<8x8xf32> -> vector<8x8xf32>
    %c0_27 = arith.constant 0 : index
    %c8_28 = arith.constant 8 : index
    %36 = vector.load %arg3[%c0_27, %c8_28] : memref<1x32xf32, #tpu.memory_space<vmem>>, vector<1x8xf32>
    %37 = vector.broadcast %36 : vector<1x8xf32> to vector<8x8xf32>
    %38 = arith.addf %35, %37 : vector<8x8xf32>
    %c0_29 = arith.constant 0 : index
    %c8_30 = arith.constant 8 : index
    %39 = vector.load %arg4[%c0_29, %c8_30] : memref<32x32xf32, #tpu.memory_space<vmem>>, vector<32x8xf32>
    %cst_31 = arith.constant dense<0.000000e+00> : vector<8x8xf32>
    %40 = tpu.matmul %1, %39, %cst_31 {dimension_numbers = #tpu.dot_dimension_numbers<[1], [0], [0], [1], [0, 0, 1, 1], [], []>} : vector<8x32xf32>, vector<32x8xf32>, vector<8x8xf32> -> vector<8x8xf32>
    %c0_32 = arith.constant 0 : index
    %c8_33 = arith.constant 8 : index
    %41 = vector.load %arg5[%c0_32, %c8_33] : memref<1x32xf32, #tpu.memory_space<vmem>>, vector<1x8xf32>
    %42 = vector.broadcast %41 : vector<1x8xf32> to vector<8x8xf32>
    %43 = arith.addf %40, %42 : vector<8x8xf32>
    %c0_34 = arith.constant 0 : index
    %c8_35 = arith.constant 8 : index
    %44 = vector.load %arg6[%c0_34, %c8_35] : memref<32x32xf32, #tpu.memory_space<vmem>>, vector<32x8xf32>
    %cst_36 = arith.constant dense<0.000000e+00> : vector<8x8xf32>
    %45 = tpu.matmul %1, %44, %cst_36 {dimension_numbers = #tpu.dot_dimension_numbers<[1], [0], [0], [1], [0, 0, 1, 1], [], []>} : vector<8x32xf32>, vector<32x8xf32>, vector<8x8xf32> -> vector<8x8xf32>
    %c0_37 = arith.constant 0 : index
    %c8_38 = arith.constant 8 : index
    %46 = vector.load %arg7[%c0_37, %c8_38] : memref<1x32xf32, #tpu.memory_space<vmem>>, vector<1x8xf32>
    %47 = vector.broadcast %46 : vector<1x8xf32> to vector<8x8xf32>
    %48 = arith.addf %45, %47 : vector<8x8xf32>
    %cst_39 = arith.constant dense<0.000000e+00> : vector<8x8xf32>
    %49 = tpu.matmul %38, %43, %cst_39 {dimension_numbers = #tpu.dot_dimension_numbers<[1], [1], [0], [0], [0, 0, 1, 0], [], []>} : vector<8x8xf32>, vector<8x8xf32>, vector<8x8xf32> -> vector<8x8xf32>
    %cst_40 = arith.constant 0.353553385 : f32
    %50 = vector.broadcast %cst_40 : f32 to vector<8x8xf32>
    %51 = arith.mulf %49, %50 : vector<8x8xf32>
    %cst_41 = arith.constant dense<0xFF800000> : vector<8xf32>
    %52 = vector.multi_reduction <maximumf>, %51, %cst_41 [1] : vector<8x8xf32> to vector<8xf32>
    %53 = vector.shape_cast %52 : vector<8xf32> to vector<8x1xf32>
    %54 = vector.broadcast %53 : vector<8x1xf32> to vector<8x8xf32>
    %55 = arith.subf %51, %54 : vector<8x8xf32>
    %56 = math.exp %55 : vector<8x8xf32>
    %cst_42 = arith.constant dense<0.000000e+00> : vector<8xf32>
    %57 = vector.multi_reduction <add>, %56, %cst_42 [1] : vector<8x8xf32> to vector<8xf32>
    %58 = vector.shape_cast %57 : vector<8xf32> to vector<8x1xf32>
    %59 = vector.broadcast %58 : vector<8x1xf32> to vector<8x8xf32>
    %60 = arith.divf %56, %59 : vector<8x8xf32>
    %cst_43 = arith.constant dense<0.000000e+00> : vector<8x8xf32>
    %61 = tpu.matmul %60, %48, %cst_43 {dimension_numbers = #tpu.dot_dimension_numbers<[1], [0], [0], [1], [0, 0, 1, 1], [], []>} : vector<8x8xf32>, vector<8x8xf32>, vector<8x8xf32> -> vector<8x8xf32>
    %c8_44 = arith.constant 8 : index
    %c0_45 = arith.constant 0 : index
    %62 = vector.load %arg8[%c8_44, %c0_45] : memref<32x32xf32, #tpu.memory_space<vmem>>, vector<8x32xf32>
    %cst_46 = arith.constant dense<0.000000e+00> : vector<8x32xf32>
    %63 = tpu.matmul %61, %62, %cst_46 {dimension_numbers = #tpu.dot_dimension_numbers<[1], [0], [0], [1], [0, 0, 1, 1], [], []>} : vector<8x8xf32>, vector<8x32xf32>, vector<8x32xf32> -> vector<8x32xf32>
    %64 = arith.addf %33, %63 : vector<8x32xf32>
    %c0_47 = arith.constant 0 : index
    %c16 = arith.constant 16 : index
    %65 = vector.load %arg2[%c0_47, %c16] : memref<32x32xf32, #tpu.memory_space<vmem>>, vector<32x8xf32>
    %cst_48 = arith.constant dense<0.000000e+00> : vector<8x8xf32>
    %66 = tpu.matmul %1, %65, %cst_48 {dimension_numbers = #tpu.dot_dimension_numbers<[1], [0], [0], [1], [0, 0, 1, 1], [], []>} : vector<8x32xf32>, vector<32x8xf32>, vector<8x8xf32> -> vector<8x8xf32>
    %c0_49 = arith.constant 0 : index
    %c16_50 = arith.constant 16 : index
    %67 = vector.load %arg3[%c0_49, %c16_50] : memref<1x32xf32, #tpu.memory_space<vmem>>, vector<1x8xf32>
    %68 = vector.broadcast %67 : vector<1x8xf32> to vector<8x8xf32>
    %69 = arith.addf %66, %68 : vector<8x8xf32>
    %c0_51 = arith.constant 0 : index
    %c16_52 = arith.constant 16 : index
    %70 = vector.load %arg4[%c0_51, %c16_52] : memref<32x32xf32, #tpu.memory_space<vmem>>, vector<32x8xf32>
    %cst_53 = arith.constant dense<0.000000e+00> : vector<8x8xf32>
    %71 = tpu.matmul %1, %70, %cst_53 {dimension_numbers = #tpu.dot_dimension_numbers<[1], [0], [0], [1], [0, 0, 1, 1], [], []>} : vector<8x32xf32>, vector<32x8xf32>, vector<8x8xf32> -> vector<8x8xf32>
    %c0_54 = arith.constant 0 : index
    %c16_55 = arith.constant 16 : index
    %72 = vector.load %arg5[%c0_54, %c16_55] : memref<1x32xf32, #tpu.memory_space<vmem>>, vector<1x8xf32>
    %73 = vector.broadcast %72 : vector<1x8xf32> to vector<8x8xf32>
    %74 = arith.addf %71, %73 : vector<8x8xf32>
    %c0_56 = arith.constant 0 : index
    %c16_57 = arith.constant 16 : index
    %75 = vector.load %arg6[%c0_56, %c16_57] : memref<32x32xf32, #tpu.memory_space<vmem>>, vector<32x8xf32>
    %cst_58 = arith.constant dense<0.000000e+00> : vector<8x8xf32>
    %76 = tpu.matmul %1, %75, %cst_58 {dimension_numbers = #tpu.dot_dimension_numbers<[1], [0], [0], [1], [0, 0, 1, 1], [], []>} : vector<8x32xf32>, vector<32x8xf32>, vector<8x8xf32> -> vector<8x8xf32>
    %c0_59 = arith.constant 0 : index
    %c16_60 = arith.constant 16 : index
    %77 = vector.load %arg7[%c0_59, %c16_60] : memref<1x32xf32, #tpu.memory_space<vmem>>, vector<1x8xf32>
    %78 = vector.broadcast %77 : vector<1x8xf32> to vector<8x8xf32>
    %79 = arith.addf %76, %78 : vector<8x8xf32>
    %cst_61 = arith.constant dense<0.000000e+00> : vector<8x8xf32>
    %80 = tpu.matmul %69, %74, %cst_61 {dimension_numbers = #tpu.dot_dimension_numbers<[1], [1], [0], [0], [0, 0, 1, 0], [], []>} : vector<8x8xf32>, vector<8x8xf32>, vector<8x8xf32> -> vector<8x8xf32>
    %cst_62 = arith.constant 0.353553385 : f32
    %81 = vector.broadcast %cst_62 : f32 to vector<8x8xf32>
    %82 = arith.mulf %80, %81 : vector<8x8xf32>
    %cst_63 = arith.constant dense<0xFF800000> : vector<8xf32>
    %83 = vector.multi_reduction <maximumf>, %82, %cst_63 [1] : vector<8x8xf32> to vector<8xf32>
    %84 = vector.shape_cast %83 : vector<8xf32> to vector<8x1xf32>
    %85 = vector.broadcast %84 : vector<8x1xf32> to vector<8x8xf32>
    %86 = arith.subf %82, %85 : vector<8x8xf32>
    %87 = math.exp %86 : vector<8x8xf32>
    %cst_64 = arith.constant dense<0.000000e+00> : vector<8xf32>
    %88 = vector.multi_reduction <add>, %87, %cst_64 [1] : vector<8x8xf32> to vector<8xf32>
    %89 = vector.shape_cast %88 : vector<8xf32> to vector<8x1xf32>
    %90 = vector.broadcast %89 : vector<8x1xf32> to vector<8x8xf32>
    %91 = arith.divf %87, %90 : vector<8x8xf32>
    %cst_65 = arith.constant dense<0.000000e+00> : vector<8x8xf32>
    %92 = tpu.matmul %91, %79, %cst_65 {dimension_numbers = #tpu.dot_dimension_numbers<[1], [0], [0], [1], [0, 0, 1, 1], [], []>} : vector<8x8xf32>, vector<8x8xf32>, vector<8x8xf32> -> vector<8x8xf32>
    %c16_66 = arith.constant 16 : index
    %c0_67 = arith.constant 0 : index
    %93 = vector.load %arg8[%c16_66, %c0_67] : memref<32x32xf32, #tpu.memory_space<vmem>>, vector<8x32xf32>
    %cst_68 = arith.constant dense<0.000000e+00> : vector<8x32xf32>
    %94 = tpu.matmul %92, %93, %cst_68 {dimension_numbers = #tpu.dot_dimension_numbers<[1], [0], [0], [1], [0, 0, 1, 1], [], []>} : vector<8x8xf32>, vector<8x32xf32>, vector<8x32xf32> -> vector<8x32xf32>
    %95 = arith.addf %64, %94 : vector<8x32xf32>
    %c0_69 = arith.constant 0 : index
    %c24 = arith.constant 24 : index
    %96 = vector.load %arg2[%c0_69, %c24] : memref<32x32xf32, #tpu.memory_space<vmem>>, vector<32x8xf32>
    %cst_70 = arith.constant dense<0.000000e+00> : vector<8x8xf32>
    %97 = tpu.matmul %1, %96, %cst_70 {dimension_numbers = #tpu.dot_dimension_numbers<[1], [0], [0], [1], [0, 0, 1, 1], [], []>} : vector<8x32xf32>, vector<32x8xf32>, vector<8x8xf32> -> vector<8x8xf32>
    %c0_71 = arith.constant 0 : index
    %c24_72 = arith.constant 24 : index
    %98 = vector.load %arg3[%c0_71, %c24_72] : memref<1x32xf32, #tpu.memory_space<vmem>>, vector<1x8xf32>
    %99 = vector.broadcast %98 : vector<1x8xf32> to vector<8x8xf32>
    %100 = arith.addf %97, %99 : vector<8x8xf32>
    %c0_73 = arith.constant 0 : index
    %c24_74 = arith.constant 24 : index
    %101 = vector.load %arg4[%c0_73, %c24_74] : memref<32x32xf32, #tpu.memory_space<vmem>>, vector<32x8xf32>
    %cst_75 = arith.constant dense<0.000000e+00> : vector<8x8xf32>
    %102 = tpu.matmul %1, %101, %cst_75 {dimension_numbers = #tpu.dot_dimension_numbers<[1], [0], [0], [1], [0, 0, 1, 1], [], []>} : vector<8x32xf32>, vector<32x8xf32>, vector<8x8xf32> -> vector<8x8xf32>
    %c0_76 = arith.constant 0 : index
    %c24_77 = arith.constant 24 : index
    %103 = vector.load %arg5[%c0_76, %c24_77] : memref<1x32xf32, #tpu.memory_space<vmem>>, vector<1x8xf32>
    %104 = vector.broadcast %103 : vector<1x8xf32> to vector<8x8xf32>
    %105 = arith.addf %102, %104 : vector<8x8xf32>
    %c0_78 = arith.constant 0 : index
    %c24_79 = arith.constant 24 : index
    %106 = vector.load %arg6[%c0_78, %c24_79] : memref<32x32xf32, #tpu.memory_space<vmem>>, vector<32x8xf32>
    %cst_80 = arith.constant dense<0.000000e+00> : vector<8x8xf32>
    %107 = tpu.matmul %1, %106, %cst_80 {dimension_numbers = #tpu.dot_dimension_numbers<[1], [0], [0], [1], [0, 0, 1, 1], [], []>} : vector<8x32xf32>, vector<32x8xf32>, vector<8x8xf32> -> vector<8x8xf32>
    %c0_81 = arith.constant 0 : index
    %c24_82 = arith.constant 24 : index
    %108 = vector.load %arg7[%c0_81, %c24_82] : memref<1x32xf32, #tpu.memory_space<vmem>>, vector<1x8xf32>
    %109 = vector.broadcast %108 : vector<1x8xf32> to vector<8x8xf32>
    %110 = arith.addf %107, %109 : vector<8x8xf32>
    %cst_83 = arith.constant dense<0.000000e+00> : vector<8x8xf32>
    %111 = tpu.matmul %100, %105, %cst_83 {dimension_numbers = #tpu.dot_dimension_numbers<[1], [1], [0], [0], [0, 0, 1, 0], [], []>} : vector<8x8xf32>, vector<8x8xf32>, vector<8x8xf32> -> vector<8x8xf32>
    %cst_84 = arith.constant 0.353553385 : f32
    %112 = vector.broadcast %cst_84 : f32 to vector<8x8xf32>
    %113 = arith.mulf %111, %112 : vector<8x8xf32>
    %cst_85 = arith.constant dense<0xFF800000> : vector<8xf32>
    %114 = vector.multi_reduction <maximumf>, %113, %cst_85 [1] : vector<8x8xf32> to vector<8xf32>
    %115 = vector.shape_cast %114 : vector<8xf32> to vector<8x1xf32>
    %116 = vector.broadcast %115 : vector<8x1xf32> to vector<8x8xf32>
    %117 = arith.subf %113, %116 : vector<8x8xf32>
    %118 = math.exp %117 : vector<8x8xf32>
    %cst_86 = arith.constant dense<0.000000e+00> : vector<8xf32>
    %119 = vector.multi_reduction <add>, %118, %cst_86 [1] : vector<8x8xf32> to vector<8xf32>
    %120 = vector.shape_cast %119 : vector<8xf32> to vector<8x1xf32>
    %121 = vector.broadcast %120 : vector<8x1xf32> to vector<8x8xf32>
    %122 = arith.divf %118, %121 : vector<8x8xf32>
    %cst_87 = arith.constant dense<0.000000e+00> : vector<8x8xf32>
    %123 = tpu.matmul %122, %110, %cst_87 {dimension_numbers = #tpu.dot_dimension_numbers<[1], [0], [0], [1], [0, 0, 1, 1], [], []>} : vector<8x8xf32>, vector<8x8xf32>, vector<8x8xf32> -> vector<8x8xf32>
    %c24_88 = arith.constant 24 : index
    %c0_89 = arith.constant 0 : index
    %124 = vector.load %arg8[%c24_88, %c0_89] : memref<32x32xf32, #tpu.memory_space<vmem>>, vector<8x32xf32>
    %cst_90 = arith.constant dense<0.000000e+00> : vector<8x32xf32>
    %125 = tpu.matmul %123, %124, %cst_90 {dimension_numbers = #tpu.dot_dimension_numbers<[1], [0], [0], [1], [0, 0, 1, 1], [], []>} : vector<8x8xf32>, vector<8x32xf32>, vector<8x32xf32> -> vector<8x32xf32>
    %126 = arith.addf %95, %125 : vector<8x32xf32>
    %c0_91 = arith.constant 0 : index
    %c0_92 = arith.constant 0 : index
    %127 = vector.load %arg9[%c0_91, %c0_92] : memref<1x32xf32, #tpu.memory_space<vmem>>, vector<1x32xf32>
    %128 = vector.broadcast %127 : vector<1x32xf32> to vector<8x32xf32>
    %129 = arith.addf %126, %128 : vector<8x32xf32>
    %130 = arith.addf %1, %129 : vector<8x32xf32>
    %c0_93 = arith.constant 0 : index
    %c0_94 = arith.constant 0 : index
    %131 = vector.load %arg14[%c0_93, %c0_94] : memref<1x32xf32, #tpu.memory_space<vmem>>, vector<1x32xf32>
    %c0_95 = arith.constant 0 : index
    %c0_96 = arith.constant 0 : index
    %132 = vector.load %arg15[%c0_95, %c0_96] : memref<1x32xf32, #tpu.memory_space<vmem>>, vector<1x32xf32>
    %cst_97 = arith.constant dense<0.000000e+00> : vector<8xf32>
    %133 = vector.multi_reduction <add>, %130, %cst_97 [1] : vector<8x32xf32> to vector<8xf32>
    %134 = vector.shape_cast %133 : vector<8xf32> to vector<8x1xf32>
    %cst_98 = arith.constant 3.200000e+01 : f32
    %135 = vector.broadcast %cst_98 : f32 to vector<8x1xf32>
    %136 = arith.divf %134, %135 : vector<8x1xf32>
    %137 = vector.broadcast %136 : vector<8x1xf32> to vector<8x32xf32>
    %138 = arith.subf %130, %137 : vector<8x32xf32>
    %139 = arith.mulf %138, %138 : vector<8x32xf32>
    %cst_99 = arith.constant dense<0.000000e+00> : vector<8xf32>
    %140 = vector.multi_reduction <add>, %139, %cst_99 [1] : vector<8x32xf32> to vector<8xf32>
    %141 = vector.shape_cast %140 : vector<8xf32> to vector<8x1xf32>
    %cst_100 = arith.constant 3.200000e+01 : f32
    %142 = vector.broadcast %cst_100 : f32 to vector<8x1xf32>
    %143 = arith.divf %141, %142 : vector<8x1xf32>
    %cst_101 = arith.constant 9.99999974E-6 : f32
    %144 = vector.broadcast %cst_101 : f32 to vector<8x1xf32>
    %145 = arith.addf %143, %144 : vector<8x1xf32>
    %146 = math.rsqrt %145 : vector<8x1xf32>
    %147 = vector.broadcast %146 : vector<8x1xf32> to vector<8x32xf32>
    %148 = arith.mulf %138, %147 : vector<8x32xf32>
    %149 = vector.broadcast %131 : vector<1x32xf32> to vector<8x32xf32>
    %150 = arith.mulf %148, %149 : vector<8x32xf32>
    %151 = vector.broadcast %132 : vector<1x32xf32> to vector<8x32xf32>
    %152 = arith.addf %150, %151 : vector<8x32xf32>
    %c0_102 = arith.constant 0 : index
    %c0_103 = arith.constant 0 : index
    %153 = vector.load %arg10[%c0_102, %c0_103] : memref<32x64xf32, #tpu.memory_space<vmem>>, vector<32x64xf32>
    %cst_104 = arith.constant dense<0.000000e+00> : vector<8x64xf32>
    %154 = tpu.matmul %152, %153, %cst_104 {dimension_numbers = #tpu.dot_dimension_numbers<[1], [0], [0], [1], [0, 0, 1, 1], [], []>} : vector<8x32xf32>, vector<32x64xf32>, vector<8x64xf32> -> vector<8x64xf32>
    %c0_105 = arith.constant 0 : index
    %c0_106 = arith.constant 0 : index
    %155 = vector.load %arg11[%c0_105, %c0_106] : memref<1x64xf32, #tpu.memory_space<vmem>>, vector<1x64xf32>
    %156 = vector.broadcast %155 : vector<1x64xf32> to vector<8x64xf32>
    %157 = arith.addf %154, %156 : vector<8x64xf32>
    %cst_107 = arith.constant 0.000000e+00 : f32
    %158 = vector.broadcast %cst_107 : f32 to vector<8x64xf32>
    %159 = arith.maximumf %157, %158 : vector<8x64xf32>
    %c0_108 = arith.constant 0 : index
    %c0_109 = arith.constant 0 : index
    %160 = vector.load %arg12[%c0_108, %c0_109] : memref<64x32xf32, #tpu.memory_space<vmem>>, vector<64x32xf32>
    %cst_110 = arith.constant dense<0.000000e+00> : vector<8x32xf32>
    %161 = tpu.matmul %159, %160, %cst_110 {dimension_numbers = #tpu.dot_dimension_numbers<[1], [0], [0], [1], [0, 0, 1, 1], [], []>} : vector<8x64xf32>, vector<64x32xf32>, vector<8x32xf32> -> vector<8x32xf32>
    %c0_111 = arith.constant 0 : index
    %c0_112 = arith.constant 0 : index
    %162 = vector.load %arg13[%c0_111, %c0_112] : memref<1x32xf32, #tpu.memory_space<vmem>>, vector<1x32xf32>
    %163 = vector.broadcast %162 : vector<1x32xf32> to vector<8x32xf32>
    %164 = arith.addf %161, %163 : vector<8x32xf32>
    %165 = arith.addf %152, %164 : vector<8x32xf32>
    %c0_113 = arith.constant 0 : index
    %c0_114 = arith.constant 0 : index
    %166 = vector.load %arg16[%c0_113, %c0_114] : memref<1x32xf32, #tpu.memory_space<vmem>>, vector<1x32xf32>
    %c0_115 = arith.constant 0 : index
    %c0_116 = arith.constant 0 : index
    %167 = vector.load %arg17[%c0_115, %c0_116] : memref<1x32xf32, #tpu.memory_space<vmem>>, vector<1x32xf32>
    %cst_117 = arith.constant dense<0.000000e+00> : vector<8xf32>
    %168 = vector.multi_reduction <add>, %165, %cst_117 [1] : vector<8x32xf32> to vector<8xf32>
    %169 = vector.shape_cast %168 : vector<8xf32> to vector<8x1xf32>
    %cst_118 = arith.constant 3.200000e+01 : f32
    %170 = vector.broadcast %cst_118 : f32 to vector<8x1xf32>
    %171 = arith.divf %169, %170 : vector<8x1xf32>
    %172 = vector.broadcast %171 : vector<8x1xf32> to vector<8x32xf32>
    %173 = arith.subf %165, %172 : vector<8x32xf32>
    %174 = arith.mulf %173, %173 : vector<8x32xf32>
    %cst_119 = arith.constant dense<0.000000e+00> : vector<8xf32>
    %175 = vector.multi_reduction <add>, %174, %cst_119 [1] : vector<8x32xf32> to vector<8xf32>
    %176 = vector.shape_cast %175 : vector<8xf32> to vector<8x1xf32>
    %cst_120 = arith.constant 3.200000e+01 : f32
    %177 = vector.broadcast %cst_120 : f32 to vector<8x1xf32>
    %178 = arith.divf %176, %177 : vector<8x1xf32>
    %cst_121 = arith.constant 9.99999974E-6 : f32
    %179 = vector.broadcast %cst_121 : f32 to vector<8x1xf32>
    %180 = arith.addf %178, %179 : vector<8x1xf32>
    %181 = math.rsqrt %180 : vector<8x1xf32>
    %182 = vector.broadcast %181 : vector<8x1xf32> to vector<8x32xf32>
    %183 = arith.mulf %173, %182 : vector<8x32xf32>
    %184 = vector.broadcast %166 : vector<1x32xf32> to vector<8x32xf32>
    %185 = arith.mulf %183, %184 : vector<8x32xf32>
    %186 = vector.broadcast %167 : vector<1x32xf32> to vector<8x32xf32>
    %187 = arith.addf %185, %186 : vector<8x32xf32>
    %c0_122 = arith.constant 0 : index
    %c0_123 = arith.constant 0 : index
    %c0_124 = arith.constant 0 : index
    %188 = vector.load %arg18[%c0_122, %c0_123, %c0_124] : memref<1x8x32xf32, #tpu.memory_space<vmem>>, vector<1x8x32xf32>
    %189 = vector.shape_cast %188 : vector<1x8x32xf32> to vector<8x32xf32>
    %190 = vector.shape_cast %187 : vector<8x32xf32> to vector<1x8x32xf32>
    tpu.vector_store %arg18[%c0_122, %c0_123, %c0_124], %190 {strides = array<i32>} : memref<1x8x32xf32, #tpu.memory_space<vmem>>, vector<1x8x32xf32>,
    return
  }
  func.func @transform_0(%arg0: i32) -> (i32, i32, i32) {
    %c0_i32 = arith.constant 0 : i32
    %c0_i32_0 = arith.constant 0 : i32
    %c0_i32_1 = arith.constant 0 : i32
    return %arg0, %c0_i32, %c0_i32_0 : i32, i32, i32
  }
  func.func @transform_1(%arg0: i32) -> (i32, i32) {
    %c0_i32 = arith.constant 0 : i32
    %c0_i32_0 = arith.constant 0 : i32
    %c0_i32_1 = arith.constant 0 : i32
    return %c0_i32, %c0_i32_0 : i32, i32
  }
  func.func @transform_2(%arg0: i32) -> (i32, i32) {
    %c0_i32 = arith.constant 0 : i32
    %c0_i32_0 = arith.constant 0 : i32
    %c0_i32_1 = arith.constant 0 : i32
    return %c0_i32, %c0_i32_0 : i32, i32
  }
  func.func @transform_3(%arg0: i32) -> (i32, i32) {
    %c0_i32 = arith.constant 0 : i32
    %c0_i32_0 = arith.constant 0 : i32
    %c0_i32_1 = arith.constant 0 : i32
    return %c0_i32, %c0_i32_0 : i32, i32
  }
  func.func @transform_4(%arg0: i32) -> (i32, i32) {
    %c0_i32 = arith.constant 0 : i32
    %c0_i32_0 = arith.constant 0 : i32
    %c0_i32_1 = arith.constant 0 : i32
    return %c0_i32, %c0_i32_0 : i32, i32
  }
  func.func @transform_5(%arg0: i32) -> (i32, i32) {
    %c0_i32 = arith.constant 0 : i32
    %c0_i32_0 = arith.constant 0 : i32
    %c0_i32_1 = arith.constant 0 : i32
    return %c0_i32, %c0_i32_0 : i32, i32
  }
  func.func @transform_6(%arg0: i32) -> (i32, i32) {
    %c0_i32 = arith.constant 0 : i32
    %c0_i32_0 = arith.constant 0 : i32
    %c0_i32_1 = arith.constant 0 : i32
    return %c0_i32, %c0_i32_0 : i32, i32
  }
  func.func @transform_7(%arg0: i32) -> (i32, i32) {
    %c0_i32 = arith.constant 0 : i32
    %c0_i32_0 = arith.constant 0 : i32
    %c0_i32_1 = arith.constant 0 : i32
    return %c0_i32, %c0_i32_0 : i32, i32
  }
  func.func @transform_8(%arg0: i32) -> (i32, i32) {
    %c0_i32 = arith.constant 0 : i32
    %c0_i32_0 = arith.constant 0 : i32
    %c0_i32_1 = arith.constant 0 : i32
    return %c0_i32, %c0_i32_0 : i32, i32
  }
  func.func @transform_9(%arg0: i32) -> (i32, i32) {
    %c0_i32 = arith.constant 0 : i32
    %c0_i32_0 = arith.constant 0 : i32
    %c0_i32_1 = arith.constant 0 : i32
    return %c0_i32, %c0_i32_0 : i32, i32
  }
  func.func @transform_10(%arg0: i32) -> (i32, i32) {
    %c0_i32 = arith.constant 0 : i32
    %c0_i32_0 = arith.constant 0 : i32
    %c0_i32_1 = arith.constant 0 : i32
    return %c0_i32, %c0_i32_0 : i32, i32
  }
  func.func @transform_11(%arg0: i32) -> (i32, i32) {
    %c0_i32 = arith.constant 0 : i32
    %c0_i32_0 = arith.constant 0 : i32
    %c0_i32_1 = arith.constant 0 : i32
    return %c0_i32, %c0_i32_0 : i32, i32
  }
  func.func @transform_12(%arg0: i32) -> (i32, i32) {
    %c0_i32 = arith.constant 0 : i32
    %c0_i32_0 = arith.constant 0 : i32
    %c0_i32_1 = arith.constant 0 : i32
    return %c0_i32, %c0_i32_0 : i32, i32
  }
  func.func @transform_13(%arg0: i32) -> (i32, i32) {
    %c0_i32 = arith.constant 0 : i32
    %c0_i32_0 = arith.constant 0 : i32
    %c0_i32_1 = arith.constant 0 : i32
    return %c0_i32, %c0_i32_0 : i32, i32
  }
  func.func @transform_14(%arg0: i32) -> (i32, i32) {
    %c0_i32 = arith.constant 0 : i32
    %c0_i32_0 = arith.constant 0 : i32
    %c0_i32_1 = arith.constant 0 : i32
    return %c0_i32, %c0_i32_0 : i32, i32
  }
  func.func @transform_15(%arg0: i32) -> (i32, i32) {
    %c0_i32 = arith.constant 0 : i32
    %c0_i32_0 = arith.constant 0 : i32
    %c0_i32_1 = arith.constant 0 : i32
    return %c0_i32, %c0_i32_0 : i32, i32
  }
  func.func @transform_16(%arg0: i32) -> (i32, i32) {
    %c0_i32 = arith.constant 0 : i32
    %c0_i32_0 = arith.constant 0 : i32
    %c0_i32_1 = arith.constant 0 : i32
    return %c0_i32, %c0_i32_0 : i32, i32
  }
  func.func @transform_17(%arg0: i32) -> (i32, i32, i32) {
    %c0_i32 = arith.constant 0 : i32
    %c0_i32_0 = arith.constant 0 : i32
    %c0_i32_1 = arith.constant 0 : i32
    return %arg0, %c0_i32, %c0_i32_0 : i32, i32, i32
  }
}

</mosaic_0001>

<llo_original>
// kernel: encoder_forward.5
$region0: #{encoder_forward.5}
  #allocation0 [shape = 'u32[]', space=smem, size = 0x4, offset = 0x4, fixed_abs, tag = 'smem constant byte address 0x4 - core index']
  #allocation1 [shape = 'u32[144,128]{1,0:T(1,128)}', space=vmem, size = 0x12000, scoped, tag = 'internal scratch']
  %s0 = inlined_call_operand.vmem [shape: f32[2,8,32], index: 0, kind: input, shape index: {}]
  %s1 = inlined_call_operand.vmem [shape: f32[1,32], index: 1, kind: input, shape index: {}]
  %s2 = inlined_call_operand.vmem [shape: f32[1,32], index: 2, kind: input, shape index: {}]
  %s3 = inlined_call_operand.hbm [shape: f32[2,8,32], index: 3, kind: output, shape index: {}]
  %s4 = sld [smem:[#allocation0]]
  $region45: #{encoder_forward.5} parent=0
    _
  %s6 = ssub.s32 1, %s4
  %s7 = scalar_select 0, %s6, %s4
  $region1: #{encoder_forward.5} parent=0
    #allocation2 [shape = 'u8[8192]{0}', space=vmem, size = 0x2000, scoped, tag = 'output window, operand 0']
    #allocation3 [shape = 's32[2]{0}', space=sflag, size = 0x8, scoped, tag = 'scoped memory for encoder_forward.5']
    %8 = vsyncpa [#allocation3], 0
    %s9 = scalar_lea.sflag [#allocation3], 1
    %10 = vsyncpa %s9, 0
    loop: start=0, step=1, limit=4
    $region2: #{encoder_forward.5} parent=1 // loop_pre_header
      _
    $region3: #{encoder_forward.5} parent=1 // loop_header
      %s12 = sphi 0, %s16
      %p13 = scmp.ge.s32.totalorder %s12, 4
      %s22 = sphi 0, %s24
      %s25 = sphi 0, %s22
      %s26 = sphi 0, %s25
      %s42 = sphi 0, %s26
      %s46 = sphi 0, %s46
      %s48 = sphi 0, %s46
      %s49 = sphi 0, %s48
      %s63 = sphi 0, %s49
      %s67 = sphi 0, %s67
      %s69 = sphi 0, %s67
      %s70 = sphi 0, %s69
      %s84 = sphi 0, %s70
      %s90 = sphi 0, %s92
      %s93 = sphi 0, %s90
      %s94 = sphi 0, %s93
      %s110 = sphi 0, %s94
    $region4: #{encoder_forward.5} parent=1 // loop_header_branch
      %15 = sbr.rel (%p13) target = $region8
    $region5: #{encoder_forward.5} parent=1 // loop_body
      %s17 = ssub.s32 %s12, 1
      %s18 = ssub.s32 %s12, 2
      %s19 = sadd.s32 %s12, 1
      %s20 = ssub.s32 %s12, %s19
      %p21 = scmp.eq.s32.totalorder %s20, 0
      %s23 = sadd.s32 %s22, 1
      %s24 = scalar_select %p21, %s22, %s23
      %p27 = pneg %p21
      %p28 = scmp.eq.s32.totalorder %s12, 1
      %p29 = por %p27, %p28
      %p30 = scmp.ne.s32.totalorder %s22, %s25
      %p31 = scmp.eq.s32.totalorder %s12, 0
      %p32 = por %p30, %p31
      %p33 = scmp.ne.s32.totalorder %s22, %s25
      %p34 = scmp.eq.s32.totalorder %s17, 1
      %p35 = por %p33, %p34
      %p36 = scmp.ne.s32.totalorder %s25, %s26
      %p37 = scmp.eq.s32.totalorder %s17, 0
      %p38 = por %p36, %p37
      %p39 = scmp.ne.s32.totalorder %s25, %s26
      %p40 = scmp.eq.s32.totalorder %s18, 1
      %p41 = por %p39, %p40
      %p43 = scmp.ne.s32.totalorder %s26, %s42
      %p44 = scmp.eq.s32.totalorder %s18, 0
      %p45 = por %p43, %p44
      %s47 = sadd.s32 %s46, 1
      %p50 = scmp.eq.s32.totalorder %s12, 1
      %p51 = scmp.ne.s32.totalorder %s46, %s48
      %p52 = scmp.eq.s32.totalorder %s12, 0
      %p53 = por %p51, %p52
      %p54 = scmp.ne.s32.totalorder %s46, %s48
      %p55 = scmp.eq.s32.totalorder %s17, 1
      %p56 = por %p54, %p55
      %p57 = scmp.ne.s32.totalorder %s48, %s49
      %p58 = scmp.eq.s32.totalorder %s17, 0
      %p59 = por %p57, %p58
      %p60 = scmp.ne.s32.totalorder %s48, %s49
      %p61 = scmp.eq.s32.totalorder %s18, 1
      %p62 = por %p60, %p61
      %p64 = scmp.ne.s32.totalorder %s49, %s63
      %p65 = scmp.eq.s32.totalorder %s18, 0
      %p66 = por %p64, %p65
      %s68 = sadd.s32 %s67, 1
      %p71 = scmp.eq.s32.totalorder %s12, 1
      %p72 = scmp.ne.s32.totalorder %s67, %s69
      %p73 = scmp.eq.s32.totalorder %s12, 0
      %p74 = por %p72, %p73
      %p75 = scmp.ne.s32.totalorder %s67, %s69
      %p76 = scmp.eq.s32.totalorder %s17, 1
      %p77 = por %p75, %p76
      %p78 = scmp.ne.s32.totalorder %s69, %s70
      %p79 = scmp.eq.s32.totalorder %s17, 0
      %p80 = por %p78, %p79
      %p81 = scmp.ne.s32.totalorder %s69, %s70
      %p82 = scmp.eq.s32.totalorder %s18, 1
      %p83 = por %p81, %p82
      %p85 = scmp.ne.s32.totalorder %s70, %s84
      %p86 = scmp.eq.s32.totalorder %s18, 0
      %p87 = por %p85, %p86
      %s88 = ssub.s32 %s12, %s19
      %p89 = scmp.eq.s32.totalorder %s88, 0
      %s91 = sadd.s32 %s90, 1
      %s92 = scalar_select %p89, %s90, %s91
      %p95 = pneg %p89
      %p96 = scmp.eq.s32.totalorder %s12, 1
      %p97 = por %p95, %p96
      %p98 = scmp.ne.s32.totalorder %s90, %s93
      %p99 = scmp.eq.s32.totalorder %s12, 0
      %p100 = por %p98, %p99
      %p101 = scmp.ne.s32.totalorder %s90, %s93
      %p102 = scmp.eq.s32.totalorder %s17, 1
      %p103 = por %p101, %p102
      %p104 = scmp.ne.s32.totalorder %s93, %s94
      %p105 = scmp.eq.s32.totalorder %s17, 0
      %p106 = por %p104, %p105
      %p107 = scmp.ne.s32.totalorder %s93, %s94
      %p108 = scmp.eq.s32.totalorder %s18, 1
      %p109 = por %p107, %p108
      %p111 = scmp.ne.s32.totalorder %s94, %s110
      %p112 = scmp.eq.s32.totalorder %s18, 0
      %p113 = por %p111, %p112
      %p114 = scmp.le.s32.totalorder 1, %s12
      %p115 = scmp.lt.s32.totalorder %s12, 3
      %p116 = pnand %p114, %p115
      %p117 = pneg %p116
      // Predicated region
      $region9: #{encoder_forward.5} parent=5 // pred_check
        _
      $region10: #{encoder_forward.5} parent=5 // pred_check_branch
        %119 = sbr.rel (%p116) target = $region12
      $region11: #{encoder_forward.5} parent=5 // pred_region
        %s120 = ssub.s32 %s12, 1
        // Predicated region
        $region13: #{encoder_forward.5} parent=11 // pred_check
          %p121 = pneg %p59
        $region14: #{encoder_forward.5} parent=11 // pred_check_branch
          %123 = sbr.rel (%p121) target = $region16
        $region15: #{encoder_forward.5} parent=11 // pred_region
          _
        $region16: #{encoder_forward.5} parent=11 // pred_fallthru
          _
        // Predicated region
        $region17: #{encoder_forward.5} parent=11 // pred_check
          %p124 = pneg %p80
        $region18: #{encoder_forward.5} parent=11 // pred_check_branch
          %126 = sbr.rel (%p124) target = $region20
        $region19: #{encoder_forward.5} parent=11 // pred_region
          _
        $region20: #{encoder_forward.5} parent=11 // pred_fallthru
          _
      $region12: #{encoder_forward.5} parent=5 // pred_fallthru
        _
      %p127 = scmp.lt.s32.totalorder %s12, 2
      // Predicated region
      $region21: #{encoder_forward.5} parent=5 // pred_check
        %p128 = pneg %p127
      $region22: #{encoder_forward.5} parent=5 // pred_check_branch
        %130 = sbr.rel (%p128) target = $region24
      $region23: #{encoder_forward.5} parent=5 // pred_region
        // Predicated region
        $region25: #{encoder_forward.5} parent=23 // pred_check
          %p131 = pneg %p32
        $region26: #{encoder_forward.5} parent=23 // pred_check_branch
          %133 = sbr.rel (%p131) target = $region28
        $region27: #{encoder_forward.5} parent=23 // pred_region
          %p134 = scmp.lt.s32.totalorder %s12, 1
          %s135 = scalar_select %p134, %s12, 1
          %s136 = smul.addr %s135, 8
          %s137 = scalar_lea.vmem %s0, %s136
        $region28: #{encoder_forward.5} parent=23 // pred_fallthru
          _
      $region24: #{encoder_forward.5} parent=5 // pred_fallthru
        _
      %p138 = scmp.le.s32.totalorder 1, %s12
      %p139 = scmp.lt.s32.totalorder %s12, 3
      %p140 = pnand %p138, %p139
      %p141 = pneg %p140
      // Predicated region
      $region29: #{encoder_forward.5} parent=5 // pred_check
        _
      $region30: #{encoder_forward.5} parent=5 // pred_check_branch
        %143 = sbr.rel (%p140) target = $region32
      $region31: #{encoder_forward.5} parent=5 // pred_region
        %s144 = ssub.s32 %s12, 1
        %p145 = scmp.lt.s32.totalorder %s17, 1
        %s146 = scalar_select %p145, %s17, 1
        %s147 = smul.addr %s146, 8
        %s148 = scalar_lea.vmem %s0, %s147
        %p149 = pneg %p38
        %p150 = pneg %p35
        %p151 = pneg %p59
        %p152 = pneg %p56
        %p153 = pneg %p80
        %p154 = pneg %p77
        %p155 = pneg %p106
        %p156 = pneg %p103
        %s157 = sand.u32 %s93, 1
        %s158 = scalar_lea.sflag [#allocation3], %s157
        %s159 = sand.u32 %s93, 1
        %s160 = smul.addr %s159, 8
        %s161 = scalar_lea.vmem [#allocation2], %s160
        %p162 = scmp.lt.s32.totalorder %s17, 1
        %s163 = scalar_select %p162, %s17, 1
        %s164 = smul.addr %s163, 8
        %s165 = scalar_lea.vmem %s0, %s164
        %v166 = vld [vmem:[%s165] sm:$0xff]
        %v167 = vld [vmem:[%s1] sm:$0x1]
        %v168 = vld [vmem:[%s2] sm:$0x1]
        %vm169 = vcmask 261120
        %v170 = vsel %vm169, %v166, 0.0
        %171 = vadd.xlane.f32.xlu0 %v170
        %v172 = vpop.xlane.xlu0 %171
        %v173 = vrcp.pop 32.0
        %v174 = vmul.f32 %v172, %v173
        %v175 = vsub.f32 %v166, %v174
        %v176 = vmul.f32 %v175, %v175
        %v177 = vsel %vm169, %v176, 0.0
        %178 = vadd.xlane.f32.xlu0 %v177
        %v179 = vpop.xlane.xlu0 %178
        %v180 = vmul.f32 %v179, %v173
        %v181 = vadd.f32 %v180, 1e-05
        %v182 = vrsqrt.pop %v181
        %v183 = vmul.f32 %v175, %v182
        %v185 = vlaneseq
        %v186 = vshrl.u32 %v185, 7
        %v187 = vsub.s32 0, %v186
        %v188 = vrot.slane %v167, %v187
        %v190 = vmul.f32 %v183, %v188
        %v192 = vlaneseq
        %v193 = vshrl.u32 %v192, 7
        %v194 = vsub.s32 0, %v193
        %v195 = vrot.slane %v168, %v194
        %v197 = vadd.f32 %v190, %v195
        %198 = vst.msk [vmem:[%s161] sm:$0xff] %vm169, %v197
        %s199 = sand.u32 %s93, 1
        %s200 = scalar_lea.sflag [#allocation3], %s199
        %s201 = sand.u32 %s93, 1
        %s202 = smul.addr %s201, 8
        %s203 = scalar_lea.vmem [#allocation2], %s202
        // Predicated region
        $region33: #{encoder_forward.5} parent=31 // pred_check
          %p204 = pneg %p103
        $region34: #{encoder_forward.5} parent=31 // pred_check_branch
          %206 = sbr.rel (%p204) target = $region36
        $region35: #{encoder_forward.5} parent=31 // pred_region
          %s208 = ssub.s32 128, 128
          %209 = vsyncadd %s200, %s208
          %s210 = smul.addr %s17, 128
          %s211 = scalar_lea.hbm %s3, %s210
          %s213 = sshll.u32 %s203, 4
          %s214 = int_to_ptr.vmem [resolvable:$true] %s213
          %216 = dma.vmem_to_hbm [thread:$0]  %s214, 128, %s211, %s200
        $region36: #{encoder_forward.5} parent=31 // pred_fallthru
          _
      $region32: #{encoder_forward.5} parent=5 // pred_fallthru
        _
      %p217 = scmp.le.s32.totalorder 2, %s12
      // Predicated region
      $region37: #{encoder_forward.5} parent=5 // pred_check
        %p218 = pneg %p217
      $region38: #{encoder_forward.5} parent=5 // pred_check_branch
        %220 = sbr.rel (%p218) target = $region40
      $region39: #{encoder_forward.5} parent=5 // pred_region
        %s221 = ssub.s32 %s12, 2
        // Predicated region
        $region41: #{encoder_forward.5} parent=39 // pred_check
          %p222 = pneg %p109
        $region42: #{encoder_forward.5} parent=39 // pred_check_branch
          %224 = sbr.rel (%p222) target = $region44
        $region43: #{encoder_forward.5} parent=39 // pred_region
          %s225 = sand.u32 %s94, 1
          %s226 = scalar_lea.sflag [#allocation3], %s225
          %s227 = sand.u32 %s94, 1
          %s228 = smul.addr %s227, 8
          %s229 = scalar_lea.vmem [#allocation2], %s228
          %230 = dma.done %s226, 128
        $region44: #{encoder_forward.5} parent=39 // pred_fallthru
          _
      $region40: #{encoder_forward.5} parent=5 // pred_fallthru
        _
    $region6: #{encoder_forward.5} parent=1 // loop_footer
      %s16 = sadd.s32 1, %s12
    $region7: #{encoder_forward.5} parent=1 // loop_footer_branch
      %11 = sbr.rel target = $region3
    $region8: #{encoder_forward.5} parent=1 // loop_exit
      _
    %231 = vsyncpa [#allocation3], 1
    %s232 = scalar_lea.sflag [#allocation3], 1
    %233 = vsyncpa %s232, 1

// kernel: encoder_forward.4
$region0: #{encoder_forward.4}
  #allocation0 [shape = 'u32[]', space=smem, size = 0x4, offset = 0x4, fixed_abs, tag = 'smem constant byte address 0x4 - core index']
  #allocation1 [shape = 'u32[144,128]{1,0:T(1,128)}', space=vmem, size = 0x12000, scoped, tag = 'internal scratch']
  %s0 = inlined_call_operand.vmem [shape: f32[2,8,32], index: 0, kind: input, shape index: {}]
  %s1 = inlined_call_operand.vmem [shape: f32[32,32], index: 1, kind: input, shape index: {}]
  %s2 = inlined_call_operand.vmem [shape: f32[1,32], index: 2, kind: input, shape index: {}]
  %s3 = inlined_call_operand.vmem [shape: f32[32,32], index: 3, kind: input, shape index: {}]
  %s4 = inlined_call_operand.vmem [shape: f32[1,32], index: 4, kind: input, shape index: {}]
  %s5 = inlined_call_operand.vmem [shape: f32[32,32], index: 5, kind: input, shape index: {}]
  %s6 = inlined_call_operand.vmem [shape: f32[1,32], index: 6, kind: input, shape index: {}]
  %s7 = inlined_call_operand.vmem [shape: f32[32,32], index: 7, kind: input, shape index: {}]
  %s8 = inlined_call_operand.vmem [shape: f32[1,32], index: 8, kind: input, shape index: {}]
  %s9 = inlined_call_operand.vmem [shape: f32[32,64], index: 9, kind: input, shape index: {}]
  %s10 = inlined_call_operand.vmem [shape: f32[1,64], index: 10, kind: input, shape index: {}]
  %s11 = inlined_call_operand.vmem [shape: f32[64,32], index: 11, kind: input, shape index: {}]
  %s12 = inlined_call_operand.vmem [shape: f32[1,32], index: 12, kind: input, shape index: {}]
  %s13 = inlined_call_operand.vmem [shape: f32[1,32], index: 13, kind: input, shape index: {}]
  %s14 = inlined_call_operand.vmem [shape: f32[1,32], index: 14, kind: input, shape index: {}]
  %s15 = inlined_call_operand.vmem [shape: f32[1,32], index: 15, kind: input, shape index: {}]
  %s16 = inlined_call_operand.vmem [shape: f32[1,32], index: 16, kind: input, shape index: {}]
  %s17 = inlined_call_operand.vmem [shape: f32[2,8,32], index: 17, kind: output, shape index: {}]
  %s18 = sld [smem:[#allocation0]]
  $region101: #{encoder_forward.4} parent=0
    _
  %s20 = ssub.s32 1, %s18
  %s21 = scalar_select 0, %s20, %s18
  loop: start=0, step=1, limit=4
  $region2: #{encoder_forward.4} parent=0 // loop_pre_header
    _
  $region3: #{encoder_forward.4} parent=0 // loop_header
    %s23 = sphi 0, %s27
    %p24 = scmp.ge.s32.totalorder %s23, 4
    %s33 = sphi 0, %s35
    %s36 = sphi 0, %s33
    %s37 = sphi 0, %s36
    %s53 = sphi 0, %s37
    %s57 = sphi 0, %s57
    %s59 = sphi 0, %s57
    %s60 = sphi 0, %s59
    %s74 = sphi 0, %s60
    %s78 = sphi 0, %s78
    %s80 = sphi 0, %s78
    %s81 = sphi 0, %s80
    %s95 = sphi 0, %s81
    %s99 = sphi 0, %s99
    %s101 = sphi 0, %s99
    %s102 = sphi 0, %s101
    %s116 = sphi 0, %s102
    %s120 = sphi 0, %s120
    %s122 = sphi 0, %s120
    %s123 = sphi 0, %s122
    %s137 = sphi 0, %s123
    %s141 = sphi 0, %s141
    %s143 = sphi 0, %s141
    %s144 = sphi 0, %s143
    %s158 = sphi 0, %s144
    %s162 = sphi 0, %s162
    %s164 = sphi 0, %s162
    %s165 = sphi 0, %s164
    %s179 = sphi 0, %s165
    %s183 = sphi 0, %s183
    %s185 = sphi 0, %s183
    %s186 = sphi 0, %s185
    %s200 = sphi 0, %s186
    %s204 = sphi 0, %s204
    %s206 = sphi 0, %s204
    %s207 = sphi 0, %s206
    %s221 = sphi 0, %s207
    %s225 = sphi 0, %s225
    %s227 = sphi 0, %s225
    %s228 = sphi 0, %s227
    %s242 = sphi 0, %s228
    %s246 = sphi 0, %s246
    %s248 = sphi 0, %s246
    %s249 = sphi 0, %s248
    %s263 = sphi 0, %s249
    %s267 = sphi 0, %s267
    %s269 = sphi 0, %s267
    %s270 = sphi 0, %s269
    %s284 = sphi 0, %s270
    %s288 = sphi 0, %s288
    %s290 = sphi 0, %s288
    %s291 = sphi 0, %s290
    %s305 = sphi 0, %s291
    %s309 = sphi 0, %s309
    %s311 = sphi 0, %s309
    %s312 = sphi 0, %s311
    %s326 = sphi 0, %s312
    %s330 = sphi 0, %s330
    %s332 = sphi 0, %s330
    %s333 = sphi 0, %s332
    %s347 = sphi 0, %s333
    %s351 = sphi 0, %s351
    %s353 = sphi 0, %s351
    %s354 = sphi 0, %s353
    %s368 = sphi 0, %s354
    %s372 = sphi 0, %s372
    %s374 = sphi 0, %s372
    %s375 = sphi 0, %s374
    %s389 = sphi 0, %s375
    %s395 = sphi 0, %s397
    %s398 = sphi 0, %s395
    %s399 = sphi 0, %s398
    %s415 = sphi 0, %s399
  $region4: #{encoder_forward.4} parent=0 // loop_header_branch
    %26 = sbr.rel (%p24) target = $region8
  $region5: #{encoder_forward.4} parent=0 // loop_body
    %s28 = ssub.s32 %s23, 1
    %s29 = ssub.s32 %s23, 2
    %s30 = sadd.s32 %s23, 1
    %s31 = ssub.s32 %s23, %s30
    %p32 = scmp.eq.s32.totalorder %s31, 0
    %s34 = sadd.s32 %s33, 1
    %s35 = scalar_select %p32, %s33, %s34
    %p38 = pneg %p32
    %p39 = scmp.eq.s32.totalorder %s23, 1
    %p40 = por %p38, %p39
    %p41 = scmp.ne.s32.totalorder %s33, %s36
    %p42 = scmp.eq.s32.totalorder %s23, 0
    %p43 = por %p41, %p42
    %p44 = scmp.ne.s32.totalorder %s33, %s36
    %p45 = scmp.eq.s32.totalorder %s28, 1
    %p46 = por %p44, %p45
    %p47 = scmp.ne.s32.totalorder %s36, %s37
    %p48 = scmp.eq.s32.totalorder %s28, 0
    %p49 = por %p47, %p48
    %p50 = scmp.ne.s32.totalorder %s36, %s37
    %p51 = scmp.eq.s32.totalorder %s29, 1
    %p52 = por %p50, %p51
    %p54 = scmp.ne.s32.totalorder %s37, %s53
    %p55 = scmp.eq.s32.totalorder %s29, 0
    %p56 = por %p54, %p55
    %s58 = sadd.s32 %s57, 1
    %p61 = scmp.eq.s32.totalorder %s23, 1
    %p62 = scmp.ne.s32.totalorder %s57, %s59
    %p63 = scmp.eq.s32.totalorder %s23, 0
    %p64 = por %p62, %p63
    %p65 = scmp.ne.s32.totalorder %s57, %s59
    %p66 = scmp.eq.s32.totalorder %s28, 1
    %p67 = por %p65, %p66
    %p68 = scmp.ne.s32.totalorder %s59, %s60
    %p69 = scmp.eq.s32.totalorder %s28, 0
    %p70 = por %p68, %p69
    %p71 = scmp.ne.s32.totalorder %s59, %s60
    %p72 = scmp.eq.s32.totalorder %s29, 1
    %p73 = por %p71, %p72
    %p75 = scmp.ne.s32.totalorder %s60, %s74
    %p76 = scmp.eq.s32.totalorder %s29, 0
    %p77 = por %p75, %p76
    %s79 = sadd.s32 %s78, 1
    %p82 = scmp.eq.s32.totalorder %s23, 1
    %p83 = scmp.ne.s32.totalorder %s78, %s80
    %p84 = scmp.eq.s32.totalorder %s23, 0
    %p85 = por %p83, %p84
    %p86 = scmp.ne.s32.totalorder %s78, %s80
    %p87 = scmp.eq.s32.totalorder %s28, 1
    %p88 = por %p86, %p87
    %p89 = scmp.ne.s32.totalorder %s80, %s81
    %p90 = scmp.eq.s32.totalorder %s28, 0
    %p91 = por %p89, %p90
    %p92 = scmp.ne.s32.totalorder %s80, %s81
    %p93 = scmp.eq.s32.totalorder %s29, 1
    %p94 = por %p92, %p93
    %p96 = scmp.ne.s32.totalorder %s81, %s95
    %p97 = scmp.eq.s32.totalorder %s29, 0
    %p98 = por %p96, %p97
    %s100 = sadd.s32 %s99, 1
    %p103 = scmp.eq.s32.totalorder %s23, 1
    %p104 = scmp.ne.s32.totalorder %s99, %s101
    %p105 = scmp.eq.s32.totalorder %s23, 0
    %p106 = por %p104, %p105
    %p107 = scmp.ne.s32.totalorder %s99, %s101
    %p108 = scmp.eq.s32.totalorder %s28, 1
    %p109 = por %p107, %p108
    %p110 = scmp.ne.s32.totalorder %s101, %s102
    %p111 = scmp.eq.s32.totalorder %s28, 0
    %p112 = por %p110, %p111
    %p113 = scmp.ne.s32.totalorder %s101, %s102
    %p114 = scmp.eq.s32.totalorder %s29, 1
    %p115 = por %p113, %p114
    %p117 = scmp.ne.s32.totalorder %s102, %s116
    %p118 = scmp.eq.s32.totalorder %s29, 0
    %p119 = por %p117, %p118
    %s121 = sadd.s32 %s120, 1
    %p124 = scmp.eq.s32.totalorder %s23, 1
    %p125 = scmp.ne.s32.totalorder %s120, %s122
    %p126 = scmp.eq.s32.totalorder %s23, 0
    %p127 = por %p125, %p126
    %p128 = scmp.ne.s32.totalorder %s120, %s122
    %p129 = scmp.eq.s32.totalorder %s28, 1
    %p130 = por %p128, %p129
    %p131 = scmp.ne.s32.totalorder %s122, %s123
    %p132 = scmp.eq.s32.totalorder %s28, 0
    %p133 = por %p131, %p132
    %p134 = scmp.ne.s32.totalorder %s122, %s123
    %p135 = scmp.eq.s32.totalorder %s29, 1
    %p136 = por %p134, %p135
    %p138 = scmp.ne.s32.totalorder %s123, %s137
    %p139 = scmp.eq.s32.totalorder %s29, 0
    %p140 = por %p138, %p139
    %s142 = sadd.s32 %s141, 1
    %p145 = scmp.eq.s32.totalorder %s23, 1
    %p146 = scmp.ne.s32.totalorder %s141, %s143
    %p147 = scmp.eq.s32.totalorder %s23, 0
    %p148 = por %p146, %p147
    %p149 = scmp.ne.s32.totalorder %s141, %s143
    %p150 = scmp.eq.s32.totalorder %s28, 1
    %p151 = por %p149, %p150
    %p152 = scmp.ne.s32.totalorder %s143, %s144
    %p153 = scmp.eq.s32.totalorder %s28, 0
    %p154 = por %p152, %p153
    %p155 = scmp.ne.s32.totalorder %s143, %s144
    %p156 = scmp.eq.s32.totalorder %s29, 1
    %p157 = por %p155, %p156
    %p159 = scmp.ne.s32.totalorder %s144, %s158
    %p160 = scmp.eq.s32.totalorder %s29, 0
    %p161 = por %p159, %p160
    %s163 = sadd.s32 %s162, 1
    %p166 = scmp.eq.s32.totalorder %s23, 1
    %p167 = scmp.ne.s32.totalorder %s162, %s164
    %p168 = scmp.eq.s32.totalorder %s23, 0
    %p169 = por %p167, %p168
    %p170 = scmp.ne.s32.totalorder %s162, %s164
    %p171 = scmp.eq.s32.totalorder %s28, 1
    %p172 = por %p170, %p171
    %p173 = scmp.ne.s32.totalorder %s164, %s165
    %p174 = scmp.eq.s32.totalorder %s28, 0
    %p175 = por %p173, %p174
    %p176 = scmp.ne.s32.totalorder %s164, %s165
    %p177 = scmp.eq.s32.totalorder %s29, 1
    %p178 = por %p176, %p177
    %p180 = scmp.ne.s32.totalorder %s165, %s179
    %p181 = scmp.eq.s32.totalorder %s29, 0
    %p182 = por %p180, %p181
    %s184 = sadd.s32 %s183, 1
    %p187 = scmp.eq.s32.totalorder %s23, 1
    %p188 = scmp.ne.s32.totalorder %s183, %s185
    %p189 = scmp.eq.s32.totalorder %s23, 0
    %p190 = por %p188, %p189
    %p191 = scmp.ne.s32.totalorder %s183, %s185
    %p192 = scmp.eq.s32.totalorder %s28, 1
    %p193 = por %p191, %p192
    %p194 = scmp.ne.s32.totalorder %s185, %s186
    %p195 = scmp.eq.s32.totalorder %s28, 0
    %p196 = por %p194, %p195
    %p197 = scmp.ne.s32.totalorder %s185, %s186
    %p198 = scmp.eq.s32.totalorder %s29, 1
    %p199 = por %p197, %p198
    %p201 = scmp.ne.s32.totalorder %s186, %s200
    %p202 = scmp.eq.s32.totalorder %s29, 0
    %p203 = por %p201, %p202
    %s205 = sadd.s32 %s204, 1
    %p208 = scmp.eq.s32.totalorder %s23, 1
    %p209 = scmp.ne.s32.totalorder %s204, %s206
    %p210 = scmp.eq.s32.totalorder %s23, 0
    %p211 = por %p209, %p210
    %p212 = scmp.ne.s32.totalorder %s204, %s206
    %p213 = scmp.eq.s32.totalorder %s28, 1
    %p214 = por %p212, %p213
    %p215 = scmp.ne.s32.totalorder %s206, %s207
    %p216 = scmp.eq.s32.totalorder %s28, 0
    %p217 = por %p215, %p216
    %p218 = scmp.ne.s32.totalorder %s206, %s207
    %p219 = scmp.eq.s32.totalorder %s29, 1
    %p220 = por %p218, %p219
    %p222 = scmp.ne.s32.totalorder %s207, %s221
    %p223 = scmp.eq.s32.totalorder %s29, 0
    %p224 = por %p222, %p223
    %s226 = sadd.s32 %s225, 1
    %p229 = scmp.eq.s32.totalorder %s23, 1
    %p230 = scmp.ne.s32.totalorder %s225, %s227
    %p231 = scmp.eq.s32.totalorder %s23, 0
    %p232 = por %p230, %p231
    %p233 = scmp.ne.s32.totalorder %s225, %s227
    %p234 = scmp.eq.s32.totalorder %s28, 1
    %p235 = por %p233, %p234
    %p236 = scmp.ne.s32.totalorder %s227, %s228
    %p237 = scmp.eq.s32.totalorder %s28, 0
    %p238 = por %p236, %p237
    %p239 = scmp.ne.s32.totalorder %s227, %s228
    %p240 = scmp.eq.s32.totalorder %s29, 1
    %p241 = por %p239, %p240
    %p243 = scmp.ne.s32.totalorder %s228, %s242
    %p244 = scmp.eq.s32.totalorder %s29, 0
    %p245 = por %p243, %p244
    %s247 = sadd.s32 %s246, 1
    %p250 = scmp.eq.s32.totalorder %s23, 1
    %p251 = scmp.ne.s32.totalorder %s246, %s248
    %p252 = scmp.eq.s32.totalorder %s23, 0
    %p253 = por %p251, %p252
    %p254 = scmp.ne.s32.totalorder %s246, %s248
    %p255 = scmp.eq.s32.totalorder %s28, 1
    %p256 = por %p254, %p255
    %p257 = scmp.ne.s32.totalorder %s248, %s249
    %p258 = scmp.eq.s32.totalorder %s28, 0
    %p259 = por %p257, %p258
    %p260 = scmp.ne.s32.totalorder %s248, %s249
    %p261 = scmp.eq.s32.totalorder %s29, 1
    %p262 = por %p260, %p261
    %p264 = scmp.ne.s32.totalorder %s249, %s263
    %p265 = scmp.eq.s32.totalorder %s29, 0
    %p266 = por %p264, %p265
    %s268 = sadd.s32 %s267, 1
    %p271 = scmp.eq.s32.totalorder %s23, 1
    %p272 = scmp.ne.s32.totalorder %s267, %s269
    %p273 = scmp.eq.s32.totalorder %s23, 0
    %p274 = por %p272, %p273
    %p275 = scmp.ne.s32.totalorder %s267, %s269
    %p276 = scmp.eq.s32.totalorder %s28, 1
    %p277 = por %p275, %p276
    %p278 = scmp.ne.s32.totalorder %s269, %s270
    %p279 = scmp.eq.s32.totalorder %s28, 0
    %p280 = por %p278, %p279
    %p281 = scmp.ne.s32.totalorder %s269, %s270
    %p282 = scmp.eq.s32.totalorder %s29, 1
    %p283 = por %p281, %p282
    %p285 = scmp.ne.s32.totalorder %s270, %s284
    %p286 = scmp.eq.s32.totalorder %s29, 0
    %p287 = por %p285, %p286
    %s289 = sadd.s32 %s288, 1
    %p292 = scmp.eq.s32.totalorder %s23, 1
    %p293 = scmp.ne.s32.totalorder %s288, %s290
    %p294 = scmp.eq.s32.totalorder %s23, 0
    %p295 = por %p293, %p294
    %p296 = scmp.ne.s32.totalorder %s288, %s290
    %p297 = scmp.eq.s32.totalorder %s28, 1
    %p298 = por %p296, %p297
    %p299 = scmp.ne.s32.totalorder %s290, %s291
    %p300 = scmp.eq.s32.totalorder %s28, 0
    %p301 = por %p299, %p300
    %p302 = scmp.ne.s32.totalorder %s290, %s291
    %p303 = scmp.eq.s32.totalorder %s29, 1
    %p304 = por %p302, %p303
    %p306 = scmp.ne.s32.totalorder %s291, %s305
    %p307 = scmp.eq.s32.totalorder %s29, 0
    %p308 = por %p306, %p307
    %s310 = sadd.s32 %s309, 1
    %p313 = scmp.eq.s32.totalorder %s23, 1
    %p314 = scmp.ne.s32.totalorder %s309, %s311
    %p315 = scmp.eq.s32.totalorder %s23, 0
    %p316 = por %p314, %p315
    %p317 = scmp.ne.s32.totalorder %s309, %s311
    %p318 = scmp.eq.s32.totalorder %s28, 1
    %p319 = por %p317, %p318
    %p320 = scmp.ne.s32.totalorder %s311, %s312
    %p321 = scmp.eq.s32.totalorder %s28, 0
    %p322 = por %p320, %p321
    %p323 = scmp.ne.s32.totalorder %s311, %s312
    %p324 = scmp.eq.s32.totalorder %s29, 1
    %p325 = por %p323, %p324
    %p327 = scmp.ne.s32.totalorder %s312, %s326
    %p328 = scmp.eq.s32.totalorder %s29, 0
    %p329 = por %p327, %p328
    %s331 = sadd.s32 %s330, 1
    %p334 = scmp.eq.s32.totalorder %s23, 1
    %p335 = scmp.ne.s32.totalorder %s330, %s332
    %p336 = scmp.eq.s32.totalorder %s23, 0
    %p337 = por %p335, %p336
    %p338 = scmp.ne.s32.totalorder %s330, %s332
    %p339 = scmp.eq.s32.totalorder %s28, 1
    %p340 = por %p338, %p339
    %p341 = scmp.ne.s32.totalorder %s332, %s333
    %p342 = scmp.eq.s32.totalorder %s28, 0
    %p343 = por %p341, %p342
    %p344 = scmp.ne.s32.totalorder %s332, %s333
    %p345 = scmp.eq.s32.totalorder %s29, 1
    %p346 = por %p344, %p345
    %p348 = scmp.ne.s32.totalorder %s333, %s347
    %p349 = scmp.eq.s32.totalorder %s29, 0
    %p350 = por %p348, %p349
    %s352 = sadd.s32 %s351, 1
    %p355 = scmp.eq.s32.totalorder %s23, 1
    %p356 = scmp.ne.s32.totalorder %s351, %s353
    %p357 = scmp.eq.s32.totalorder %s23, 0
    %p358 = por %p356, %p357
    %p359 = scmp.ne.s32.totalorder %s351, %s353
    %p360 = scmp.eq.s32.totalorder %s28, 1
    %p361 = por %p359, %p360
    %p362 = scmp.ne.s32.totalorder %s353, %s354
    %p363 = scmp.eq.s32.totalorder %s28, 0
    %p364 = por %p362, %p363
    %p365 = scmp.ne.s32.totalorder %s353, %s354
    %p366 = scmp.eq.s32.totalorder %s29, 1
    %p367 = por %p365, %p366
    %p369 = scmp.ne.s32.totalorder %s354, %s368
    %p370 = scmp.eq.s32.totalorder %s29, 0
    %p371 = por %p369, %p370
    %s373 = sadd.s32 %s372, 1
    %p376 = scmp.eq.s32.totalorder %s23, 1
    %p377 = scmp.ne.s32.totalorder %s372, %s374
    %p378 = scmp.eq.s32.totalorder %s23, 0
    %p379 = por %p377, %p378
    %p380 = scmp.ne.s32.totalorder %s372, %s374
    %p381 = scmp.eq.s32.totalorder %s28, 1
    %p382 = por %p380, %p381
    %p383 = scmp.ne.s32.totalorder %s374, %s375
    %p384 = scmp.eq.s32.totalorder %s28, 0
    %p385 = por %p383, %p384
    %p386 = scmp.ne.s32.totalorder %s374, %s375
    %p387 = scmp.eq.s32.totalorder %s29, 1
    %p388 = por %p386, %p387
    %p390 = scmp.ne.s32.totalorder %s375, %s389
    %p391 = scmp.eq.s32.totalorder %s29, 0
    %p392 = por %p390, %p391
    %s393 = ssub.s32 %s23, %s30
    %p394 = scmp.eq.s32.totalorder %s393, 0
    %s396 = sadd.s32 %s395, 1
    %s397 = scalar_select %p394, %s395, %s396
    %p400 = pneg %p394
    %p401 = scmp.eq.s32.totalorder %s23, 1
    %p402 = por %p400, %p401
    %p403 = scmp.ne.s32.totalorder %s395, %s398
    %p404 = scmp.eq.s32.totalorder %s23, 0
    %p405 = por %p403, %p404
    %p406 = scmp.ne.s32.totalorder %s395, %s398
    %p407 = scmp.eq.s32.totalorder %s28, 1
    %p408 = por %p406, %p407
    %p409 = scmp.ne.s32.totalorder %s398, %s399
    %p410 = scmp.eq.s32.totalorder %s28, 0
    %p411 = por %p409, %p410
    %p412 = scmp.ne.s32.totalorder %s398, %s399
    %p413 = scmp.eq.s32.totalorder %s29, 1
    %p414 = por %p412, %p413
    %p416 = scmp.ne.s32.totalorder %s399, %s415
    %p417 = scmp.eq.s32.totalorder %s29, 0
    %p418 = por %p416, %p417
    %p419 = scmp.le.s32.totalorder 1, %s23
    %p420 = scmp.lt.s32.totalorder %s23, 3
    %p421 = pnand %p419, %p420
    %p422 = pneg %p421
    // Predicated region
    $region9: #{encoder_forward.4} parent=5 // pred_check
      _
    $region10: #{encoder_forward.4} parent=5 // pred_check_branch
      %424 = sbr.rel (%p421) target = $region12
    $region11: #{encoder_forward.4} parent=5 // pred_region
      %s425 = ssub.s32 %s23, 1
      // Predicated region
      $region13: #{encoder_forward.4} parent=11 // pred_check
        %p426 = pneg %p70
      $region14: #{encoder_forward.4} parent=11 // pred_check_branch
        %428 = sbr.rel (%p426) target = $region16
      $region15: #{encoder_forward.4} parent=11 // pred_region
        _
      $region16: #{encoder_forward.4} parent=11 // pred_fallthru
        _
      // Predicated region
      $region17: #{encoder_forward.4} parent=11 // pred_check
        %p429 = pneg %p91
      $region18: #{encoder_forward.4} parent=11 // pred_check_branch
        %431 = sbr.rel (%p429) target = $region20
      $region19: #{encoder_forward.4} parent=11 // pred_region
        _
      $region20: #{encoder_forward.4} parent=11 // pred_fallthru
        _
      // Predicated region
      $region21: #{encoder_forward.4} parent=11 // pred_check
        %p432 = pneg %p112
      $region22: #{encoder_forward.4} parent=11 // pred_check_branch
        %434 = sbr.rel (%p432) target = $region24
      $region23: #{encoder_forward.4} parent=11 // pred_region
        _
      $region24: #{encoder_forward.4} parent=11 // pred_fallthru
        _
      // Predicated region
      $region25: #{encoder_forward.4} parent=11 // pred_check
        %p435 = pneg %p133
      $region26: #{encoder_forward.4} parent=11 // pred_check_branch
        %437 = sbr.rel (%p435) target = $region28
      $region27: #{encoder_forward.4} parent=11 // pred_region
        _
      $region28: #{encoder_forward.4} parent=11 // pred_fallthru
        _
      // Predicated region
      $region29: #{encoder_forward.4} parent=11 // pred_check
        %p438 = pneg %p154
      $region30: #{encoder_forward.4} parent=11 // pred_check_branch
        %440 = sbr.rel (%p438) target = $region32
      $region31: #{encoder_forward.4} parent=11 // pred_region
        _
      $region32: #{encoder_forward.4} parent=11 // pred_fallthru
        _
      // Predicated region
      $region33: #{encoder_forward.4} parent=11 // pred_check
        %p441 = pneg %p175
      $region34: #{encoder_forward.4} parent=11 // pred_check_branch
        %443 = sbr.rel (%p441) target = $region36
      $region35: #{encoder_forward.4} parent=11 // pred_region
        _
      $region36: #{encoder_forward.4} parent=11 // pred_fallthru
        _
      // Predicated region
      $region37: #{encoder_forward.4} parent=11 // pred_check
        %p444 = pneg %p196
      $region38: #{encoder_forward.4} parent=11 // pred_check_branch
        %446 = sbr.rel (%p444) target = $region40
      $region39: #{encoder_forward.4} parent=11 // pred_region
        _
      $region40: #{encoder_forward.4} parent=11 // pred_fallthru
        _
      // Predicated region
      $region41: #{encoder_forward.4} parent=11 // pred_check
        %p447 = pneg %p217
      $region42: #{encoder_forward.4} parent=11 // pred_check_branch
        %449 = sbr.rel (%p447) target = $region44
      $region43: #{encoder_forward.4} parent=11 // pred_region
        _
      $region44: #{encoder_forward.4} parent=11 // pred_fallthru
        _
      // Predicated region
      $region45: #{encoder_forward.4} parent=11 // pred_check
        %p450 = pneg %p238
      $region46: #{encoder_forward.4} parent=11 // pred_check_branch
        %452 = sbr.rel (%p450) target = $region48
      $region47: #{encoder_forward.4} parent=11 // pred_region
        _
      $region48: #{encoder_forward.4} parent=11 // pred_fallthru
        _
      // Predicated region
      $region49: #{encoder_forward.4} parent=11 // pred_check
        %p453 = pneg %p259
      $region50: #{encoder_forward.4} parent=11 // pred_check_branch
        %455 = sbr.rel (%p453) target = $region52
      $region51: #{encoder_forward.4} parent=11 // pred_region
        _
      $region52: #{encoder_forward.4} parent=11 // pred_fallthru
        _
      // Predicated region
      $region53: #{encoder_forward.4} parent=11 // pred_check
        %p456 = pneg %p280
      $region54: #{encoder_forward.4} parent=11 // pred_check_branch
        %458 = sbr.rel (%p456) target = $region56
      $region55: #{encoder_forward.4} parent=11 // pred_region
        _
      $region56: #{encoder_forward.4} parent=11 // pred_fallthru
        _
      // Predicated region
      $region57: #{encoder_forward.4} parent=11 // pred_check
        %p459 = pneg %p301
      $region58: #{encoder_forward.4} parent=11 // pred_check_branch
        %461 = sbr.rel (%p459) target = $region60
      $region59: #{encoder_forward.4} parent=11 // pred_region
        _
      $region60: #{encoder_forward.4} parent=11 // pred_fallthru
        _
      // Predicated region
      $region61: #{encoder_forward.4} parent=11 // pred_check
        %p462 = pneg %p322
      $region62: #{encoder_forward.4} parent=11 // pred_check_branch
        %464 = sbr.rel (%p462) target = $region64
      $region63: #{encoder_forward.4} parent=11 // pred_region
        _
      $region64: #{encoder_forward.4} parent=11 // pred_fallthru
        _
      // Predicated region
      $region65: #{encoder_forward.4} parent=11 // pred_check
        %p465 = pneg %p343
      $region66: #{encoder_forward.4} parent=11 // pred_check_branch
        %467 = sbr.rel (%p465) target = $region68
      $region67: #{encoder_forward.4} parent=11 // pred_region
        _
      $region68: #{encoder_forward.4} parent=11 // pred_fallthru
        _
      // Predicated region
      $region69: #{encoder_forward.4} parent=11 // pred_check
        %p468 = pneg %p364
      $region70: #{encoder_forward.4} parent=11 // pred_check_branch
        %470 = sbr.rel (%p468) target = $region72
      $region71: #{encoder_forward.4} parent=11 // pred_region
        _
      $region72: #{encoder_forward.4} parent=11 // pred_fallthru
        _
      // Predicated region
      $region73: #{encoder_forward.4} parent=11 // pred_check
        %p471 = pneg %p385
      $region74: #{encoder_forward.4} parent=11 // pred_check_branch
        %473 = sbr.rel (%p471) target = $region76
      $region75: #{encoder_forward.4} parent=11 // pred_region
        _
      $region76: #{encoder_forward.4} parent=11 // pred_fallthru
        _
    $region12: #{encoder_forward.4} parent=5 // pred_fallthru
      _
    %p474 = scmp.lt.s32.totalorder %s23, 2
    // Predicated region
    $region77: #{encoder_forward.4} parent=5 // pred_check
      %p475 = pneg %p474
    $region78: #{encoder_forward.4} parent=5 // pred_check_branch
      %477 = sbr.rel (%p475) target = $region80
    $region79: #{encoder_forward.4} parent=5 // pred_region
      // Predicated region
      $region81: #{encoder_forward.4} parent=79 // pred_check
        %p478 = pneg %p43
      $region82: #{encoder_forward.4} parent=79 // pred_check_branch
        %480 = sbr.rel (%p478) target = $region84
      $region83: #{encoder_forward.4} parent=79 // pred_region
        %p481 = scmp.lt.s32.totalorder %s23, 1
        %s482 = scalar_select %p481, %s23, 1
        %s483 = smul.addr %s482, 8
        %s484 = scalar_lea.vmem %s0, %s483
      $region84: #{encoder_forward.4} parent=79 // pred_fallthru
        _
    $region80: #{encoder_forward.4} parent=5 // pred_fallthru
      _
    %p485 = scmp.le.s32.totalorder 1, %s23
    %p486 = scmp.lt.s32.totalorder %s23, 3
    %p487 = pnand %p485, %p486
    %p488 = pneg %p487
    // Predicated region
    $region85: #{encoder_forward.4} parent=5 // pred_check
      _
    $region86: #{encoder_forward.4} parent=5 // pred_check_branch
      %490 = sbr.rel (%p487) target = $region88
    $region87: #{encoder_forward.4} parent=5 // pred_region
      %s491 = ssub.s32 %s23, 1
      %p492 = scmp.lt.s32.totalorder %s28, 1
      %s493 = scalar_select %p492, %s28, 1
      %s494 = smul.addr %s493, 8
      %s495 = scalar_lea.vmem %s0, %s494
      %p496 = pneg %p49
      %p497 = pneg %p46
      %p498 = pneg %p70
      %p499 = pneg %p67
      %p500 = pneg %p91
      %p501 = pneg %p88
      %p502 = pneg %p112
      %p503 = pneg %p109
      %p504 = pneg %p133
      %p505 = pneg %p130
      %p506 = pneg %p154
      %p507 = pneg %p151
      %p508 = pneg %p175
      %p509 = pneg %p172
      %p510 = pneg %p196
      %p511 = pneg %p193
      %p512 = pneg %p217
      %p513 = pneg %p214
      %p514 = pneg %p238
      %p515 = pneg %p235
      %p516 = pneg %p259
      %p517 = pneg %p256
      %p518 = pneg %p280
      %p519 = pneg %p277
      %p520 = pneg %p301
      %p521 = pneg %p298
      %p522 = pneg %p322
      %p523 = pneg %p319
      %p524 = pneg %p343
      %p525 = pneg %p340
      %p526 = pneg %p364
      %p527 = pneg %p361
      %p528 = pneg %p385
      %p529 = pneg %p382
      %p530 = pneg %p411
      %p531 = pneg %p408
      %p532 = scmp.lt.s32.totalorder %s28, 1
      %s533 = scalar_select %p532, %s28, 1
      %s534 = smul.addr %s533, 8
      %s535 = scalar_lea.vmem %s17, %s534
      %p536 = scmp.lt.s32.totalorder %s28, 1
      %s537 = scalar_select %p536, %s28, 1
      %s538 = smul.addr %s537, 8
      %s539 = scalar_lea.vmem %s0, %s538
      %p540 = scmp.lt.s32.totalorder %s28, 1
      %s541 = scalar_select %p540, %s28, 1
      %s542 = smul.addr %s541, 8
      %s543 = scalar_lea.vmem %s17, %s542
      %v544 = vld [vmem:[%s539] sm:$0xff]
      %v545 = vld [vmem:[%s1] sm:$0xff]
      %v546 = vld [vmem:[%s1 + $0x8] sm:$0xff]
      %v547 = vld [vmem:[%s1 + $0x10] sm:$0xff]
      %v548 = vld [vmem:[%s1 + $0x18] sm:$0xff]
      %v549 = vld [vmem:[%s2] sm:$0x1]
      %v551 = vlaneseq
      %v552 = vshrl.u32 %v551, 7
      %v553 = vsub.s32 0, %v552
      %v554 = vrot.slane %v549, %v553
      %vm556 = vcmask 261120
      %v558 = vsel %vm556, %v544, 0
      %560 = vmatprep.subr.mxu0 0.0
      %561 = vmatpush1.msra.mxu0 %v545
      %562 = vmatprep.subr.mxu0 0.0
      %563 = vmatpush1.msra.mxu0 %v546
      %564 = vmatprep.subr.mxu0 0.0
      %565 = vmatpush1.msra.mxu0 %v547
      %566 = vmatprep.subr.mxu0 0.0
      %567 = vmatpush1.msra.mxu0 %v548
      %568 = vmatprep.subr.mxu0 0.0
      %569 = vmatpush1.msra.mxu0 0.0
      %570 = vmatprep.subr.mxu0 0.0
      %571 = vmatpush1.msra.mxu0 0.0
      %572 = vmatprep.subr.mxu0 0.0
      %573 = vmatpush1.msra.mxu0 0.0
      %574 = vmatprep.subr.mxu0 0.0
      %575 = vmatpush1.msra.mxu0 0.0
      %576 = vmatprep.subr.mxu0 0.0
      %577 = vmatpush1.msra.mxu0 0.0
      %578 = vmatprep.subr.mxu0 0.0
      %579 = vmatpush1.msra.mxu0 0.0
      %580 = vmatprep.subr.mxu0 0.0
      %581 = vmatpush1.msra.mxu0 0.0
      %582 = vmatprep.subr.mxu0 0.0
      %583 = vmatpush1.msra.mxu0 0.0
      %584 = vmatprep.subr.mxu0 0.0
      %585 = vmatpush1.msra.mxu0 0.0
      %586 = vmatprep.subr.mxu0 0.0
      %587 = vmatpush1.msra.mxu0 0.0
      %588 = vmatprep.subr.mxu0 0.0
      %589 = vmatpush1.msra.mxu0 0.0
      %590 = vmatprep.subr.mxu0 0.0
      %591 = vmatpush1.msra.mxu0 0.0
      %592 = vmatprep.subr.mxu0 0.0
      %593 = vmatpush1.msra.mxu0 0.0
      %594 = vmatprep.subr.mxu0 0.0
      %595 = vmatpush1.msra.mxu0 0.0
      %596 = vmatprep.subr.mxu0 0.0
      %597 = vmatpush1.msra.mxu0 0.0
      %598 = vmatprep.subr.mxu0 0.0
      %599 = vmatpush1.msra.mxu0 0.0
      %600 = vmatprep.subr.mxu0 0.0
      %601 = vmatpush1.msra.mxu0 0.0
      %602 = vmatprep.subr.mxu0 0.0
      %603 = vmatpush1.msra.mxu0 0.0
      %604 = vmatprep.subr.mxu0 0.0
      %605 = vmatpush1.msra.mxu0 0.0
      %606 = vmatprep.subr.mxu0 0.0
      %607 = vmatpush1.msra.mxu0 0.0
      %608 = vmatprep.subr.mxu0 0.0
      %609 = vmatpush1.msra.mxu0 0.0
      %610 = vmatprep.subr.mxu0 0.0
      %611 = vmatpush1.msra.mxu0 0.0
      %612 = vmatprep.subr.mxu0 0.0
      %613 = vmatpush1.msra.mxu0 0.0
      %614 = vmatprep.subr.mxu0 0.0
      %615 = vmatpush1.msra.mxu0 0.0
      %616 = vmatprep.subr.mxu0 0.0
      %617 = vmatpush1.msra.mxu0 0.0
      %618 = vmatprep.subr.mxu0 0.0
      %619 = vmatpush1.msra.mxu0 0.0
      %620 = vmatprep.subr.mxu0 0.0
      %621 = vmatpush1.msra.mxu0 0.0
      %622 = vmatprep.subr.mxu0 0.0
      %623 = vmatpush1.msra.mxu0 0.0
      %624 = vmatprep.mubr.f32.mxu0 0.0
      %625 = vmatmul.mubr.f32.gmra.mrb[0].mxu0 %v558
      %v626 = vpop.f32.mrb[0].mxu0
      %v627 = vadd.f32 %v554, %v626
      %v628 = vpop.f32.mrb[0].mxu0
      %629 = vdwg.mxu0
      %v630 = vld [vmem:[%s3] sm:$0xff]
      %v631 = vld [vmem:[%s3 + $0x8] sm:$0xff]
      %v632 = vld [vmem:[%s3 + $0x10] sm:$0xff]
      %v633 = vld [vmem:[%s3 + $0x18] sm:$0xff]
      %v634 = vld [vmem:[%s4] sm:$0x1]
      %v636 = vlaneseq
      %v637 = vshrl.u32 %v636, 7
      %v638 = vsub.s32 0, %v637
      %v639 = vrot.slane %v634, %v638
      %641 = vmatprep.subr.mxu0 0.0
      %642 = vmatpush1.msra.mxu0 %v630
      %643 = vmatprep.subr.mxu0 0.0
      %644 = vmatpush1.msra.mxu0 %v631
      %645 = vmatprep.subr.mxu0 0.0
      %646 = vmatpush1.msra.mxu0 %v632
      %647 = vmatprep.subr.mxu0 0.0
      %648 = vmatpush1.msra.mxu0 %v633
      %649 = vmatprep.subr.mxu0 0.0
      %650 = vmatpush1.msra.mxu0 0.0
      %651 = vmatprep.subr.mxu0 0.0
      %652 = vmatpush1.msra.mxu0 0.0
      %653 = vmatprep.subr.mxu0 0.0
      %654 = vmatpush1.msra.mxu0 0.0
      %655 = vmatprep.subr.mxu0 0.0
      %656 = vmatpush1.msra.mxu0 0.0
      %657 = vmatprep.subr.mxu0 0.0
      %658 = vmatpush1.msra.mxu0 0.0
      %659 = vmatprep.subr.mxu0 0.0
      %660 = vmatpush1.msra.mxu0 0.0
      %661 = vmatprep.subr.mxu0 0.0
      %662 = vmatpush1.msra.mxu0 0.0
      %663 = vmatprep.subr.mxu0 0.0
      %664 = vmatpush1.msra.mxu0 0.0
      %665 = vmatprep.subr.mxu0 0.0
      %666 = vmatpush1.msra.mxu0 0.0
      %667 = vmatprep.subr.mxu0 0.0
      %668 = vmatpush1.msra.mxu0 0.0
      %669 = vmatprep.subr.mxu0 0.0
      %670 = vmatpush1.msra.mxu0 0.0
      %671 = vmatprep.subr.mxu0 0.0
      %672 = vmatpush1.msra.mxu0 0.0
      %673 = vmatprep.subr.mxu0 0.0
      %674 = vmatpush1.msra.mxu0 0.0
      %675 = vmatprep.subr.mxu0 0.0
      %676 = vmatpush1.msra.mxu0 0.0
      %677 = vmatprep.subr.mxu0 0.0
      %678 = vmatpush1.msra.mxu0 0.0
      %679 = vmatprep.subr.mxu0 0.0
      %680 = vmatpush1.msra.mxu0 0.0
      %681 = vmatprep.subr.mxu0 0.0
      %682 = vmatpush1.msra.mxu0 0.0
      %683 = vmatprep.subr.mxu0 0.0
      %684 = vmatpush1.msra.mxu0 0.0
      %685 = vmatprep.subr.mxu0 0.0
      %686 = vmatpush1.msra.mxu0 0.0
      %687 = vmatprep.subr.mxu0 0.0
      %688 = vmatpush1.msra.mxu0 0.0
      %689 = vmatprep.subr.mxu0 0.0
      %690 = vmatpush1.msra.mxu0 0.0
      %691 = vmatprep.subr.mxu0 0.0
      %692 = vmatpush1.msra.mxu0 0.0
      %693 = vmatprep.subr.mxu0 0.0
      %694 = vmatpush1.msra.mxu0 0.0
      %695 = vmatprep.subr.mxu0 0.0
      %696 = vmatpush1.msra.mxu0 0.0
      %697 = vmatprep.subr.mxu0 0.0
      %698 = vmatpush1.msra.mxu0 0.0
      %699 = vmatprep.subr.mxu0 0.0
      %700 = vmatpush1.msra.mxu0 0.0
      %701 = vmatprep.subr.mxu0 0.0
      %702 = vmatpush1.msra.mxu0 0.0
      %703 = vmatprep.subr.mxu0 0.0
      %704 = vmatpush1.msra.mxu0 0.0
      %705 = vmatprep.mubr.f32.mxu0 0.0
      %706 = vmatmul.mubr.f32.gmra.mrb[0].mxu0 %v558
      %v707 = vpop.f32.mrb[0].mxu0
      %v708 = vadd.f32 %v639, %v707
      %v709 = vpop.f32.mrb[0].mxu0
      %710 = vdwg.mxu0
      %v711 = vld [vmem:[%s5] sm:$0xff]
      %v712 = vld [vmem:[%s5 + $0x8] sm:$0xff]
      %v713 = vld [vmem:[%s5 + $0x10] sm:$0xff]
      %v714 = vld [vmem:[%s5 + $0x18] sm:$0xff]
      %v715 = vld [vmem:[%s6] sm:$0x1]
      %v717 = vlaneseq
      %v718 = vshrl.u32 %v717, 7
      %v719 = vsub.s32 0, %v718
      %v720 = vrot.slane %v715, %v719
      %722 = vmatprep.subr.mxu0 0.0
      %723 = vmatpush1.msra.mxu0 %v711
      %724 = vmatprep.subr.mxu0 0.0
      %725 = vmatpush1.msra.mxu0 %v712
      %726 = vmatprep.subr.mxu0 0.0
      %727 = vmatpush1.msra.mxu0 %v713
      %728 = vmatprep.subr.mxu0 0.0
      %729 = vmatpush1.msra.mxu0 %v714
      %730 = vmatprep.subr.mxu0 0.0
      %731 = vmatpush1.msra.mxu0 0.0
      %732 = vmatprep.subr.mxu0 0.0
      %733 = vmatpush1.msra.mxu0 0.0
      %734 = vmatprep.subr.mxu0 0.0
      %735 = vmatpush1.msra.mxu0 0.0
      %736 = vmatprep.subr.mxu0 0.0
      %737 = vmatpush1.msra.mxu0 0.0
      %738 = vmatprep.subr.mxu0 0.0
      %739 = vmatpush1.msra.mxu0 0.0
      %740 = vmatprep.subr.mxu0 0.0
      %741 = vmatpush1.msra.mxu0 0.0
      %742 = vmatprep.subr.mxu0 0.0
      %743 = vmatpush1.msra.mxu0 0.0
      %744 = vmatprep.subr.mxu0 0.0
      %745 = vmatpush1.msra.mxu0 0.0
      %746 = vmatprep.subr.mxu0 0.0
      %747 = vmatpush1.msra.mxu0 0.0
      %748 = vmatprep.subr.mxu0 0.0
      %749 = vmatpush1.msra.mxu0 0.0
      %750 = vmatprep.subr.mxu0 0.0
      %751 = vmatpush1.msra.mxu0 0.0
      %752 = vmatprep.subr.mxu0 0.0
      %753 = vmatpush1.msra.mxu0 0.0
      %754 = vmatprep.subr.mxu0 0.0
      %755 = vmatpush1.msra.mxu0 0.0
      %756 = vmatprep.subr.mxu0 0.0
      %757 = vmatpush1.msra.mxu0 0.0
      %758 = vmatprep.subr.mxu0 0.0
      %759 = vmatpush1.msra.mxu0 0.0
      %760 = vmatprep.subr.mxu0 0.0
      %761 = vmatpush1.msra.mxu0 0.0
      %762 = vmatprep.subr.mxu0 0.0
      %763 = vmatpush1.msra.mxu0 0.0
      %764 = vmatprep.subr.mxu0 0.0
      %765 = vmatpush1.msra.mxu0 0.0
      %766 = vmatprep.subr.mxu0 0.0
      %767 = vmatpush1.msra.mxu0 0.0
      %768 = vmatprep.subr.mxu0 0.0
      %769 = vmatpush1.msra.mxu0 0.0
      %770 = vmatprep.subr.mxu0 0.0
      %771 = vmatpush1.msra.mxu0 0.0
      %772 = vmatprep.subr.mxu0 0.0
      %773 = vmatpush1.msra.mxu0 0.0
      %774 = vmatprep.subr.mxu0 0.0
      %775 = vmatpush1.msra.mxu0 0.0
      %776 = vmatprep.subr.mxu0 0.0
      %777 = vmatpush1.msra.mxu0 0.0
      %778 = vmatprep.subr.mxu0 0.0
      %779 = vmatpush1.msra.mxu0 0.0
      %780 = vmatprep.subr.mxu0 0.0
      %781 = vmatpush1.msra.mxu0 0.0
      %782 = vmatprep.subr.mxu0 0.0
      %783 = vmatpush1.msra.mxu0 0.0
      %784 = vmatprep.subr.mxu0 0.0
      %785 = vmatpush1.msra.mxu0 0.0
      %786 = vmatprep.mubr.f32.mxu0 0.0
      %787 = vmatmul.mubr.f32.gmra.mrb[0].mxu0 %v558
      %v788 = vpop.f32.mrb[0].mxu0
      %v789 = vadd.f32 %v720, %v788
      %v790 = vpop.f32.mrb[0].mxu0
      %791 = vdwg.mxu0
      %vm792 = vcmask 64512
      %v794 = vsel %vm792, %v627, 0
      %v797 = vsel %vm792, %v708, 0
      %799 = vmatprep.subr.mxu0 0.0
      %800 = vmatpush1.xpose.msra.mxu0 %v797
      %801 = vmatprep.subr.mxu0 0.0
      %802 = vmatpush1.xpose.msra.mxu0 0.0
      %803 = vmatprep.subr.mxu0 0.0
      %804 = vmatpush1.xpose.msra.mxu0 0.0
      %805 = vmatprep.subr.mxu0 0.0
      %806 = vmatpush1.xpose.msra.mxu0 0.0
      %807 = vmatprep.subr.mxu0 0.0
      %808 = vmatpush1.xpose.msra.mxu0 0.0
      %809 = vmatprep.subr.mxu0 0.0
      %810 = vmatpush1.xpose.msra.mxu0 0.0
      %811 = vmatprep.subr.mxu0 0.0
      %812 = vmatpush1.xpose.msra.mxu0 0.0
      %813 = vmatprep.subr.mxu0 0.0
      %814 = vmatpush1.xpose.msra.mxu0 0.0
      %815 = vmatprep.subr.mxu0 0.0
      %816 = vmatpush1.xpose.msra.mxu0 0.0
      %817 = vmatprep.subr.mxu0 0.0
      %818 = vmatpush1.xpose.msra.mxu0 0.0
      %819 = vmatprep.subr.mxu0 0.0
      %820 = vmatpush1.xpose.msra.mxu0 0.0
      %821 = vmatprep.subr.mxu0 0.0
      %822 = vmatpush1.xpose.msra.mxu0 0.0
      %823 = vmatprep.subr.mxu0 0.0
      %824 = vmatpush1.xpose.msra.mxu0 0.0
      %825 = vmatprep.subr.mxu0 0.0
      %826 = vmatpush1.xpose.msra.mxu0 0.0
      %827 = vmatprep.subr.mxu0 0.0
      %828 = vmatpush1.xpose.msra.mxu0 0.0
      %829 = vmatprep.subr.mxu0 0.0
      %830 = vmatpush1.xpose.msra.mxu0 0.0
      %831 = vmatprep.subr.mxu0 0.0
      %832 = vmatpush1.xpose.msra.mxu0 0.0
      %833 = vmatprep.subr.mxu0 0.0
      %834 = vmatpush1.xpose.msra.mxu0 0.0
      %835 = vmatprep.subr.mxu0 0.0
      %836 = vmatpush1.xpose.msra.mxu0 0.0
      %837 = vmatprep.subr.mxu0 0.0
      %838 = vmatpush1.xpose.msra.mxu0 0.0
      %839 = vmatprep.subr.mxu0 0.0
      %840 = vmatpush1.xpose.msra.mxu0 0.0
      %841 = vmatprep.subr.mxu0 0.0
      %842 = vmatpush1.xpose.msra.mxu0 0.0
      %843 = vmatprep.subr.mxu0 0.0
      %844 = vmatpush1.xpose.msra.mxu0 0.0
      %845 = vmatprep.subr.mxu0 0.0
      %846 = vmatpush1.xpose.msra.mxu0 0.0
      %847 = vmatprep.subr.mxu0 0.0
      %848 = vmatpush1.xpose.msra.mxu0 0.0
      %849 = vmatprep.subr.mxu0 0.0
      %850 = vmatpush1.xpose.msra.mxu0 0.0
      %851 = vmatprep.subr.mxu0 0.0
      %852 = vmatpush1.xpose.msra.mxu0 0.0
      %853 = vmatprep.subr.mxu0 0.0
      %854 = vmatpush1.xpose.msra.mxu0 0.0
      %855 = vmatprep.subr.mxu0 0.0
      %856 = vmatpush1.xpose.msra.mxu0 0.0
      %857 = vmatprep.subr.mxu0 0.0
      %858 = vmatpush1.xpose.msra.mxu0 0.0
      %859 = vmatprep.subr.mxu0 0.0
      %860 = vmatpush1.xpose.msra.mxu0 0.0
      %861 = vmatprep.subr.mxu0 0.0
      %862 = vmatpush1.xpose.msra.mxu0 0.0
      %863 = vmatprep.mubr.f32.mxu0 0.0
      %864 = vmatmul.mubr.f32.gmra.mrb[0].mxu0 %v794
      %v865 = vpop.f32.mrb[0].mxu0
      %v866 = vadd.f32 0.0, %v865
      %v867 = vpop.f32.mrb[0].mxu0
      %868 = vdwg.mxu0
      %v869 = vmul.f32 %v866, 0.35355338
      %v870 = vsel %vm792, %v869, -inf
      %871 = vmax.xlane.f32.xlu0 %v870
      %v872 = vpop.xlane.xlu0 %871
      %v873 = vsub.f32 %v869, %v872
      %v874 = vmul.f32 %v873, 1.442695
      %v875 = vpow.pop %v874
      %v876 = vsel %vm792, %v875, 0.0
      %877 = vadd.xlane.f32.xlu0 %v876
      %v878 = vpop.xlane.xlu0 %877
      %v879 = vrcp.pop %v878
      %v880 = vmul.f32 %v875, %v879
      %v882 = vsel %vm792, %v880, 0
      %884 = vmatprep.subr.mxu0 0.0
      %885 = vmatpush1.msra.mxu0 %v789
      %886 = vmatprep.subr.mxu0 0.0
      %887 = vmatpush1.msra.mxu0 0.0
      %888 = vmatprep.subr.mxu0 0.0
      %889 = vmatpush1.msra.mxu0 0.0
      %890 = vmatprep.subr.mxu0 0.0
      %891 = vmatpush1.msra.mxu0 0.0
      %892 = vmatprep.subr.mxu0 0.0
      %893 = vmatpush1.msra.mxu0 0.0
      %894 = vmatprep.subr.mxu0 0.0
      %895 = vmatpush1.msra.mxu0 0.0
      %896 = vmatprep.subr.mxu0 0.0
      %897 = vmatpush1.msra.mxu0 0.0
      %898 = vmatprep.subr.mxu0 0.0
      %899 = vmatpush1.msra.mxu0 0.0
      %900 = vmatprep.subr.mxu0 0.0
      %901 = vmatpush1.msra.mxu0 0.0
      %902 = vmatprep.subr.mxu0 0.0
      %903 = vmatpush1.msra.mxu0 0.0
      %904 = vmatprep.subr.mxu0 0.0
      %905 = vmatpush1.msra.mxu0 0.0
      %906 = vmatprep.subr.mxu0 0.0
      %907 = vmatpush1.msra.mxu0 0.0
      %908 = vmatprep.subr.mxu0 0.0
      %909 = vmatpush1.msra.mxu0 0.0
      %910 = vmatprep.subr.mxu0 0.0
      %911 = vmatpush1.msra.mxu0 0.0
      %912 = vmatprep.subr.mxu0 0.0
      %913 = vmatpush1.msra.mxu0 0.0
      %914 = vmatprep.subr.mxu0 0.0
      %915 = vmatpush1.msra.mxu0 0.0
      %916 = vmatprep.subr.mxu0 0.0
      %917 = vmatpush1.msra.mxu0 0.0
      %918 = vmatprep.subr.mxu0 0.0
      %919 = vmatpush1.msra.mxu0 0.0
      %920 = vmatprep.subr.mxu0 0.0
      %921 = vmatpush1.msra.mxu0 0.0
      %922 = vmatprep.subr.mxu0 0.0
      %923 = vmatpush1.msra.mxu0 0.0
      %924 = vmatprep.subr.mxu0 0.0
      %925 = vmatpush1.msra.mxu0 0.0
      %926 = vmatprep.subr.mxu0 0.0
      %927 = vmatpush1.msra.mxu0 0.0
      %928 = vmatprep.subr.mxu0 0.0
      %929 = vmatpush1.msra.mxu0 0.0
      %930 = vmatprep.subr.mxu0 0.0
      %931 = vmatpush1.msra.mxu0 0.0
      %932 = vmatprep.subr.mxu0 0.0
      %933 = vmatpush1.msra.mxu0 0.0
      %934 = vmatprep.subr.mxu0 0.0
      %935 = vmatpush1.msra.mxu0 0.0
      %936 = vmatprep.subr.mxu0 0.0
      %937 = vmatpush1.msra.mxu0 0.0
      %938 = vmatprep.subr.mxu0 0.0
      %939 = vmatpush1.msra.mxu0 0.0
      %940 = vmatprep.subr.mxu0 0.0
      %941 = vmatpush1.msra.mxu0 0.0
      %942 = vmatprep.subr.mxu0 0.0
      %943 = vmatpush1.msra.mxu0 0.0
      %944 = vmatprep.subr.mxu0 0.0
      %945 = vmatpush1.msra.mxu0 0.0
      %946 = vmatprep.subr.mxu0 0.0
      %947 = vmatpush1.msra.mxu0 0.0
      %948 = vmatprep.mubr.f32.mxu0 0.0
      %949 = vmatmul.mubr.f32.gmra.mrb[0].mxu0 %v882
      %v950 = vpop.f32.mrb[0].mxu0
      %v951 = vadd.f32 0.0, %v950
      %v952 = vpop.f32.mrb[0].mxu0
      %953 = vdwg.mxu0
      %v954 = vld [vmem:[%s7] sm:$0xff]
      %959 = vrot.lane.b32.xlu0 %v545, 120
      %v960 = vpop.permute.xlu0 %959
      %961 = vrot.lane.b32.xlu0 %v546, 120
      %v962 = vpop.permute.xlu0 %961
      %963 = vrot.lane.b32.xlu0 %v547, 120
      %v964 = vpop.permute.xlu0 %963
      %965 = vrot.lane.b32.xlu0 %v548, 120
      %v966 = vpop.permute.xlu0 %965
      %971 = vrot.lane.b32.xlu0 %v554, 120
      %v972 = vpop.permute.xlu0 %971
      %974 = vmatprep.subr.mxu0 0.0
      %975 = vmatpush1.msra.mxu0 %v960
      %976 = vmatprep.subr.mxu0 0.0
      %977 = vmatpush1.msra.mxu0 %v962
      %978 = vmatprep.subr.mxu0 0.0
      %979 = vmatpush1.msra.mxu0 %v964
      %980 = vmatprep.subr.mxu0 0.0
      %981 = vmatpush1.msra.mxu0 %v966
      %982 = vmatprep.subr.mxu0 0.0
      %983 = vmatpush1.msra.mxu0 0.0
      %984 = vmatprep.subr.mxu0 0.0
      %985 = vmatpush1.msra.mxu0 0.0
      %986 = vmatprep.subr.mxu0 0.0
      %987 = vmatpush1.msra.mxu0 0.0
      %988 = vmatprep.subr.mxu0 0.0
      %989 = vmatpush1.msra.mxu0 0.0
      %990 = vmatprep.subr.mxu0 0.0
      %991 = vmatpush1.msra.mxu0 0.0
      %992 = vmatprep.subr.mxu0 0.0
      %993 = vmatpush1.msra.mxu0 0.0
      %994 = vmatprep.subr.mxu0 0.0
      %995 = vmatpush1.msra.mxu0 0.0
      %996 = vmatprep.subr.mxu0 0.0
      %997 = vmatpush1.msra.mxu0 0.0
      %998 = vmatprep.subr.mxu0 0.0
      %999 = vmatpush1.msra.mxu0 0.0
      %1000 = vmatprep.subr.mxu0 0.0
      %1001 = vmatpush1.msra.mxu0 0.0
      %1002 = vmatprep.subr.mxu0 0.0
      %1003 = vmatpush1.msra.mxu0 0.0
      %1004 = vmatprep.subr.mxu0 0.0
      %1005 = vmatpush1.msra.mxu0 0.0
      %1006 = vmatprep.subr.mxu0 0.0
      %1007 = vmatpush1.msra.mxu0 0.0
      %1008 = vmatprep.subr.mxu0 0.0
      %1009 = vmatpush1.msra.mxu0 0.0
      %1010 = vmatprep.subr.mxu0 0.0
      %1011 = vmatpush1.msra.mxu0 0.0
      %1012 = vmatprep.subr.mxu0 0.0
      %1013 = vmatpush1.msra.mxu0 0.0
      %1014 = vmatprep.subr.mxu0 0.0
      %1015 = vmatpush1.msra.mxu0 0.0
      %1016 = vmatprep.subr.mxu0 0.0
      %1017 = vmatpush1.msra.mxu0 0.0
      %1018 = vmatprep.subr.mxu0 0.0
      %1019 = vmatpush1.msra.mxu0 0.0
      %1020 = vmatprep.subr.mxu0 0.0
      %1021 = vmatpush1.msra.mxu0 0.0
      %1022 = vmatprep.subr.mxu0 0.0
      %1023 = vmatpush1.msra.mxu0 0.0
      %1024 = vmatprep.subr.mxu0 0.0
      %1025 = vmatpush1.msra.mxu0 0.0
      %1026 = vmatprep.subr.mxu0 0.0
      %1027 = vmatpush1.msra.mxu0 0.0
      %1028 = vmatprep.subr.mxu0 0.0
      %1029 = vmatpush1.msra.mxu0 0.0
      %1030 = vmatprep.subr.mxu0 0.0
      %1031 = vmatpush1.msra.mxu0 0.0
      %1032 = vmatprep.subr.mxu0 0.0
      %1033 = vmatpush1.msra.mxu0 0.0
      %1034 = vmatprep.subr.mxu0 0.0
      %1035 = vmatpush1.msra.mxu0 0.0
      %1036 = vmatprep.subr.mxu0 0.0
      %1037 = vmatpush1.msra.mxu0 0.0
      %1038 = vmatprep.mubr.f32.mxu0 0.0
      %1039 = vmatmul.mubr.f32.gmra.mrb[0].mxu0 %v558
      %v1040 = vpop.f32.mrb[0].mxu0
      %v1041 = vadd.f32 %v972, %v1040
      %v1042 = vpop.f32.mrb[0].mxu0
      %1043 = vdwg.mxu0
      %1048 = vrot.lane.b32.xlu0 %v630, 120
      %v1049 = vpop.permute.xlu0 %1048
      %1050 = vrot.lane.b32.xlu0 %v631, 120
      %v1051 = vpop.permute.xlu0 %1050
      %1052 = vrot.lane.b32.xlu0 %v632, 120
      %v1053 = vpop.permute.xlu0 %1052
      %1054 = vrot.lane.b32.xlu0 %v633, 120
      %v1055 = vpop.permute.xlu0 %1054
      %1060 = vrot.lane.b32.xlu0 %v639, 120
      %v1061 = vpop.permute.xlu0 %1060
      %1063 = vmatprep.subr.mxu0 0.0
      %1064 = vmatpush1.msra.mxu0 %v1049
      %1065 = vmatprep.subr.mxu0 0.0
      %1066 = vmatpush1.msra.mxu0 %v1051
      %1067 = vmatprep.subr.mxu0 0.0
      %1068 = vmatpush1.msra.mxu0 %v1053
      %1069 = vmatprep.subr.mxu0 0.0
      %1070 = vmatpush1.msra.mxu0 %v1055
      %1071 = vmatprep.subr.mxu0 0.0
      %1072 = vmatpush1.msra.mxu0 0.0
      %1073 = vmatprep.subr.mxu0 0.0
      %1074 = vmatpush1.msra.mxu0 0.0
      %1075 = vmatprep.subr.mxu0 0.0
      %1076 = vmatpush1.msra.mxu0 0.0
      %1077 = vmatprep.subr.mxu0 0.0
      %1078 = vmatpush1.msra.mxu0 0.0
      %1079 = vmatprep.subr.mxu0 0.0
      %1080 = vmatpush1.msra.mxu0 0.0
      %1081 = vmatprep.subr.mxu0 0.0
      %1082 = vmatpush1.msra.mxu0 0.0
      %1083 = vmatprep.subr.mxu0 0.0
      %1084 = vmatpush1.msra.mxu0 0.0
      %1085 = vmatprep.subr.mxu0 0.0
      %1086 = vmatpush1.msra.mxu0 0.0
      %1087 = vmatprep.subr.mxu0 0.0
      %1088 = vmatpush1.msra.mxu0 0.0
      %1089 = vmatprep.subr.mxu0 0.0
      %1090 = vmatpush1.msra.mxu0 0.0
      %1091 = vmatprep.subr.mxu0 0.0
      %1092 = vmatpush1.msra.mxu0 0.0
      %1093 = vmatprep.subr.mxu0 0.0
      %1094 = vmatpush1.msra.mxu0 0.0
      %1095 = vmatprep.subr.mxu0 0.0
      %1096 = vmatpush1.msra.mxu0 0.0
      %1097 = vmatprep.subr.mxu0 0.0
      %1098 = vmatpush1.msra.mxu0 0.0
      %1099 = vmatprep.subr.mxu0 0.0
      %1100 = vmatpush1.msra.mxu0 0.0
      %1101 = vmatprep.subr.mxu0 0.0
      %1102 = vmatpush1.msra.mxu0 0.0
      %1103 = vmatprep.subr.mxu0 0.0
      %1104 = vmatpush1.msra.mxu0 0.0
      %1105 = vmatprep.subr.mxu0 0.0
      %1106 = vmatpush1.msra.mxu0 0.0
      %1107 = vmatprep.subr.mxu0 0.0
      %1108 = vmatpush1.msra.mxu0 0.0
      %1109 = vmatprep.subr.mxu0 0.0
      %1110 = vmatpush1.msra.mxu0 0.0
      %1111 = vmatprep.subr.mxu0 0.0
      %1112 = vmatpush1.msra.mxu0 0.0
      %1113 = vmatprep.subr.mxu0 0.0
      %1114 = vmatpush1.msra.mxu0 0.0
      %1115 = vmatprep.subr.mxu0 0.0
      %1116 = vmatpush1.msra.mxu0 0.0
      %1117 = vmatprep.subr.mxu0 0.0
      %1118 = vmatpush1.msra.mxu0 0.0
      %1119 = vmatprep.subr.mxu0 0.0
      %1120 = vmatpush1.msra.mxu0 0.0
      %1121 = vmatprep.subr.mxu0 0.0
      %1122 = vmatpush1.msra.mxu0 0.0
      %1123 = vmatprep.subr.mxu0 0.0
      %1124 = vmatpush1.msra.mxu0 0.0
      %1125 = vmatprep.subr.mxu0 0.0
      %1126 = vmatpush1.msra.mxu0 0.0
      %1127 = vmatprep.mubr.f32.mxu0 0.0
      %1128 = vmatmul.mubr.f32.gmra.mrb[0].mxu0 %v558
      %v1129 = vpop.f32.mrb[0].mxu0
      %v1130 = vadd.f32 %v1061, %v1129
      %v1131 = vpop.f32.mrb[0].mxu0
      %1132 = vdwg.mxu0
      %1137 = vrot.lane.b32.xlu0 %v711, 120
      %v1138 = vpop.permute.xlu0 %1137
      %1139 = vrot.lane.b32.xlu0 %v712, 120
      %v1140 = vpop.permute.xlu0 %1139
      %1141 = vrot.lane.b32.xlu0 %v713, 120
      %v1142 = vpop.permute.xlu0 %1141
      %1143 = vrot.lane.b32.xlu0 %v714, 120
      %v1144 = vpop.permute.xlu0 %1143
      %1149 = vrot.lane.b32.xlu0 %v720, 120
      %v1150 = vpop.permute.xlu0 %1149
      %1152 = vmatprep.subr.mxu0 0.0
      %1153 = vmatpush1.msra.mxu0 %v1138
      %1154 = vmatprep.subr.mxu0 0.0
      %1155 = vmatpush1.msra.mxu0 %v1140
      %1156 = vmatprep.subr.mxu0 0.0
      %1157 = vmatpush1.msra.mxu0 %v1142
      %1158 = vmatprep.subr.mxu0 0.0
      %1159 = vmatpush1.msra.mxu0 %v1144
      %1160 = vmatprep.subr.mxu0 0.0
      %1161 = vmatpush1.msra.mxu0 0.0
      %1162 = vmatprep.subr.mxu0 0.0
      %1163 = vmatpush1.msra.mxu0 0.0
      %1164 = vmatprep.subr.mxu0 0.0
      %1165 = vmatpush1.msra.mxu0 0.0
      %1166 = vmatprep.subr.mxu0 0.0
      %1167 = vmatpush1.msra.mxu0 0.0
      %1168 = vmatprep.subr.mxu0 0.0
      %1169 = vmatpush1.msra.mxu0 0.0
      %1170 = vmatprep.subr.mxu0 0.0
      %1171 = vmatpush1.msra.mxu0 0.0
      %1172 = vmatprep.subr.mxu0 0.0
      %1173 = vmatpush1.msra.mxu0 0.0
      %1174 = vmatprep.subr.mxu0 0.0
      %1175 = vmatpush1.msra.mxu0 0.0
      %1176 = vmatprep.subr.mxu0 0.0
      %1177 = vmatpush1.msra.mxu0 0.0
      %1178 = vmatprep.subr.mxu0 0.0
      %1179 = vmatpush1.msra.mxu0 0.0
      %1180 = vmatprep.subr.mxu0 0.0
      %1181 = vmatpush1.msra.mxu0 0.0
      %1182 = vmatprep.subr.mxu0 0.0
      %1183 = vmatpush1.msra.mxu0 0.0
      %1184 = vmatprep.subr.mxu0 0.0
      %1185 = vmatpush1.msra.mxu0 0.0
      %1186 = vmatprep.subr.mxu0 0.0
      %1187 = vmatpush1.msra.mxu0 0.0
      %1188 = vmatprep.subr.mxu0 0.0
      %1189 = vmatpush1.msra.mxu0 0.0
      %1190 = vmatprep.subr.mxu0 0.0
      %1191 = vmatpush1.msra.mxu0 0.0
      %1192 = vmatprep.subr.mxu0 0.0
      %1193 = vmatpush1.msra.mxu0 0.0
      %1194 = vmatprep.subr.mxu0 0.0
      %1195 = vmatpush1.msra.mxu0 0.0
      %1196 = vmatprep.subr.mxu0 0.0
      %1197 = vmatpush1.msra.mxu0 0.0
      %1198 = vmatprep.subr.mxu0 0.0
      %1199 = vmatpush1.msra.mxu0 0.0
      %1200 = vmatprep.subr.mxu0 0.0
      %1201 = vmatpush1.msra.mxu0 0.0
      %1202 = vmatprep.subr.mxu0 0.0
      %1203 = vmatpush1.msra.mxu0 0.0
      %1204 = vmatprep.subr.mxu0 0.0
      %1205 = vmatpush1.msra.mxu0 0.0
      %1206 = vmatprep.subr.mxu0 0.0
      %1207 = vmatpush1.msra.mxu0 0.0
      %1208 = vmatprep.subr.mxu0 0.0
      %1209 = vmatpush1.msra.mxu0 0.0
      %1210 = vmatprep.subr.mxu0 0.0
      %1211 = vmatpush1.msra.mxu0 0.0
      %1212 = vmatprep.subr.mxu0 0.0
      %1213 = vmatpush1.msra.mxu0 0.0
      %1214 = vmatprep.subr.mxu0 0.0
      %1215 = vmatpush1.msra.mxu0 0.0
      %1216 = vmatprep.mubr.f32.mxu0 0.0
      %1217 = vmatmul.mubr.f32.gmra.mrb[0].mxu0 %v558
      %v1218 = vpop.f32.mrb[0].mxu0
      %v1219 = vadd.f32 %v1150, %v1218
      %v1220 = vpop.f32.mrb[0].mxu0
      %1221 = vdwg.mxu0
      %v1223 = vsel %vm792, %v1041, 0
      %v1226 = vsel %vm792, %v1130, 0
      %1228 = vmatprep.subr.mxu0 0.0
      %1229 = vmatpush1.xpose.msra.mxu0 %v1226
      %1230 = vmatprep.subr.mxu0 0.0
      %1231 = vmatpush1.xpose.msra.mxu0 0.0
      %1232 = vmatprep.subr.mxu0 0.0
      %1233 = vmatpush1.xpose.msra.mxu0 0.0
      %1234 = vmatprep.subr.mxu0 0.0
      %1235 = vmatpush1.xpose.msra.mxu0 0.0
      %1236 = vmatprep.subr.mxu0 0.0
      %1237 = vmatpush1.xpose.msra.mxu0 0.0
      %1238 = vmatprep.subr.mxu0 0.0
      %1239 = vmatpush1.xpose.msra.mxu0 0.0
      %1240 = vmatprep.subr.mxu0 0.0
      %1241 = vmatpush1.xpose.msra.mxu0 0.0
      %1242 = vmatprep.subr.mxu0 0.0
      %1243 = vmatpush1.xpose.msra.mxu0 0.0
      %1244 = vmatprep.subr.mxu0 0.0
      %1245 = vmatpush1.xpose.msra.mxu0 0.0
      %1246 = vmatprep.subr.mxu0 0.0
      %1247 = vmatpush1.xpose.msra.mxu0 0.0
      %1248 = vmatprep.subr.mxu0 0.0
      %1249 = vmatpush1.xpose.msra.mxu0 0.0
      %1250 = vmatprep.subr.mxu0 0.0
      %1251 = vmatpush1.xpose.msra.mxu0 0.0
      %1252 = vmatprep.subr.mxu0 0.0
      %1253 = vmatpush1.xpose.msra.mxu0 0.0
      %1254 = vmatprep.subr.mxu0 0.0
      %1255 = vmatpush1.xpose.msra.mxu0 0.0
      %1256 = vmatprep.subr.mxu0 0.0
      %1257 = vmatpush1.xpose.msra.mxu0 0.0
      %1258 = vmatprep.subr.mxu0 0.0
      %1259 = vmatpush1.xpose.msra.mxu0 0.0
      %1260 = vmatprep.subr.mxu0 0.0
      %1261 = vmatpush1.xpose.msra.mxu0 0.0
      %1262 = vmatprep.subr.mxu0 0.0
      %1263 = vmatpush1.xpose.msra.mxu0 0.0
      %1264 = vmatprep.subr.mxu0 0.0
      %1265 = vmatpush1.xpose.msra.mxu0 0.0
      %1266 = vmatprep.subr.mxu0 0.0
      %1267 = vmatpush1.xpose.msra.mxu0 0.0
      %1268 = vmatprep.subr.mxu0 0.0
      %1269 = vmatpush1.xpose.msra.mxu0 0.0
      %1270 = vmatprep.subr.mxu0 0.0
      %1271 = vmatpush1.xpose.msra.mxu0 0.0
      %1272 = vmatprep.subr.mxu0 0.0
      %1273 = vmatpush1.xpose.msra.mxu0 0.0
      %1274 = vmatprep.subr.mxu0 0.0
      %1275 = vmatpush1.xpose.msra.mxu0 0.0
      %1276 = vmatprep.subr.mxu0 0.0
      %1277 = vmatpush1.xpose.msra.mxu0 0.0
      %1278 = vmatprep.subr.mxu0 0.0
      %1279 = vmatpush1.xpose.msra.mxu0 0.0
      %1280 = vmatprep.subr.mxu0 0.0
      %1281 = vmatpush1.xpose.msra.mxu0 0.0
      %1282 = vmatprep.subr.mxu0 0.0
      %1283 = vmatpush1.xpose.msra.mxu0 0.0
      %1284 = vmatprep.subr.mxu0 0.0
      %1285 = vmatpush1.xpose.msra.mxu0 0.0
      %1286 = vmatprep.subr.mxu0 0.0
      %1287 = vmatpush1.xpose.msra.mxu0 0.0
      %1288 = vmatprep.subr.mxu0 0.0
      %1289 = vmatpush1.xpose.msra.mxu0 0.0
      %1290 = vmatprep.subr.mxu0 0.0
      %1291 = vmatpush1.xpose.msra.mxu0 0.0
      %1292 = vmatprep.mubr.f32.mxu0 0.0
      %1293 = vmatmul.mubr.f32.gmra.mrb[0].mxu0 %v1223
      %v1294 = vpop.f32.mrb[0].mxu0
      %v1295 = vadd.f32 0.0, %v1294
      %v1296 = vpop.f32.mrb[0].mxu0
      %1297 = vdwg.mxu0
      %v1298 = vmul.f32 %v1295, 0.35355338
      %v1299 = vsel %vm792, %v1298, -inf
      %1300 = vmax.xlane.f32.xlu0 %v1299
      %v1301 = vpop.xlane.xlu0 %1300
      %v1302 = vsub.f32 %v1298, %v1301
      %v1303 = vmul.f32 %v1302, 1.442695
      %v1304 = vpow.pop %v1303
      %v1305 = vsel %vm792, %v1304, 0.0
      %1306 = vadd.xlane.f32.xlu0 %v1305
      %v1307 = vpop.xlane.xlu0 %1306
      %v1308 = vrcp.pop %v1307
      %v1309 = vmul.f32 %v1304, %v1308
      %v1311 = vsel %vm792, %v1309, 0
      %1313 = vmatprep.subr.mxu0 0.0
      %1314 = vmatpush1.msra.mxu0 %v1219
      %1315 = vmatprep.subr.mxu0 0.0
      %1316 = vmatpush1.msra.mxu0 0.0
      %1317 = vmatprep.subr.mxu0 0.0
      %1318 = vmatpush1.msra.mxu0 0.0
      %1319 = vmatprep.subr.mxu0 0.0
      %1320 = vmatpush1.msra.mxu0 0.0
      %1321 = vmatprep.subr.mxu0 0.0
      %1322 = vmatpush1.msra.mxu0 0.0
      %1323 = vmatprep.subr.mxu0 0.0
      %1324 = vmatpush1.msra.mxu0 0.0
      %1325 = vmatprep.subr.mxu0 0.0
      %1326 = vmatpush1.msra.mxu0 0.0
      %1327 = vmatprep.subr.mxu0 0.0
      %1328 = vmatpush1.msra.mxu0 0.0
      %1329 = vmatprep.subr.mxu0 0.0
      %1330 = vmatpush1.msra.mxu0 0.0
      %1331 = vmatprep.subr.mxu0 0.0
      %1332 = vmatpush1.msra.mxu0 0.0
      %1333 = vmatprep.subr.mxu0 0.0
      %1334 = vmatpush1.msra.mxu0 0.0
      %1335 = vmatprep.subr.mxu0 0.0
      %1336 = vmatpush1.msra.mxu0 0.0
      %1337 = vmatprep.subr.mxu0 0.0
      %1338 = vmatpush1.msra.mxu0 0.0
      %1339 = vmatprep.subr.mxu0 0.0
      %1340 = vmatpush1.msra.mxu0 0.0
      %1341 = vmatprep.subr.mxu0 0.0
      %1342 = vmatpush1.msra.mxu0 0.0
      %1343 = vmatprep.subr.mxu0 0.0
      %1344 = vmatpush1.msra.mxu0 0.0
      %1345 = vmatprep.subr.mxu0 0.0
      %1346 = vmatpush1.msra.mxu0 0.0
      %1347 = vmatprep.subr.mxu0 0.0
      %1348 = vmatpush1.msra.mxu0 0.0
      %1349 = vmatprep.subr.mxu0 0.0
      %1350 = vmatpush1.msra.mxu0 0.0
      %1351 = vmatprep.subr.mxu0 0.0
      %1352 = vmatpush1.msra.mxu0 0.0
      %1353 = vmatprep.subr.mxu0 0.0
      %1354 = vmatpush1.msra.mxu0 0.0
      %1355 = vmatprep.subr.mxu0 0.0
      %1356 = vmatpush1.msra.mxu0 0.0
      %1357 = vmatprep.subr.mxu0 0.0
      %1358 = vmatpush1.msra.mxu0 0.0
      %1359 = vmatprep.subr.mxu0 0.0
      %1360 = vmatpush1.msra.mxu0 0.0
      %1361 = vmatprep.subr.mxu0 0.0
      %1362 = vmatpush1.msra.mxu0 0.0
      %1363 = vmatprep.subr.mxu0 0.0
      %1364 = vmatpush1.msra.mxu0 0.0
      %1365 = vmatprep.subr.mxu0 0.0
      %1366 = vmatpush1.msra.mxu0 0.0
      %1367 = vmatprep.subr.mxu0 0.0
      %1368 = vmatpush1.msra.mxu0 0.0
      %1369 = vmatprep.subr.mxu0 0.0
      %1370 = vmatpush1.msra.mxu0 0.0
      %1371 = vmatprep.subr.mxu0 0.0
      %1372 = vmatpush1.msra.mxu0 0.0
      %1373 = vmatprep.subr.mxu0 0.0
      %1374 = vmatpush1.msra.mxu0 0.0
      %1375 = vmatprep.subr.mxu0 0.0
      %1376 = vmatpush1.msra.mxu0 0.0
      %1377 = vmatprep.mubr.f32.mxu0 0.0
      %1378 = vmatmul.mubr.f32.gmra.mrb[0].mxu0 %v1311
      %v1379 = vpop.f32.mrb[0].mxu0
      %v1380 = vadd.f32 0.0, %v1379
      %v1381 = vpop.f32.mrb[0].mxu0
      %1382 = vdwg.mxu0
      %v1383 = vld [vmem:[%s7 + $0x8] sm:$0xff]
      %v1385 = vsel %vm792, %v1380, 0
      %1387 = vmatprep.subr.mxu0 0.0
      %1388 = vmatpush1.msra.mxu0 %v1383
      %1389 = vmatprep.subr.mxu0 0.0
      %1390 = vmatpush1.msra.mxu0 0.0
      %1391 = vmatprep.subr.mxu0 0.0
      %1392 = vmatpush1.msra.mxu0 0.0
      %1393 = vmatprep.subr.mxu0 0.0
      %1394 = vmatpush1.msra.mxu0 0.0
      %1395 = vmatprep.subr.mxu0 0.0
      %1396 = vmatpush1.msra.mxu0 0.0
      %1397 = vmatprep.subr.mxu0 0.0
      %1398 = vmatpush1.msra.mxu0 0.0
      %1399 = vmatprep.subr.mxu0 0.0
      %1400 = vmatpush1.msra.mxu0 0.0
      %1401 = vmatprep.subr.mxu0 0.0
      %1402 = vmatpush1.msra.mxu0 0.0
      %1403 = vmatprep.subr.mxu0 0.0
      %1404 = vmatpush1.msra.mxu0 0.0
      %1405 = vmatprep.subr.mxu0 0.0
      %1406 = vmatpush1.msra.mxu0 0.0
      %1407 = vmatprep.subr.mxu0 0.0
      %1408 = vmatpush1.msra.mxu0 0.0
      %1409 = vmatprep.subr.mxu0 0.0
      %1410 = vmatpush1.msra.mxu0 0.0
      %1411 = vmatprep.subr.mxu0 0.0
      %1412 = vmatpush1.msra.mxu0 0.0
      %1413 = vmatprep.subr.mxu0 0.0
      %1414 = vmatpush1.msra.mxu0 0.0
      %1415 = vmatprep.subr.mxu0 0.0
      %1416 = vmatpush1.msra.mxu0 0.0
      %1417 = vmatprep.subr.mxu0 0.0
      %1418 = vmatpush1.msra.mxu0 0.0
      %1419 = vmatprep.subr.mxu0 0.0
      %1420 = vmatpush1.msra.mxu0 0.0
      %1421 = vmatprep.subr.mxu0 0.0
      %1422 = vmatpush1.msra.mxu0 0.0
      %1423 = vmatprep.subr.mxu0 0.0
      %1424 = vmatpush1.msra.mxu0 0.0
      %1425 = vmatprep.subr.mxu0 0.0
      %1426 = vmatpush1.msra.mxu0 0.0
      %1427 = vmatprep.subr.mxu0 0.0
      %1428 = vmatpush1.msra.mxu0 0.0
      %1429 = vmatprep.subr.mxu0 0.0
      %1430 = vmatpush1.msra.mxu0 0.0
      %1431 = vmatprep.subr.mxu0 0.0
      %1432 = vmatpush1.msra.mxu0 0.0
      %1433 = vmatprep.subr.mxu0 0.0
      %1434 = vmatpush1.msra.mxu0 0.0
      %1435 = vmatprep.subr.mxu0 0.0
      %1436 = vmatpush1.msra.mxu0 0.0
      %1437 = vmatprep.subr.mxu0 0.0
      %1438 = vmatpush1.msra.mxu0 0.0
      %1439 = vmatprep.subr.mxu0 0.0
      %1440 = vmatpush1.msra.mxu0 0.0
      %1441 = vmatprep.subr.mxu0 0.0
      %1442 = vmatpush1.msra.mxu0 0.0
      %1443 = vmatprep.subr.mxu0 0.0
      %1444 = vmatpush1.msra.mxu0 0.0
      %1445 = vmatprep.subr.mxu0 0.0
      %1446 = vmatpush1.msra.mxu0 0.0
      %1447 = vmatprep.subr.mxu0 0.0
      %1448 = vmatpush1.msra.mxu0 0.0
      %1449 = vmatprep.subr.mxu0 0.0
      %1450 = vmatpush1.msra.mxu0 0.0
      %1451 = vmatprep.mubr.f32.mxu0 0.0
      %1452 = vmatmul.mubr.f32.gmra.mrb[0].mxu0 %v1385
      %v1453 = vpop.f32.mrb[0].mxu0
      %v1454 = vadd.f32 0.0, %v1453
      %v1455 = vpop.f32.mrb[0].mxu0
      %1456 = vdwg.mxu0
      %v1458 = vsel %vm792, %v951, 0
      %1460 = vmatprep.subr.mxu0 0.0
      %1461 = vmatpush1.msra.mxu0 %v954
      %1462 = vmatprep.subr.mxu0 0.0
      %1463 = vmatpush1.msra.mxu0 0.0
      %1464 = vmatprep.subr.mxu0 0.0
      %1465 = vmatpush1.msra.mxu0 0.0
      %1466 = vmatprep.subr.mxu0 0.0
      %1467 = vmatpush1.msra.mxu0 0.0
      %1468 = vmatprep.subr.mxu0 0.0
      %1469 = vmatpush1.msra.mxu0 0.0
      %1470 = vmatprep.subr.mxu0 0.0
      %1471 = vmatpush1.msra.mxu0 0.0
      %1472 = vmatprep.subr.mxu0 0.0
      %1473 = vmatpush1.msra.mxu0 0.0
      %1474 = vmatprep.subr.mxu0 0.0
      %1475 = vmatpush1.msra.mxu0 0.0
      %1476 = vmatprep.subr.mxu0 0.0
      %1477 = vmatpush1.msra.mxu0 0.0
      %1478 = vmatprep.subr.mxu0 0.0
      %1479 = vmatpush1.msra.mxu0 0.0
      %1480 = vmatprep.subr.mxu0 0.0
      %1481 = vmatpush1.msra.mxu0 0.0
      %1482 = vmatprep.subr.mxu0 0.0
      %1483 = vmatpush1.msra.mxu0 0.0
      %1484 = vmatprep.subr.mxu0 0.0
      %1485 = vmatpush1.msra.mxu0 0.0
      %1486 = vmatprep.subr.mxu0 0.0
      %1487 = vmatpush1.msra.mxu0 0.0
      %1488 = vmatprep.subr.mxu0 0.0
      %1489 = vmatpush1.msra.mxu0 0.0
      %1490 = vmatprep.subr.mxu0 0.0
      %1491 = vmatpush1.msra.mxu0 0.0
      %1492 = vmatprep.subr.mxu0 0.0
      %1493 = vmatpush1.msra.mxu0 0.0
      %1494 = vmatprep.subr.mxu0 0.0
      %1495 = vmatpush1.msra.mxu0 0.0
      %1496 = vmatprep.subr.mxu0 0.0
      %1497 = vmatpush1.msra.mxu0 0.0
      %1498 = vmatprep.subr.mxu0 0.0
      %1499 = vmatpush1.msra.mxu0 0.0
      %1500 = vmatprep.subr.mxu0 0.0
      %1501 = vmatpush1.msra.mxu0 0.0
      %1502 = vmatprep.subr.mxu0 0.0
      %1503 = vmatpush1.msra.mxu0 0.0
      %1504 = vmatprep.subr.mxu0 0.0
      %1505 = vmatpush1.msra.mxu0 0.0
      %1506 = vmatprep.subr.mxu0 0.0
      %1507 = vmatpush1.msra.mxu0 0.0
      %1508 = vmatprep.subr.mxu0 0.0
      %1509 = vmatpush1.msra.mxu0 0.0
      %1510 = vmatprep.subr.mxu0 0.0
      %1511 = vmatpush1.msra.mxu0 0.0
      %1512 = vmatprep.subr.mxu0 0.0
      %1513 = vmatpush1.msra.mxu0 0.0
      %1514 = vmatprep.subr.mxu0 0.0
      %1515 = vmatpush1.msra.mxu0 0.0
      %1516 = vmatprep.subr.mxu0 0.0
      %1517 = vmatpush1.msra.mxu0 0.0
      %1518 = vmatprep.subr.mxu0 0.0
      %1519 = vmatpush1.msra.mxu0 0.0
      %1520 = vmatprep.subr.mxu0 0.0
      %1521 = vmatpush1.msra.mxu0 0.0
      %1522 = vmatprep.subr.mxu0 0.0
      %1523 = vmatpush1.msra.mxu0 0.0
      %1524 = vmatprep.mubr.f32.mxu0 0.0
      %1525 = vmatmul.mubr.f32.gmra.mrb[0].mxu0 %v1458
      %v1526 = vpop.f32.mrb[0].mxu0
      %v1527 = vadd.f32 %v1454, %v1526
      %v1528 = vpop.f32.mrb[0].mxu0
      %1529 = vdwg.mxu0
      %1530 = vrot.lane.b32.xlu0 %v545, 112
      %v1531 = vpop.permute.xlu0 %1530
      %1532 = vrot.lane.b32.xlu0 %v546, 112
      %v1533 = vpop.permute.xlu0 %1532
      %1534 = vrot.lane.b32.xlu0 %v547, 112
      %v1535 = vpop.permute.xlu0 %1534
      %1536 = vrot.lane.b32.xlu0 %v548, 112
      %v1537 = vpop.permute.xlu0 %1536
      %1542 = vrot.lane.b32.xlu0 %v554, 112
      %v1543 = vpop.permute.xlu0 %1542
      %1545 = vmatprep.subr.mxu0 0.0
      %1546 = vmatpush1.msra.mxu0 %v1531
      %1547 = vmatprep.subr.mxu0 0.0
      %1548 = vmatpush1.msra.mxu0 %v1533
      %1549 = vmatprep.subr.mxu0 0.0
      %1550 = vmatpush1.msra.mxu0 %v1535
      %1551 = vmatprep.subr.mxu0 0.0
      %1552 = vmatpush1.msra.mxu0 %v1537
      %1553 = vmatprep.subr.mxu0 0.0
      %1554 = vmatpush1.msra.mxu0 0.0
      %1555 = vmatprep.subr.mxu0 0.0
      %1556 = vmatpush1.msra.mxu0 0.0
      %1557 = vmatprep.subr.mxu0 0.0
      %1558 = vmatpush1.msra.mxu0 0.0
      %1559 = vmatprep.subr.mxu0 0.0
      %1560 = vmatpush1.msra.mxu0 0.0
      %1561 = vmatprep.subr.mxu0 0.0
      %1562 = vmatpush1.msra.mxu0 0.0
      %1563 = vmatprep.subr.mxu0 0.0
      %1564 = vmatpush1.msra.mxu0 0.0
      %1565 = vmatprep.subr.mxu0 0.0
      %1566 = vmatpush1.msra.mxu0 0.0
      %1567 = vmatprep.subr.mxu0 0.0
      %1568 = vmatpush1.msra.mxu0 0.0
      %1569 = vmatprep.subr.mxu0 0.0
      %1570 = vmatpush1.msra.mxu0 0.0
      %1571 = vmatprep.subr.mxu0 0.0
      %1572 = vmatpush1.msra.mxu0 0.0
      %1573 = vmatprep.subr.mxu0 0.0
      %1574 = vmatpush1.msra.mxu0 0.0
      %1575 = vmatprep.subr.mxu0 0.0
      %1576 = vmatpush1.msra.mxu0 0.0
      %1577 = vmatprep.subr.mxu0 0.0
      %1578 = vmatpush1.msra.mxu0 0.0
      %1579 = vmatprep.subr.mxu0 0.0
      %1580 = vmatpush1.msra.mxu0 0.0
      %1581 = vmatprep.subr.mxu0 0.0
      %1582 = vmatpush1.msra.mxu0 0.0
      %1583 = vmatprep.subr.mxu0 0.0
      %1584 = vmatpush1.msra.mxu0 0.0
      %1585 = vmatprep.subr.mxu0 0.0
      %1586 = vmatpush1.msra.mxu0 0.0
      %1587 = vmatprep.subr.mxu0 0.0
      %1588 = vmatpush1.msra.mxu0 0.0
      %1589 = vmatprep.subr.mxu0 0.0
      %1590 = vmatpush1.msra.mxu0 0.0
      %1591 = vmatprep.subr.mxu0 0.0
      %1592 = vmatpush1.msra.mxu0 0.0
      %1593 = vmatprep.subr.mxu0 0.0
      %1594 = vmatpush1.msra.mxu0 0.0
      %1595 = vmatprep.subr.mxu0 0.0
      %1596 = vmatpush1.msra.mxu0 0.0
      %1597 = vmatprep.subr.mxu0 0.0
      %1598 = vmatpush1.msra.mxu0 0.0
      %1599 = vmatprep.subr.mxu0 0.0
      %1600 = vmatpush1.msra.mxu0 0.0
      %1601 = vmatprep.subr.mxu0 0.0
      %1602 = vmatpush1.msra.mxu0 0.0
      %1603 = vmatprep.subr.mxu0 0.0
      %1604 = vmatpush1.msra.mxu0 0.0
      %1605 = vmatprep.subr.mxu0 0.0
      %1606 = vmatpush1.msra.mxu0 0.0
      %1607 = vmatprep.subr.mxu0 0.0
      %1608 = vmatpush1.msra.mxu0 0.0
      %1609 = vmatprep.mubr.f32.mxu0 0.0
      %1610 = vmatmul.mubr.f32.gmra.mrb[0].mxu0 %v558
      %v1611 = vpop.f32.mrb[0].mxu0
      %v1612 = vadd.f32 %v1543, %v1611
      %v1613 = vpop.f32.mrb[0].mxu0
      %1614 = vdwg.mxu0
      %1615 = vrot.lane.b32.xlu0 %v630, 112
      %v1616 = vpop.permute.xlu0 %1615
      %1617 = vrot.lane.b32.xlu0 %v631, 112
      %v1618 = vpop.permute.xlu0 %1617
      %1619 = vrot.lane.b32.xlu0 %v632, 112
      %v1620 = vpop.permute.xlu0 %1619
      %1621 = vrot.lane.b32.xlu0 %v633, 112
      %v1622 = vpop.permute.xlu0 %1621
      %1627 = vrot.lane.b32.xlu0 %v639, 112
      %v1628 = vpop.permute.xlu0 %1627
      %1630 = vmatprep.subr.mxu0 0.0
      %1631 = vmatpush1.msra.mxu0 %v1616
      %1632 = vmatprep.subr.mxu0 0.0
      %1633 = vmatpush1.msra.mxu0 %v1618
      %1634 = vmatprep.subr.mxu0 0.0
      %1635 = vmatpush1.msra.mxu0 %v1620
      %1636 = vmatprep.subr.mxu0 0.0
      %1637 = vmatpush1.msra.mxu0 %v1622
      %1638 = vmatprep.subr.mxu0 0.0
      %1639 = vmatpush1.msra.mxu0 0.0
      %1640 = vmatprep.subr.mxu0 0.0
      %1641 = vmatpush1.msra.mxu0 0.0
      %1642 = vmatprep.subr.mxu0 0.0
      %1643 = vmatpush1.msra.mxu0 0.0
      %1644 = vmatprep.subr.mxu0 0.0
      %1645 = vmatpush1.msra.mxu0 0.0
      %1646 = vmatprep.subr.mxu0 0.0
      %1647 = vmatpush1.msra.mxu0 0.0
      %1648 = vmatprep.subr.mxu0 0.0
      %1649 = vmatpush1.msra.mxu0 0.0
      %1650 = vmatprep.subr.mxu0 0.0
      %1651 = vmatpush1.msra.mxu0 0.0
      %1652 = vmatprep.subr.mxu0 0.0
      %1653 = vmatpush1.msra.mxu0 0.0
      %1654 = vmatprep.subr.mxu0 0.0
      %1655 = vmatpush1.msra.mxu0 0.0
      %1656 = vmatprep.subr.mxu0 0.0
      %1657 = vmatpush1.msra.mxu0 0.0
      %1658 = vmatprep.subr.mxu0 0.0
      %1659 = vmatpush1.msra.mxu0 0.0
      %1660 = vmatprep.subr.mxu0 0.0
      %1661 = vmatpush1.msra.mxu0 0.0
      %1662 = vmatprep.subr.mxu0 0.0
      %1663 = vmatpush1.msra.mxu0 0.0
      %1664 = vmatprep.subr.mxu0 0.0
      %1665 = vmatpush1.msra.mxu0 0.0
      %1666 = vmatprep.subr.mxu0 0.0
      %1667 = vmatpush1.msra.mxu0 0.0
      %1668 = vmatprep.subr.mxu0 0.0
      %1669 = vmatpush1.msra.mxu0 0.0
      %1670 = vmatprep.subr.mxu0 0.0
      %1671 = vmatpush1.msra.mxu0 0.0
      %1672 = vmatprep.subr.mxu0 0.0
      %1673 = vmatpush1.msra.mxu0 0.0
      %1674 = vmatprep.subr.mxu0 0.0
      %1675 = vmatpush1.msra.mxu0 0.0
      %1676 = vmatprep.subr.mxu0 0.0
      %1677 = vmatpush1.msra.mxu0 0.0
      %1678 = vmatprep.subr.mxu0 0.0
      %1679 = vmatpush1.msra.mxu0 0.0
      %1680 = vmatprep.subr.mxu0 0.0
      %1681 = vmatpush1.msra.mxu0 0.0
      %1682 = vmatprep.subr.mxu0 0.0
      %1683 = vmatpush1.msra.mxu0 0.0
      %1684 = vmatprep.subr.mxu0 0.0
      %1685 = vmatpush1.msra.mxu0 0.0
      %1686 = vmatprep.subr.mxu0 0.0
      %1687 = vmatpush1.msra.mxu0 0.0
      %1688 = vmatprep.subr.mxu0 0.0
      %1689 = vmatpush1.msra.mxu0 0.0
      %1690 = vmatprep.subr.mxu0 0.0
      %1691 = vmatpush1.msra.mxu0 0.0
      %1692 = vmatprep.subr.mxu0 0.0
      %1693 = vmatpush1.msra.mxu0 0.0
      %1694 = vmatprep.mubr.f32.mxu0 0.0
      %1695 = vmatmul.mubr.f32.gmra.mrb[0].mxu0 %v558
      %v1696 = vpop.f32.mrb[0].mxu0
      %v1697 = vadd.f32 %v1628, %v1696
      %v1698 = vpop.f32.mrb[0].mxu0
      %1699 = vdwg.mxu0
      %1700 = vrot.lane.b32.xlu0 %v711, 112
      %v1701 = vpop.permute.xlu0 %1700
      %1702 = vrot.lane.b32.xlu0 %v712, 112
      %v1703 = vpop.permute.xlu0 %1702
      %1704 = vrot.lane.b32.xlu0 %v713, 112
      %v1705 = vpop.permute.xlu0 %1704
      %1706 = vrot.lane.b32.xlu0 %v714, 112
      %v1707 = vpop.permute.xlu0 %1706
      %1712 = vrot.lane.b32.xlu0 %v720, 112
      %v1713 = vpop.permute.xlu0 %1712
      %1715 = vmatprep.subr.mxu0 0.0
      %1716 = vmatpush1.msra.mxu0 %v1701
      %1717 = vmatprep.subr.mxu0 0.0
      %1718 = vmatpush1.msra.mxu0 %v1703
      %1719 = vmatprep.subr.mxu0 0.0
      %1720 = vmatpush1.msra.mxu0 %v1705
      %1721 = vmatprep.subr.mxu0 0.0
      %1722 = vmatpush1.msra.mxu0 %v1707
      %1723 = vmatprep.subr.mxu0 0.0
      %1724 = vmatpush1.msra.mxu0 0.0
      %1725 = vmatprep.subr.mxu0 0.0
      %1726 = vmatpush1.msra.mxu0 0.0
      %1727 = vmatprep.subr.mxu0 0.0
      %1728 = vmatpush1.msra.mxu0 0.0
      %1729 = vmatprep.subr.mxu0 0.0
      %1730 = vmatpush1.msra.mxu0 0.0
      %1731 = vmatprep.subr.mxu0 0.0
      %1732 = vmatpush1.msra.mxu0 0.0
      %1733 = vmatprep.subr.mxu0 0.0
      %1734 = vmatpush1.msra.mxu0 0.0
      %1735 = vmatprep.subr.mxu0 0.0
      %1736 = vmatpush1.msra.mxu0 0.0
      %1737 = vmatprep.subr.mxu0 0.0
      %1738 = vmatpush1.msra.mxu0 0.0
      %1739 = vmatprep.subr.mxu0 0.0
      %1740 = vmatpush1.msra.mxu0 0.0
      %1741 = vmatprep.subr.mxu0 0.0
      %1742 = vmatpush1.msra.mxu0 0.0
      %1743 = vmatprep.subr.mxu0 0.0
      %1744 = vmatpush1.msra.mxu0 0.0
      %1745 = vmatprep.subr.mxu0 0.0
      %1746 = vmatpush1.msra.mxu0 0.0
      %1747 = vmatprep.subr.mxu0 0.0
      %1748 = vmatpush1.msra.mxu0 0.0
      %1749 = vmatprep.subr.mxu0 0.0
      %1750 = vmatpush1.msra.mxu0 0.0
      %1751 = vmatprep.subr.mxu0 0.0
      %1752 = vmatpush1.msra.mxu0 0.0
      %1753 = vmatprep.subr.mxu0 0.0
      %1754 = vmatpush1.msra.mxu0 0.0
      %1755 = vmatprep.subr.mxu0 0.0
      %1756 = vmatpush1.msra.mxu0 0.0
      %1757 = vmatprep.subr.mxu0 0.0
      %1758 = vmatpush1.msra.mxu0 0.0
      %1759 = vmatprep.subr.mxu0 0.0
      %1760 = vmatpush1.msra.mxu0 0.0
      %1761 = vmatprep.subr.mxu0 0.0
      %1762 = vmatpush1.msra.mxu0 0.0
      %1763 = vmatprep.subr.mxu0 0.0
      %1764 = vmatpush1.msra.mxu0 0.0
      %1765 = vmatprep.subr.mxu0 0.0
      %1766 = vmatpush1.msra.mxu0 0.0
      %1767 = vmatprep.subr.mxu0 0.0
      %1768 = vmatpush1.msra.mxu0 0.0
      %1769 = vmatprep.subr.mxu0 0.0
      %1770 = vmatpush1.msra.mxu0 0.0
      %1771 = vmatprep.subr.mxu0 0.0
      %1772 = vmatpush1.msra.mxu0 0.0
      %1773 = vmatprep.subr.mxu0 0.0
      %1774 = vmatpush1.msra.mxu0 0.0
      %1775 = vmatprep.subr.mxu0 0.0
      %1776 = vmatpush1.msra.mxu0 0.0
      %1777 = vmatprep.subr.mxu0 0.0
      %1778 = vmatpush1.msra.mxu0 0.0
      %1779 = vmatprep.mubr.f32.mxu0 0.0
      %1780 = vmatmul.mubr.f32.gmra.mrb[0].mxu0 %v558
      %v1781 = vpop.f32.mrb[0].mxu0
      %v1782 = vadd.f32 %v1713, %v1781
      %v1783 = vpop.f32.mrb[0].mxu0
      %1784 = vdwg.mxu0
      %v1786 = vsel %vm792, %v1612, 0
      %v1789 = vsel %vm792, %v1697, 0
      %1791 = vmatprep.subr.mxu0 0.0
      %1792 = vmatpush1.xpose.msra.mxu0 %v1789
      %1793 = vmatprep.subr.mxu0 0.0
      %1794 = vmatpush1.xpose.msra.mxu0 0.0
      %1795 = vmatprep.subr.mxu0 0.0
      %1796 = vmatpush1.xpose.msra.mxu0 0.0
      %1797 = vmatprep.subr.mxu0 0.0
      %1798 = vmatpush1.xpose.msra.mxu0 0.0
      %1799 = vmatprep.subr.mxu0 0.0
      %1800 = vmatpush1.xpose.msra.mxu0 0.0
      %1801 = vmatprep.subr.mxu0 0.0
      %1802 = vmatpush1.xpose.msra.mxu0 0.0
      %1803 = vmatprep.subr.mxu0 0.0
      %1804 = vmatpush1.xpose.msra.mxu0 0.0
      %1805 = vmatprep.subr.mxu0 0.0
      %1806 = vmatpush1.xpose.msra.mxu0 0.0
      %1807 = vmatprep.subr.mxu0 0.0
      %1808 = vmatpush1.xpose.msra.mxu0 0.0
      %1809 = vmatprep.subr.mxu0 0.0
      %1810 = vmatpush1.xpose.msra.mxu0 0.0
      %1811 = vmatprep.subr.mxu0 0.0
      %1812 = vmatpush1.xpose.msra.mxu0 0.0
      %1813 = vmatprep.subr.mxu0 0.0
      %1814 = vmatpush1.xpose.msra.mxu0 0.0
      %1815 = vmatprep.subr.mxu0 0.0
      %1816 = vmatpush1.xpose.msra.mxu0 0.0
      %1817 = vmatprep.subr.mxu0 0.0
      %1818 = vmatpush1.xpose.msra.mxu0 0.0
      %1819 = vmatprep.subr.mxu0 0.0
      %1820 = vmatpush1.xpose.msra.mxu0 0.0
      %1821 = vmatprep.subr.mxu0 0.0
      %1822 = vmatpush1.xpose.msra.mxu0 0.0
      %1823 = vmatprep.subr.mxu0 0.0
      %1824 = vmatpush1.xpose.msra.mxu0 0.0
      %1825 = vmatprep.subr.mxu0 0.0
      %1826 = vmatpush1.xpose.msra.mxu0 0.0
      %1827 = vmatprep.subr.mxu0 0.0
      %1828 = vmatpush1.xpose.msra.mxu0 0.0
      %1829 = vmatprep.subr.mxu0 0.0
      %1830 = vmatpush1.xpose.msra.mxu0 0.0
      %1831 = vmatprep.subr.mxu0 0.0
      %1832 = vmatpush1.xpose.msra.mxu0 0.0
      %1833 = vmatprep.subr.mxu0 0.0
      %1834 = vmatpush1.xpose.msra.mxu0 0.0
      %1835 = vmatprep.subr.mxu0 0.0
      %1836 = vmatpush1.xpose.msra.mxu0 0.0
      %1837 = vmatprep.subr.mxu0 0.0
      %1838 = vmatpush1.xpose.msra.mxu0 0.0
      %1839 = vmatprep.subr.mxu0 0.0
      %1840 = vmatpush1.xpose.msra.mxu0 0.0
      %1841 = vmatprep.subr.mxu0 0.0
      %1842 = vmatpush1.xpose.msra.mxu0 0.0
      %1843 = vmatprep.subr.mxu0 0.0
      %1844 = vmatpush1.xpose.msra.mxu0 0.0
      %1845 = vmatprep.subr.mxu0 0.0
      %1846 = vmatpush1.xpose.msra.mxu0 0.0
      %1847 = vmatprep.subr.mxu0 0.0
      %1848 = vmatpush1.xpose.msra.mxu0 0.0
      %1849 = vmatprep.subr.mxu0 0.0
      %1850 = vmatpush1.xpose.msra.mxu0 0.0
      %1851 = vmatprep.subr.mxu0 0.0
      %1852 = vmatpush1.xpose.msra.mxu0 0.0
      %1853 = vmatprep.subr.mxu0 0.0
      %1854 = vmatpush1.xpose.msra.mxu0 0.0
      %1855 = vmatprep.mubr.f32.mxu0 0.0
      %1856 = vmatmul.mubr.f32.gmra.mrb[0].mxu0 %v1786
      %v1857 = vpop.f32.mrb[0].mxu0
      %v1858 = vadd.f32 0.0, %v1857
      %v1859 = vpop.f32.mrb[0].mxu0
      %1860 = vdwg.mxu0
      %v1861 = vmul.f32 %v1858, 0.35355338
      %v1862 = vsel %vm792, %v1861, -inf
      %1863 = vmax.xlane.f32.xlu0 %v1862
      %v1864 = vpop.xlane.xlu0 %1863
      %v1865 = vsub.f32 %v1861, %v1864
      %v1866 = vmul.f32 %v1865, 1.442695
      %v1867 = vpow.pop %v1866
      %v1868 = vsel %vm792, %v1867, 0.0
      %1869 = vadd.xlane.f32.xlu0 %v1868
      %v1870 = vpop.xlane.xlu0 %1869
      %v1871 = vrcp.pop %v1870
      %v1872 = vmul.f32 %v1867, %v1871
      %v1874 = vsel %vm792, %v1872, 0
      %1876 = vmatprep.subr.mxu0 0.0
      %1877 = vmatpush1.msra.mxu0 %v1782
      %1878 = vmatprep.subr.mxu0 0.0
      %1879 = vmatpush1.msra.mxu0 0.0
      %1880 = vmatprep.subr.mxu0 0.0
      %1881 = vmatpush1.msra.mxu0 0.0
      %1882 = vmatprep.subr.mxu0 0.0
      %1883 = vmatpush1.msra.mxu0 0.0
      %1884 = vmatprep.subr.mxu0 0.0
      %1885 = vmatpush1.msra.mxu0 0.0
      %1886 = vmatprep.subr.mxu0 0.0
      %1887 = vmatpush1.msra.mxu0 0.0
      %1888 = vmatprep.subr.mxu0 0.0
      %1889 = vmatpush1.msra.mxu0 0.0
      %1890 = vmatprep.subr.mxu0 0.0
      %1891 = vmatpush1.msra.mxu0 0.0
      %1892 = vmatprep.subr.mxu0 0.0
      %1893 = vmatpush1.msra.mxu0 0.0
      %1894 = vmatprep.subr.mxu0 0.0
      %1895 = vmatpush1.msra.mxu0 0.0
      %1896 = vmatprep.subr.mxu0 0.0
      %1897 = vmatpush1.msra.mxu0 0.0
      %1898 = vmatprep.subr.mxu0 0.0
      %1899 = vmatpush1.msra.mxu0 0.0
      %1900 = vmatprep.subr.mxu0 0.0
      %1901 = vmatpush1.msra.mxu0 0.0
      %1902 = vmatprep.subr.mxu0 0.0
      %1903 = vmatpush1.msra.mxu0 0.0
      %1904 = vmatprep.subr.mxu0 0.0
      %1905 = vmatpush1.msra.mxu0 0.0
      %1906 = vmatprep.subr.mxu0 0.0
      %1907 = vmatpush1.msra.mxu0 0.0
      %1908 = vmatprep.subr.mxu0 0.0
      %1909 = vmatpush1.msra.mxu0 0.0
      %1910 = vmatprep.subr.mxu0 0.0
      %1911 = vmatpush1.msra.mxu0 0.0
      %1912 = vmatprep.subr.mxu0 0.0
      %1913 = vmatpush1.msra.mxu0 0.0
      %1914 = vmatprep.subr.mxu0 0.0
      %1915 = vmatpush1.msra.mxu0 0.0
      %1916 = vmatprep.subr.mxu0 0.0
      %1917 = vmatpush1.msra.mxu0 0.0
      %1918 = vmatprep.subr.mxu0 0.0
      %1919 = vmatpush1.msra.mxu0 0.0
      %1920 = vmatprep.subr.mxu0 0.0
      %1921 = vmatpush1.msra.mxu0 0.0
      %1922 = vmatprep.subr.mxu0 0.0
      %1923 = vmatpush1.msra.mxu0 0.0
      %1924 = vmatprep.subr.mxu0 0.0
      %1925 = vmatpush1.msra.mxu0 0.0
      %1926 = vmatprep.subr.mxu0 0.0
      %1927 = vmatpush1.msra.mxu0 0.0
      %1928 = vmatprep.subr.mxu0 0.0
      %1929 = vmatpush1.msra.mxu0 0.0
      %1930 = vmatprep.subr.mxu0 0.0
      %1931 = vmatpush1.msra.mxu0 0.0
      %1932 = vmatprep.subr.mxu0 0.0
      %1933 = vmatpush1.msra.mxu0 0.0
      %1934 = vmatprep.subr.mxu0 0.0
      %1935 = vmatpush1.msra.mxu0 0.0
      %1936 = vmatprep.subr.mxu0 0.0
      %1937 = vmatpush1.msra.mxu0 0.0
      %1938 = vmatprep.subr.mxu0 0.0
      %1939 = vmatpush1.msra.mxu0 0.0
      %1940 = vmatprep.mubr.f32.mxu0 0.0
      %1941 = vmatmul.mubr.f32.gmra.mrb[0].mxu0 %v1874
      %v1942 = vpop.f32.mrb[0].mxu0
      %v1943 = vadd.f32 0.0, %v1942
      %v1944 = vpop.f32.mrb[0].mxu0
      %1945 = vdwg.mxu0
      %v1946 = vld [vmem:[%s7 + $0x10] sm:$0xff]
      %v1948 = vsel %vm792, %v1943, 0
      %1950 = vmatprep.subr.mxu0 0.0
      %1951 = vmatpush1.msra.mxu0 %v1946
      %1952 = vmatprep.subr.mxu0 0.0
      %1953 = vmatpush1.msra.mxu0 0.0
      %1954 = vmatprep.subr.mxu0 0.0
      %1955 = vmatpush1.msra.mxu0 0.0
      %1956 = vmatprep.subr.mxu0 0.0
      %1957 = vmatpush1.msra.mxu0 0.0
      %1958 = vmatprep.subr.mxu0 0.0
      %1959 = vmatpush1.msra.mxu0 0.0
      %1960 = vmatprep.subr.mxu0 0.0
      %1961 = vmatpush1.msra.mxu0 0.0
      %1962 = vmatprep.subr.mxu0 0.0
      %1963 = vmatpush1.msra.mxu0 0.0
      %1964 = vmatprep.subr.mxu0 0.0
      %1965 = vmatpush1.msra.mxu0 0.0
      %1966 = vmatprep.subr.mxu0 0.0
      %1967 = vmatpush1.msra.mxu0 0.0
      %1968 = vmatprep.subr.mxu0 0.0
      %1969 = vmatpush1.msra.mxu0 0.0
      %1970 = vmatprep.subr.mxu0 0.0
      %1971 = vmatpush1.msra.mxu0 0.0
      %1972 = vmatprep.subr.mxu0 0.0
      %1973 = vmatpush1.msra.mxu0 0.0
      %1974 = vmatprep.subr.mxu0 0.0
      %1975 = vmatpush1.msra.mxu0 0.0
      %1976 = vmatprep.subr.mxu0 0.0
      %1977 = vmatpush1.msra.mxu0 0.0
      %1978 = vmatprep.subr.mxu0 0.0
      %1979 = vmatpush1.msra.mxu0 0.0
      %1980 = vmatprep.subr.mxu0 0.0
      %1981 = vmatpush1.msra.mxu0 0.0
      %1982 = vmatprep.subr.mxu0 0.0
      %1983 = vmatpush1.msra.mxu0 0.0
      %1984 = vmatprep.subr.mxu0 0.0
      %1985 = vmatpush1.msra.mxu0 0.0
      %1986 = vmatprep.subr.mxu0 0.0
      %1987 = vmatpush1.msra.mxu0 0.0
      %1988 = vmatprep.subr.mxu0 0.0
      %1989 = vmatpush1.msra.mxu0 0.0
      %1990 = vmatprep.subr.mxu0 0.0
      %1991 = vmatpush1.msra.mxu0 0.0
      %1992 = vmatprep.subr.mxu0 0.0
      %1993 = vmatpush1.msra.mxu0 0.0
      %1994 = vmatprep.subr.mxu0 0.0
      %1995 = vmatpush1.msra.mxu0 0.0
      %1996 = vmatprep.subr.mxu0 0.0
      %1997 = vmatpush1.msra.mxu0 0.0
      %1998 = vmatprep.subr.mxu0 0.0
      %1999 = vmatpush1.msra.mxu0 0.0
      %2000 = vmatprep.subr.mxu0 0.0
      %2001 = vmatpush1.msra.mxu0 0.0
      %2002 = vmatprep.subr.mxu0 0.0
      %2003 = vmatpush1.msra.mxu0 0.0
      %2004 = vmatprep.subr.mxu0 0.0
      %2005 = vmatpush1.msra.mxu0 0.0
      %2006 = vmatprep.subr.mxu0 0.0
      %2007 = vmatpush1.msra.mxu0 0.0
      %2008 = vmatprep.subr.mxu0 0.0
      %2009 = vmatpush1.msra.mxu0 0.0
      %2010 = vmatprep.subr.mxu0 0.0
      %2011 = vmatpush1.msra.mxu0 0.0
      %2012 = vmatprep.subr.mxu0 0.0
      %2013 = vmatpush1.msra.mxu0 0.0
      %2014 = vmatprep.mubr.f32.mxu0 0.0
      %2015 = vmatmul.mubr.f32.gmra.mrb[0].mxu0 %v1948
      %v2016 = vpop.f32.mrb[0].mxu0
      %v2017 = vadd.f32 0.0, %v2016
      %v2018 = vpop.f32.mrb[0].mxu0
      %2019 = vdwg.mxu0
      %v2020 = vadd.f32 %v1527, %v2017
      %2021 = vrot.lane.b32.xlu0 %v545, 104
      %v2022 = vpop.permute.xlu0 %2021
      %2023 = vrot.lane.b32.xlu0 %v546, 104
      %v2024 = vpop.permute.xlu0 %2023
      %2025 = vrot.lane.b32.xlu0 %v547, 104
      %v2026 = vpop.permute.xlu0 %2025
      %2027 = vrot.lane.b32.xlu0 %v548, 104
      %v2028 = vpop.permute.xlu0 %2027
      %2033 = vrot.lane.b32.xlu0 %v554, 104
      %v2034 = vpop.permute.xlu0 %2033
      %2036 = vmatprep.subr.mxu0 0.0
      %2037 = vmatpush1.msra.mxu0 %v2022
      %2038 = vmatprep.subr.mxu0 0.0
      %2039 = vmatpush1.msra.mxu0 %v2024
      %2040 = vmatprep.subr.mxu0 0.0
      %2041 = vmatpush1.msra.mxu0 %v2026
      %2042 = vmatprep.subr.mxu0 0.0
      %2043 = vmatpush1.msra.mxu0 %v2028
      %2044 = vmatprep.subr.mxu0 0.0
      %2045 = vmatpush1.msra.mxu0 0.0
      %2046 = vmatprep.subr.mxu0 0.0
      %2047 = vmatpush1.msra.mxu0 0.0
      %2048 = vmatprep.subr.mxu0 0.0
      %2049 = vmatpush1.msra.mxu0 0.0
      %2050 = vmatprep.subr.mxu0 0.0
      %2051 = vmatpush1.msra.mxu0 0.0
      %2052 = vmatprep.subr.mxu0 0.0
      %2053 = vmatpush1.msra.mxu0 0.0
      %2054 = vmatprep.subr.mxu0 0.0
      %2055 = vmatpush1.msra.mxu0 0.0
      %2056 = vmatprep.subr.mxu0 0.0
      %2057 = vmatpush1.msra.mxu0 0.0
      %2058 = vmatprep.subr.mxu0 0.0
      %2059 = vmatpush1.msra.mxu0 0.0
      %2060 = vmatprep.subr.mxu0 0.0
      %2061 = vmatpush1.msra.mxu0 0.0
      %2062 = vmatprep.subr.mxu0 0.0
      %2063 = vmatpush1.msra.mxu0 0.0
      %2064 = vmatprep.subr.mxu0 0.0
      %2065 = vmatpush1.msra.mxu0 0.0
      %2066 = vmatprep.subr.mxu0 0.0
      %2067 = vmatpush1.msra.mxu0 0.0
      %2068 = vmatprep.subr.mxu0 0.0
      %2069 = vmatpush1.msra.mxu0 0.0
      %2070 = vmatprep.subr.mxu0 0.0
      %2071 = vmatpush1.msra.mxu0 0.0
      %2072 = vmatprep.subr.mxu0 0.0
      %2073 = vmatpush1.msra.mxu0 0.0
      %2074 = vmatprep.subr.mxu0 0.0
      %2075 = vmatpush1.msra.mxu0 0.0
      %2076 = vmatprep.subr.mxu0 0.0
      %2077 = vmatpush1.msra.mxu0 0.0
      %2078 = vmatprep.subr.mxu0 0.0
      %2079 = vmatpush1.msra.mxu0 0.0
      %2080 = vmatprep.subr.mxu0 0.0
      %2081 = vmatpush1.msra.mxu0 0.0
      %2082 = vmatprep.subr.mxu0 0.0
      %2083 = vmatpush1.msra.mxu0 0.0
      %2084 = vmatprep.subr.mxu0 0.0
      %2085 = vmatpush1.msra.mxu0 0.0
      %2086 = vmatprep.subr.mxu0 0.0
      %2087 = vmatpush1.msra.mxu0 0.0
      %2088 = vmatprep.subr.mxu0 0.0
      %2089 = vmatpush1.msra.mxu0 0.0
      %2090 = vmatprep.subr.mxu0 0.0
      %2091 = vmatpush1.msra.mxu0 0.0
      %2092 = vmatprep.subr.mxu0 0.0
      %2093 = vmatpush1.msra.mxu0 0.0
      %2094 = vmatprep.subr.mxu0 0.0
      %2095 = vmatpush1.msra.mxu0 0.0
      %2096 = vmatprep.subr.mxu0 0.0
      %2097 = vmatpush1.msra.mxu0 0.0
      %2098 = vmatprep.subr.mxu0 0.0
      %2099 = vmatpush1.msra.mxu0 0.0
      %2100 = vmatprep.mubr.f32.mxu0 0.0
      %2101 = vmatmul.mubr.f32.gmra.mrb[0].mxu0 %v558
      %v2102 = vpop.f32.mrb[0].mxu0
      %v2103 = vadd.f32 %v2034, %v2102
      %v2104 = vpop.f32.mrb[0].mxu0
      %2105 = vdwg.mxu0
      %2106 = vrot.lane.b32.xlu0 %v630, 104
      %v2107 = vpop.permute.xlu0 %2106
      %2108 = vrot.lane.b32.xlu0 %v631, 104
      %v2109 = vpop.permute.xlu0 %2108
      %2110 = vrot.lane.b32.xlu0 %v632, 104
      %v2111 = vpop.permute.xlu0 %2110
      %2112 = vrot.lane.b32.xlu0 %v633, 104
      %v2113 = vpop.permute.xlu0 %2112
      %2118 = vrot.lane.b32.xlu0 %v639, 104
      %v2119 = vpop.permute.xlu0 %2118
      %2121 = vmatprep.subr.mxu0 0.0
      %2122 = vmatpush1.msra.mxu0 %v2107
      %2123 = vmatprep.subr.mxu0 0.0
      %2124 = vmatpush1.msra.mxu0 %v2109
      %2125 = vmatprep.subr.mxu0 0.0
      %2126 = vmatpush1.msra.mxu0 %v2111
      %2127 = vmatprep.subr.mxu0 0.0
      %2128 = vmatpush1.msra.mxu0 %v2113
      %2129 = vmatprep.subr.mxu0 0.0
      %2130 = vmatpush1.msra.mxu0 0.0
      %2131 = vmatprep.subr.mxu0 0.0
      %2132 = vmatpush1.msra.mxu0 0.0
      %2133 = vmatprep.subr.mxu0 0.0
      %2134 = vmatpush1.msra.mxu0 0.0
      %2135 = vmatprep.subr.mxu0 0.0
      %2136 = vmatpush1.msra.mxu0 0.0
      %2137 = vmatprep.subr.mxu0 0.0
      %2138 = vmatpush1.msra.mxu0 0.0
      %2139 = vmatprep.subr.mxu0 0.0
      %2140 = vmatpush1.msra.mxu0 0.0
      %2141 = vmatprep.subr.mxu0 0.0
      %2142 = vmatpush1.msra.mxu0 0.0
      %2143 = vmatprep.subr.mxu0 0.0
      %2144 = vmatpush1.msra.mxu0 0.0
      %2145 = vmatprep.subr.mxu0 0.0
      %2146 = vmatpush1.msra.mxu0 0.0
      %2147 = vmatprep.subr.mxu0 0.0
      %2148 = vmatpush1.msra.mxu0 0.0
      %2149 = vmatprep.subr.mxu0 0.0
      %2150 = vmatpush1.msra.mxu0 0.0
      %2151 = vmatprep.subr.mxu0 0.0
      %2152 = vmatpush1.msra.mxu0 0.0
      %2153 = vmatprep.subr.mxu0 0.0
      %2154 = vmatpush1.msra.mxu0 0.0
      %2155 = vmatprep.subr.mxu0 0.0
      %2156 = vmatpush1.msra.mxu0 0.0
      %2157 = vmatprep.subr.mxu0 0.0
      %2158 = vmatpush1.msra.mxu0 0.0
      %2159 = vmatprep.subr.mxu0 0.0
      %2160 = vmatpush1.msra.mxu0 0.0
      %2161 = vmatprep.subr.mxu0 0.0
      %2162 = vmatpush1.msra.mxu0 0.0
      %2163 = vmatprep.subr.mxu0 0.0
      %2164 = vmatpush1.msra.mxu0 0.0
      %2165 = vmatprep.subr.mxu0 0.0
      %2166 = vmatpush1.msra.mxu0 0.0
      %2167 = vmatprep.subr.mxu0 0.0
      %2168 = vmatpush1.msra.mxu0 0.0
      %2169 = vmatprep.subr.mxu0 0.0
      %2170 = vmatpush1.msra.mxu0 0.0
      %2171 = vmatprep.subr.mxu0 0.0
      %2172 = vmatpush1.msra.mxu0 0.0
      %2173 = vmatprep.subr.mxu0 0.0
      %2174 = vmatpush1.msra.mxu0 0.0
      %2175 = vmatprep.subr.mxu0 0.0
      %2176 = vmatpush1.msra.mxu0 0.0
      %2177 = vmatprep.subr.mxu0 0.0
      %2178 = vmatpush1.msra.mxu0 0.0
      %2179 = vmatprep.subr.mxu0 0.0
      %2180 = vmatpush1.msra.mxu0 0.0
      %2181 = vmatprep.subr.mxu0 0.0
      %2182 = vmatpush1.msra.mxu0 0.0
      %2183 = vmatprep.subr.mxu0 0.0
      %2184 = vmatpush1.msra.mxu0 0.0
      %2185 = vmatprep.mubr.f32.mxu0 0.0
      %2186 = vmatmul.mubr.f32.gmra.mrb[0].mxu0 %v558
      %v2187 = vpop.f32.mrb[0].mxu0
      %v2188 = vadd.f32 %v2119, %v2187
      %v2189 = vpop.f32.mrb[0].mxu0
      %2190 = vdwg.mxu0
      %2191 = vrot.lane.b32.xlu0 %v711, 104
      %v2192 = vpop.permute.xlu0 %2191
      %2193 = vrot.lane.b32.xlu0 %v712, 104
      %v2194 = vpop.permute.xlu0 %2193
      %2195 = vrot.lane.b32.xlu0 %v713, 104
      %v2196 = vpop.permute.xlu0 %2195
      %2197 = vrot.lane.b32.xlu0 %v714, 104
      %v2198 = vpop.permute.xlu0 %2197
      %2203 = vrot.lane.b32.xlu0 %v720, 104
      %v2204 = vpop.permute.xlu0 %2203
      %2206 = vmatprep.subr.mxu0 0.0
      %2207 = vmatpush1.msra.mxu0 %v2192
      %2208 = vmatprep.subr.mxu0 0.0
      %2209 = vmatpush1.msra.mxu0 %v2194
      %2210 = vmatprep.subr.mxu0 0.0
      %2211 = vmatpush1.msra.mxu0 %v2196
      %2212 = vmatprep.subr.mxu0 0.0
      %2213 = vmatpush1.msra.mxu0 %v2198
      %2214 = vmatprep.subr.mxu0 0.0
      %2215 = vmatpush1.msra.mxu0 0.0
      %2216 = vmatprep.subr.mxu0 0.0
      %2217 = vmatpush1.msra.mxu0 0.0
      %2218 = vmatprep.subr.mxu0 0.0
      %2219 = vmatpush1.msra.mxu0 0.0
      %2220 = vmatprep.subr.mxu0 0.0
      %2221 = vmatpush1.msra.mxu0 0.0
      %2222 = vmatprep.subr.mxu0 0.0
      %2223 = vmatpush1.msra.mxu0 0.0
      %2224 = vmatprep.subr.mxu0 0.0
      %2225 = vmatpush1.msra.mxu0 0.0
      %2226 = vmatprep.subr.mxu0 0.0
      %2227 = vmatpush1.msra.mxu0 0.0
      %2228 = vmatprep.subr.mxu0 0.0
      %2229 = vmatpush1.msra.mxu0 0.0
      %2230 = vmatprep.subr.mxu0 0.0
      %2231 = vmatpush1.msra.mxu0 0.0
      %2232 = vmatprep.subr.mxu0 0.0
      %2233 = vmatpush1.msra.mxu0 0.0
      %2234 = vmatprep.subr.mxu0 0.0
      %2235 = vmatpush1.msra.mxu0 0.0
      %2236 = vmatprep.subr.mxu0 0.0
      %2237 = vmatpush1.msra.mxu0 0.0
      %2238 = vmatprep.subr.mxu0 0.0
      %2239 = vmatpush1.msra.mxu0 0.0
      %2240 = vmatprep.subr.mxu0 0.0
      %2241 = vmatpush1.msra.mxu0 0.0
      %2242 = vmatprep.subr.mxu0 0.0
      %2243 = vmatpush1.msra.mxu0 0.0
      %2244 = vmatprep.subr.mxu0 0.0
      %2245 = vmatpush1.msra.mxu0 0.0
      %2246 = vmatprep.subr.mxu0 0.0
      %2247 = vmatpush1.msra.mxu0 0.0
      %2248 = vmatprep.subr.mxu0 0.0
      %2249 = vmatpush1.msra.mxu0 0.0
      %2250 = vmatprep.subr.mxu0 0.0
      %2251 = vmatpush1.msra.mxu0 0.0
      %2252 = vmatprep.subr.mxu0 0.0
      %2253 = vmatpush1.msra.mxu0 0.0
      %2254 = vmatprep.subr.mxu0 0.0
      %2255 = vmatpush1.msra.mxu0 0.0
      %2256 = vmatprep.subr.mxu0 0.0
      %2257 = vmatpush1.msra.mxu0 0.0
      %2258 = vmatprep.subr.mxu0 0.0
      %2259 = vmatpush1.msra.mxu0 0.0
      %2260 = vmatprep.subr.mxu0 0.0
      %2261 = vmatpush1.msra.mxu0 0.0
      %2262 = vmatprep.subr.mxu0 0.0
      %2263 = vmatpush1.msra.mxu0 0.0
      %2264 = vmatprep.subr.mxu0 0.0
      %2265 = vmatpush1.msra.mxu0 0.0
      %2266 = vmatprep.subr.mxu0 0.0
      %2267 = vmatpush1.msra.mxu0 0.0
      %2268 = vmatprep.subr.mxu0 0.0
      %2269 = vmatpush1.msra.mxu0 0.0
      %2270 = vmatprep.mubr.f32.mxu0 0.0
      %2271 = vmatmul.mubr.f32.gmra.mrb[0].mxu0 %v558
      %v2272 = vpop.f32.mrb[0].mxu0
      %v2273 = vadd.f32 %v2204, %v2272
      %v2274 = vpop.f32.mrb[0].mxu0
      %2275 = vdwg.mxu0
      %v2277 = vsel %vm792, %v2103, 0
      %v2280 = vsel %vm792, %v2188, 0
      %2282 = vmatprep.subr.mxu0 0.0
      %2283 = vmatpush1.xpose.msra.mxu0 %v2280
      %2284 = vmatprep.subr.mxu0 0.0
      %2285 = vmatpush1.xpose.msra.mxu0 0.0
      %2286 = vmatprep.subr.mxu0 0.0
      %2287 = vmatpush1.xpose.msra.mxu0 0.0
      %2288 = vmatprep.subr.mxu0 0.0
      %2289 = vmatpush1.xpose.msra.mxu0 0.0
      %2290 = vmatprep.subr.mxu0 0.0
      %2291 = vmatpush1.xpose.msra.mxu0 0.0
      %2292 = vmatprep.subr.mxu0 0.0
      %2293 = vmatpush1.xpose.msra.mxu0 0.0
      %2294 = vmatprep.subr.mxu0 0.0
      %2295 = vmatpush1.xpose.msra.mxu0 0.0
      %2296 = vmatprep.subr.mxu0 0.0
      %2297 = vmatpush1.xpose.msra.mxu0 0.0
      %2298 = vmatprep.subr.mxu0 0.0
      %2299 = vmatpush1.xpose.msra.mxu0 0.0
      %2300 = vmatprep.subr.mxu0 0.0
      %2301 = vmatpush1.xpose.msra.mxu0 0.0
      %2302 = vmatprep.subr.mxu0 0.0
      %2303 = vmatpush1.xpose.msra.mxu0 0.0
      %2304 = vmatprep.subr.mxu0 0.0
      %2305 = vmatpush1.xpose.msra.mxu0 0.0
      %2306 = vmatprep.subr.mxu0 0.0
      %2307 = vmatpush1.xpose.msra.mxu0 0.0
      %2308 = vmatprep.subr.mxu0 0.0
      %2309 = vmatpush1.xpose.msra.mxu0 0.0
      %2310 = vmatprep.subr.mxu0 0.0
      %2311 = vmatpush1.xpose.msra.mxu0 0.0
      %2312 = vmatprep.subr.mxu0 0.0
      %2313 = vmatpush1.xpose.msra.mxu0 0.0
      %2314 = vmatprep.subr.mxu0 0.0
      %2315 = vmatpush1.xpose.msra.mxu0 0.0
      %2316 = vmatprep.subr.mxu0 0.0
      %2317 = vmatpush1.xpose.msra.mxu0 0.0
      %2318 = vmatprep.subr.mxu0 0.0
      %2319 = vmatpush1.xpose.msra.mxu0 0.0
      %2320 = vmatprep.subr.mxu0 0.0
      %2321 = vmatpush1.xpose.msra.mxu0 0.0
      %2322 = vmatprep.subr.mxu0 0.0
      %2323 = vmatpush1.xpose.msra.mxu0 0.0
      %2324 = vmatprep.subr.mxu0 0.0
      %2325 = vmatpush1.xpose.msra.mxu0 0.0
      %2326 = vmatprep.subr.mxu0 0.0
      %2327 = vmatpush1.xpose.msra.mxu0 0.0
      %2328 = vmatprep.subr.mxu0 0.0
      %2329 = vmatpush1.xpose.msra.mxu0 0.0
      %2330 = vmatprep.subr.mxu0 0.0
      %2331 = vmatpush1.xpose.msra.mxu0 0.0
      %2332 = vmatprep.subr.mxu0 0.0
      %2333 = vmatpush1.xpose.msra.mxu0 0.0
      %2334 = vmatprep.subr.mxu0 0.0
      %2335 = vmatpush1.xpose.msra.mxu0 0.0
      %2336 = vmatprep.subr.mxu0 0.0
      %2337 = vmatpush1.xpose.msra.mxu0 0.0
      %2338 = vmatprep.subr.mxu0 0.0
      %2339 = vmatpush1.xpose.msra.mxu0 0.0
      %2340 = vmatprep.subr.mxu0 0.0
      %2341 = vmatpush1.xpose.msra.mxu0 0.0
      %2342 = vmatprep.subr.mxu0 0.0
      %2343 = vmatpush1.xpose.msra.mxu0 0.0
      %2344 = vmatprep.subr.mxu0 0.0
      %2345 = vmatpush1.xpose.msra.mxu0 0.0
      %2346 = vmatprep.mubr.f32.mxu0 0.0
      %2347 = vmatmul.mubr.f32.gmra.mrb[0].mxu0 %v2277
      %v2348 = vpop.f32.mrb[0].mxu0
      %v2349 = vadd.f32 0.0, %v2348
      %v2350 = vpop.f32.mrb[0].mxu0
      %2351 = vdwg.mxu0
      %v2352 = vmul.f32 %v2349, 0.35355338
      %v2353 = vsel %vm792, %v2352, -inf
      %2354 = vmax.xlane.f32.xlu0 %v2353
      %v2355 = vpop.xlane.xlu0 %2354
      %v2356 = vsub.f32 %v2352, %v2355
      %v2357 = vmul.f32 %v2356, 1.442695
      %v2358 = vpow.pop %v2357
      %v2359 = vsel %vm792, %v2358, 0.0
      %2360 = vadd.xlane.f32.xlu0 %v2359
      %v2361 = vpop.xlane.xlu0 %2360
      %v2362 = vrcp.pop %v2361
      %v2363 = vmul.f32 %v2358, %v2362
      %v2365 = vsel %vm792, %v2363, 0
      %2367 = vmatprep.subr.mxu0 0.0
      %2368 = vmatpush1.msra.mxu0 %v2273
      %2369 = vmatprep.subr.mxu0 0.0
      %2370 = vmatpush1.msra.mxu0 0.0
      %2371 = vmatprep.subr.mxu0 0.0
      %2372 = vmatpush1.msra.mxu0 0.0
      %2373 = vmatprep.subr.mxu0 0.0
      %2374 = vmatpush1.msra.mxu0 0.0
      %2375 = vmatprep.subr.mxu0 0.0
      %2376 = vmatpush1.msra.mxu0 0.0
      %2377 = vmatprep.subr.mxu0 0.0
      %2378 = vmatpush1.msra.mxu0 0.0
      %2379 = vmatprep.subr.mxu0 0.0
      %2380 = vmatpush1.msra.mxu0 0.0
      %2381 = vmatprep.subr.mxu0 0.0
      %2382 = vmatpush1.msra.mxu0 0.0
      %2383 = vmatprep.subr.mxu0 0.0
      %2384 = vmatpush1.msra.mxu0 0.0
      %2385 = vmatprep.subr.mxu0 0.0
      %2386 = vmatpush1.msra.mxu0 0.0
      %2387 = vmatprep.subr.mxu0 0.0
      %2388 = vmatpush1.msra.mxu0 0.0
      %2389 = vmatprep.subr.mxu0 0.0
      %2390 = vmatpush1.msra.mxu0 0.0
      %2391 = vmatprep.subr.mxu0 0.0
      %2392 = vmatpush1.msra.mxu0 0.0
      %2393 = vmatprep.subr.mxu0 0.0
      %2394 = vmatpush1.msra.mxu0 0.0
      %2395 = vmatprep.subr.mxu0 0.0
      %2396 = vmatpush1.msra.mxu0 0.0
      %2397 = vmatprep.subr.mxu0 0.0
      %2398 = vmatpush1.msra.mxu0 0.0
      %2399 = vmatprep.subr.mxu0 0.0
      %2400 = vmatpush1.msra.mxu0 0.0
      %2401 = vmatprep.subr.mxu0 0.0
      %2402 = vmatpush1.msra.mxu0 0.0
      %2403 = vmatprep.subr.mxu0 0.0
      %2404 = vmatpush1.msra.mxu0 0.0
      %2405 = vmatprep.subr.mxu0 0.0
      %2406 = vmatpush1.msra.mxu0 0.0
      %2407 = vmatprep.subr.mxu0 0.0
      %2408 = vmatpush1.msra.mxu0 0.0
      %2409 = vmatprep.subr.mxu0 0.0
      %2410 = vmatpush1.msra.mxu0 0.0
      %2411 = vmatprep.subr.mxu0 0.0
      %2412 = vmatpush1.msra.mxu0 0.0
      %2413 = vmatprep.subr.mxu0 0.0
      %2414 = vmatpush1.msra.mxu0 0.0
      %2415 = vmatprep.subr.mxu0 0.0
      %2416 = vmatpush1.msra.mxu0 0.0
      %2417 = vmatprep.subr.mxu0 0.0
      %2418 = vmatpush1.msra.mxu0 0.0
      %2419 = vmatprep.subr.mxu0 0.0
      %2420 = vmatpush1.msra.mxu0 0.0
      %2421 = vmatprep.subr.mxu0 0.0
      %2422 = vmatpush1.msra.mxu0 0.0
      %2423 = vmatprep.subr.mxu0 0.0
      %2424 = vmatpush1.msra.mxu0 0.0
      %2425 = vmatprep.subr.mxu0 0.0
      %2426 = vmatpush1.msra.mxu0 0.0
      %2427 = vmatprep.subr.mxu0 0.0
      %2428 = vmatpush1.msra.mxu0 0.0
      %2429 = vmatprep.subr.mxu0 0.0
      %2430 = vmatpush1.msra.mxu0 0.0
      %2431 = vmatprep.mubr.f32.mxu0 0.0
      %2432 = vmatmul.mubr.f32.gmra.mrb[0].mxu0 %v2365
      %v2433 = vpop.f32.mrb[0].mxu0
      %v2434 = vadd.f32 0.0, %v2433
      %v2435 = vpop.f32.mrb[0].mxu0
      %2436 = vdwg.mxu0
      %v2437 = vld [vmem:[%s7 + $0x18] sm:$0xff]
      %v2439 = vsel %vm792, %v2434, 0
      %2441 = vmatprep.subr.mxu0 0.0
      %2442 = vmatpush1.msra.mxu0 %v2437
      %2443 = vmatprep.subr.mxu0 0.0
      %2444 = vmatpush1.msra.mxu0 0.0
      %2445 = vmatprep.subr.mxu0 0.0
      %2446 = vmatpush1.msra.mxu0 0.0
      %2447 = vmatprep.subr.mxu0 0.0
      %2448 = vmatpush1.msra.mxu0 0.0
      %2449 = vmatprep.subr.mxu0 0.0
      %2450 = vmatpush1.msra.mxu0 0.0
      %2451 = vmatprep.subr.mxu0 0.0
      %2452 = vmatpush1.msra.mxu0 0.0
      %2453 = vmatprep.subr.mxu0 0.0
      %2454 = vmatpush1.msra.mxu0 0.0
      %2455 = vmatprep.subr.mxu0 0.0
      %2456 = vmatpush1.msra.mxu0 0.0
      %2457 = vmatprep.subr.mxu0 0.0
      %2458 = vmatpush1.msra.mxu0 0.0
      %2459 = vmatprep.subr.mxu0 0.0
      %2460 = vmatpush1.msra.mxu0 0.0
      %2461 = vmatprep.subr.mxu0 0.0
      %2462 = vmatpush1.msra.mxu0 0.0
      %2463 = vmatprep.subr.mxu0 0.0
      %2464 = vmatpush1.msra.mxu0 0.0
      %2465 = vmatprep.subr.mxu0 0.0
      %2466 = vmatpush1.msra.mxu0 0.0
      %2467 = vmatprep.subr.mxu0 0.0
      %2468 = vmatpush1.msra.mxu0 0.0
      %2469 = vmatprep.subr.mxu0 0.0
      %2470 = vmatpush1.msra.mxu0 0.0
      %2471 = vmatprep.subr.mxu0 0.0
      %2472 = vmatpush1.msra.mxu0 0.0
      %2473 = vmatprep.subr.mxu0 0.0
      %2474 = vmatpush1.msra.mxu0 0.0
      %2475 = vmatprep.subr.mxu0 0.0
      %2476 = vmatpush1.msra.mxu0 0.0
      %2477 = vmatprep.subr.mxu0 0.0
      %2478 = vmatpush1.msra.mxu0 0.0
      %2479 = vmatprep.subr.mxu0 0.0
      %2480 = vmatpush1.msra.mxu0 0.0
      %2481 = vmatprep.subr.mxu0 0.0
      %2482 = vmatpush1.msra.mxu0 0.0
      %2483 = vmatprep.subr.mxu0 0.0
      %2484 = vmatpush1.msra.mxu0 0.0
      %2485 = vmatprep.subr.mxu0 0.0
      %2486 = vmatpush1.msra.mxu0 0.0
      %2487 = vmatprep.subr.mxu0 0.0
      %2488 = vmatpush1.msra.mxu0 0.0
      %2489 = vmatprep.subr.mxu0 0.0
      %2490 = vmatpush1.msra.mxu0 0.0
      %2491 = vmatprep.subr.mxu0 0.0
      %2492 = vmatpush1.msra.mxu0 0.0
      %2493 = vmatprep.subr.mxu0 0.0
      %2494 = vmatpush1.msra.mxu0 0.0
      %2495 = vmatprep.subr.mxu0 0.0
      %2496 = vmatpush1.msra.mxu0 0.0
      %2497 = vmatprep.subr.mxu0 0.0
      %2498 = vmatpush1.msra.mxu0 0.0
      %2499 = vmatprep.subr.mxu0 0.0
      %2500 = vmatpush1.msra.mxu0 0.0
      %2501 = vmatprep.subr.mxu0 0.0
      %2502 = vmatpush1.msra.mxu0 0.0
      %2503 = vmatprep.subr.mxu0 0.0
      %2504 = vmatpush1.msra.mxu0 0.0
      %2505 = vmatprep.mubr.f32.mxu0 0.0
      %2506 = vmatmul.mubr.f32.gmra.mrb[0].mxu0 %v2439
      %v2507 = vpop.f32.mrb[0].mxu0
      %v2508 = vadd.f32 0.0, %v2507
      %v2509 = vpop.f32.mrb[0].mxu0
      %2510 = vdwg.mxu0
      %v2511 = vadd.f32 %v2020, %v2508
      %v2512 = vld [vmem:[%s8] sm:$0x1]
      %v2514 = vlaneseq
      %v2515 = vshrl.u32 %v2514, 7
      %v2516 = vsub.s32 0, %v2515
      %v2517 = vrot.slane %v2512, %v2516
      %v2519 = vadd.f32 %v2511, %v2517
      %v2520 = vadd.f32 %v544, %v2519
      %v2521 = vld [vmem:[%s13] sm:$0x1]
      %v2522 = vld [vmem:[%s14] sm:$0x1]
      %v2523 = vsel %vm556, %v2520, 0.0
      %2524 = vadd.xlane.f32.xlu0 %v2523
      %v2525 = vpop.xlane.xlu0 %2524
      %v2526 = vrcp.pop 32.0
      %v2527 = vmul.f32 %v2525, %v2526
      %v2528 = vsub.f32 %v2520, %v2527
      %v2529 = vmul.f32 %v2528, %v2528
      %v2530 = vsel %vm556, %v2529, 0.0
      %2531 = vadd.xlane.f32.xlu0 %v2530
      %v2532 = vpop.xlane.xlu0 %2531
      %v2533 = vmul.f32 %v2532, %v2526
      %v2534 = vadd.f32 %v2533, 1e-05
      %v2535 = vrsqrt.pop %v2534
      %v2536 = vmul.f32 %v2528, %v2535
      %v2538 = vlaneseq
      %v2539 = vshrl.u32 %v2538, 7
      %v2540 = vsub.s32 0, %v2539
      %v2541 = vrot.slane %v2521, %v2540
      %v2543 = vmul.f32 %v2536, %v2541
      %v2545 = vlaneseq
      %v2546 = vshrl.u32 %v2545, 7
      %v2547 = vsub.s32 0, %v2546
      %v2548 = vrot.slane %v2522, %v2547
      %v2550 = vadd.f32 %v2543, %v2548
      %v2551 = vld [vmem:[%s9] sm:$0xff]
      %v2552 = vld [vmem:[%s9 + $0x8] sm:$0xff]
      %v2553 = vld [vmem:[%s9 + $0x10] sm:$0xff]
      %v2554 = vld [vmem:[%s9 + $0x18] sm:$0xff]
      %v2555 = vld [vmem:[%s10] sm:$0x1]
      %v2557 = vlaneseq
      %v2558 = vshrl.u32 %v2557, 7
      %v2559 = vsub.s32 0, %v2558
      %v2560 = vrot.slane %v2555, %v2559
      %v2563 = vsel %vm556, %v2550, 0
      %2565 = vmatprep.subr.mxu0 0.0
      %2566 = vmatpush1.msra.mxu0 %v2551
      %2567 = vmatprep.subr.mxu0 0.0
      %2568 = vmatpush1.msra.mxu0 %v2552
      %2569 = vmatprep.subr.mxu0 0.0
      %2570 = vmatpush1.msra.mxu0 %v2553
      %2571 = vmatprep.subr.mxu0 0.0
      %2572 = vmatpush1.msra.mxu0 %v2554
      %2573 = vmatprep.subr.mxu0 0.0
      %2574 = vmatpush1.msra.mxu0 0.0
      %2575 = vmatprep.subr.mxu0 0.0
      %2576 = vmatpush1.msra.mxu0 0.0
      %2577 = vmatprep.subr.mxu0 0.0
      %2578 = vmatpush1.msra.mxu0 0.0
      %2579 = vmatprep.subr.mxu0 0.0
      %2580 = vmatpush1.msra.mxu0 0.0
      %2581 = vmatprep.subr.mxu0 0.0
      %2582 = vmatpush1.msra.mxu0 0.0
      %2583 = vmatprep.subr.mxu0 0.0
      %2584 = vmatpush1.msra.mxu0 0.0
      %2585 = vmatprep.subr.mxu0 0.0
      %2586 = vmatpush1.msra.mxu0 0.0
      %2587 = vmatprep.subr.mxu0 0.0
      %2588 = vmatpush1.msra.mxu0 0.0
      %2589 = vmatprep.subr.mxu0 0.0
      %2590 = vmatpush1.msra.mxu0 0.0
      %2591 = vmatprep.subr.mxu0 0.0
      %2592 = vmatpush1.msra.mxu0 0.0
      %2593 = vmatprep.subr.mxu0 0.0
      %2594 = vmatpush1.msra.mxu0 0.0
      %2595 = vmatprep.subr.mxu0 0.0
      %2596 = vmatpush1.msra.mxu0 0.0
      %2597 = vmatprep.subr.mxu0 0.0
      %2598 = vmatpush1.msra.mxu0 0.0
      %2599 = vmatprep.subr.mxu0 0.0
      %2600 = vmatpush1.msra.mxu0 0.0
      %2601 = vmatprep.subr.mxu0 0.0
      %2602 = vmatpush1.msra.mxu0 0.0
      %2603 = vmatprep.subr.mxu0 0.0
      %2604 = vmatpush1.msra.mxu0 0.0
      %2605 = vmatprep.subr.mxu0 0.0
      %2606 = vmatpush1.msra.mxu0 0.0
      %2607 = vmatprep.subr.mxu0 0.0
      %2608 = vmatpush1.msra.mxu0 0.0
      %2609 = vmatprep.subr.mxu0 0.0
      %2610 = vmatpush1.msra.mxu0 0.0
      %2611 = vmatprep.subr.mxu0 0.0
      %2612 = vmatpush1.msra.mxu0 0.0
      %2613 = vmatprep.subr.mxu0 0.0
      %2614 = vmatpush1.msra.mxu0 0.0
      %2615 = vmatprep.subr.mxu0 0.0
      %2616 = vmatpush1.msra.mxu0 0.0
      %2617 = vmatprep.subr.mxu0 0.0
      %2618 = vmatpush1.msra.mxu0 0.0
      %2619 = vmatprep.subr.mxu0 0.0
      %2620 = vmatpush1.msra.mxu0 0.0
      %2621 = vmatprep.subr.mxu0 0.0
      %2622 = vmatpush1.msra.mxu0 0.0
      %2623 = vmatprep.subr.mxu0 0.0
      %2624 = vmatpush1.msra.mxu0 0.0
      %2625 = vmatprep.subr.mxu0 0.0
      %2626 = vmatpush1.msra.mxu0 0.0
      %2627 = vmatprep.subr.mxu0 0.0
      %2628 = vmatpush1.msra.mxu0 0.0
      %2629 = vmatprep.mubr.f32.mxu0 0.0
      %2630 = vmatmul.mubr.f32.gmra.mrb[0].mxu0 %v2563
      %v2631 = vpop.f32.mrb[0].mxu0
      %v2632 = vadd.f32 %v2560, %v2631
      %v2633 = vpop.f32.mrb[0].mxu0
      %2634 = vdwg.mxu0
      %v2635 = vmax.f32 %v2632, 0.0
      %v2636 = vld [vmem:[%s11] sm:$0xff]
      %v2637 = vld [vmem:[%s11 + $0x8] sm:$0xff]
      %v2638 = vld [vmem:[%s11 + $0x10] sm:$0xff]
      %v2639 = vld [vmem:[%s11 + $0x18] sm:$0xff]
      %v2640 = vld [vmem:[%s11 + $0x20] sm:$0xff]
      %v2641 = vld [vmem:[%s11 + $0x28] sm:$0xff]
      %v2642 = vld [vmem:[%s11 + $0x30] sm:$0xff]
      %v2643 = vld [vmem:[%s11 + $0x38] sm:$0xff]
      %v2644 = vld [vmem:[%s12] sm:$0x1]
      %v2646 = vlaneseq
      %v2647 = vshrl.u32 %v2646, 7
      %v2648 = vsub.s32 0, %v2647
      %v2649 = vrot.slane %v2644, %v2648
      %vm2651 = vcmask 523264
      %v2653 = vsel %vm2651, %v2635, 0
      %2655 = vmatprep.subr.mxu0 0.0
      %2656 = vmatpush1.msra.mxu0 %v2636
      %2657 = vmatprep.subr.mxu0 0.0
      %2658 = vmatpush1.msra.mxu0 %v2637
      %2659 = vmatprep.subr.mxu0 0.0
      %2660 = vmatpush1.msra.mxu0 %v2638
      %2661 = vmatprep.subr.mxu0 0.0
      %2662 = vmatpush1.msra.mxu0 %v2639
      %2663 = vmatprep.subr.mxu0 0.0
      %2664 = vmatpush1.msra.mxu0 %v2640
      %2665 = vmatprep.subr.mxu0 0.0
      %2666 = vmatpush1.msra.mxu0 %v2641
      %2667 = vmatprep.subr.mxu0 0.0
      %2668 = vmatpush1.msra.mxu0 %v2642
      %2669 = vmatprep.subr.mxu0 0.0
      %2670 = vmatpush1.msra.mxu0 %v2643
      %2671 = vmatprep.subr.mxu0 0.0
      %2672 = vmatpush1.msra.mxu0 0.0
      %2673 = vmatprep.subr.mxu0 0.0
      %2674 = vmatpush1.msra.mxu0 0.0
      %2675 = vmatprep.subr.mxu0 0.0
      %2676 = vmatpush1.msra.mxu0 0.0
      %2677 = vmatprep.subr.mxu0 0.0
      %2678 = vmatpush1.msra.mxu0 0.0
      %2679 = vmatprep.subr.mxu0 0.0
      %2680 = vmatpush1.msra.mxu0 0.0
      %2681 = vmatprep.subr.mxu0 0.0
      %2682 = vmatpush1.msra.mxu0 0.0
      %2683 = vmatprep.subr.mxu0 0.0
      %2684 = vmatpush1.msra.mxu0 0.0
      %2685 = vmatprep.subr.mxu0 0.0
      %2686 = vmatpush1.msra.mxu0 0.0
      %2687 = vmatprep.subr.mxu0 0.0
      %2688 = vmatpush1.msra.mxu0 0.0
      %2689 = vmatprep.subr.mxu0 0.0
      %2690 = vmatpush1.msra.mxu0 0.0
      %2691 = vmatprep.subr.mxu0 0.0
      %2692 = vmatpush1.msra.mxu0 0.0
      %2693 = vmatprep.subr.mxu0 0.0
      %2694 = vmatpush1.msra.mxu0 0.0
      %2695 = vmatprep.subr.mxu0 0.0
      %2696 = vmatpush1.msra.mxu0 0.0
      %2697 = vmatprep.subr.mxu0 0.0
      %2698 = vmatpush1.msra.mxu0 0.0
      %2699 = vmatprep.subr.mxu0 0.0
      %2700 = vmatpush1.msra.mxu0 0.0
      %2701 = vmatprep.subr.mxu0 0.0
      %2702 = vmatpush1.msra.mxu0 0.0
      %2703 = vmatprep.subr.mxu0 0.0
      %2704 = vmatpush1.msra.mxu0 0.0
      %2705 = vmatprep.subr.mxu0 0.0
      %2706 = vmatpush1.msra.mxu0 0.0
      %2707 = vmatprep.subr.mxu0 0.0
      %2708 = vmatpush1.msra.mxu0 0.0
      %2709 = vmatprep.subr.mxu0 0.0
      %2710 = vmatpush1.msra.mxu0 0.0
      %2711 = vmatprep.subr.mxu0 0.0
      %2712 = vmatpush1.msra.mxu0 0.0
      %2713 = vmatprep.subr.mxu0 0.0
      %2714 = vmatpush1.msra.mxu0 0.0
      %2715 = vmatprep.subr.mxu0 0.0
      %2716 = vmatpush1.msra.mxu0 0.0
      %2717 = vmatprep.subr.mxu0 0.0
      %2718 = vmatpush1.msra.mxu0 0.0
      %2719 = vmatprep.mubr.f32.mxu0 0.0
      %2720 = vmatmul.mubr.f32.gmra.mrb[0].mxu0 %v2653
      %v2721 = vpop.f32.mrb[0].mxu0
      %v2722 = vadd.f32 %v2649, %v2721
      %v2723 = vpop.f32.mrb[0].mxu0
      %2724 = vdwg.mxu0
      %v2725 = vadd.f32 %v2550, %v2722
      %v2726 = vld [vmem:[%s15] sm:$0x1]
      %v2727 = vld [vmem:[%s16] sm:$0x1]
      %v2728 = vsel %vm556, %v2725, 0.0
      %2729 = vadd.xlane.f32.xlu0 %v2728
      %v2730 = vpop.xlane.xlu0 %2729
      %v2731 = vmul.f32 %v2730, %v2526
      %v2732 = vsub.f32 %v2725, %v2731
      %v2733 = vmul.f32 %v2732, %v2732
      %v2734 = vsel %vm556, %v2733, 0.0
      %2735 = vadd.xlane.f32.xlu0 %v2734
      %v2736 = vpop.xlane.xlu0 %2735
      %v2737 = vmul.f32 %v2736, %v2526
      %v2738 = vadd.f32 %v2737, 1e-05
      %v2739 = vrsqrt.pop %v2738
      %v2740 = vmul.f32 %v2732, %v2739
      %v2742 = vlaneseq
      %v2743 = vshrl.u32 %v2742, 7
      %v2744 = vsub.s32 0, %v2743
      %v2745 = vrot.slane %v2726, %v2744
      %v2747 = vmul.f32 %v2740, %v2745
      %v2749 = vlaneseq
      %v2750 = vshrl.u32 %v2749, 7
      %v2751 = vsub.s32 0, %v2750
      %v2752 = vrot.slane %v2727, %v2751
      %v2754 = vadd.f32 %v2747, %v2752
      %2755 = vst.msk [vmem:[%s543] sm:$0xff] %vm556, %v2754
      %p2756 = scmp.lt.s32.totalorder %s28, 1
      %s2757 = scalar_select %p2756, %s28, 1
      %s2758 = smul.addr %s2757, 8
      %s2759 = scalar_lea.vmem %s17, %s2758
      // Predicated region
      $region89: #{encoder_forward.4} parent=87 // pred_check
        %p2760 = pneg %p408
      $region90: #{encoder_forward.4} parent=87 // pred_check_branch
        %2762 = sbr.rel (%p2760) target = $region92
      $region91: #{encoder_forward.4} parent=87 // pred_region
        _
      $region92: #{encoder_forward.4} parent=87 // pred_fallthru
        _
    $region88: #{encoder_forward.4} parent=5 // pred_fallthru
      _
    %p2763 = scmp.le.s32.totalorder 2, %s23
    // Predicated region
    $region93: #{encoder_forward.4} parent=5 // pred_check
      %p2764 = pneg %p2763
    $region94: #{encoder_forward.4} parent=5 // pred_check_branch
      %2766 = sbr.rel (%p2764) target = $region96
    $region95: #{encoder_forward.4} parent=5 // pred_region
      %s2767 = ssub.s32 %s23, 2
      // Predicated region
      $region97: #{encoder_forward.4} parent=95 // pred_check
        %p2768 = pneg %p414
      $region98: #{encoder_forward.4} parent=95 // pred_check_branch
        %2770 = sbr.rel (%p2768) target = $region100
      $region99: #{encoder_forward.4} parent=95 // pred_region
        %p2771 = scmp.lt.s32.totalorder %s29, 1
        %s2772 = scalar_select %p2771, %s29, 1
        %s2773 = smul.addr %s2772, 8
        %s2774 = scalar_lea.vmem %s17, %s2773
      $region100: #{encoder_forward.4} parent=95 // pred_fallthru
        _
    $region96: #{encoder_forward.4} parent=5 // pred_fallthru
      _
  $region6: #{encoder_forward.4} parent=0 // loop_footer
    %s27 = sadd.s32 1, %s23
  $region7: #{encoder_forward.4} parent=0 // loop_footer_branch
    %22 = sbr.rel target = $region3
  $region8: #{encoder_forward.4} parent=0 // loop_exit
    _

// kernel: encoder_forward.3
$region0: #{encoder_forward.3}
  #allocation0 [shape = 'u32[]', space=smem, size = 0x4, offset = 0x4, fixed_abs, tag = 'smem constant byte address 0x4 - core index']
  #allocation1 [shape = 'u32[144,128]{1,0:T(1,128)}', space=vmem, size = 0x12000, scoped, tag = 'internal scratch']
  %s0 = inlined_call_operand.hbm [shape: f32[2,8,32], index: 0, kind: input, shape index: {}]
  %s1 = inlined_call_operand.vmem [shape: f32[32,32], index: 1, kind: input, shape index: {}]
  %s2 = inlined_call_operand.vmem [shape: f32[1,32], index: 2, kind: input, shape index: {}]
  %s3 = inlined_call_operand.vmem [shape: f32[32,32], index: 3, kind: input, shape index: {}]
  %s4 = inlined_call_operand.vmem [shape: f32[1,32], index: 4, kind: input, shape index: {}]
  %s5 = inlined_call_operand.vmem [shape: f32[32,32], index: 5, kind: input, shape index: {}]
  %s6 = inlined_call_operand.vmem [shape: f32[1,32], index: 6, kind: input, shape index: {}]
  %s7 = inlined_call_operand.hbm [shape: f32[32,32], index: 7, kind: input, shape index: {}]
  %s8 = inlined_call_operand.vmem [shape: f32[1,32], index: 8, kind: input, shape index: {}]
  %s9 = inlined_call_operand.hbm [shape: f32[32,64], index: 9, kind: input, shape index: {}]
  %s10 = inlined_call_operand.hbm [shape: f32[1,64], index: 10, kind: input, shape index: {}]
  %s11 = inlined_call_operand.vmem [shape: f32[64,32], index: 11, kind: input, shape index: {}]
  %s12 = inlined_call_operand.vmem [shape: f32[1,32], index: 12, kind: input, shape index: {}]
  %s13 = inlined_call_operand.vmem [shape: f32[1,32], index: 13, kind: input, shape index: {}]
  %s14 = inlined_call_operand.vmem [shape: f32[1,32], index: 14, kind: input, shape index: {}]
  %s15 = inlined_call_operand.vmem [shape: f32[1,32], index: 15, kind: input, shape index: {}]
  %s16 = inlined_call_operand.vmem [shape: f32[1,32], index: 16, kind: input, shape index: {}]
  %s17 = inlined_call_operand.vmem [shape: f32[2,8,32], index: 17, kind: output, shape index: {}]
  %s18 = sld [smem:[#allocation0]]
  $region117: #{encoder_forward.3} parent=0
    _
  %s20 = ssub.s32 1, %s18
  %s21 = scalar_select 0, %s20, %s18
  $region1: #{encoder_forward.3} parent=0
    #allocation2 [shape = 'u8[8192]{0}', space=vmem, size = 0x2000, scoped, tag = 'input window, operand 0']
    #allocation3 [shape = 's32[2]{0}', space=sflag, size = 0x8, scoped, tag = 'scoped memory for encoder_forward.3']
    #allocation4 [shape = 'u8[16384]{0}', space=vmem, size = 0x4000, scoped, tag = 'input window, operand 7, single buffered']
    #allocation5 [shape = 's32[1]{0}', space=sflag, size = 0x4, scoped, tag = 'scoped memory for encoder_forward.3']
    #allocation6 [shape = 'u8[16384]{0}', space=vmem, size = 0x4000, scoped, tag = 'input window, operand 9, single buffered']
    #allocation7 [shape = 'u8[512]{0}', space=vmem, size = 0x400, scoped, tag = 'input window, operand 10, single buffered']
    #allocation8 [shape = 's32[1]{0}', space=sflag, size = 0x4, scoped, tag = 'scoped memory for encoder_forward.3']
    %22 = vsyncpa [#allocation3], 0
    %s23 = scalar_lea.sflag [#allocation3], 1
    %24 = vsyncpa %s23, 0
    %25 = vsyncpa [#allocation5], 0
    %26 = vsyncpa [#allocation8], 0
    loop: start=0, step=1, limit=4
    $region2: #{encoder_forward.3} parent=1 // loop_pre_header
      _
    $region3: #{encoder_forward.3} parent=1 // loop_header
      %s28 = sphi 0, %s32
      %p29 = scmp.ge.s32.totalorder %s28, 4
      %s38 = sphi 0, %s40
      %s41 = sphi 0, %s38
      %s42 = sphi 0, %s41
      %s58 = sphi 0, %s42
      %s62 = sphi 0, %s62
      %s64 = sphi 0, %s62
      %s65 = sphi 0, %s64
      %s79 = sphi 0, %s65
      %s83 = sphi 0, %s83
      %s85 = sphi 0, %s83
      %s86 = sphi 0, %s85
      %s100 = sphi 0, %s86
      %s104 = sphi 0, %s104
      %s106 = sphi 0, %s104
      %s107 = sphi 0, %s106
      %s121 = sphi 0, %s107
      %s125 = sphi 0, %s125
      %s127 = sphi 0, %s125
      %s128 = sphi 0, %s127
      %s142 = sphi 0, %s128
      %s146 = sphi 0, %s146
      %s148 = sphi 0, %s146
      %s149 = sphi 0, %s148
      %s163 = sphi 0, %s149
      %s167 = sphi 0, %s167
      %s169 = sphi 0, %s167
      %s170 = sphi 0, %s169
      %s184 = sphi 0, %s170
      %s188 = sphi 0, %s188
      %s190 = sphi 0, %s188
      %s191 = sphi 0, %s190
      %s205 = sphi 0, %s191
      %s209 = sphi 0, %s209
      %s211 = sphi 0, %s209
      %s212 = sphi 0, %s211
      %s226 = sphi 0, %s212
      %s230 = sphi 0, %s230
      %s232 = sphi 0, %s230
      %s233 = sphi 0, %s232
      %s247 = sphi 0, %s233
      %s251 = sphi 0, %s251
      %s253 = sphi 0, %s251
      %s254 = sphi 0, %s253
      %s268 = sphi 0, %s254
      %s272 = sphi 0, %s272
      %s274 = sphi 0, %s272
      %s275 = sphi 0, %s274
      %s289 = sphi 0, %s275
      %s293 = sphi 0, %s293
      %s295 = sphi 0, %s293
      %s296 = sphi 0, %s295
      %s310 = sphi 0, %s296
      %s314 = sphi 0, %s314
      %s316 = sphi 0, %s314
      %s317 = sphi 0, %s316
      %s331 = sphi 0, %s317
      %s335 = sphi 0, %s335
      %s337 = sphi 0, %s335
      %s338 = sphi 0, %s337
      %s352 = sphi 0, %s338
      %s356 = sphi 0, %s356
      %s358 = sphi 0, %s356
      %s359 = sphi 0, %s358
      %s373 = sphi 0, %s359
      %s377 = sphi 0, %s377
      %s379 = sphi 0, %s377
      %s380 = sphi 0, %s379
      %s394 = sphi 0, %s380
      %s400 = sphi 0, %s402
      %s403 = sphi 0, %s400
      %s404 = sphi 0, %s403
      %s420 = sphi 0, %s404
    $region4: #{encoder_forward.3} parent=1 // loop_header_branch
      %31 = sbr.rel (%p29) target = $region8
    $region5: #{encoder_forward.3} parent=1 // loop_body
      %s33 = ssub.s32 %s28, 1
      %s34 = ssub.s32 %s28, 2
      %s35 = sadd.s32 %s28, 1
      %s36 = ssub.s32 %s28, %s35
      %p37 = scmp.eq.s32.totalorder %s36, 0
      %s39 = sadd.s32 %s38, 1
      %s40 = scalar_select %p37, %s38, %s39
      %p43 = pneg %p37
      %p44 = scmp.eq.s32.totalorder %s28, 1
      %p45 = por %p43, %p44
      %p46 = scmp.ne.s32.totalorder %s38, %s41
      %p47 = scmp.eq.s32.totalorder %s28, 0
      %p48 = por %p46, %p47
      %p49 = scmp.ne.s32.totalorder %s38, %s41
      %p50 = scmp.eq.s32.totalorder %s33, 1
      %p51 = por %p49, %p50
      %p52 = scmp.ne.s32.totalorder %s41, %s42
      %p53 = scmp.eq.s32.totalorder %s33, 0
      %p54 = por %p52, %p53
      %p55 = scmp.ne.s32.totalorder %s41, %s42
      %p56 = scmp.eq.s32.totalorder %s34, 1
      %p57 = por %p55, %p56
      %p59 = scmp.ne.s32.totalorder %s42, %s58
      %p60 = scmp.eq.s32.totalorder %s34, 0
      %p61 = por %p59, %p60
      %s63 = sadd.s32 %s62, 1
      %p66 = scmp.eq.s32.totalorder %s28, 1
      %p67 = scmp.ne.s32.totalorder %s62, %s64
      %p68 = scmp.eq.s32.totalorder %s28, 0
      %p69 = por %p67, %p68
      %p70 = scmp.ne.s32.totalorder %s62, %s64
      %p71 = scmp.eq.s32.totalorder %s33, 1
      %p72 = por %p70, %p71
      %p73 = scmp.ne.s32.totalorder %s64, %s65
      %p74 = scmp.eq.s32.totalorder %s33, 0
      %p75 = por %p73, %p74
      %p76 = scmp.ne.s32.totalorder %s64, %s65
      %p77 = scmp.eq.s32.totalorder %s34, 1
      %p78 = por %p76, %p77
      %p80 = scmp.ne.s32.totalorder %s65, %s79
      %p81 = scmp.eq.s32.totalorder %s34, 0
      %p82 = por %p80, %p81
      %s84 = sadd.s32 %s83, 1
      %p87 = scmp.eq.s32.totalorder %s28, 1
      %p88 = scmp.ne.s32.totalorder %s83, %s85
      %p89 = scmp.eq.s32.totalorder %s28, 0
      %p90 = por %p88, %p89
      %p91 = scmp.ne.s32.totalorder %s83, %s85
      %p92 = scmp.eq.s32.totalorder %s33, 1
      %p93 = por %p91, %p92
      %p94 = scmp.ne.s32.totalorder %s85, %s86
      %p95 = scmp.eq.s32.totalorder %s33, 0
      %p96 = por %p94, %p95
      %p97 = scmp.ne.s32.totalorder %s85, %s86
      %p98 = scmp.eq.s32.totalorder %s34, 1
      %p99 = por %p97, %p98
      %p101 = scmp.ne.s32.totalorder %s86, %s100
      %p102 = scmp.eq.s32.totalorder %s34, 0
      %p103 = por %p101, %p102
      %s105 = sadd.s32 %s104, 1
      %p108 = scmp.eq.s32.totalorder %s28, 1
      %p109 = scmp.ne.s32.totalorder %s104, %s106
      %p110 = scmp.eq.s32.totalorder %s28, 0
      %p111 = por %p109, %p110
      %p112 = scmp.ne.s32.totalorder %s104, %s106
      %p113 = scmp.eq.s32.totalorder %s33, 1
      %p114 = por %p112, %p113
      %p115 = scmp.ne.s32.totalorder %s106, %s107
      %p116 = scmp.eq.s32.totalorder %s33, 0
      %p117 = por %p115, %p116
      %p118 = scmp.ne.s32.totalorder %s106, %s107
      %p119 = scmp.eq.s32.totalorder %s34, 1
      %p120 = por %p118, %p119
      %p122 = scmp.ne.s32.totalorder %s107, %s121
      %p123 = scmp.eq.s32.totalorder %s34, 0
      %p124 = por %p122, %p123
      %s126 = sadd.s32 %s125, 1
      %p129 = scmp.eq.s32.totalorder %s28, 1
      %p130 = scmp.ne.s32.totalorder %s125, %s127
      %p131 = scmp.eq.s32.totalorder %s28, 0
      %p132 = por %p130, %p131
      %p133 = scmp.ne.s32.totalorder %s125, %s127
      %p134 = scmp.eq.s32.totalorder %s33, 1
      %p135 = por %p133, %p134
      %p136 = scmp.ne.s32.totalorder %s127, %s128
      %p137 = scmp.eq.s32.totalorder %s33, 0
      %p138 = por %p136, %p137
      %p139 = scmp.ne.s32.totalorder %s127, %s128
      %p140 = scmp.eq.s32.totalorder %s34, 1
      %p141 = por %p139, %p140
      %p143 = scmp.ne.s32.totalorder %s128, %s142
      %p144 = scmp.eq.s32.totalorder %s34, 0
      %p145 = por %p143, %p144
      %s147 = sadd.s32 %s146, 1
      %p150 = scmp.eq.s32.totalorder %s28, 1
      %p151 = scmp.ne.s32.totalorder %s146, %s148
      %p152 = scmp.eq.s32.totalorder %s28, 0
      %p153 = por %p151, %p152
      %p154 = scmp.ne.s32.totalorder %s146, %s148
      %p155 = scmp.eq.s32.totalorder %s33, 1
      %p156 = por %p154, %p155
      %p157 = scmp.ne.s32.totalorder %s148, %s149
      %p158 = scmp.eq.s32.totalorder %s33, 0
      %p159 = por %p157, %p158
      %p160 = scmp.ne.s32.totalorder %s148, %s149
      %p161 = scmp.eq.s32.totalorder %s34, 1
      %p162 = por %p160, %p161
      %p164 = scmp.ne.s32.totalorder %s149, %s163
      %p165 = scmp.eq.s32.totalorder %s34, 0
      %p166 = por %p164, %p165
      %s168 = sadd.s32 %s167, 1
      %p171 = scmp.eq.s32.totalorder %s28, 1
      %p172 = scmp.ne.s32.totalorder %s167, %s169
      %p173 = scmp.eq.s32.totalorder %s28, 0
      %p174 = por %p172, %p173
      %p175 = scmp.ne.s32.totalorder %s167, %s169
      %p176 = scmp.eq.s32.totalorder %s33, 1
      %p177 = por %p175, %p176
      %p178 = scmp.ne.s32.totalorder %s169, %s170
      %p179 = scmp.eq.s32.totalorder %s33, 0
      %p180 = por %p178, %p179
      %p181 = scmp.ne.s32.totalorder %s169, %s170
      %p182 = scmp.eq.s32.totalorder %s34, 1
      %p183 = por %p181, %p182
      %p185 = scmp.ne.s32.totalorder %s170, %s184
      %p186 = scmp.eq.s32.totalorder %s34, 0
      %p187 = por %p185, %p186
      %s189 = sadd.s32 %s188, 1
      %p192 = scmp.eq.s32.totalorder %s28, 1
      %p193 = scmp.ne.s32.totalorder %s188, %s190
      %p194 = scmp.eq.s32.totalorder %s28, 0
      %p195 = por %p193, %p194
      %p196 = scmp.ne.s32.totalorder %s188, %s190
      %p197 = scmp.eq.s32.totalorder %s33, 1
      %p198 = por %p196, %p197
      %p199 = scmp.ne.s32.totalorder %s190, %s191
      %p200 = scmp.eq.s32.totalorder %s33, 0
      %p201 = por %p199, %p200
      %p202 = scmp.ne.s32.totalorder %s190, %s191
      %p203 = scmp.eq.s32.totalorder %s34, 1
      %p204 = por %p202, %p203
      %p206 = scmp.ne.s32.totalorder %s191, %s205
      %p207 = scmp.eq.s32.totalorder %s34, 0
      %p208 = por %p206, %p207
      %s210 = sadd.s32 %s209, 1
      %p213 = scmp.eq.s32.totalorder %s28, 1
      %p214 = scmp.ne.s32.totalorder %s209, %s211
      %p215 = scmp.eq.s32.totalorder %s28, 0
      %p216 = por %p214, %p215
      %p217 = scmp.ne.s32.totalorder %s209, %s211
      %p218 = scmp.eq.s32.totalorder %s33, 1
      %p219 = por %p217, %p218
      %p220 = scmp.ne.s32.totalorder %s211, %s212
      %p221 = scmp.eq.s32.totalorder %s33, 0
      %p222 = por %p220, %p221
      %p223 = scmp.ne.s32.totalorder %s211, %s212
      %p224 = scmp.eq.s32.totalorder %s34, 1
      %p225 = por %p223, %p224
      %p227 = scmp.ne.s32.totalorder %s212, %s226
      %p228 = scmp.eq.s32.totalorder %s34, 0
      %p229 = por %p227, %p228
      %s231 = sadd.s32 %s230, 1
      %p234 = scmp.eq.s32.totalorder %s28, 1
      %p235 = scmp.ne.s32.totalorder %s230, %s232
      %p236 = scmp.eq.s32.totalorder %s28, 0
      %p237 = por %p235, %p236
      %p238 = scmp.ne.s32.totalorder %s230, %s232
      %p239 = scmp.eq.s32.totalorder %s33, 1
      %p240 = por %p238, %p239
      %p241 = scmp.ne.s32.totalorder %s232, %s233
      %p242 = scmp.eq.s32.totalorder %s33, 0
      %p243 = por %p241, %p242
      %p244 = scmp.ne.s32.totalorder %s232, %s233
      %p245 = scmp.eq.s32.totalorder %s34, 1
      %p246 = por %p244, %p245
      %p248 = scmp.ne.s32.totalorder %s233, %s247
      %p249 = scmp.eq.s32.totalorder %s34, 0
      %p250 = por %p248, %p249
      %s252 = sadd.s32 %s251, 1
      %p255 = scmp.eq.s32.totalorder %s28, 1
      %p256 = scmp.ne.s32.totalorder %s251, %s253
      %p257 = scmp.eq.s32.totalorder %s28, 0
      %p258 = por %p256, %p257
      %p259 = scmp.ne.s32.totalorder %s251, %s253
      %p260 = scmp.eq.s32.totalorder %s33, 1
      %p261 = por %p259, %p260
      %p262 = scmp.ne.s32.totalorder %s253, %s254
      %p263 = scmp.eq.s32.totalorder %s33, 0
      %p264 = por %p262, %p263
      %p265 = scmp.ne.s32.totalorder %s253, %s254
      %p266 = scmp.eq.s32.totalorder %s34, 1
      %p267 = por %p265, %p266
      %p269 = scmp.ne.s32.totalorder %s254, %s268
      %p270 = scmp.eq.s32.totalorder %s34, 0
      %p271 = por %p269, %p270
      %s273 = sadd.s32 %s272, 1
      %p276 = scmp.eq.s32.totalorder %s28, 1
      %p277 = scmp.ne.s32.totalorder %s272, %s274
      %p278 = scmp.eq.s32.totalorder %s28, 0
      %p279 = por %p277, %p278
      %p280 = scmp.ne.s32.totalorder %s272, %s274
      %p281 = scmp.eq.s32.totalorder %s33, 1
      %p282 = por %p280, %p281
      %p283 = scmp.ne.s32.totalorder %s274, %s275
      %p284 = scmp.eq.s32.totalorder %s33, 0
      %p285 = por %p283, %p284
      %p286 = scmp.ne.s32.totalorder %s274, %s275
      %p287 = scmp.eq.s32.totalorder %s34, 1
      %p288 = por %p286, %p287
      %p290 = scmp.ne.s32.totalorder %s275, %s289
      %p291 = scmp.eq.s32.totalorder %s34, 0
      %p292 = por %p290, %p291
      %s294 = sadd.s32 %s293, 1
      %p297 = scmp.eq.s32.totalorder %s28, 1
      %p298 = scmp.ne.s32.totalorder %s293, %s295
      %p299 = scmp.eq.s32.totalorder %s28, 0
      %p300 = por %p298, %p299
      %p301 = scmp.ne.s32.totalorder %s293, %s295
      %p302 = scmp.eq.s32.totalorder %s33, 1
      %p303 = por %p301, %p302
      %p304 = scmp.ne.s32.totalorder %s295, %s296
      %p305 = scmp.eq.s32.totalorder %s33, 0
      %p306 = por %p304, %p305
      %p307 = scmp.ne.s32.totalorder %s295, %s296
      %p308 = scmp.eq.s32.totalorder %s34, 1
      %p309 = por %p307, %p308
      %p311 = scmp.ne.s32.totalorder %s296, %s310
      %p312 = scmp.eq.s32.totalorder %s34, 0
      %p313 = por %p311, %p312
      %s315 = sadd.s32 %s314, 1
      %p318 = scmp.eq.s32.totalorder %s28, 1
      %p319 = scmp.ne.s32.totalorder %s314, %s316
      %p320 = scmp.eq.s32.totalorder %s28, 0
      %p321 = por %p319, %p320
      %p322 = scmp.ne.s32.totalorder %s314, %s316
      %p323 = scmp.eq.s32.totalorder %s33, 1
      %p324 = por %p322, %p323
      %p325 = scmp.ne.s32.totalorder %s316, %s317
      %p326 = scmp.eq.s32.totalorder %s33, 0
      %p327 = por %p325, %p326
      %p328 = scmp.ne.s32.totalorder %s316, %s317
      %p329 = scmp.eq.s32.totalorder %s34, 1
      %p330 = por %p328, %p329
      %p332 = scmp.ne.s32.totalorder %s317, %s331
      %p333 = scmp.eq.s32.totalorder %s34, 0
      %p334 = por %p332, %p333
      %s336 = sadd.s32 %s335, 1
      %p339 = scmp.eq.s32.totalorder %s28, 1
      %p340 = scmp.ne.s32.totalorder %s335, %s337
      %p341 = scmp.eq.s32.totalorder %s28, 0
      %p342 = por %p340, %p341
      %p343 = scmp.ne.s32.totalorder %s335, %s337
      %p344 = scmp.eq.s32.totalorder %s33, 1
      %p345 = por %p343, %p344
      %p346 = scmp.ne.s32.totalorder %s337, %s338
      %p347 = scmp.eq.s32.totalorder %s33, 0
      %p348 = por %p346, %p347
      %p349 = scmp.ne.s32.totalorder %s337, %s338
      %p350 = scmp.eq.s32.totalorder %s34, 1
      %p351 = por %p349, %p350
      %p353 = scmp.ne.s32.totalorder %s338, %s352
      %p354 = scmp.eq.s32.totalorder %s34, 0
      %p355 = por %p353, %p354
      %s357 = sadd.s32 %s356, 1
      %p360 = scmp.eq.s32.totalorder %s28, 1
      %p361 = scmp.ne.s32.totalorder %s356, %s358
      %p362 = scmp.eq.s32.totalorder %s28, 0
      %p363 = por %p361, %p362
      %p364 = scmp.ne.s32.totalorder %s356, %s358
      %p365 = scmp.eq.s32.totalorder %s33, 1
      %p366 = por %p364, %p365
      %p367 = scmp.ne.s32.totalorder %s358, %s359
      %p368 = scmp.eq.s32.totalorder %s33, 0
      %p369 = por %p367, %p368
      %p370 = scmp.ne.s32.totalorder %s358, %s359
      %p371 = scmp.eq.s32.totalorder %s34, 1
      %p372 = por %p370, %p371
      %p374 = scmp.ne.s32.totalorder %s359, %s373
      %p375 = scmp.eq.s32.totalorder %s34, 0
      %p376 = por %p374, %p375
      %s378 = sadd.s32 %s377, 1
      %p381 = scmp.eq.s32.totalorder %s28, 1
      %p382 = scmp.ne.s32.totalorder %s377, %s379
      %p383 = scmp.eq.s32.totalorder %s28, 0
      %p384 = por %p382, %p383
      %p385 = scmp.ne.s32.totalorder %s377, %s379
      %p386 = scmp.eq.s32.totalorder %s33, 1
      %p387 = por %p385, %p386
      %p388 = scmp.ne.s32.totalorder %s379, %s380
      %p389 = scmp.eq.s32.totalorder %s33, 0
      %p390 = por %p388, %p389
      %p391 = scmp.ne.s32.totalorder %s379, %s380
      %p392 = scmp.eq.s32.totalorder %s34, 1
      %p393 = por %p391, %p392
      %p395 = scmp.ne.s32.totalorder %s380, %s394
      %p396 = scmp.eq.s32.totalorder %s34, 0
      %p397 = por %p395, %p396
      %s398 = ssub.s32 %s28, %s35
      %p399 = scmp.eq.s32.totalorder %s398, 0
      %s401 = sadd.s32 %s400, 1
      %s402 = scalar_select %p399, %s400, %s401
      %p405 = pneg %p399
      %p406 = scmp.eq.s32.totalorder %s28, 1
      %p407 = por %p405, %p406
      %p408 = scmp.ne.s32.totalorder %s400, %s403
      %p409 = scmp.eq.s32.totalorder %s28, 0
      %p410 = por %p408, %p409
      %p411 = scmp.ne.s32.totalorder %s400, %s403
      %p412 = scmp.eq.s32.totalorder %s33, 1
      %p413 = por %p411, %p412
      %p414 = scmp.ne.s32.totalorder %s403, %s404
      %p415 = scmp.eq.s32.totalorder %s33, 0
      %p416 = por %p414, %p415
      %p417 = scmp.ne.s32.totalorder %s403, %s404
      %p418 = scmp.eq.s32.totalorder %s34, 1
      %p419 = por %p417, %p418
      %p421 = scmp.ne.s32.totalorder %s404, %s420
      %p422 = scmp.eq.s32.totalorder %s34, 0
      %p423 = por %p421, %p422
      %p424 = scmp.le.s32.totalorder 1, %s28
      %p425 = scmp.lt.s32.totalorder %s28, 3
      %p426 = pnand %p424, %p425
      %p427 = pneg %p426
      // Predicated region
      $region9: #{encoder_forward.3} parent=5 // pred_check
        _
      $region10: #{encoder_forward.3} parent=5 // pred_check_branch
        %429 = sbr.rel (%p426) target = $region12
      $region11: #{encoder_forward.3} parent=5 // pred_region
        %s430 = ssub.s32 %s28, 1
        // Predicated region
        $region13: #{encoder_forward.3} parent=11 // pred_check
          %p431 = pneg %p75
        $region14: #{encoder_forward.3} parent=11 // pred_check_branch
          %433 = sbr.rel (%p431) target = $region16
        $region15: #{encoder_forward.3} parent=11 // pred_region
          _
        $region16: #{encoder_forward.3} parent=11 // pred_fallthru
          _
        // Predicated region
        $region17: #{encoder_forward.3} parent=11 // pred_check
          %p434 = pneg %p96
        $region18: #{encoder_forward.3} parent=11 // pred_check_branch
          %436 = sbr.rel (%p434) target = $region20
        $region19: #{encoder_forward.3} parent=11 // pred_region
          _
        $region20: #{encoder_forward.3} parent=11 // pred_fallthru
          _
        // Predicated region
        $region21: #{encoder_forward.3} parent=11 // pred_check
          %p437 = pneg %p117
        $region22: #{encoder_forward.3} parent=11 // pred_check_branch
          %439 = sbr.rel (%p437) target = $region24
        $region23: #{encoder_forward.3} parent=11 // pred_region
          _
        $region24: #{encoder_forward.3} parent=11 // pred_fallthru
          _
        // Predicated region
        $region25: #{encoder_forward.3} parent=11 // pred_check
          %p440 = pneg %p138
        $region26: #{encoder_forward.3} parent=11 // pred_check_branch
          %442 = sbr.rel (%p440) target = $region28
        $region27: #{encoder_forward.3} parent=11 // pred_region
          _
        $region28: #{encoder_forward.3} parent=11 // pred_fallthru
          _
        // Predicated region
        $region29: #{encoder_forward.3} parent=11 // pred_check
          %p443 = pneg %p159
        $region30: #{encoder_forward.3} parent=11 // pred_check_branch
          %445 = sbr.rel (%p443) target = $region32
        $region31: #{encoder_forward.3} parent=11 // pred_region
          _
        $region32: #{encoder_forward.3} parent=11 // pred_fallthru
          _
        // Predicated region
        $region33: #{encoder_forward.3} parent=11 // pred_check
          %p446 = pneg %p180
        $region34: #{encoder_forward.3} parent=11 // pred_check_branch
          %448 = sbr.rel (%p446) target = $region36
        $region35: #{encoder_forward.3} parent=11 // pred_region
          _
        $region36: #{encoder_forward.3} parent=11 // pred_fallthru
          _
        // Predicated region
        $region37: #{encoder_forward.3} parent=11 // pred_check
          %p449 = pneg %p201
        $region38: #{encoder_forward.3} parent=11 // pred_check_branch
          %451 = sbr.rel (%p449) target = $region40
        $region39: #{encoder_forward.3} parent=11 // pred_region
          %s453 = ssub.s32 512, 512
          %454 = vsyncadd [#allocation5], %s453
          %s455 = sshll.u32 [#allocation4], 4
          %s456 = int_to_ptr.vmem [resolvable:$true] %s455
          %461 = dma.hbm_to_vmem [thread:$0]  %s7, 512, %s456, [#allocation5], 128, 128, 8
        $region40: #{encoder_forward.3} parent=11 // pred_fallthru
          _
        // Predicated region
        $region41: #{encoder_forward.3} parent=11 // pred_check
          %p462 = pneg %p222
        $region42: #{encoder_forward.3} parent=11 // pred_check_branch
          %464 = sbr.rel (%p462) target = $region44
        $region43: #{encoder_forward.3} parent=11 // pred_region
          _
        $region44: #{encoder_forward.3} parent=11 // pred_fallthru
          _
        // Predicated region
        $region45: #{encoder_forward.3} parent=11 // pred_check
          %p465 = pneg %p243
        $region46: #{encoder_forward.3} parent=11 // pred_check_branch
          %467 = sbr.rel (%p465) target = $region48
        $region47: #{encoder_forward.3} parent=11 // pred_region
          %s469 = ssub.s32 512, 512
          %470 = vsyncadd [#allocation5], %s469
          %s471 = sshll.u32 [#allocation6], 4
          %s472 = int_to_ptr.vmem [resolvable:$true] %s471
          %477 = dma.hbm_to_vmem [thread:$0]  %s9, 512, %s472, [#allocation5], 128, 128, 8
        $region48: #{encoder_forward.3} parent=11 // pred_fallthru
          _
        // Predicated region
        $region49: #{encoder_forward.3} parent=11 // pred_check
          %p478 = pneg %p264
        $region50: #{encoder_forward.3} parent=11 // pred_check_branch
          %480 = sbr.rel (%p478) target = $region52
        $region51: #{encoder_forward.3} parent=11 // pred_region
          %s482 = ssub.s32 16, 16
          %483 = vsyncadd [#allocation8], %s482
          %s485 = sshll.u32 [#allocation7], 4
          %s486 = int_to_ptr.vmem [resolvable:$true] %s485
          %488 = dma.hbm_to_vmem [thread:$0]  %s10, 16, %s486, [#allocation8]
        $region52: #{encoder_forward.3} parent=11 // pred_fallthru
          _
        // Predicated region
        $region53: #{encoder_forward.3} parent=11 // pred_check
          %p489 = pneg %p285
        $region54: #{encoder_forward.3} parent=11 // pred_check_branch
          %491 = sbr.rel (%p489) target = $region56
        $region55: #{encoder_forward.3} parent=11 // pred_region
          _
        $region56: #{encoder_forward.3} parent=11 // pred_fallthru
          _
        // Predicated region
        $region57: #{encoder_forward.3} parent=11 // pred_check
          %p492 = pneg %p306
        $region58: #{encoder_forward.3} parent=11 // pred_check_branch
          %494 = sbr.rel (%p492) target = $region60
        $region59: #{encoder_forward.3} parent=11 // pred_region
          _
        $region60: #{encoder_forward.3} parent=11 // pred_fallthru
          _
        // Predicated region
        $region61: #{encoder_forward.3} parent=11 // pred_check
          %p495 = pneg %p327
        $region62: #{encoder_forward.3} parent=11 // pred_check_branch
          %497 = sbr.rel (%p495) target = $region64
        $region63: #{encoder_forward.3} parent=11 // pred_region
          _
        $region64: #{encoder_forward.3} parent=11 // pred_fallthru
          _
        // Predicated region
        $region65: #{encoder_forward.3} parent=11 // pred_check
          %p498 = pneg %p348
        $region66: #{encoder_forward.3} parent=11 // pred_check_branch
          %500 = sbr.rel (%p498) target = $region68
        $region67: #{encoder_forward.3} parent=11 // pred_region
          _
        $region68: #{encoder_forward.3} parent=11 // pred_fallthru
          _
        // Predicated region
        $region69: #{encoder_forward.3} parent=11 // pred_check
          %p501 = pneg %p369
        $region70: #{encoder_forward.3} parent=11 // pred_check_branch
          %503 = sbr.rel (%p501) target = $region72
        $region71: #{encoder_forward.3} parent=11 // pred_region
          _
        $region72: #{encoder_forward.3} parent=11 // pred_fallthru
          _
        // Predicated region
        $region73: #{encoder_forward.3} parent=11 // pred_check
          %p504 = pneg %p390
        $region74: #{encoder_forward.3} parent=11 // pred_check_branch
          %506 = sbr.rel (%p504) target = $region76
        $region75: #{encoder_forward.3} parent=11 // pred_region
          _
        $region76: #{encoder_forward.3} parent=11 // pred_fallthru
          _
      $region12: #{encoder_forward.3} parent=5 // pred_fallthru
        _
      %p507 = scmp.lt.s32.totalorder %s28, 2
      // Predicated region
      $region77: #{encoder_forward.3} parent=5 // pred_check
        %p508 = pneg %p507
      $region78: #{encoder_forward.3} parent=5 // pred_check_branch
        %510 = sbr.rel (%p508) target = $region80
      $region79: #{encoder_forward.3} parent=5 // pred_region
        // Predicated region
        $region81: #{encoder_forward.3} parent=79 // pred_check
          %p511 = pneg %p48
        $region82: #{encoder_forward.3} parent=79 // pred_check_branch
          %513 = sbr.rel (%p511) target = $region84
        $region83: #{encoder_forward.3} parent=79 // pred_region
          %s514 = sand.u32 %s38, 1
          %s515 = scalar_lea.sflag [#allocation3], %s514
          %s516 = sand.u32 %s38, 1
          %s517 = smul.addr %s516, 8
          %s518 = scalar_lea.vmem [#allocation2], %s517
          %s520 = ssub.s32 128, 128
          %521 = vsyncadd %s515, %s520
          %s522 = smul.addr %s28, 128
          %s523 = scalar_lea.hbm %s0, %s522
          %s525 = sshll.u32 %s518, 4
          %s526 = int_to_ptr.vmem [resolvable:$true] %s525
          %528 = dma.hbm_to_vmem [thread:$0]  %s523, 128, %s526, %s515
        $region84: #{encoder_forward.3} parent=79 // pred_fallthru
          _
      $region80: #{encoder_forward.3} parent=5 // pred_fallthru
        _
      %p529 = scmp.le.s32.totalorder 1, %s28
      %p530 = scmp.lt.s32.totalorder %s28, 3
      %p531 = pnand %p529, %p530
      %p532 = pneg %p531
      // Predicated region
      $region85: #{encoder_forward.3} parent=5 // pred_check
        _
      $region86: #{encoder_forward.3} parent=5 // pred_check_branch
        %534 = sbr.rel (%p531) target = $region88
      $region87: #{encoder_forward.3} parent=5 // pred_region
        %s535 = ssub.s32 %s28, 1
        %s536 = sand.u32 %s41, 1
        %s537 = scalar_lea.sflag [#allocation3], %s536
        %s538 = sand.u32 %s41, 1
        %s539 = smul.addr %s538, 8
        %s540 = scalar_lea.vmem [#allocation2], %s539
        // Predicated region
        $region89: #{encoder_forward.3} parent=87 // pred_check
          %p541 = pneg %p54
        $region90: #{encoder_forward.3} parent=87 // pred_check_branch
          %543 = sbr.rel (%p541) target = $region92
        $region91: #{encoder_forward.3} parent=87 // pred_region
          %544 = dma.done %s537, 128
        $region92: #{encoder_forward.3} parent=87 // pred_fallthru
          _
        // Predicated region
        $region93: #{encoder_forward.3} parent=87 // pred_check
          %p545 = pneg %p201
        $region94: #{encoder_forward.3} parent=87 // pred_check_branch
          %547 = sbr.rel (%p545) target = $region96
        $region95: #{encoder_forward.3} parent=87 // pred_region
          %548 = dma.done [#allocation5], 512
        $region96: #{encoder_forward.3} parent=87 // pred_fallthru
          _
        // Predicated region
        $region97: #{encoder_forward.3} parent=87 // pred_check
          %p549 = pneg %p243
        $region98: #{encoder_forward.3} parent=87 // pred_check_branch
          %551 = sbr.rel (%p549) target = $region100
        $region99: #{encoder_forward.3} parent=87 // pred_region
          %552 = dma.done [#allocation5], 512
        $region100: #{encoder_forward.3} parent=87 // pred_fallthru
          _
        // Predicated region
        $region101: #{encoder_forward.3} parent=87 // pred_check
          %p553 = pneg %p264
        $region102: #{encoder_forward.3} parent=87 // pred_check_branch
          %555 = sbr.rel (%p553) target = $region104
        $region103: #{encoder_forward.3} parent=87 // pred_region
          %556 = dma.done [#allocation8], 16
        $region104: #{encoder_forward.3} parent=87 // pred_fallthru
          _
        %s557 = sand.u32 %s41, 1
        %s558 = scalar_lea.sflag [#allocation3], %s557
        %s559 = sand.u32 %s41, 1
        %s560 = smul.addr %s559, 8
        %s561 = scalar_lea.vmem [#allocation2], %s560
        %p562 = pneg %p54
        %p563 = pneg %p51
        %p564 = pneg %p75
        %p565 = pneg %p72
        %p566 = pneg %p96
        %p567 = pneg %p93
        %p568 = pneg %p117
        %p569 = pneg %p114
        %p570 = pneg %p138
        %p571 = pneg %p135
        %p572 = pneg %p159
        %p573 = pneg %p156
        %p574 = pneg %p180
        %p575 = pneg %p177
        %p576 = pneg %p201
        %p577 = pneg %p198
        %p578 = pneg %p222
        %p579 = pneg %p219
        %p580 = pneg %p243
        %p581 = pneg %p240
        %p582 = pneg %p264
        %p583 = pneg %p261
        %p584 = pneg %p285
        %p585 = pneg %p282
        %p586 = pneg %p306
        %p587 = pneg %p303
        %p588 = pneg %p327
        %p589 = pneg %p324
        %p590 = pneg %p348
        %p591 = pneg %p345
        %p592 = pneg %p369
        %p593 = pneg %p366
        %p594 = pneg %p390
        %p595 = pneg %p387
        %p596 = pneg %p416
        %p597 = pneg %p413
        %p598 = scmp.lt.s32.totalorder %s33, 1
        %s599 = scalar_select %p598, %s33, 1
        %s600 = smul.addr %s599, 8
        %s601 = scalar_lea.vmem %s17, %s600
        %p602 = scmp.lt.s32.totalorder %s33, 1
        %s603 = scalar_select %p602, %s33, 1
        %s604 = smul.addr %s603, 8
        %s605 = scalar_lea.vmem %s17, %s604
        %v606 = vld [vmem:[%s540] sm:$0xff]
        %v607 = vld [vmem:[%s1] sm:$0xff]
        %v608 = vld [vmem:[%s1 + $0x8] sm:$0xff]
        %v609 = vld [vmem:[%s1 + $0x10] sm:$0xff]
        %v610 = vld [vmem:[%s1 + $0x18] sm:$0xff]
        %v611 = vld [vmem:[%s2] sm:$0x1]
        %v613 = vlaneseq
        %v614 = vshrl.u32 %v613, 7
        %v615 = vsub.s32 0, %v614
        %v616 = vrot.slane %v611, %v615
        %vm618 = vcmask 261120
        %v620 = vsel %vm618, %v606, 0
        %622 = vmatprep.subr.mxu0 0.0
        %623 = vmatpush1.msra.mxu0 %v607
        %624 = vmatprep.subr.mxu0 0.0
        %625 = vmatpush1.msra.mxu0 %v608
        %626 = vmatprep.subr.mxu0 0.0
        %627 = vmatpush1.msra.mxu0 %v609
        %628 = vmatprep.subr.mxu0 0.0
        %629 = vmatpush1.msra.mxu0 %v610
        %630 = vmatprep.subr.mxu0 0.0
        %631 = vmatpush1.msra.mxu0 0.0
        %632 = vmatprep.subr.mxu0 0.0
        %633 = vmatpush1.msra.mxu0 0.0
        %634 = vmatprep.subr.mxu0 0.0
        %635 = vmatpush1.msra.mxu0 0.0
        %636 = vmatprep.subr.mxu0 0.0
        %637 = vmatpush1.msra.mxu0 0.0
        %638 = vmatprep.subr.mxu0 0.0
        %639 = vmatpush1.msra.mxu0 0.0
        %640 = vmatprep.subr.mxu0 0.0
        %641 = vmatpush1.msra.mxu0 0.0
        %642 = vmatprep.subr.mxu0 0.0
        %643 = vmatpush1.msra.mxu0 0.0
        %644 = vmatprep.subr.mxu0 0.0
        %645 = vmatpush1.msra.mxu0 0.0
        %646 = vmatprep.subr.mxu0 0.0
        %647 = vmatpush1.msra.mxu0 0.0
        %648 = vmatprep.subr.mxu0 0.0
        %649 = vmatpush1.msra.mxu0 0.0
        %650 = vmatprep.subr.mxu0 0.0
        %651 = vmatpush1.msra.mxu0 0.0
        %652 = vmatprep.subr.mxu0 0.0
        %653 = vmatpush1.msra.mxu0 0.0
        %654 = vmatprep.subr.mxu0 0.0
        %655 = vmatpush1.msra.mxu0 0.0
        %656 = vmatprep.subr.mxu0 0.0
        %657 = vmatpush1.msra.mxu0 0.0
        %658 = vmatprep.subr.mxu0 0.0
        %659 = vmatpush1.msra.mxu0 0.0
        %660 = vmatprep.subr.mxu0 0.0
        %661 = vmatpush1.msra.mxu0 0.0
        %662 = vmatprep.subr.mxu0 0.0
        %663 = vmatpush1.msra.mxu0 0.0
        %664 = vmatprep.subr.mxu0 0.0
        %665 = vmatpush1.msra.mxu0 0.0
        %666 = vmatprep.subr.mxu0 0.0
        %667 = vmatpush1.msra.mxu0 0.0
        %668 = vmatprep.subr.mxu0 0.0
        %669 = vmatpush1.msra.mxu0 0.0
        %670 = vmatprep.subr.mxu0 0.0
        %671 = vmatpush1.msra.mxu0 0.0
        %672 = vmatprep.subr.mxu0 0.0
        %673 = vmatpush1.msra.mxu0 0.0
        %674 = vmatprep.subr.mxu0 0.0
        %675 = vmatpush1.msra.mxu0 0.0
        %676 = vmatprep.subr.mxu0 0.0
        %677 = vmatpush1.msra.mxu0 0.0
        %678 = vmatprep.subr.mxu0 0.0
        %679 = vmatpush1.msra.mxu0 0.0
        %680 = vmatprep.subr.mxu0 0.0
        %681 = vmatpush1.msra.mxu0 0.0
        %682 = vmatprep.subr.mxu0 0.0
        %683 = vmatpush1.msra.mxu0 0.0
        %684 = vmatprep.subr.mxu0 0.0
        %685 = vmatpush1.msra.mxu0 0.0
        %686 = vmatprep.mubr.f32.mxu0 0.0
        %687 = vmatmul.mubr.f32.gmra.mrb[0].mxu0 %v620
        %v688 = vpop.f32.mrb[0].mxu0
        %v689 = vadd.f32 %v616, %v688
        %v690 = vpop.f32.mrb[0].mxu0
        %691 = vdwg.mxu0
        %v692 = vld [vmem:[%s3] sm:$0xff]
        %v693 = vld [vmem:[%s3 + $0x8] sm:$0xff]
        %v694 = vld [vmem:[%s3 + $0x10] sm:$0xff]
        %v695 = vld [vmem:[%s3 + $0x18] sm:$0xff]
        %v696 = vld [vmem:[%s4] sm:$0x1]
        %v698 = vlaneseq
        %v699 = vshrl.u32 %v698, 7
        %v700 = vsub.s32 0, %v699
        %v701 = vrot.slane %v696, %v700
        %703 = vmatprep.subr.mxu0 0.0
        %704 = vmatpush1.msra.mxu0 %v692
        %705 = vmatprep.subr.mxu0 0.0
        %706 = vmatpush1.msra.mxu0 %v693
        %707 = vmatprep.subr.mxu0 0.0
        %708 = vmatpush1.msra.mxu0 %v694
        %709 = vmatprep.subr.mxu0 0.0
        %710 = vmatpush1.msra.mxu0 %v695
        %711 = vmatprep.subr.mxu0 0.0
        %712 = vmatpush1.msra.mxu0 0.0
        %713 = vmatprep.subr.mxu0 0.0
        %714 = vmatpush1.msra.mxu0 0.0
        %715 = vmatprep.subr.mxu0 0.0
        %716 = vmatpush1.msra.mxu0 0.0
        %717 = vmatprep.subr.mxu0 0.0
        %718 = vmatpush1.msra.mxu0 0.0
        %719 = vmatprep.subr.mxu0 0.0
        %720 = vmatpush1.msra.mxu0 0.0
        %721 = vmatprep.subr.mxu0 0.0
        %722 = vmatpush1.msra.mxu0 0.0
        %723 = vmatprep.subr.mxu0 0.0
        %724 = vmatpush1.msra.mxu0 0.0
        %725 = vmatprep.subr.mxu0 0.0
        %726 = vmatpush1.msra.mxu0 0.0
        %727 = vmatprep.subr.mxu0 0.0
        %728 = vmatpush1.msra.mxu0 0.0
        %729 = vmatprep.subr.mxu0 0.0
        %730 = vmatpush1.msra.mxu0 0.0
        %731 = vmatprep.subr.mxu0 0.0
        %732 = vmatpush1.msra.mxu0 0.0
        %733 = vmatprep.subr.mxu0 0.0
        %734 = vmatpush1.msra.mxu0 0.0
        %735 = vmatprep.subr.mxu0 0.0
        %736 = vmatpush1.msra.mxu0 0.0
        %737 = vmatprep.subr.mxu0 0.0
        %738 = vmatpush1.msra.mxu0 0.0
        %739 = vmatprep.subr.mxu0 0.0
        %740 = vmatpush1.msra.mxu0 0.0
        %741 = vmatprep.subr.mxu0 0.0
        %742 = vmatpush1.msra.mxu0 0.0
        %743 = vmatprep.subr.mxu0 0.0
        %744 = vmatpush1.msra.mxu0 0.0
        %745 = vmatprep.subr.mxu0 0.0
        %746 = vmatpush1.msra.mxu0 0.0
        %747 = vmatprep.subr.mxu0 0.0
        %748 = vmatpush1.msra.mxu0 0.0
        %749 = vmatprep.subr.mxu0 0.0
        %750 = vmatpush1.msra.mxu0 0.0
        %751 = vmatprep.subr.mxu0 0.0
        %752 = vmatpush1.msra.mxu0 0.0
        %753 = vmatprep.subr.mxu0 0.0
        %754 = vmatpush1.msra.mxu0 0.0
        %755 = vmatprep.subr.mxu0 0.0
        %756 = vmatpush1.msra.mxu0 0.0
        %757 = vmatprep.subr.mxu0 0.0
        %758 = vmatpush1.msra.mxu0 0.0
        %759 = vmatprep.subr.mxu0 0.0
        %760 = vmatpush1.msra.mxu0 0.0
        %761 = vmatprep.subr.mxu0 0.0
        %762 = vmatpush1.msra.mxu0 0.0
        %763 = vmatprep.subr.mxu0 0.0
        %764 = vmatpush1.msra.mxu0 0.0
        %765 = vmatprep.subr.mxu0 0.0
        %766 = vmatpush1.msra.mxu0 0.0
        %767 = vmatprep.mubr.f32.mxu0 0.0
        %768 = vmatmul.mubr.f32.gmra.mrb[0].mxu0 %v620
        %v769 = vpop.f32.mrb[0].mxu0
        %v770 = vadd.f32 %v701, %v769
        %v771 = vpop.f32.mrb[0].mxu0
        %772 = vdwg.mxu0
        %v773 = vld [vmem:[%s5] sm:$0xff]
        %v774 = vld [vmem:[%s5 + $0x8] sm:$0xff]
        %v775 = vld [vmem:[%s5 + $0x10] sm:$0xff]
        %v776 = vld [vmem:[%s5 + $0x18] sm:$0xff]
        %v777 = vld [vmem:[%s6] sm:$0x1]
        %v779 = vlaneseq
        %v780 = vshrl.u32 %v779, 7
        %v781 = vsub.s32 0, %v780
        %v782 = vrot.slane %v777, %v781
        %784 = vmatprep.subr.mxu0 0.0
        %785 = vmatpush1.msra.mxu0 %v773
        %786 = vmatprep.subr.mxu0 0.0
        %787 = vmatpush1.msra.mxu0 %v774
        %788 = vmatprep.subr.mxu0 0.0
        %789 = vmatpush1.msra.mxu0 %v775
        %790 = vmatprep.subr.mxu0 0.0
        %791 = vmatpush1.msra.mxu0 %v776
        %792 = vmatprep.subr.mxu0 0.0
        %793 = vmatpush1.msra.mxu0 0.0
        %794 = vmatprep.subr.mxu0 0.0
        %795 = vmatpush1.msra.mxu0 0.0
        %796 = vmatprep.subr.mxu0 0.0
        %797 = vmatpush1.msra.mxu0 0.0
        %798 = vmatprep.subr.mxu0 0.0
        %799 = vmatpush1.msra.mxu0 0.0
        %800 = vmatprep.subr.mxu0 0.0
        %801 = vmatpush1.msra.mxu0 0.0
        %802 = vmatprep.subr.mxu0 0.0
        %803 = vmatpush1.msra.mxu0 0.0
        %804 = vmatprep.subr.mxu0 0.0
        %805 = vmatpush1.msra.mxu0 0.0
        %806 = vmatprep.subr.mxu0 0.0
        %807 = vmatpush1.msra.mxu0 0.0
        %808 = vmatprep.subr.mxu0 0.0
        %809 = vmatpush1.msra.mxu0 0.0
        %810 = vmatprep.subr.mxu0 0.0
        %811 = vmatpush1.msra.mxu0 0.0
        %812 = vmatprep.subr.mxu0 0.0
        %813 = vmatpush1.msra.mxu0 0.0
        %814 = vmatprep.subr.mxu0 0.0
        %815 = vmatpush1.msra.mxu0 0.0
        %816 = vmatprep.subr.mxu0 0.0
        %817 = vmatpush1.msra.mxu0 0.0
        %818 = vmatprep.subr.mxu0 0.0
        %819 = vmatpush1.msra.mxu0 0.0
        %820 = vmatprep.subr.mxu0 0.0
        %821 = vmatpush1.msra.mxu0 0.0
        %822 = vmatprep.subr.mxu0 0.0
        %823 = vmatpush1.msra.mxu0 0.0
        %824 = vmatprep.subr.mxu0 0.0
        %825 = vmatpush1.msra.mxu0 0.0
        %826 = vmatprep.subr.mxu0 0.0
        %827 = vmatpush1.msra.mxu0 0.0
        %828 = vmatprep.subr.mxu0 0.0
        %829 = vmatpush1.msra.mxu0 0.0
        %830 = vmatprep.subr.mxu0 0.0
        %831 = vmatpush1.msra.mxu0 0.0
        %832 = vmatprep.subr.mxu0 0.0
        %833 = vmatpush1.msra.mxu0 0.0
        %834 = vmatprep.subr.mxu0 0.0
        %835 = vmatpush1.msra.mxu0 0.0
        %836 = vmatprep.subr.mxu0 0.0
        %837 = vmatpush1.msra.mxu0 0.0
        %838 = vmatprep.subr.mxu0 0.0
        %839 = vmatpush1.msra.mxu0 0.0
        %840 = vmatprep.subr.mxu0 0.0
        %841 = vmatpush1.msra.mxu0 0.0
        %842 = vmatprep.subr.mxu0 0.0
        %843 = vmatpush1.msra.mxu0 0.0
        %844 = vmatprep.subr.mxu0 0.0
        %845 = vmatpush1.msra.mxu0 0.0
        %846 = vmatprep.subr.mxu0 0.0
        %847 = vmatpush1.msra.mxu0 0.0
        %848 = vmatprep.mubr.f32.mxu0 0.0
        %849 = vmatmul.mubr.f32.gmra.mrb[0].mxu0 %v620
        %v850 = vpop.f32.mrb[0].mxu0
        %v851 = vadd.f32 %v782, %v850
        %v852 = vpop.f32.mrb[0].mxu0
        %853 = vdwg.mxu0
        %vm854 = vcmask 64512
        %v856 = vsel %vm854, %v689, 0
        %v859 = vsel %vm854, %v770, 0
        %861 = vmatprep.subr.mxu0 0.0
        %862 = vmatpush1.xpose.msra.mxu0 %v859
        %863 = vmatprep.subr.mxu0 0.0
        %864 = vmatpush1.xpose.msra.mxu0 0.0
        %865 = vmatprep.subr.mxu0 0.0
        %866 = vmatpush1.xpose.msra.mxu0 0.0
        %867 = vmatprep.subr.mxu0 0.0
        %868 = vmatpush1.xpose.msra.mxu0 0.0
        %869 = vmatprep.subr.mxu0 0.0
        %870 = vmatpush1.xpose.msra.mxu0 0.0
        %871 = vmatprep.subr.mxu0 0.0
        %872 = vmatpush1.xpose.msra.mxu0 0.0
        %873 = vmatprep.subr.mxu0 0.0
        %874 = vmatpush1.xpose.msra.mxu0 0.0
        %875 = vmatprep.subr.mxu0 0.0
        %876 = vmatpush1.xpose.msra.mxu0 0.0
        %877 = vmatprep.subr.mxu0 0.0
        %878 = vmatpush1.xpose.msra.mxu0 0.0
        %879 = vmatprep.subr.mxu0 0.0
        %880 = vmatpush1.xpose.msra.mxu0 0.0
        %881 = vmatprep.subr.mxu0 0.0
        %882 = vmatpush1.xpose.msra.mxu0 0.0
        %883 = vmatprep.subr.mxu0 0.0
        %884 = vmatpush1.xpose.msra.mxu0 0.0
        %885 = vmatprep.subr.mxu0 0.0
        %886 = vmatpush1.xpose.msra.mxu0 0.0
        %887 = vmatprep.subr.mxu0 0.0
        %888 = vmatpush1.xpose.msra.mxu0 0.0
        %889 = vmatprep.subr.mxu0 0.0
        %890 = vmatpush1.xpose.msra.mxu0 0.0
        %891 = vmatprep.subr.mxu0 0.0
        %892 = vmatpush1.xpose.msra.mxu0 0.0
        %893 = vmatprep.subr.mxu0 0.0
        %894 = vmatpush1.xpose.msra.mxu0 0.0
        %895 = vmatprep.subr.mxu0 0.0
        %896 = vmatpush1.xpose.msra.mxu0 0.0
        %897 = vmatprep.subr.mxu0 0.0
        %898 = vmatpush1.xpose.msra.mxu0 0.0
        %899 = vmatprep.subr.mxu0 0.0
        %900 = vmatpush1.xpose.msra.mxu0 0.0
        %901 = vmatprep.subr.mxu0 0.0
        %902 = vmatpush1.xpose.msra.mxu0 0.0
        %903 = vmatprep.subr.mxu0 0.0
        %904 = vmatpush1.xpose.msra.mxu0 0.0
        %905 = vmatprep.subr.mxu0 0.0
        %906 = vmatpush1.xpose.msra.mxu0 0.0
        %907 = vmatprep.subr.mxu0 0.0
        %908 = vmatpush1.xpose.msra.mxu0 0.0
        %909 = vmatprep.subr.mxu0 0.0
        %910 = vmatpush1.xpose.msra.mxu0 0.0
        %911 = vmatprep.subr.mxu0 0.0
        %912 = vmatpush1.xpose.msra.mxu0 0.0
        %913 = vmatprep.subr.mxu0 0.0
        %914 = vmatpush1.xpose.msra.mxu0 0.0
        %915 = vmatprep.subr.mxu0 0.0
        %916 = vmatpush1.xpose.msra.mxu0 0.0
        %917 = vmatprep.subr.mxu0 0.0
        %918 = vmatpush1.xpose.msra.mxu0 0.0
        %919 = vmatprep.subr.mxu0 0.0
        %920 = vmatpush1.xpose.msra.mxu0 0.0
        %921 = vmatprep.subr.mxu0 0.0
        %922 = vmatpush1.xpose.msra.mxu0 0.0
        %923 = vmatprep.subr.mxu0 0.0
        %924 = vmatpush1.xpose.msra.mxu0 0.0
        %925 = vmatprep.mubr.f32.mxu0 0.0
        %926 = vmatmul.mubr.f32.gmra.mrb[0].mxu0 %v856
        %v927 = vpop.f32.mrb[0].mxu0
        %v928 = vadd.f32 0.0, %v927
        %v929 = vpop.f32.mrb[0].mxu0
        %930 = vdwg.mxu0
        %v931 = vmul.f32 %v928, 0.35355338
        %v932 = vsel %vm854, %v931, -inf
        %933 = vmax.xlane.f32.xlu0 %v932
        %v934 = vpop.xlane.xlu0 %933
        %v935 = vsub.f32 %v931, %v934
        %v936 = vmul.f32 %v935, 1.442695
        %v937 = vpow.pop %v936
        %v938 = vsel %vm854, %v937, 0.0
        %939 = vadd.xlane.f32.xlu0 %v938
        %v940 = vpop.xlane.xlu0 %939
        %v941 = vrcp.pop %v940
        %v942 = vmul.f32 %v937, %v941
        %v944 = vsel %vm854, %v942, 0
        %946 = vmatprep.subr.mxu0 0.0
        %947 = vmatpush1.msra.mxu0 %v851
        %948 = vmatprep.subr.mxu0 0.0
        %949 = vmatpush1.msra.mxu0 0.0
        %950 = vmatprep.subr.mxu0 0.0
        %951 = vmatpush1.msra.mxu0 0.0
        %952 = vmatprep.subr.mxu0 0.0
        %953 = vmatpush1.msra.mxu0 0.0
        %954 = vmatprep.subr.mxu0 0.0
        %955 = vmatpush1.msra.mxu0 0.0
        %956 = vmatprep.subr.mxu0 0.0
        %957 = vmatpush1.msra.mxu0 0.0
        %958 = vmatprep.subr.mxu0 0.0
        %959 = vmatpush1.msra.mxu0 0.0
        %960 = vmatprep.subr.mxu0 0.0
        %961 = vmatpush1.msra.mxu0 0.0
        %962 = vmatprep.subr.mxu0 0.0
        %963 = vmatpush1.msra.mxu0 0.0
        %964 = vmatprep.subr.mxu0 0.0
        %965 = vmatpush1.msra.mxu0 0.0
        %966 = vmatprep.subr.mxu0 0.0
        %967 = vmatpush1.msra.mxu0 0.0
        %968 = vmatprep.subr.mxu0 0.0
        %969 = vmatpush1.msra.mxu0 0.0
        %970 = vmatprep.subr.mxu0 0.0
        %971 = vmatpush1.msra.mxu0 0.0
        %972 = vmatprep.subr.mxu0 0.0
        %973 = vmatpush1.msra.mxu0 0.0
        %974 = vmatprep.subr.mxu0 0.0
        %975 = vmatpush1.msra.mxu0 0.0
        %976 = vmatprep.subr.mxu0 0.0
        %977 = vmatpush1.msra.mxu0 0.0
        %978 = vmatprep.subr.mxu0 0.0
        %979 = vmatpush1.msra.mxu0 0.0
        %980 = vmatprep.subr.mxu0 0.0
        %981 = vmatpush1.msra.mxu0 0.0
        %982 = vmatprep.subr.mxu0 0.0
        %983 = vmatpush1.msra.mxu0 0.0
        %984 = vmatprep.subr.mxu0 0.0
        %985 = vmatpush1.msra.mxu0 0.0
        %986 = vmatprep.subr.mxu0 0.0
        %987 = vmatpush1.msra.mxu0 0.0
        %988 = vmatprep.subr.mxu0 0.0
        %989 = vmatpush1.msra.mxu0 0.0
        %990 = vmatprep.subr.mxu0 0.0
        %991 = vmatpush1.msra.mxu0 0.0
        %992 = vmatprep.subr.mxu0 0.0
        %993 = vmatpush1.msra.mxu0 0.0
        %994 = vmatprep.subr.mxu0 0.0
        %995 = vmatpush1.msra.mxu0 0.0
        %996 = vmatprep.subr.mxu0 0.0
        %997 = vmatpush1.msra.mxu0 0.0
        %998 = vmatprep.subr.mxu0 0.0
        %999 = vmatpush1.msra.mxu0 0.0
        %1000 = vmatprep.subr.mxu0 0.0
        %1001 = vmatpush1.msra.mxu0 0.0
        %1002 = vmatprep.subr.mxu0 0.0
        %1003 = vmatpush1.msra.mxu0 0.0
        %1004 = vmatprep.subr.mxu0 0.0
        %1005 = vmatpush1.msra.mxu0 0.0
        %1006 = vmatprep.subr.mxu0 0.0
        %1007 = vmatpush1.msra.mxu0 0.0
        %1008 = vmatprep.subr.mxu0 0.0
        %1009 = vmatpush1.msra.mxu0 0.0
        %1010 = vmatprep.mubr.f32.mxu0 0.0
        %1011 = vmatmul.mubr.f32.gmra.mrb[0].mxu0 %v944
        %v1012 = vpop.f32.mrb[0].mxu0
        %v1013 = vadd.f32 0.0, %v1012
        %v1014 = vpop.f32.mrb[0].mxu0
        %1015 = vdwg.mxu0
        %v1016 = vld [vmem:[#allocation4] sm:$0xff]
        %1021 = vrot.lane.b32.xlu0 %v607, 120
        %v1022 = vpop.permute.xlu0 %1021
        %1023 = vrot.lane.b32.xlu0 %v608, 120
        %v1024 = vpop.permute.xlu0 %1023
        %1025 = vrot.lane.b32.xlu0 %v609, 120
        %v1026 = vpop.permute.xlu0 %1025
        %1027 = vrot.lane.b32.xlu0 %v610, 120
        %v1028 = vpop.permute.xlu0 %1027
        %1033 = vrot.lane.b32.xlu0 %v616, 120
        %v1034 = vpop.permute.xlu0 %1033
        %1036 = vmatprep.subr.mxu0 0.0
        %1037 = vmatpush1.msra.mxu0 %v1022
        %1038 = vmatprep.subr.mxu0 0.0
        %1039 = vmatpush1.msra.mxu0 %v1024
        %1040 = vmatprep.subr.mxu0 0.0
        %1041 = vmatpush1.msra.mxu0 %v1026
        %1042 = vmatprep.subr.mxu0 0.0
        %1043 = vmatpush1.msra.mxu0 %v1028
        %1044 = vmatprep.subr.mxu0 0.0
        %1045 = vmatpush1.msra.mxu0 0.0
        %1046 = vmatprep.subr.mxu0 0.0
        %1047 = vmatpush1.msra.mxu0 0.0
        %1048 = vmatprep.subr.mxu0 0.0
        %1049 = vmatpush1.msra.mxu0 0.0
        %1050 = vmatprep.subr.mxu0 0.0
        %1051 = vmatpush1.msra.mxu0 0.0
        %1052 = vmatprep.subr.mxu0 0.0
        %1053 = vmatpush1.msra.mxu0 0.0
        %1054 = vmatprep.subr.mxu0 0.0
        %1055 = vmatpush1.msra.mxu0 0.0
        %1056 = vmatprep.subr.mxu0 0.0
        %1057 = vmatpush1.msra.mxu0 0.0
        %1058 = vmatprep.subr.mxu0 0.0
        %1059 = vmatpush1.msra.mxu0 0.0
        %1060 = vmatprep.subr.mxu0 0.0
        %1061 = vmatpush1.msra.mxu0 0.0
        %1062 = vmatprep.subr.mxu0 0.0
        %1063 = vmatpush1.msra.mxu0 0.0
        %1064 = vmatprep.subr.mxu0 0.0
        %1065 = vmatpush1.msra.mxu0 0.0
        %1066 = vmatprep.subr.mxu0 0.0
        %1067 = vmatpush1.msra.mxu0 0.0
        %1068 = vmatprep.subr.mxu0 0.0
        %1069 = vmatpush1.msra.mxu0 0.0
        %1070 = vmatprep.subr.mxu0 0.0
        %1071 = vmatpush1.msra.mxu0 0.0
        %1072 = vmatprep.subr.mxu0 0.0
        %1073 = vmatpush1.msra.mxu0 0.0
        %1074 = vmatprep.subr.mxu0 0.0
        %1075 = vmatpush1.msra.mxu0 0.0
        %1076 = vmatprep.subr.mxu0 0.0
        %1077 = vmatpush1.msra.mxu0 0.0
        %1078 = vmatprep.subr.mxu0 0.0
        %1079 = vmatpush1.msra.mxu0 0.0
        %1080 = vmatprep.subr.mxu0 0.0
        %1081 = vmatpush1.msra.mxu0 0.0
        %1082 = vmatprep.subr.mxu0 0.0
        %1083 = vmatpush1.msra.mxu0 0.0
        %1084 = vmatprep.subr.mxu0 0.0
        %1085 = vmatpush1.msra.mxu0 0.0
        %1086 = vmatprep.subr.mxu0 0.0
        %1087 = vmatpush1.msra.mxu0 0.0
        %1088 = vmatprep.subr.mxu0 0.0
        %1089 = vmatpush1.msra.mxu0 0.0
        %1090 = vmatprep.subr.mxu0 0.0
        %1091 = vmatpush1.msra.mxu0 0.0
        %1092 = vmatprep.subr.mxu0 0.0
        %1093 = vmatpush1.msra.mxu0 0.0
        %1094 = vmatprep.subr.mxu0 0.0
        %1095 = vmatpush1.msra.mxu0 0.0
        %1096 = vmatprep.subr.mxu0 0.0
        %1097 = vmatpush1.msra.mxu0 0.0
        %1098 = vmatprep.subr.mxu0 0.0
        %1099 = vmatpush1.msra.mxu0 0.0
        %1100 = vmatprep.mubr.f32.mxu0 0.0
        %1101 = vmatmul.mubr.f32.gmra.mrb[0].mxu0 %v620
        %v1102 = vpop.f32.mrb[0].mxu0
        %v1103 = vadd.f32 %v1034, %v1102
        %v1104 = vpop.f32.mrb[0].mxu0
        %1105 = vdwg.mxu0
        %1110 = vrot.lane.b32.xlu0 %v692, 120
        %v1111 = vpop.permute.xlu0 %1110
        %1112 = vrot.lane.b32.xlu0 %v693, 120
        %v1113 = vpop.permute.xlu0 %1112
        %1114 = vrot.lane.b32.xlu0 %v694, 120
        %v1115 = vpop.permute.xlu0 %1114
        %1116 = vrot.lane.b32.xlu0 %v695, 120
        %v1117 = vpop.permute.xlu0 %1116
        %1122 = vrot.lane.b32.xlu0 %v701, 120
        %v1123 = vpop.permute.xlu0 %1122
        %1125 = vmatprep.subr.mxu0 0.0
        %1126 = vmatpush1.msra.mxu0 %v1111
        %1127 = vmatprep.subr.mxu0 0.0
        %1128 = vmatpush1.msra.mxu0 %v1113
        %1129 = vmatprep.subr.mxu0 0.0
        %1130 = vmatpush1.msra.mxu0 %v1115
        %1131 = vmatprep.subr.mxu0 0.0
        %1132 = vmatpush1.msra.mxu0 %v1117
        %1133 = vmatprep.subr.mxu0 0.0
        %1134 = vmatpush1.msra.mxu0 0.0
        %1135 = vmatprep.subr.mxu0 0.0
        %1136 = vmatpush1.msra.mxu0 0.0
        %1137 = vmatprep.subr.mxu0 0.0
        %1138 = vmatpush1.msra.mxu0 0.0
        %1139 = vmatprep.subr.mxu0 0.0
        %1140 = vmatpush1.msra.mxu0 0.0
        %1141 = vmatprep.subr.mxu0 0.0
        %1142 = vmatpush1.msra.mxu0 0.0
        %1143 = vmatprep.subr.mxu0 0.0
        %1144 = vmatpush1.msra.mxu0 0.0
        %1145 = vmatprep.subr.mxu0 0.0
        %1146 = vmatpush1.msra.mxu0 0.0
        %1147 = vmatprep.subr.mxu0 0.0
        %1148 = vmatpush1.msra.mxu0 0.0
        %1149 = vmatprep.subr.mxu0 0.0
        %1150 = vmatpush1.msra.mxu0 0.0
        %1151 = vmatprep.subr.mxu0 0.0
        %1152 = vmatpush1.msra.mxu0 0.0
        %1153 = vmatprep.subr.mxu0 0.0
        %1154 = vmatpush1.msra.mxu0 0.0
        %1155 = vmatprep.subr.mxu0 0.0
        %1156 = vmatpush1.msra.mxu0 0.0
        %1157 = vmatprep.subr.mxu0 0.0
        %1158 = vmatpush1.msra.mxu0 0.0
        %1159 = vmatprep.subr.mxu0 0.0
        %1160 = vmatpush1.msra.mxu0 0.0
        %1161 = vmatprep.subr.mxu0 0.0
        %1162 = vmatpush1.msra.mxu0 0.0
        %1163 = vmatprep.subr.mxu0 0.0
        %1164 = vmatpush1.msra.mxu0 0.0
        %1165 = vmatprep.subr.mxu0 0.0
        %1166 = vmatpush1.msra.mxu0 0.0
        %1167 = vmatprep.subr.mxu0 0.0
        %1168 = vmatpush1.msra.mxu0 0.0
        %1169 = vmatprep.subr.mxu0 0.0
        %1170 = vmatpush1.msra.mxu0 0.0
        %1171 = vmatprep.subr.mxu0 0.0
        %1172 = vmatpush1.msra.mxu0 0.0
        %1173 = vmatprep.subr.mxu0 0.0
        %1174 = vmatpush1.msra.mxu0 0.0
        %1175 = vmatprep.subr.mxu0 0.0
        %1176 = vmatpush1.msra.mxu0 0.0
        %1177 = vmatprep.subr.mxu0 0.0
        %1178 = vmatpush1.msra.mxu0 0.0
        %1179 = vmatprep.subr.mxu0 0.0
        %1180 = vmatpush1.msra.mxu0 0.0
        %1181 = vmatprep.subr.mxu0 0.0
        %1182 = vmatpush1.msra.mxu0 0.0
        %1183 = vmatprep.subr.mxu0 0.0
        %1184 = vmatpush1.msra.mxu0 0.0
        %1185 = vmatprep.subr.mxu0 0.0
        %1186 = vmatpush1.msra.mxu0 0.0
        %1187 = vmatprep.subr.mxu0 0.0
        %1188 = vmatpush1.msra.mxu0 0.0
        %1189 = vmatprep.mubr.f32.mxu0 0.0
        %1190 = vmatmul.mubr.f32.gmra.mrb[0].mxu0 %v620
        %v1191 = vpop.f32.mrb[0].mxu0
        %v1192 = vadd.f32 %v1123, %v1191
        %v1193 = vpop.f32.mrb[0].mxu0
        %1194 = vdwg.mxu0
        %1199 = vrot.lane.b32.xlu0 %v773, 120
        %v1200 = vpop.permute.xlu0 %1199
        %1201 = vrot.lane.b32.xlu0 %v774, 120
        %v1202 = vpop.permute.xlu0 %1201
        %1203 = vrot.lane.b32.xlu0 %v775, 120
        %v1204 = vpop.permute.xlu0 %1203
        %1205 = vrot.lane.b32.xlu0 %v776, 120
        %v1206 = vpop.permute.xlu0 %1205
        %1211 = vrot.lane.b32.xlu0 %v782, 120
        %v1212 = vpop.permute.xlu0 %1211
        %1214 = vmatprep.subr.mxu0 0.0
        %1215 = vmatpush1.msra.mxu0 %v1200
        %1216 = vmatprep.subr.mxu0 0.0
        %1217 = vmatpush1.msra.mxu0 %v1202
        %1218 = vmatprep.subr.mxu0 0.0
        %1219 = vmatpush1.msra.mxu0 %v1204
        %1220 = vmatprep.subr.mxu0 0.0
        %1221 = vmatpush1.msra.mxu0 %v1206
        %1222 = vmatprep.subr.mxu0 0.0
        %1223 = vmatpush1.msra.mxu0 0.0
        %1224 = vmatprep.subr.mxu0 0.0
        %1225 = vmatpush1.msra.mxu0 0.0
        %1226 = vmatprep.subr.mxu0 0.0
        %1227 = vmatpush1.msra.mxu0 0.0
        %1228 = vmatprep.subr.mxu0 0.0
        %1229 = vmatpush1.msra.mxu0 0.0
        %1230 = vmatprep.subr.mxu0 0.0
        %1231 = vmatpush1.msra.mxu0 0.0
        %1232 = vmatprep.subr.mxu0 0.0
        %1233 = vmatpush1.msra.mxu0 0.0
        %1234 = vmatprep.subr.mxu0 0.0
        %1235 = vmatpush1.msra.mxu0 0.0
        %1236 = vmatprep.subr.mxu0 0.0
        %1237 = vmatpush1.msra.mxu0 0.0
        %1238 = vmatprep.subr.mxu0 0.0
        %1239 = vmatpush1.msra.mxu0 0.0
        %1240 = vmatprep.subr.mxu0 0.0
        %1241 = vmatpush1.msra.mxu0 0.0
        %1242 = vmatprep.subr.mxu0 0.0
        %1243 = vmatpush1.msra.mxu0 0.0
        %1244 = vmatprep.subr.mxu0 0.0
        %1245 = vmatpush1.msra.mxu0 0.0
        %1246 = vmatprep.subr.mxu0 0.0
        %1247 = vmatpush1.msra.mxu0 0.0
        %1248 = vmatprep.subr.mxu0 0.0
        %1249 = vmatpush1.msra.mxu0 0.0
        %1250 = vmatprep.subr.mxu0 0.0
        %1251 = vmatpush1.msra.mxu0 0.0
        %1252 = vmatprep.subr.mxu0 0.0
        %1253 = vmatpush1.msra.mxu0 0.0
        %1254 = vmatprep.subr.mxu0 0.0
        %1255 = vmatpush1.msra.mxu0 0.0
        %1256 = vmatprep.subr.mxu0 0.0
        %1257 = vmatpush1.msra.mxu0 0.0
        %1258 = vmatprep.subr.mxu0 0.0
        %1259 = vmatpush1.msra.mxu0 0.0
        %1260 = vmatprep.subr.mxu0 0.0
        %1261 = vmatpush1.msra.mxu0 0.0
        %1262 = vmatprep.subr.mxu0 0.0
        %1263 = vmatpush1.msra.mxu0 0.0
        %1264 = vmatprep.subr.mxu0 0.0
        %1265 = vmatpush1.msra.mxu0 0.0
        %1266 = vmatprep.subr.mxu0 0.0
        %1267 = vmatpush1.msra.mxu0 0.0
        %1268 = vmatprep.subr.mxu0 0.0
        %1269 = vmatpush1.msra.mxu0 0.0
        %1270 = vmatprep.subr.mxu0 0.0
        %1271 = vmatpush1.msra.mxu0 0.0
        %1272 = vmatprep.subr.mxu0 0.0
        %1273 = vmatpush1.msra.mxu0 0.0
        %1274 = vmatprep.subr.mxu0 0.0
        %1275 = vmatpush1.msra.mxu0 0.0
        %1276 = vmatprep.subr.mxu0 0.0
        %1277 = vmatpush1.msra.mxu0 0.0
        %1278 = vmatprep.mubr.f32.mxu0 0.0
        %1279 = vmatmul.mubr.f32.gmra.mrb[0].mxu0 %v620
        %v1280 = vpop.f32.mrb[0].mxu0
        %v1281 = vadd.f32 %v1212, %v1280
        %v1282 = vpop.f32.mrb[0].mxu0
        %1283 = vdwg.mxu0
        %v1285 = vsel %vm854, %v1103, 0
        %v1288 = vsel %vm854, %v1192, 0
        %1290 = vmatprep.subr.mxu0 0.0
        %1291 = vmatpush1.xpose.msra.mxu0 %v1288
        %1292 = vmatprep.subr.mxu0 0.0
        %1293 = vmatpush1.xpose.msra.mxu0 0.0
        %1294 = vmatprep.subr.mxu0 0.0
        %1295 = vmatpush1.xpose.msra.mxu0 0.0
        %1296 = vmatprep.subr.mxu0 0.0
        %1297 = vmatpush1.xpose.msra.mxu0 0.0
        %1298 = vmatprep.subr.mxu0 0.0
        %1299 = vmatpush1.xpose.msra.mxu0 0.0
        %1300 = vmatprep.subr.mxu0 0.0
        %1301 = vmatpush1.xpose.msra.mxu0 0.0
        %1302 = vmatprep.subr.mxu0 0.0
        %1303 = vmatpush1.xpose.msra.mxu0 0.0
        %1304 = vmatprep.subr.mxu0 0.0
        %1305 = vmatpush1.xpose.msra.mxu0 0.0
        %1306 = vmatprep.subr.mxu0 0.0
        %1307 = vmatpush1.xpose.msra.mxu0 0.0
        %1308 = vmatprep.subr.mxu0 0.0
        %1309 = vmatpush1.xpose.msra.mxu0 0.0
        %1310 = vmatprep.subr.mxu0 0.0
        %1311 = vmatpush1.xpose.msra.mxu0 0.0
        %1312 = vmatprep.subr.mxu0 0.0
        %1313 = vmatpush1.xpose.msra.mxu0 0.0
        %1314 = vmatprep.subr.mxu0 0.0
        %1315 = vmatpush1.xpose.msra.mxu0 0.0
        %1316 = vmatprep.subr.mxu0 0.0
        %1317 = vmatpush1.xpose.msra.mxu0 0.0
        %1318 = vmatprep.subr.mxu0 0.0
        %1319 = vmatpush1.xpose.msra.mxu0 0.0
        %1320 = vmatprep.subr.mxu0 0.0
        %1321 = vmatpush1.xpose.msra.mxu0 0.0
        %1322 = vmatprep.subr.mxu0 0.0
        %1323 = vmatpush1.xpose.msra.mxu0 0.0
        %1324 = vmatprep.subr.mxu0 0.0
        %1325 = vmatpush1.xpose.msra.mxu0 0.0
        %1326 = vmatprep.subr.mxu0 0.0
        %1327 = vmatpush1.xpose.msra.mxu0 0.0
        %1328 = vmatprep.subr.mxu0 0.0
        %1329 = vmatpush1.xpose.msra.mxu0 0.0
        %1330 = vmatprep.subr.mxu0 0.0
        %1331 = vmatpush1.xpose.msra.mxu0 0.0
        %1332 = vmatprep.subr.mxu0 0.0
        %1333 = vmatpush1.xpose.msra.mxu0 0.0
        %1334 = vmatprep.subr.mxu0 0.0
        %1335 = vmatpush1.xpose.msra.mxu0 0.0
        %1336 = vmatprep.subr.mxu0 0.0
        %1337 = vmatpush1.xpose.msra.mxu0 0.0
        %1338 = vmatprep.subr.mxu0 0.0
        %1339 = vmatpush1.xpose.msra.mxu0 0.0
        %1340 = vmatprep.subr.mxu0 0.0
        %1341 = vmatpush1.xpose.msra.mxu0 0.0
        %1342 = vmatprep.subr.mxu0 0.0
        %1343 = vmatpush1.xpose.msra.mxu0 0.0
        %1344 = vmatprep.subr.mxu0 0.0
        %1345 = vmatpush1.xpose.msra.mxu0 0.0
        %1346 = vmatprep.subr.mxu0 0.0
        %1347 = vmatpush1.xpose.msra.mxu0 0.0
        %1348 = vmatprep.subr.mxu0 0.0
        %1349 = vmatpush1.xpose.msra.mxu0 0.0
        %1350 = vmatprep.subr.mxu0 0.0
        %1351 = vmatpush1.xpose.msra.mxu0 0.0
        %1352 = vmatprep.subr.mxu0 0.0
        %1353 = vmatpush1.xpose.msra.mxu0 0.0
        %1354 = vmatprep.mubr.f32.mxu0 0.0
        %1355 = vmatmul.mubr.f32.gmra.mrb[0].mxu0 %v1285
        %v1356 = vpop.f32.mrb[0].mxu0
        %v1357 = vadd.f32 0.0, %v1356
        %v1358 = vpop.f32.mrb[0].mxu0
        %1359 = vdwg.mxu0
        %v1360 = vmul.f32 %v1357, 0.35355338
        %v1361 = vsel %vm854, %v1360, -inf
        %1362 = vmax.xlane.f32.xlu0 %v1361
        %v1363 = vpop.xlane.xlu0 %1362
        %v1364 = vsub.f32 %v1360, %v1363
        %v1365 = vmul.f32 %v1364, 1.442695
        %v1366 = vpow.pop %v1365
        %v1367 = vsel %vm854, %v1366, 0.0
        %1368 = vadd.xlane.f32.xlu0 %v1367
        %v1369 = vpop.xlane.xlu0 %1368
        %v1370 = vrcp.pop %v1369
        %v1371 = vmul.f32 %v1366, %v1370
        %v1373 = vsel %vm854, %v1371, 0
        %1375 = vmatprep.subr.mxu0 0.0
        %1376 = vmatpush1.msra.mxu0 %v1281
        %1377 = vmatprep.subr.mxu0 0.0
        %1378 = vmatpush1.msra.mxu0 0.0
        %1379 = vmatprep.subr.mxu0 0.0
        %1380 = vmatpush1.msra.mxu0 0.0
        %1381 = vmatprep.subr.mxu0 0.0
        %1382 = vmatpush1.msra.mxu0 0.0
        %1383 = vmatprep.subr.mxu0 0.0
        %1384 = vmatpush1.msra.mxu0 0.0
        %1385 = vmatprep.subr.mxu0 0.0
        %1386 = vmatpush1.msra.mxu0 0.0
        %1387 = vmatprep.subr.mxu0 0.0
        %1388 = vmatpush1.msra.mxu0 0.0
        %1389 = vmatprep.subr.mxu0 0.0
        %1390 = vmatpush1.msra.mxu0 0.0
        %1391 = vmatprep.subr.mxu0 0.0
        %1392 = vmatpush1.msra.mxu0 0.0
        %1393 = vmatprep.subr.mxu0 0.0
        %1394 = vmatpush1.msra.mxu0 0.0
        %1395 = vmatprep.subr.mxu0 0.0
        %1396 = vmatpush1.msra.mxu0 0.0
        %1397 = vmatprep.subr.mxu0 0.0
        %1398 = vmatpush1.msra.mxu0 0.0
        %1399 = vmatprep.subr.mxu0 0.0
        %1400 = vmatpush1.msra.mxu0 0.0
        %1401 = vmatprep.subr.mxu0 0.0
        %1402 = vmatpush1.msra.mxu0 0.0
        %1403 = vmatprep.subr.mxu0 0.0
        %1404 = vmatpush1.msra.mxu0 0.0
        %1405 = vmatprep.subr.mxu0 0.0
        %1406 = vmatpush1.msra.mxu0 0.0
        %1407 = vmatprep.subr.mxu0 0.0
        %1408 = vmatpush1.msra.mxu0 0.0
        %1409 = vmatprep.subr.mxu0 0.0
        %1410 = vmatpush1.msra.mxu0 0.0
        %1411 = vmatprep.subr.mxu0 0.0
        %1412 = vmatpush1.msra.mxu0 0.0
        %1413 = vmatprep.subr.mxu0 0.0
        %1414 = vmatpush1.msra.mxu0 0.0
        %1415 = vmatprep.subr.mxu0 0.0
        %1416 = vmatpush1.msra.mxu0 0.0
        %1417 = vmatprep.subr.mxu0 0.0
        %1418 = vmatpush1.msra.mxu0 0.0
        %1419 = vmatprep.subr.mxu0 0.0
        %1420 = vmatpush1.msra.mxu0 0.0
        %1421 = vmatprep.subr.mxu0 0.0
        %1422 = vmatpush1.msra.mxu0 0.0
        %1423 = vmatprep.subr.mxu0 0.0
        %1424 = vmatpush1.msra.mxu0 0.0
        %1425 = vmatprep.subr.mxu0 0.0
        %1426 = vmatpush1.msra.mxu0 0.0
        %1427 = vmatprep.subr.mxu0 0.0
        %1428 = vmatpush1.msra.mxu0 0.0
        %1429 = vmatprep.subr.mxu0 0.0
        %1430 = vmatpush1.msra.mxu0 0.0
        %1431 = vmatprep.subr.mxu0 0.0
        %1432 = vmatpush1.msra.mxu0 0.0
        %1433 = vmatprep.subr.mxu0 0.0
        %1434 = vmatpush1.msra.mxu0 0.0
        %1435 = vmatprep.subr.mxu0 0.0
        %1436 = vmatpush1.msra.mxu0 0.0
        %1437 = vmatprep.subr.mxu0 0.0
        %1438 = vmatpush1.msra.mxu0 0.0
        %1439 = vmatprep.mubr.f32.mxu0 0.0
        %1440 = vmatmul.mubr.f32.gmra.mrb[0].mxu0 %v1373
        %v1441 = vpop.f32.mrb[0].mxu0
        %v1442 = vadd.f32 0.0, %v1441
        %v1443 = vpop.f32.mrb[0].mxu0
        %1444 = vdwg.mxu0
        %v1445 = vld [vmem:[#allocation4 + $0x8] sm:$0xff]
        %v1447 = vsel %vm854, %v1442, 0
        %1449 = vmatprep.subr.mxu0 0.0
        %1450 = vmatpush1.msra.mxu0 %v1445
        %1451 = vmatprep.subr.mxu0 0.0
        %1452 = vmatpush1.msra.mxu0 0.0
        %1453 = vmatprep.subr.mxu0 0.0
        %1454 = vmatpush1.msra.mxu0 0.0
        %1455 = vmatprep.subr.mxu0 0.0
        %1456 = vmatpush1.msra.mxu0 0.0
        %1457 = vmatprep.subr.mxu0 0.0
        %1458 = vmatpush1.msra.mxu0 0.0
        %1459 = vmatprep.subr.mxu0 0.0
        %1460 = vmatpush1.msra.mxu0 0.0
        %1461 = vmatprep.subr.mxu0 0.0
        %1462 = vmatpush1.msra.mxu0 0.0
        %1463 = vmatprep.subr.mxu0 0.0
        %1464 = vmatpush1.msra.mxu0 0.0
        %1465 = vmatprep.subr.mxu0 0.0
        %1466 = vmatpush1.msra.mxu0 0.0
        %1467 = vmatprep.subr.mxu0 0.0
        %1468 = vmatpush1.msra.mxu0 0.0
        %1469 = vmatprep.subr.mxu0 0.0
        %1470 = vmatpush1.msra.mxu0 0.0
        %1471 = vmatprep.subr.mxu0 0.0
        %1472 = vmatpush1.msra.mxu0 0.0
        %1473 = vmatprep.subr.mxu0 0.0
        %1474 = vmatpush1.msra.mxu0 0.0
        %1475 = vmatprep.subr.mxu0 0.0
        %1476 = vmatpush1.msra.mxu0 0.0
        %1477 = vmatprep.subr.mxu0 0.0
        %1478 = vmatpush1.msra.mxu0 0.0
        %1479 = vmatprep.subr.mxu0 0.0
        %1480 = vmatpush1.msra.mxu0 0.0
        %1481 = vmatprep.subr.mxu0 0.0
        %1482 = vmatpush1.msra.mxu0 0.0
        %1483 = vmatprep.subr.mxu0 0.0
        %1484 = vmatpush1.msra.mxu0 0.0
        %1485 = vmatprep.subr.mxu0 0.0
        %1486 = vmatpush1.msra.mxu0 0.0
        %1487 = vmatprep.subr.mxu0 0.0
        %1488 = vmatpush1.msra.mxu0 0.0
        %1489 = vmatprep.subr.mxu0 0.0
        %1490 = vmatpush1.msra.mxu0 0.0
        %1491 = vmatprep.subr.mxu0 0.0
        %1492 = vmatpush1.msra.mxu0 0.0
        %1493 = vmatprep.subr.mxu0 0.0
        %1494 = vmatpush1.msra.mxu0 0.0
        %1495 = vmatprep.subr.mxu0 0.0
        %1496 = vmatpush1.msra.mxu0 0.0
        %1497 = vmatprep.subr.mxu0 0.0
        %1498 = vmatpush1.msra.mxu0 0.0
        %1499 = vmatprep.subr.mxu0 0.0
        %1500 = vmatpush1.msra.mxu0 0.0
        %1501 = vmatprep.subr.mxu0 0.0
        %1502 = vmatpush1.msra.mxu0 0.0
        %1503 = vmatprep.subr.mxu0 0.0
        %1504 = vmatpush1.msra.mxu0 0.0
        %1505 = vmatprep.subr.mxu0 0.0
        %1506 = vmatpush1.msra.mxu0 0.0
        %1507 = vmatprep.subr.mxu0 0.0
        %1508 = vmatpush1.msra.mxu0 0.0
        %1509 = vmatprep.subr.mxu0 0.0
        %1510 = vmatpush1.msra.mxu0 0.0
        %1511 = vmatprep.subr.mxu0 0.0
        %1512 = vmatpush1.msra.mxu0 0.0
        %1513 = vmatprep.mubr.f32.mxu0 0.0
        %1514 = vmatmul.mubr.f32.gmra.mrb[0].mxu0 %v1447
        %v1515 = vpop.f32.mrb[0].mxu0
        %v1516 = vadd.f32 0.0, %v1515
        %v1517 = vpop.f32.mrb[0].mxu0
        %1518 = vdwg.mxu0
        %v1520 = vsel %vm854, %v1013, 0
        %1522 = vmatprep.subr.mxu0 0.0
        %1523 = vmatpush1.msra.mxu0 %v1016
        %1524 = vmatprep.subr.mxu0 0.0
        %1525 = vmatpush1.msra.mxu0 0.0
        %1526 = vmatprep.subr.mxu0 0.0
        %1527 = vmatpush1.msra.mxu0 0.0
        %1528 = vmatprep.subr.mxu0 0.0
        %1529 = vmatpush1.msra.mxu0 0.0
        %1530 = vmatprep.subr.mxu0 0.0
        %1531 = vmatpush1.msra.mxu0 0.0
        %1532 = vmatprep.subr.mxu0 0.0
        %1533 = vmatpush1.msra.mxu0 0.0
        %1534 = vmatprep.subr.mxu0 0.0
        %1535 = vmatpush1.msra.mxu0 0.0
        %1536 = vmatprep.subr.mxu0 0.0
        %1537 = vmatpush1.msra.mxu0 0.0
        %1538 = vmatprep.subr.mxu0 0.0
        %1539 = vmatpush1.msra.mxu0 0.0
        %1540 = vmatprep.subr.mxu0 0.0
        %1541 = vmatpush1.msra.mxu0 0.0
        %1542 = vmatprep.subr.mxu0 0.0
        %1543 = vmatpush1.msra.mxu0 0.0
        %1544 = vmatprep.subr.mxu0 0.0
        %1545 = vmatpush1.msra.mxu0 0.0
        %1546 = vmatprep.subr.mxu0 0.0
        %1547 = vmatpush1.msra.mxu0 0.0
        %1548 = vmatprep.subr.mxu0 0.0
        %1549 = vmatpush1.msra.mxu0 0.0
        %1550 = vmatprep.subr.mxu0 0.0
        %1551 = vmatpush1.msra.mxu0 0.0
        %1552 = vmatprep.subr.mxu0 0.0
        %1553 = vmatpush1.msra.mxu0 0.0
        %1554 = vmatprep.subr.mxu0 0.0
        %1555 = vmatpush1.msra.mxu0 0.0
        %1556 = vmatprep.subr.mxu0 0.0
        %1557 = vmatpush1.msra.mxu0 0.0
        %1558 = vmatprep.subr.mxu0 0.0
        %1559 = vmatpush1.msra.mxu0 0.0
        %1560 = vmatprep.subr.mxu0 0.0
        %1561 = vmatpush1.msra.mxu0 0.0
        %1562 = vmatprep.subr.mxu0 0.0
        %1563 = vmatpush1.msra.mxu0 0.0
        %1564 = vmatprep.subr.mxu0 0.0
        %1565 = vmatpush1.msra.mxu0 0.0
        %1566 = vmatprep.subr.mxu0 0.0
        %1567 = vmatpush1.msra.mxu0 0.0
        %1568 = vmatprep.subr.mxu0 0.0
        %1569 = vmatpush1.msra.mxu0 0.0
        %1570 = vmatprep.subr.mxu0 0.0
        %1571 = vmatpush1.msra.mxu0 0.0
        %1572 = vmatprep.subr.mxu0 0.0
        %1573 = vmatpush1.msra.mxu0 0.0
        %1574 = vmatprep.subr.mxu0 0.0
        %1575 = vmatpush1.msra.mxu0 0.0
        %1576 = vmatprep.subr.mxu0 0.0
        %1577 = vmatpush1.msra.mxu0 0.0
        %1578 = vmatprep.subr.mxu0 0.0
        %1579 = vmatpush1.msra.mxu0 0.0
        %1580 = vmatprep.subr.mxu0 0.0
        %1581 = vmatpush1.msra.mxu0 0.0
        %1582 = vmatprep.subr.mxu0 0.0
        %1583 = vmatpush1.msra.mxu0 0.0
        %1584 = vmatprep.subr.mxu0 0.0
        %1585 = vmatpush1.msra.mxu0 0.0
        %1586 = vmatprep.mubr.f32.mxu0 0.0
        %1587 = vmatmul.mubr.f32.gmra.mrb[0].mxu0 %v1520
        %v1588 = vpop.f32.mrb[0].mxu0
        %v1589 = vadd.f32 %v1516, %v1588
        %v1590 = vpop.f32.mrb[0].mxu0
        %1591 = vdwg.mxu0
        %1592 = vrot.lane.b32.xlu0 %v607, 112
        %v1593 = vpop.permute.xlu0 %1592
        %1594 = vrot.lane.b32.xlu0 %v608, 112
        %v1595 = vpop.permute.xlu0 %1594
        %1596 = vrot.lane.b32.xlu0 %v609, 112
        %v1597 = vpop.permute.xlu0 %1596
        %1598 = vrot.lane.b32.xlu0 %v610, 112
        %v1599 = vpop.permute.xlu0 %1598
        %1604 = vrot.lane.b32.xlu0 %v616, 112
        %v1605 = vpop.permute.xlu0 %1604
        %1607 = vmatprep.subr.mxu0 0.0
        %1608 = vmatpush1.msra.mxu0 %v1593
        %1609 = vmatprep.subr.mxu0 0.0
        %1610 = vmatpush1.msra.mxu0 %v1595
        %1611 = vmatprep.subr.mxu0 0.0
        %1612 = vmatpush1.msra.mxu0 %v1597
        %1613 = vmatprep.subr.mxu0 0.0
        %1614 = vmatpush1.msra.mxu0 %v1599
        %1615 = vmatprep.subr.mxu0 0.0
        %1616 = vmatpush1.msra.mxu0 0.0
        %1617 = vmatprep.subr.mxu0 0.0
        %1618 = vmatpush1.msra.mxu0 0.0
        %1619 = vmatprep.subr.mxu0 0.0
        %1620 = vmatpush1.msra.mxu0 0.0
        %1621 = vmatprep.subr.mxu0 0.0
        %1622 = vmatpush1.msra.mxu0 0.0
        %1623 = vmatprep.subr.mxu0 0.0
        %1624 = vmatpush1.msra.mxu0 0.0
        %1625 = vmatprep.subr.mxu0 0.0
        %1626 = vmatpush1.msra.mxu0 0.0
        %1627 = vmatprep.subr.mxu0 0.0
        %1628 = vmatpush1.msra.mxu0 0.0
        %1629 = vmatprep.subr.mxu0 0.0
        %1630 = vmatpush1.msra.mxu0 0.0
        %1631 = vmatprep.subr.mxu0 0.0
        %1632 = vmatpush1.msra.mxu0 0.0
        %1633 = vmatprep.subr.mxu0 0.0
        %1634 = vmatpush1.msra.mxu0 0.0
        %1635 = vmatprep.subr.mxu0 0.0
        %1636 = vmatpush1.msra.mxu0 0.0
        %1637 = vmatprep.subr.mxu0 0.0
        %1638 = vmatpush1.msra.mxu0 0.0
        %1639 = vmatprep.subr.mxu0 0.0
        %1640 = vmatpush1.msra.mxu0 0.0
        %1641 = vmatprep.subr.mxu0 0.0
        %1642 = vmatpush1.msra.mxu0 0.0
        %1643 = vmatprep.subr.mxu0 0.0
        %1644 = vmatpush1.msra.mxu0 0.0
        %1645 = vmatprep.subr.mxu0 0.0
        %1646 = vmatpush1.msra.mxu0 0.0
        %1647 = vmatprep.subr.mxu0 0.0
        %1648 = vmatpush1.msra.mxu0 0.0
        %1649 = vmatprep.subr.mxu0 0.0
        %1650 = vmatpush1.msra.mxu0 0.0
        %1651 = vmatprep.subr.mxu0 0.0
        %1652 = vmatpush1.msra.mxu0 0.0
        %1653 = vmatprep.subr.mxu0 0.0
        %1654 = vmatpush1.msra.mxu0 0.0
        %1655 = vmatprep.subr.mxu0 0.0
        %1656 = vmatpush1.msra.mxu0 0.0
        %1657 = vmatprep.subr.mxu0 0.0
        %1658 = vmatpush1.msra.mxu0 0.0
        %1659 = vmatprep.subr.mxu0 0.0
        %1660 = vmatpush1.msra.mxu0 0.0
        %1661 = vmatprep.subr.mxu0 0.0
        %1662 = vmatpush1.msra.mxu0 0.0
        %1663 = vmatprep.subr.mxu0 0.0
        %1664 = vmatpush1.msra.mxu0 0.0
        %1665 = vmatprep.subr.mxu0 0.0
        %1666 = vmatpush1.msra.mxu0 0.0
        %1667 = vmatprep.subr.mxu0 0.0
        %1668 = vmatpush1.msra.mxu0 0.0
        %1669 = vmatprep.subr.mxu0 0.0
        %1670 = vmatpush1.msra.mxu0 0.0
        %1671 = vmatprep.mubr.f32.mxu0 0.0
        %1672 = vmatmul.mubr.f32.gmra.mrb[0].mxu0 %v620
        %v1673 = vpop.f32.mrb[0].mxu0
        %v1674 = vadd.f32 %v1605, %v1673
        %v1675 = vpop.f32.mrb[0].mxu0
        %1676 = vdwg.mxu0
        %1677 = vrot.lane.b32.xlu0 %v692, 112
        %v1678 = vpop.permute.xlu0 %1677
        %1679 = vrot.lane.b32.xlu0 %v693, 112
        %v1680 = vpop.permute.xlu0 %1679
        %1681 = vrot.lane.b32.xlu0 %v694, 112
        %v1682 = vpop.permute.xlu0 %1681
        %1683 = vrot.lane.b32.xlu0 %v695, 112
        %v1684 = vpop.permute.xlu0 %1683
        %1689 = vrot.lane.b32.xlu0 %v701, 112
        %v1690 = vpop.permute.xlu0 %1689
        %1692 = vmatprep.subr.mxu0 0.0
        %1693 = vmatpush1.msra.mxu0 %v1678
        %1694 = vmatprep.subr.mxu0 0.0
        %1695 = vmatpush1.msra.mxu0 %v1680
        %1696 = vmatprep.subr.mxu0 0.0
        %1697 = vmatpush1.msra.mxu0 %v1682
        %1698 = vmatprep.subr.mxu0 0.0
        %1699 = vmatpush1.msra.mxu0 %v1684
        %1700 = vmatprep.subr.mxu0 0.0
        %1701 = vmatpush1.msra.mxu0 0.0
        %1702 = vmatprep.subr.mxu0 0.0
        %1703 = vmatpush1.msra.mxu0 0.0
        %1704 = vmatprep.subr.mxu0 0.0
        %1705 = vmatpush1.msra.mxu0 0.0
        %1706 = vmatprep.subr.mxu0 0.0
        %1707 = vmatpush1.msra.mxu0 0.0
        %1708 = vmatprep.subr.mxu0 0.0
        %1709 = vmatpush1.msra.mxu0 0.0
        %1710 = vmatprep.subr.mxu0 0.0
        %1711 = vmatpush1.msra.mxu0 0.0
        %1712 = vmatprep.subr.mxu0 0.0
        %1713 = vmatpush1.msra.mxu0 0.0
        %1714 = vmatprep.subr.mxu0 0.0
        %1715 = vmatpush1.msra.mxu0 0.0
        %1716 = vmatprep.subr.mxu0 0.0
        %1717 = vmatpush1.msra.mxu0 0.0
        %1718 = vmatprep.subr.mxu0 0.0
        %1719 = vmatpush1.msra.mxu0 0.0
        %1720 = vmatprep.subr.mxu0 0.0
        %1721 = vmatpush1.msra.mxu0 0.0
        %1722 = vmatprep.subr.mxu0 0.0
        %1723 = vmatpush1.msra.mxu0 0.0
        %1724 = vmatprep.subr.mxu0 0.0
        %1725 = vmatpush1.msra.mxu0 0.0
        %1726 = vmatprep.subr.mxu0 0.0
        %1727 = vmatpush1.msra.mxu0 0.0
        %1728 = vmatprep.subr.mxu0 0.0
        %1729 = vmatpush1.msra.mxu0 0.0
        %1730 = vmatprep.subr.mxu0 0.0
        %1731 = vmatpush1.msra.mxu0 0.0
        %1732 = vmatprep.subr.mxu0 0.0
        %1733 = vmatpush1.msra.mxu0 0.0
        %1734 = vmatprep.subr.mxu0 0.0
        %1735 = vmatpush1.msra.mxu0 0.0
        %1736 = vmatprep.subr.mxu0 0.0
        %1737 = vmatpush1.msra.mxu0 0.0
        %1738 = vmatprep.subr.mxu0 0.0
        %1739 = vmatpush1.msra.mxu0 0.0
        %1740 = vmatprep.subr.mxu0 0.0
        %1741 = vmatpush1.msra.mxu0 0.0
        %1742 = vmatprep.subr.mxu0 0.0
        %1743 = vmatpush1.msra.mxu0 0.0
        %1744 = vmatprep.subr.mxu0 0.0
        %1745 = vmatpush1.msra.mxu0 0.0
        %1746 = vmatprep.subr.mxu0 0.0
        %1747 = vmatpush1.msra.mxu0 0.0
        %1748 = vmatprep.subr.mxu0 0.0
        %1749 = vmatpush1.msra.mxu0 0.0
        %1750 = vmatprep.subr.mxu0 0.0
        %1751 = vmatpush1.msra.mxu0 0.0
        %1752 = vmatprep.subr.mxu0 0.0
        %1753 = vmatpush1.msra.mxu0 0.0
        %1754 = vmatprep.subr.mxu0 0.0
        %1755 = vmatpush1.msra.mxu0 0.0
        %1756 = vmatprep.mubr.f32.mxu0 0.0
        %1757 = vmatmul.mubr.f32.gmra.mrb[0].mxu0 %v620
        %v1758 = vpop.f32.mrb[0].mxu0
        %v1759 = vadd.f32 %v1690, %v1758
        %v1760 = vpop.f32.mrb[0].mxu0
        %1761 = vdwg.mxu0
        %1762 = vrot.lane.b32.xlu0 %v773, 112
        %v1763 = vpop.permute.xlu0 %1762
        %1764 = vrot.lane.b32.xlu0 %v774, 112
        %v1765 = vpop.permute.xlu0 %1764
        %1766 = vrot.lane.b32.xlu0 %v775, 112
        %v1767 = vpop.permute.xlu0 %1766
        %1768 = vrot.lane.b32.xlu0 %v776, 112
        %v1769 = vpop.permute.xlu0 %1768
        %1774 = vrot.lane.b32.xlu0 %v782, 112
        %v1775 = vpop.permute.xlu0 %1774
        %1777 = vmatprep.subr.mxu0 0.0
        %1778 = vmatpush1.msra.mxu0 %v1763
        %1779 = vmatprep.subr.mxu0 0.0
        %1780 = vmatpush1.msra.mxu0 %v1765
        %1781 = vmatprep.subr.mxu0 0.0
        %1782 = vmatpush1.msra.mxu0 %v1767
        %1783 = vmatprep.subr.mxu0 0.0
        %1784 = vmatpush1.msra.mxu0 %v1769
        %1785 = vmatprep.subr.mxu0 0.0
        %1786 = vmatpush1.msra.mxu0 0.0
        %1787 = vmatprep.subr.mxu0 0.0
        %1788 = vmatpush1.msra.mxu0 0.0
        %1789 = vmatprep.subr.mxu0 0.0
        %1790 = vmatpush1.msra.mxu0 0.0
        %1791 = vmatprep.subr.mxu0 0.0
        %1792 = vmatpush1.msra.mxu0 0.0
        %1793 = vmatprep.subr.mxu0 0.0
        %1794 = vmatpush1.msra.mxu0 0.0
        %1795 = vmatprep.subr.mxu0 0.0
        %1796 = vmatpush1.msra.mxu0 0.0
        %1797 = vmatprep.subr.mxu0 0.0
        %1798 = vmatpush1.msra.mxu0 0.0
        %1799 = vmatprep.subr.mxu0 0.0
        %1800 = vmatpush1.msra.mxu0 0.0
        %1801 = vmatprep.subr.mxu0 0.0
        %1802 = vmatpush1.msra.mxu0 0.0
        %1803 = vmatprep.subr.mxu0 0.0
        %1804 = vmatpush1.msra.mxu0 0.0
        %1805 = vmatprep.subr.mxu0 0.0
        %1806 = vmatpush1.msra.mxu0 0.0
        %1807 = vmatprep.subr.mxu0 0.0
        %1808 = vmatpush1.msra.mxu0 0.0
        %1809 = vmatprep.subr.mxu0 0.0
        %1810 = vmatpush1.msra.mxu0 0.0
        %1811 = vmatprep.subr.mxu0 0.0
        %1812 = vmatpush1.msra.mxu0 0.0
        %1813 = vmatprep.subr.mxu0 0.0
        %1814 = vmatpush1.msra.mxu0 0.0
        %1815 = vmatprep.subr.mxu0 0.0
        %1816 = vmatpush1.msra.mxu0 0.0
        %1817 = vmatprep.subr.mxu0 0.0
        %1818 = vmatpush1.msra.mxu0 0.0
        %1819 = vmatprep.subr.mxu0 0.0
        %1820 = vmatpush1.msra.mxu0 0.0
        %1821 = vmatprep.subr.mxu0 0.0
        %1822 = vmatpush1.msra.mxu0 0.0
        %1823 = vmatprep.subr.mxu0 0.0
        %1824 = vmatpush1.msra.mxu0 0.0
        %1825 = vmatprep.subr.mxu0 0.0
        %1826 = vmatpush1.msra.mxu0 0.0
        %1827 = vmatprep.subr.mxu0 0.0
        %1828 = vmatpush1.msra.mxu0 0.0
        %1829 = vmatprep.subr.mxu0 0.0
        %1830 = vmatpush1.msra.mxu0 0.0
        %1831 = vmatprep.subr.mxu0 0.0
        %1832 = vmatpush1.msra.mxu0 0.0
        %1833 = vmatprep.subr.mxu0 0.0
        %1834 = vmatpush1.msra.mxu0 0.0
        %1835 = vmatprep.subr.mxu0 0.0
        %1836 = vmatpush1.msra.mxu0 0.0
        %1837 = vmatprep.subr.mxu0 0.0
        %1838 = vmatpush1.msra.mxu0 0.0
        %1839 = vmatprep.subr.mxu0 0.0
        %1840 = vmatpush1.msra.mxu0 0.0
        %1841 = vmatprep.mubr.f32.mxu0 0.0
        %1842 = vmatmul.mubr.f32.gmra.mrb[0].mxu0 %v620
        %v1843 = vpop.f32.mrb[0].mxu0
        %v1844 = vadd.f32 %v1775, %v1843
        %v1845 = vpop.f32.mrb[0].mxu0
        %1846 = vdwg.mxu0
        %v1848 = vsel %vm854, %v1674, 0
        %v1851 = vsel %vm854, %v1759, 0
        %1853 = vmatprep.subr.mxu0 0.0
        %1854 = vmatpush1.xpose.msra.mxu0 %v1851
        %1855 = vmatprep.subr.mxu0 0.0
        %1856 = vmatpush1.xpose.msra.mxu0 0.0
        %1857 = vmatprep.subr.mxu0 0.0
        %1858 = vmatpush1.xpose.msra.mxu0 0.0
        %1859 = vmatprep.subr.mxu0 0.0
        %1860 = vmatpush1.xpose.msra.mxu0 0.0
        %1861 = vmatprep.subr.mxu0 0.0
        %1862 = vmatpush1.xpose.msra.mxu0 0.0
        %1863 = vmatprep.subr.mxu0 0.0
        %1864 = vmatpush1.xpose.msra.mxu0 0.0
        %1865 = vmatprep.subr.mxu0 0.0
        %1866 = vmatpush1.xpose.msra.mxu0 0.0
        %1867 = vmatprep.subr.mxu0 0.0
        %1868 = vmatpush1.xpose.msra.mxu0 0.0
        %1869 = vmatprep.subr.mxu0 0.0
        %1870 = vmatpush1.xpose.msra.mxu0 0.0
        %1871 = vmatprep.subr.mxu0 0.0
        %1872 = vmatpush1.xpose.msra.mxu0 0.0
        %1873 = vmatprep.subr.mxu0 0.0
        %1874 = vmatpush1.xpose.msra.mxu0 0.0
        %1875 = vmatprep.subr.mxu0 0.0
        %1876 = vmatpush1.xpose.msra.mxu0 0.0
        %1877 = vmatprep.subr.mxu0 0.0
        %1878 = vmatpush1.xpose.msra.mxu0 0.0
        %1879 = vmatprep.subr.mxu0 0.0
        %1880 = vmatpush1.xpose.msra.mxu0 0.0
        %1881 = vmatprep.subr.mxu0 0.0
        %1882 = vmatpush1.xpose.msra.mxu0 0.0
        %1883 = vmatprep.subr.mxu0 0.0
        %1884 = vmatpush1.xpose.msra.mxu0 0.0
        %1885 = vmatprep.subr.mxu0 0.0
        %1886 = vmatpush1.xpose.msra.mxu0 0.0
        %1887 = vmatprep.subr.mxu0 0.0
        %1888 = vmatpush1.xpose.msra.mxu0 0.0
        %1889 = vmatprep.subr.mxu0 0.0
        %1890 = vmatpush1.xpose.msra.mxu0 0.0
        %1891 = vmatprep.subr.mxu0 0.0
        %1892 = vmatpush1.xpose.msra.mxu0 0.0
        %1893 = vmatprep.subr.mxu0 0.0
        %1894 = vmatpush1.xpose.msra.mxu0 0.0
        %1895 = vmatprep.subr.mxu0 0.0
        %1896 = vmatpush1.xpose.msra.mxu0 0.0
        %1897 = vmatprep.subr.mxu0 0.0
        %1898 = vmatpush1.xpose.msra.mxu0 0.0
        %1899 = vmatprep.subr.mxu0 0.0
        %1900 = vmatpush1.xpose.msra.mxu0 0.0
        %1901 = vmatprep.subr.mxu0 0.0
        %1902 = vmatpush1.xpose.msra.mxu0 0.0
        %1903 = vmatprep.subr.mxu0 0.0
        %1904 = vmatpush1.xpose.msra.mxu0 0.0
        %1905 = vmatprep.subr.mxu0 0.0
        %1906 = vmatpush1.xpose.msra.mxu0 0.0
        %1907 = vmatprep.subr.mxu0 0.0
        %1908 = vmatpush1.xpose.msra.mxu0 0.0
        %1909 = vmatprep.subr.mxu0 0.0
        %1910 = vmatpush1.xpose.msra.mxu0 0.0
        %1911 = vmatprep.subr.mxu0 0.0
        %1912 = vmatpush1.xpose.msra.mxu0 0.0
        %1913 = vmatprep.subr.mxu0 0.0
        %1914 = vmatpush1.xpose.msra.mxu0 0.0
        %1915 = vmatprep.subr.mxu0 0.0
        %1916 = vmatpush1.xpose.msra.mxu0 0.0
        %1917 = vmatprep.mubr.f32.mxu0 0.0
        %1918 = vmatmul.mubr.f32.gmra.mrb[0].mxu0 %v1848
        %v1919 = vpop.f32.mrb[0].mxu0
        %v1920 = vadd.f32 0.0, %v1919
        %v1921 = vpop.f32.mrb[0].mxu0
        %1922 = vdwg.mxu0
        %v1923 = vmul.f32 %v1920, 0.35355338
        %v1924 = vsel %vm854, %v1923, -inf
        %1925 = vmax.xlane.f32.xlu0 %v1924
        %v1926 = vpop.xlane.xlu0 %1925
        %v1927 = vsub.f32 %v1923, %v1926
        %v1928 = vmul.f32 %v1927, 1.442695
        %v1929 = vpow.pop %v1928
        %v1930 = vsel %vm854, %v1929, 0.0
        %1931 = vadd.xlane.f32.xlu0 %v1930
        %v1932 = vpop.xlane.xlu0 %1931
        %v1933 = vrcp.pop %v1932
        %v1934 = vmul.f32 %v1929, %v1933
        %v1936 = vsel %vm854, %v1934, 0
        %1938 = vmatprep.subr.mxu0 0.0
        %1939 = vmatpush1.msra.mxu0 %v1844
        %1940 = vmatprep.subr.mxu0 0.0
        %1941 = vmatpush1.msra.mxu0 0.0
        %1942 = vmatprep.subr.mxu0 0.0
        %1943 = vmatpush1.msra.mxu0 0.0
        %1944 = vmatprep.subr.mxu0 0.0
        %1945 = vmatpush1.msra.mxu0 0.0
        %1946 = vmatprep.subr.mxu0 0.0
        %1947 = vmatpush1.msra.mxu0 0.0
        %1948 = vmatprep.subr.mxu0 0.0
        %1949 = vmatpush1.msra.mxu0 0.0
        %1950 = vmatprep.subr.mxu0 0.0
        %1951 = vmatpush1.msra.mxu0 0.0
        %1952 = vmatprep.subr.mxu0 0.0
        %1953 = vmatpush1.msra.mxu0 0.0
        %1954 = vmatprep.subr.mxu0 0.0
        %1955 = vmatpush1.msra.mxu0 0.0
        %1956 = vmatprep.subr.mxu0 0.0
        %1957 = vmatpush1.msra.mxu0 0.0
        %1958 = vmatprep.subr.mxu0 0.0
        %1959 = vmatpush1.msra.mxu0 0.0
        %1960 = vmatprep.subr.mxu0 0.0
        %1961 = vmatpush1.msra.mxu0 0.0
        %1962 = vmatprep.subr.mxu0 0.0
        %1963 = vmatpush1.msra.mxu0 0.0
        %1964 = vmatprep.subr.mxu0 0.0
        %1965 = vmatpush1.msra.mxu0 0.0
        %1966 = vmatprep.subr.mxu0 0.0
        %1967 = vmatpush1.msra.mxu0 0.0
        %1968 = vmatprep.subr.mxu0 0.0
        %1969 = vmatpush1.msra.mxu0 0.0
        %1970 = vmatprep.subr.mxu0 0.0
        %1971 = vmatpush1.msra.mxu0 0.0
        %1972 = vmatprep.subr.mxu0 0.0
        %1973 = vmatpush1.msra.mxu0 0.0
        %1974 = vmatprep.subr.mxu0 0.0
        %1975 = vmatpush1.msra.mxu0 0.0
        %1976 = vmatprep.subr.mxu0 0.0
        %1977 = vmatpush1.msra.mxu0 0.0
        %1978 = vmatprep.subr.mxu0 0.0
        %1979 = vmatpush1.msra.mxu0 0.0
        %1980 = vmatprep.subr.mxu0 0.0
        %1981 = vmatpush1.msra.mxu0 0.0
        %1982 = vmatprep.subr.mxu0 0.0
        %1983 = vmatpush1.msra.mxu0 0.0
        %1984 = vmatprep.subr.mxu0 0.0
        %1985 = vmatpush1.msra.mxu0 0.0
        %1986 = vmatprep.subr.mxu0 0.0
        %1987 = vmatpush1.msra.mxu0 0.0
        %1988 = vmatprep.subr.mxu0 0.0
        %1989 = vmatpush1.msra.mxu0 0.0
        %1990 = vmatprep.subr.mxu0 0.0
        %1991 = vmatpush1.msra.mxu0 0.0
        %1992 = vmatprep.subr.mxu0 0.0
        %1993 = vmatpush1.msra.mxu0 0.0
        %1994 = vmatprep.subr.mxu0 0.0
        %1995 = vmatpush1.msra.mxu0 0.0
        %1996 = vmatprep.subr.mxu0 0.0
        %1997 = vmatpush1.msra.mxu0 0.0
        %1998 = vmatprep.subr.mxu0 0.0
        %1999 = vmatpush1.msra.mxu0 0.0
        %2000 = vmatprep.subr.mxu0 0.0
        %2001 = vmatpush1.msra.mxu0 0.0
        %2002 = vmatprep.mubr.f32.mxu0 0.0
        %2003 = vmatmul.mubr.f32.gmra.mrb[0].mxu0 %v1936
        %v2004 = vpop.f32.mrb[0].mxu0
        %v2005 = vadd.f32 0.0, %v2004
        %v2006 = vpop.f32.mrb[0].mxu0
        %2007 = vdwg.mxu0
        %v2008 = vld [vmem:[#allocation4 + $0x10] sm:$0xff]
        %v2010 = vsel %vm854, %v2005, 0
        %2012 = vmatprep.subr.mxu0 0.0
        %2013 = vmatpush1.msra.mxu0 %v2008
        %2014 = vmatprep.subr.mxu0 0.0
        %2015 = vmatpush1.msra.mxu0 0.0
        %2016 = vmatprep.subr.mxu0 0.0
        %2017 = vmatpush1.msra.mxu0 0.0
        %2018 = vmatprep.subr.mxu0 0.0
        %2019 = vmatpush1.msra.mxu0 0.0
        %2020 = vmatprep.subr.mxu0 0.0
        %2021 = vmatpush1.msra.mxu0 0.0
        %2022 = vmatprep.subr.mxu0 0.0
        %2023 = vmatpush1.msra.mxu0 0.0
        %2024 = vmatprep.subr.mxu0 0.0
        %2025 = vmatpush1.msra.mxu0 0.0
        %2026 = vmatprep.subr.mxu0 0.0
        %2027 = vmatpush1.msra.mxu0 0.0
        %2028 = vmatprep.subr.mxu0 0.0
        %2029 = vmatpush1.msra.mxu0 0.0
        %2030 = vmatprep.subr.mxu0 0.0
        %2031 = vmatpush1.msra.mxu0 0.0
        %2032 = vmatprep.subr.mxu0 0.0
        %2033 = vmatpush1.msra.mxu0 0.0
        %2034 = vmatprep.subr.mxu0 0.0
        %2035 = vmatpush1.msra.mxu0 0.0
        %2036 = vmatprep.subr.mxu0 0.0
        %2037 = vmatpush1.msra.mxu0 0.0
        %2038 = vmatprep.subr.mxu0 0.0
        %2039 = vmatpush1.msra.mxu0 0.0
        %2040 = vmatprep.subr.mxu0 0.0
        %2041 = vmatpush1.msra.mxu0 0.0
        %2042 = vmatprep.subr.mxu0 0.0
        %2043 = vmatpush1.msra.mxu0 0.0
        %2044 = vmatprep.subr.mxu0 0.0
        %2045 = vmatpush1.msra.mxu0 0.0
        %2046 = vmatprep.subr.mxu0 0.0
        %2047 = vmatpush1.msra.mxu0 0.0
        %2048 = vmatprep.subr.mxu0 0.0
        %2049 = vmatpush1.msra.mxu0 0.0
        %2050 = vmatprep.subr.mxu0 0.0
        %2051 = vmatpush1.msra.mxu0 0.0
        %2052 = vmatprep.subr.mxu0 0.0
        %2053 = vmatpush1.msra.mxu0 0.0
        %2054 = vmatprep.subr.mxu0 0.0
        %2055 = vmatpush1.msra.mxu0 0.0
        %2056 = vmatprep.subr.mxu0 0.0
        %2057 = vmatpush1.msra.mxu0 0.0
        %2058 = vmatprep.subr.mxu0 0.0
        %2059 = vmatpush1.msra.mxu0 0.0
        %2060 = vmatprep.subr.mxu0 0.0
        %2061 = vmatpush1.msra.mxu0 0.0
        %2062 = vmatprep.subr.mxu0 0.0
        %2063 = vmatpush1.msra.mxu0 0.0
        %2064 = vmatprep.subr.mxu0 0.0
        %2065 = vmatpush1.msra.mxu0 0.0
        %2066 = vmatprep.subr.mxu0 0.0
        %2067 = vmatpush1.msra.mxu0 0.0
        %2068 = vmatprep.subr.mxu0 0.0
        %2069 = vmatpush1.msra.mxu0 0.0
        %2070 = vmatprep.subr.mxu0 0.0
        %2071 = vmatpush1.msra.mxu0 0.0
        %2072 = vmatprep.subr.mxu0 0.0
        %2073 = vmatpush1.msra.mxu0 0.0
        %2074 = vmatprep.subr.mxu0 0.0
        %2075 = vmatpush1.msra.mxu0 0.0
        %2076 = vmatprep.mubr.f32.mxu0 0.0
        %2077 = vmatmul.mubr.f32.gmra.mrb[0].mxu0 %v2010
        %v2078 = vpop.f32.mrb[0].mxu0
        %v2079 = vadd.f32 0.0, %v2078
        %v2080 = vpop.f32.mrb[0].mxu0
        %2081 = vdwg.mxu0
        %v2082 = vadd.f32 %v1589, %v2079
        %2083 = vrot.lane.b32.xlu0 %v607, 104
        %v2084 = vpop.permute.xlu0 %2083
        %2085 = vrot.lane.b32.xlu0 %v608, 104
        %v2086 = vpop.permute.xlu0 %2085
        %2087 = vrot.lane.b32.xlu0 %v609, 104
        %v2088 = vpop.permute.xlu0 %2087
        %2089 = vrot.lane.b32.xlu0 %v610, 104
        %v2090 = vpop.permute.xlu0 %2089
        %2095 = vrot.lane.b32.xlu0 %v616, 104
        %v2096 = vpop.permute.xlu0 %2095
        %2098 = vmatprep.subr.mxu0 0.0
        %2099 = vmatpush1.msra.mxu0 %v2084
        %2100 = vmatprep.subr.mxu0 0.0
        %2101 = vmatpush1.msra.mxu0 %v2086
        %2102 = vmatprep.subr.mxu0 0.0
        %2103 = vmatpush1.msra.mxu0 %v2088
        %2104 = vmatprep.subr.mxu0 0.0
        %2105 = vmatpush1.msra.mxu0 %v2090
        %2106 = vmatprep.subr.mxu0 0.0
        %2107 = vmatpush1.msra.mxu0 0.0
        %2108 = vmatprep.subr.mxu0 0.0
        %2109 = vmatpush1.msra.mxu0 0.0
        %2110 = vmatprep.subr.mxu0 0.0
        %2111 = vmatpush1.msra.mxu0 0.0
        %2112 = vmatprep.subr.mxu0 0.0
        %2113 = vmatpush1.msra.mxu0 0.0
        %2114 = vmatprep.subr.mxu0 0.0
        %2115 = vmatpush1.msra.mxu0 0.0
        %2116 = vmatprep.subr.mxu0 0.0
        %2117 = vmatpush1.msra.mxu0 0.0
        %2118 = vmatprep.subr.mxu0 0.0
        %2119 = vmatpush1.msra.mxu0 0.0
        %2120 = vmatprep.subr.mxu0 0.0
        %2121 = vmatpush1.msra.mxu0 0.0
        %2122 = vmatprep.subr.mxu0 0.0
        %2123 = vmatpush1.msra.mxu0 0.0
        %2124 = vmatprep.subr.mxu0 0.0
        %2125 = vmatpush1.msra.mxu0 0.0
        %2126 = vmatprep.subr.mxu0 0.0
        %2127 = vmatpush1.msra.mxu0 0.0
        %2128 = vmatprep.subr.mxu0 0.0
        %2129 = vmatpush1.msra.mxu0 0.0
        %2130 = vmatprep.subr.mxu0 0.0
        %2131 = vmatpush1.msra.mxu0 0.0
        %2132 = vmatprep.subr.mxu0 0.0
        %2133 = vmatpush1.msra.mxu0 0.0
        %2134 = vmatprep.subr.mxu0 0.0
        %2135 = vmatpush1.msra.mxu0 0.0
        %2136 = vmatprep.subr.mxu0 0.0
        %2137 = vmatpush1.msra.mxu0 0.0
        %2138 = vmatprep.subr.mxu0 0.0
        %2139 = vmatpush1.msra.mxu0 0.0
        %2140 = vmatprep.subr.mxu0 0.0
        %2141 = vmatpush1.msra.mxu0 0.0
        %2142 = vmatprep.subr.mxu0 0.0
        %2143 = vmatpush1.msra.mxu0 0.0
        %2144 = vmatprep.subr.mxu0 0.0
        %2145 = vmatpush1.msra.mxu0 0.0
        %2146 = vmatprep.subr.mxu0 0.0
        %2147 = vmatpush1.msra.mxu0 0.0
        %2148 = vmatprep.subr.mxu0 0.0
        %2149 = vmatpush1.msra.mxu0 0.0
        %2150 = vmatprep.subr.mxu0 0.0
        %2151 = vmatpush1.msra.mxu0 0.0
        %2152 = vmatprep.subr.mxu0 0.0
        %2153 = vmatpush1.msra.mxu0 0.0
        %2154 = vmatprep.subr.mxu0 0.0
        %2155 = vmatpush1.msra.mxu0 0.0
        %2156 = vmatprep.subr.mxu0 0.0
        %2157 = vmatpush1.msra.mxu0 0.0
        %2158 = vmatprep.subr.mxu0 0.0
        %2159 = vmatpush1.msra.mxu0 0.0
        %2160 = vmatprep.subr.mxu0 0.0
        %2161 = vmatpush1.msra.mxu0 0.0
        %2162 = vmatprep.mubr.f32.mxu0 0.0
        %2163 = vmatmul.mubr.f32.gmra.mrb[0].mxu0 %v620
        %v2164 = vpop.f32.mrb[0].mxu0
        %v2165 = vadd.f32 %v2096, %v2164
        %v2166 = vpop.f32.mrb[0].mxu0
        %2167 = vdwg.mxu0
        %2168 = vrot.lane.b32.xlu0 %v692, 104
        %v2169 = vpop.permute.xlu0 %2168
        %2170 = vrot.lane.b32.xlu0 %v693, 104
        %v2171 = vpop.permute.xlu0 %2170
        %2172 = vrot.lane.b32.xlu0 %v694, 104
        %v2173 = vpop.permute.xlu0 %2172
        %2174 = vrot.lane.b32.xlu0 %v695, 104
        %v2175 = vpop.permute.xlu0 %2174
        %2180 = vrot.lane.b32.xlu0 %v701, 104
        %v2181 = vpop.permute.xlu0 %2180
        %2183 = vmatprep.subr.mxu0 0.0
        %2184 = vmatpush1.msra.mxu0 %v2169
        %2185 = vmatprep.subr.mxu0 0.0
        %2186 = vmatpush1.msra.mxu0 %v2171
        %2187 = vmatprep.subr.mxu0 0.0
        %2188 = vmatpush1.msra.mxu0 %v2173
        %2189 = vmatprep.subr.mxu0 0.0
        %2190 = vmatpush1.msra.mxu0 %v2175
        %2191 = vmatprep.subr.mxu0 0.0
        %2192 = vmatpush1.msra.mxu0 0.0
        %2193 = vmatprep.subr.mxu0 0.0
        %2194 = vmatpush1.msra.mxu0 0.0
        %2195 = vmatprep.subr.mxu0 0.0
        %2196 = vmatpush1.msra.mxu0 0.0
        %2197 = vmatprep.subr.mxu0 0.0
        %2198 = vmatpush1.msra.mxu0 0.0
        %2199 = vmatprep.subr.mxu0 0.0
        %2200 = vmatpush1.msra.mxu0 0.0
        %2201 = vmatprep.subr.mxu0 0.0
        %2202 = vmatpush1.msra.mxu0 0.0
        %2203 = vmatprep.subr.mxu0 0.0
        %2204 = vmatpush1.msra.mxu0 0.0
        %2205 = vmatprep.subr.mxu0 0.0
        %2206 = vmatpush1.msra.mxu0 0.0
        %2207 = vmatprep.subr.mxu0 0.0
        %2208 = vmatpush1.msra.mxu0 0.0
        %2209 = vmatprep.subr.mxu0 0.0
        %2210 = vmatpush1.msra.mxu0 0.0
        %2211 = vmatprep.subr.mxu0 0.0
        %2212 = vmatpush1.msra.mxu0 0.0
        %2213 = vmatprep.subr.mxu0 0.0
        %2214 = vmatpush1.msra.mxu0 0.0
        %2215 = vmatprep.subr.mxu0 0.0
        %2216 = vmatpush1.msra.mxu0 0.0
        %2217 = vmatprep.subr.mxu0 0.0
        %2218 = vmatpush1.msra.mxu0 0.0
        %2219 = vmatprep.subr.mxu0 0.0
        %2220 = vmatpush1.msra.mxu0 0.0
        %2221 = vmatprep.subr.mxu0 0.0
        %2222 = vmatpush1.msra.mxu0 0.0
        %2223 = vmatprep.subr.mxu0 0.0
        %2224 = vmatpush1.msra.mxu0 0.0
        %2225 = vmatprep.subr.mxu0 0.0
        %2226 = vmatpush1.msra.mxu0 0.0
        %2227 = vmatprep.subr.mxu0 0.0
        %2228 = vmatpush1.msra.mxu0 0.0
        %2229 = vmatprep.subr.mxu0 0.0
        %2230 = vmatpush1.msra.mxu0 0.0
        %2231 = vmatprep.subr.mxu0 0.0
        %2232 = vmatpush1.msra.mxu0 0.0
        %2233 = vmatprep.subr.mxu0 0.0
        %2234 = vmatpush1.msra.mxu0 0.0
        %2235 = vmatprep.subr.mxu0 0.0
        %2236 = vmatpush1.msra.mxu0 0.0
        %2237 = vmatprep.subr.mxu0 0.0
        %2238 = vmatpush1.msra.mxu0 0.0
        %2239 = vmatprep.subr.mxu0 0.0
        %2240 = vmatpush1.msra.mxu0 0.0
        %2241 = vmatprep.subr.mxu0 0.0
        %2242 = vmatpush1.msra.mxu0 0.0
        %2243 = vmatprep.subr.mxu0 0.0
        %2244 = vmatpush1.msra.mxu0 0.0
        %2245 = vmatprep.subr.mxu0 0.0
        %2246 = vmatpush1.msra.mxu0 0.0
        %2247 = vmatprep.mubr.f32.mxu0 0.0
        %2248 = vmatmul.mubr.f32.gmra.mrb[0].mxu0 %v620
        %v2249 = vpop.f32.mrb[0].mxu0
        %v2250 = vadd.f32 %v2181, %v2249
        %v2251 = vpop.f32.mrb[0].mxu0
        %2252 = vdwg.mxu0
        %2253 = vrot.lane.b32.xlu0 %v773, 104
        %v2254 = vpop.permute.xlu0 %2253
        %2255 = vrot.lane.b32.xlu0 %v774, 104
        %v2256 = vpop.permute.xlu0 %2255
        %2257 = vrot.lane.b32.xlu0 %v775, 104
        %v2258 = vpop.permute.xlu0 %2257
        %2259 = vrot.lane.b32.xlu0 %v776, 104
        %v2260 = vpop.permute.xlu0 %2259
        %2265 = vrot.lane.b32.xlu0 %v782, 104
        %v2266 = vpop.permute.xlu0 %2265
        %2268 = vmatprep.subr.mxu0 0.0
        %2269 = vmatpush1.msra.mxu0 %v2254
        %2270 = vmatprep.subr.mxu0 0.0
        %2271 = vmatpush1.msra.mxu0 %v2256
        %2272 = vmatprep.subr.mxu0 0.0
        %2273 = vmatpush1.msra.mxu0 %v2258
        %2274 = vmatprep.subr.mxu0 0.0
        %2275 = vmatpush1.msra.mxu0 %v2260
        %2276 = vmatprep.subr.mxu0 0.0
        %2277 = vmatpush1.msra.mxu0 0.0
        %2278 = vmatprep.subr.mxu0 0.0
        %2279 = vmatpush1.msra.mxu0 0.0
        %2280 = vmatprep.subr.mxu0 0.0
        %2281 = vmatpush1.msra.mxu0 0.0
        %2282 = vmatprep.subr.mxu0 0.0
        %2283 = vmatpush1.msra.mxu0 0.0
        %2284 = vmatprep.subr.mxu0 0.0
        %2285 = vmatpush1.msra.mxu0 0.0
        %2286 = vmatprep.subr.mxu0 0.0
        %2287 = vmatpush1.msra.mxu0 0.0
        %2288 = vmatprep.subr.mxu0 0.0
        %2289 = vmatpush1.msra.mxu0 0.0
        %2290 = vmatprep.subr.mxu0 0.0
        %2291 = vmatpush1.msra.mxu0 0.0
        %2292 = vmatprep.subr.mxu0 0.0
        %2293 = vmatpush1.msra.mxu0 0.0
        %2294 = vmatprep.subr.mxu0 0.0
        %2295 = vmatpush1.msra.mxu0 0.0
        %2296 = vmatprep.subr.mxu0 0.0
        %2297 = vmatpush1.msra.mxu0 0.0
        %2298 = vmatprep.subr.mxu0 0.0
        %2299 = vmatpush1.msra.mxu0 0.0
        %2300 = vmatprep.subr.mxu0 0.0
        %2301 = vmatpush1.msra.mxu0 0.0
        %2302 = vmatprep.subr.mxu0 0.0
        %2303 = vmatpush1.msra.mxu0 0.0
        %2304 = vmatprep.subr.mxu0 0.0
        %2305 = vmatpush1.msra.mxu0 0.0
        %2306 = vmatprep.subr.mxu0 0.0
        %2307 = vmatpush1.msra.mxu0 0.0
        %2308 = vmatprep.subr.mxu0 0.0
        %2309 = vmatpush1.msra.mxu0 0.0
        %2310 = vmatprep.subr.mxu0 0.0
        %2311 = vmatpush1.msra.mxu0 0.0
        %2312 = vmatprep.subr.mxu0 0.0
        %2313 = vmatpush1.msra.mxu0 0.0
        %2314 = vmatprep.subr.mxu0 0.0
        %2315 = vmatpush1.msra.mxu0 0.0
        %2316 = vmatprep.subr.mxu0 0.0
        %2317 = vmatpush1.msra.mxu0 0.0
        %2318 = vmatprep.subr.mxu0 0.0
        %2319 = vmatpush1.msra.mxu0 0.0
        %2320 = vmatprep.subr.mxu0 0.0
        %2321 = vmatpush1.msra.mxu0 0.0
        %2322 = vmatprep.subr.mxu0 0.0
        %2323 = vmatpush1.msra.mxu0 0.0
        %2324 = vmatprep.subr.mxu0 0.0
        %2325 = vmatpush1.msra.mxu0 0.0
        %2326 = vmatprep.subr.mxu0 0.0
        %2327 = vmatpush1.msra.mxu0 0.0
        %2328 = vmatprep.subr.mxu0 0.0
        %2329 = vmatpush1.msra.mxu0 0.0
        %2330 = vmatprep.subr.mxu0 0.0
        %2331 = vmatpush1.msra.mxu0 0.0
        %2332 = vmatprep.mubr.f32.mxu0 0.0
        %2333 = vmatmul.mubr.f32.gmra.mrb[0].mxu0 %v620
        %v2334 = vpop.f32.mrb[0].mxu0
        %v2335 = vadd.f32 %v2266, %v2334
        %v2336 = vpop.f32.mrb[0].mxu0
        %2337 = vdwg.mxu0
        %v2339 = vsel %vm854, %v2165, 0
        %v2342 = vsel %vm854, %v2250, 0
        %2344 = vmatprep.subr.mxu0 0.0
        %2345 = vmatpush1.xpose.msra.mxu0 %v2342
        %2346 = vmatprep.subr.mxu0 0.0
        %2347 = vmatpush1.xpose.msra.mxu0 0.0
        %2348 = vmatprep.subr.mxu0 0.0
        %2349 = vmatpush1.xpose.msra.mxu0 0.0
        %2350 = vmatprep.subr.mxu0 0.0
        %2351 = vmatpush1.xpose.msra.mxu0 0.0
        %2352 = vmatprep.subr.mxu0 0.0
        %2353 = vmatpush1.xpose.msra.mxu0 0.0
        %2354 = vmatprep.subr.mxu0 0.0
        %2355 = vmatpush1.xpose.msra.mxu0 0.0
        %2356 = vmatprep.subr.mxu0 0.0
        %2357 = vmatpush1.xpose.msra.mxu0 0.0
        %2358 = vmatprep.subr.mxu0 0.0
        %2359 = vmatpush1.xpose.msra.mxu0 0.0
        %2360 = vmatprep.subr.mxu0 0.0
        %2361 = vmatpush1.xpose.msra.mxu0 0.0
        %2362 = vmatprep.subr.mxu0 0.0
        %2363 = vmatpush1.xpose.msra.mxu0 0.0
        %2364 = vmatprep.subr.mxu0 0.0
        %2365 = vmatpush1.xpose.msra.mxu0 0.0
        %2366 = vmatprep.subr.mxu0 0.0
        %2367 = vmatpush1.xpose.msra.mxu0 0.0
        %2368 = vmatprep.subr.mxu0 0.0
        %2369 = vmatpush1.xpose.msra.mxu0 0.0
        %2370 = vmatprep.subr.mxu0 0.0
        %2371 = vmatpush1.xpose.msra.mxu0 0.0
        %2372 = vmatprep.subr.mxu0 0.0
        %2373 = vmatpush1.xpose.msra.mxu0 0.0
        %2374 = vmatprep.subr.mxu0 0.0
        %2375 = vmatpush1.xpose.msra.mxu0 0.0
        %2376 = vmatprep.subr.mxu0 0.0
        %2377 = vmatpush1.xpose.msra.mxu0 0.0
        %2378 = vmatprep.subr.mxu0 0.0
        %2379 = vmatpush1.xpose.msra.mxu0 0.0
        %2380 = vmatprep.subr.mxu0 0.0
        %2381 = vmatpush1.xpose.msra.mxu0 0.0
        %2382 = vmatprep.subr.mxu0 0.0
        %2383 = vmatpush1.xpose.msra.mxu0 0.0
        %2384 = vmatprep.subr.mxu0 0.0
        %2385 = vmatpush1.xpose.msra.mxu0 0.0
        %2386 = vmatprep.subr.mxu0 0.0
        %2387 = vmatpush1.xpose.msra.mxu0 0.0
        %2388 = vmatprep.subr.mxu0 0.0
        %2389 = vmatpush1.xpose.msra.mxu0 0.0
        %2390 = vmatprep.subr.mxu0 0.0
        %2391 = vmatpush1.xpose.msra.mxu0 0.0
        %2392 = vmatprep.subr.mxu0 0.0
        %2393 = vmatpush1.xpose.msra.mxu0 0.0
        %2394 = vmatprep.subr.mxu0 0.0
        %2395 = vmatpush1.xpose.msra.mxu0 0.0
        %2396 = vmatprep.subr.mxu0 0.0
        %2397 = vmatpush1.xpose.msra.mxu0 0.0
        %2398 = vmatprep.subr.mxu0 0.0
        %2399 = vmatpush1.xpose.msra.mxu0 0.0
        %2400 = vmatprep.subr.mxu0 0.0
        %2401 = vmatpush1.xpose.msra.mxu0 0.0
        %2402 = vmatprep.subr.mxu0 0.0
        %2403 = vmatpush1.xpose.msra.mxu0 0.0
        %2404 = vmatprep.subr.mxu0 0.0
        %2405 = vmatpush1.xpose.msra.mxu0 0.0
        %2406 = vmatprep.subr.mxu0 0.0
        %2407 = vmatpush1.xpose.msra.mxu0 0.0
        %2408 = vmatprep.mubr.f32.mxu0 0.0
        %2409 = vmatmul.mubr.f32.gmra.mrb[0].mxu0 %v2339
        %v2410 = vpop.f32.mrb[0].mxu0
        %v2411 = vadd.f32 0.0, %v2410
        %v2412 = vpop.f32.mrb[0].mxu0
        %2413 = vdwg.mxu0
        %v2414 = vmul.f32 %v2411, 0.35355338
        %v2415 = vsel %vm854, %v2414, -inf
        %2416 = vmax.xlane.f32.xlu0 %v2415
        %v2417 = vpop.xlane.xlu0 %2416
        %v2418 = vsub.f32 %v2414, %v2417
        %v2419 = vmul.f32 %v2418, 1.442695
        %v2420 = vpow.pop %v2419
        %v2421 = vsel %vm854, %v2420, 0.0
        %2422 = vadd.xlane.f32.xlu0 %v2421
        %v2423 = vpop.xlane.xlu0 %2422
        %v2424 = vrcp.pop %v2423
        %v2425 = vmul.f32 %v2420, %v2424
        %v2427 = vsel %vm854, %v2425, 0
        %2429 = vmatprep.subr.mxu0 0.0
        %2430 = vmatpush1.msra.mxu0 %v2335
        %2431 = vmatprep.subr.mxu0 0.0
        %2432 = vmatpush1.msra.mxu0 0.0
        %2433 = vmatprep.subr.mxu0 0.0
        %2434 = vmatpush1.msra.mxu0 0.0
        %2435 = vmatprep.subr.mxu0 0.0
        %2436 = vmatpush1.msra.mxu0 0.0
        %2437 = vmatprep.subr.mxu0 0.0
        %2438 = vmatpush1.msra.mxu0 0.0
        %2439 = vmatprep.subr.mxu0 0.0
        %2440 = vmatpush1.msra.mxu0 0.0
        %2441 = vmatprep.subr.mxu0 0.0
        %2442 = vmatpush1.msra.mxu0 0.0
        %2443 = vmatprep.subr.mxu0 0.0
        %2444 = vmatpush1.msra.mxu0 0.0
        %2445 = vmatprep.subr.mxu0 0.0
        %2446 = vmatpush1.msra.mxu0 0.0
        %2447 = vmatprep.subr.mxu0 0.0
        %2448 = vmatpush1.msra.mxu0 0.0
        %2449 = vmatprep.subr.mxu0 0.0
        %2450 = vmatpush1.msra.mxu0 0.0
        %2451 = vmatprep.subr.mxu0 0.0
        %2452 = vmatpush1.msra.mxu0 0.0
        %2453 = vmatprep.subr.mxu0 0.0
        %2454 = vmatpush1.msra.mxu0 0.0
        %2455 = vmatprep.subr.mxu0 0.0
        %2456 = vmatpush1.msra.mxu0 0.0
        %2457 = vmatprep.subr.mxu0 0.0
        %2458 = vmatpush1.msra.mxu0 0.0
        %2459 = vmatprep.subr.mxu0 0.0
        %2460 = vmatpush1.msra.mxu0 0.0
        %2461 = vmatprep.subr.mxu0 0.0
        %2462 = vmatpush1.msra.mxu0 0.0
        %2463 = vmatprep.subr.mxu0 0.0
        %2464 = vmatpush1.msra.mxu0 0.0
        %2465 = vmatprep.subr.mxu0 0.0
        %2466 = vmatpush1.msra.mxu0 0.0
        %2467 = vmatprep.subr.mxu0 0.0
        %2468 = vmatpush1.msra.mxu0 0.0
        %2469 = vmatprep.subr.mxu0 0.0
        %2470 = vmatpush1.msra.mxu0 0.0
        %2471 = vmatprep.subr.mxu0 0.0
        %2472 = vmatpush1.msra.mxu0 0.0
        %2473 = vmatprep.subr.mxu0 0.0
        %2474 = vmatpush1.msra.mxu0 0.0
        %2475 = vmatprep.subr.mxu0 0.0
        %2476 = vmatpush1.msra.mxu0 0.0
        %2477 = vmatprep.subr.mxu0 0.0
        %2478 = vmatpush1.msra.mxu0 0.0
        %2479 = vmatprep.subr.mxu0 0.0
        %2480 = vmatpush1.msra.mxu0 0.0
        %2481 = vmatprep.subr.mxu0 0.0
        %2482 = vmatpush1.msra.mxu0 0.0
        %2483 = vmatprep.subr.mxu0 0.0
        %2484 = vmatpush1.msra.mxu0 0.0
        %2485 = vmatprep.subr.mxu0 0.0
        %2486 = vmatpush1.msra.mxu0 0.0
        %2487 = vmatprep.subr.mxu0 0.0
        %2488 = vmatpush1.msra.mxu0 0.0
        %2489 = vmatprep.subr.mxu0 0.0
        %2490 = vmatpush1.msra.mxu0 0.0
        %2491 = vmatprep.subr.mxu0 0.0
        %2492 = vmatpush1.msra.mxu0 0.0
        %2493 = vmatprep.mubr.f32.mxu0 0.0
        %2494 = vmatmul.mubr.f32.gmra.mrb[0].mxu0 %v2427
        %v2495 = vpop.f32.mrb[0].mxu0
        %v2496 = vadd.f32 0.0, %v2495
        %v2497 = vpop.f32.mrb[0].mxu0
        %2498 = vdwg.mxu0
        %v2499 = vld [vmem:[#allocation4 + $0x18] sm:$0xff]
        %v2501 = vsel %vm854, %v2496, 0
        %2503 = vmatprep.subr.mxu0 0.0
        %2504 = vmatpush1.msra.mxu0 %v2499
        %2505 = vmatprep.subr.mxu0 0.0
        %2506 = vmatpush1.msra.mxu0 0.0
        %2507 = vmatprep.subr.mxu0 0.0
        %2508 = vmatpush1.msra.mxu0 0.0
        %2509 = vmatprep.subr.mxu0 0.0
        %2510 = vmatpush1.msra.mxu0 0.0
        %2511 = vmatprep.subr.mxu0 0.0
        %2512 = vmatpush1.msra.mxu0 0.0
        %2513 = vmatprep.subr.mxu0 0.0
        %2514 = vmatpush1.msra.mxu0 0.0
        %2515 = vmatprep.subr.mxu0 0.0
        %2516 = vmatpush1.msra.mxu0 0.0
        %2517 = vmatprep.subr.mxu0 0.0
        %2518 = vmatpush1.msra.mxu0 0.0
        %2519 = vmatprep.subr.mxu0 0.0
        %2520 = vmatpush1.msra.mxu0 0.0
        %2521 = vmatprep.subr.mxu0 0.0
        %2522 = vmatpush1.msra.mxu0 0.0
        %2523 = vmatprep.subr.mxu0 0.0
        %2524 = vmatpush1.msra.mxu0 0.0
        %2525 = vmatprep.subr.mxu0 0.0
        %2526 = vmatpush1.msra.mxu0 0.0
        %2527 = vmatprep.subr.mxu0 0.0
        %2528 = vmatpush1.msra.mxu0 0.0
        %2529 = vmatprep.subr.mxu0 0.0
        %2530 = vmatpush1.msra.mxu0 0.0
        %2531 = vmatprep.subr.mxu0 0.0
        %2532 = vmatpush1.msra.mxu0 0.0
        %2533 = vmatprep.subr.mxu0 0.0
        %2534 = vmatpush1.msra.mxu0 0.0
        %2535 = vmatprep.subr.mxu0 0.0
        %2536 = vmatpush1.msra.mxu0 0.0
        %2537 = vmatprep.subr.mxu0 0.0
        %2538 = vmatpush1.msra.mxu0 0.0
        %2539 = vmatprep.subr.mxu0 0.0
        %2540 = vmatpush1.msra.mxu0 0.0
        %2541 = vmatprep.subr.mxu0 0.0
        %2542 = vmatpush1.msra.mxu0 0.0
        %2543 = vmatprep.subr.mxu0 0.0
        %2544 = vmatpush1.msra.mxu0 0.0
        %2545 = vmatprep.subr.mxu0 0.0
        %2546 = vmatpush1.msra.mxu0 0.0
        %2547 = vmatprep.subr.mxu0 0.0
        %2548 = vmatpush1.msra.mxu0 0.0
        %2549 = vmatprep.subr.mxu0 0.0
        %2550 = vmatpush1.msra.mxu0 0.0
        %2551 = vmatprep.subr.mxu0 0.0
        %2552 = vmatpush1.msra.mxu0 0.0
        %2553 = vmatprep.subr.mxu0 0.0
        %2554 = vmatpush1.msra.mxu0 0.0
        %2555 = vmatprep.subr.mxu0 0.0
        %2556 = vmatpush1.msra.mxu0 0.0
        %2557 = vmatprep.subr.mxu0 0.0
        %2558 = vmatpush1.msra.mxu0 0.0
        %2559 = vmatprep.subr.mxu0 0.0
        %2560 = vmatpush1.msra.mxu0 0.0
        %2561 = vmatprep.subr.mxu0 0.0
        %2562 = vmatpush1.msra.mxu0 0.0
        %2563 = vmatprep.subr.mxu0 0.0
        %2564 = vmatpush1.msra.mxu0 0.0
        %2565 = vmatprep.subr.mxu0 0.0
        %2566 = vmatpush1.msra.mxu0 0.0
        %2567 = vmatprep.mubr.f32.mxu0 0.0
        %2568 = vmatmul.mubr.f32.gmra.mrb[0].mxu0 %v2501
        %v2569 = vpop.f32.mrb[0].mxu0
        %v2570 = vadd.f32 0.0, %v2569
        %v2571 = vpop.f32.mrb[0].mxu0
        %2572 = vdwg.mxu0
        %v2573 = vadd.f32 %v2082, %v2570
        %v2574 = vld [vmem:[%s8] sm:$0x1]
        %v2576 = vlaneseq
        %v2577 = vshrl.u32 %v2576, 7
        %v2578 = vsub.s32 0, %v2577
        %v2579 = vrot.slane %v2574, %v2578
        %v2581 = vadd.f32 %v2573, %v2579
        %v2582 = vadd.f32 %v606, %v2581
        %v2583 = vld [vmem:[%s13] sm:$0x1]
        %v2584 = vld [vmem:[%s14] sm:$0x1]
        %v2585 = vsel %vm618, %v2582, 0.0
        %2586 = vadd.xlane.f32.xlu0 %v2585
        %v2587 = vpop.xlane.xlu0 %2586
        %v2588 = vrcp.pop 32.0
        %v2589 = vmul.f32 %v2587, %v2588
        %v2590 = vsub.f32 %v2582, %v2589
        %v2591 = vmul.f32 %v2590, %v2590
        %v2592 = vsel %vm618, %v2591, 0.0
        %2593 = vadd.xlane.f32.xlu0 %v2592
        %v2594 = vpop.xlane.xlu0 %2593
        %v2595 = vmul.f32 %v2594, %v2588
        %v2596 = vadd.f32 %v2595, 1e-05
        %v2597 = vrsqrt.pop %v2596
        %v2598 = vmul.f32 %v2590, %v2597
        %v2600 = vlaneseq
        %v2601 = vshrl.u32 %v2600, 7
        %v2602 = vsub.s32 0, %v2601
        %v2603 = vrot.slane %v2583, %v2602
        %v2605 = vmul.f32 %v2598, %v2603
        %v2607 = vlaneseq
        %v2608 = vshrl.u32 %v2607, 7
        %v2609 = vsub.s32 0, %v2608
        %v2610 = vrot.slane %v2584, %v2609
        %v2612 = vadd.f32 %v2605, %v2610
        %v2613 = vld [vmem:[#allocation6] sm:$0xff]
        %v2614 = vld [vmem:[#allocation6 + $0x8] sm:$0xff]
        %v2615 = vld [vmem:[#allocation6 + $0x10] sm:$0xff]
        %v2616 = vld [vmem:[#allocation6 + $0x18] sm:$0xff]
        %v2617 = vld [vmem:[#allocation7] sm:$0x1]
        %v2619 = vlaneseq
        %v2620 = vshrl.u32 %v2619, 7
        %v2621 = vsub.s32 0, %v2620
        %v2622 = vrot.slane %v2617, %v2621
        %v2625 = vsel %vm618, %v2612, 0
        %2627 = vmatprep.subr.mxu0 0.0
        %2628 = vmatpush1.msra.mxu0 %v2613
        %2629 = vmatprep.subr.mxu0 0.0
        %2630 = vmatpush1.msra.mxu0 %v2614
        %2631 = vmatprep.subr.mxu0 0.0
        %2632 = vmatpush1.msra.mxu0 %v2615
        %2633 = vmatprep.subr.mxu0 0.0
        %2634 = vmatpush1.msra.mxu0 %v2616
        %2635 = vmatprep.subr.mxu0 0.0
        %2636 = vmatpush1.msra.mxu0 0.0
        %2637 = vmatprep.subr.mxu0 0.0
        %2638 = vmatpush1.msra.mxu0 0.0
        %2639 = vmatprep.subr.mxu0 0.0
        %2640 = vmatpush1.msra.mxu0 0.0
        %2641 = vmatprep.subr.mxu0 0.0
        %2642 = vmatpush1.msra.mxu0 0.0
        %2643 = vmatprep.subr.mxu0 0.0
        %2644 = vmatpush1.msra.mxu0 0.0
        %2645 = vmatprep.subr.mxu0 0.0
        %2646 = vmatpush1.msra.mxu0 0.0
        %2647 = vmatprep.subr.mxu0 0.0
        %2648 = vmatpush1.msra.mxu0 0.0
        %2649 = vmatprep.subr.mxu0 0.0
        %2650 = vmatpush1.msra.mxu0 0.0
        %2651 = vmatprep.subr.mxu0 0.0
        %2652 = vmatpush1.msra.mxu0 0.0
        %2653 = vmatprep.subr.mxu0 0.0
        %2654 = vmatpush1.msra.mxu0 0.0
        %2655 = vmatprep.subr.mxu0 0.0
        %2656 = vmatpush1.msra.mxu0 0.0
        %2657 = vmatprep.subr.mxu0 0.0
        %2658 = vmatpush1.msra.mxu0 0.0
        %2659 = vmatprep.subr.mxu0 0.0
        %2660 = vmatpush1.msra.mxu0 0.0
        %2661 = vmatprep.subr.mxu0 0.0
        %2662 = vmatpush1.msra.mxu0 0.0
        %2663 = vmatprep.subr.mxu0 0.0
        %2664 = vmatpush1.msra.mxu0 0.0
        %2665 = vmatprep.subr.mxu0 0.0
        %2666 = vmatpush1.msra.mxu0 0.0
        %2667 = vmatprep.subr.mxu0 0.0
        %2668 = vmatpush1.msra.mxu0 0.0
        %2669 = vmatprep.subr.mxu0 0.0
        %2670 = vmatpush1.msra.mxu0 0.0
        %2671 = vmatprep.subr.mxu0 0.0
        %2672 = vmatpush1.msra.mxu0 0.0
        %2673 = vmatprep.subr.mxu0 0.0
        %2674 = vmatpush1.msra.mxu0 0.0
        %2675 = vmatprep.subr.mxu0 0.0
        %2676 = vmatpush1.msra.mxu0 0.0
        %2677 = vmatprep.subr.mxu0 0.0
        %2678 = vmatpush1.msra.mxu0 0.0
        %2679 = vmatprep.subr.mxu0 0.0
        %2680 = vmatpush1.msra.mxu0 0.0
        %2681 = vmatprep.subr.mxu0 0.0
        %2682 = vmatpush1.msra.mxu0 0.0
        %2683 = vmatprep.subr.mxu0 0.0
        %2684 = vmatpush1.msra.mxu0 0.0
        %2685 = vmatprep.subr.mxu0 0.0
        %2686 = vmatpush1.msra.mxu0 0.0
        %2687 = vmatprep.subr.mxu0 0.0
        %2688 = vmatpush1.msra.mxu0 0.0
        %2689 = vmatprep.subr.mxu0 0.0
        %2690 = vmatpush1.msra.mxu0 0.0
        %2691 = vmatprep.mubr.f32.mxu0 0.0
        %2692 = vmatmul.mubr.f32.gmra.mrb[0].mxu0 %v2625
        %v2693 = vpop.f32.mrb[0].mxu0
        %v2694 = vadd.f32 %v2622, %v2693
        %v2695 = vpop.f32.mrb[0].mxu0
        %2696 = vdwg.mxu0
        %v2697 = vmax.f32 %v2694, 0.0
        %v2698 = vld [vmem:[%s11] sm:$0xff]
        %v2699 = vld [vmem:[%s11 + $0x8] sm:$0xff]
        %v2700 = vld [vmem:[%s11 + $0x10] sm:$0xff]
        %v2701 = vld [vmem:[%s11 + $0x18] sm:$0xff]
        %v2702 = vld [vmem:[%s11 + $0x20] sm:$0xff]
        %v2703 = vld [vmem:[%s11 + $0x28] sm:$0xff]
        %v2704 = vld [vmem:[%s11 + $0x30] sm:$0xff]
        %v2705 = vld [vmem:[%s11 + $0x38] sm:$0xff]
        %v2706 = vld [vmem:[%s12] sm:$0x1]
        %v2708 = vlaneseq
        %v2709 = vshrl.u32 %v2708, 7
        %v2710 = vsub.s32 0, %v2709
        %v2711 = vrot.slane %v2706, %v2710
        %vm2713 = vcmask 523264
        %v2715 = vsel %vm2713, %v2697, 0
        %2717 = vmatprep.subr.mxu0 0.0
        %2718 = vmatpush1.msra.mxu0 %v2698
        %2719 = vmatprep.subr.mxu0 0.0
        %2720 = vmatpush1.msra.mxu0 %v2699
        %2721 = vmatprep.subr.mxu0 0.0
        %2722 = vmatpush1.msra.mxu0 %v2700
        %2723 = vmatprep.subr.mxu0 0.0
        %2724 = vmatpush1.msra.mxu0 %v2701
        %2725 = vmatprep.subr.mxu0 0.0
        %2726 = vmatpush1.msra.mxu0 %v2702
        %2727 = vmatprep.subr.mxu0 0.0
        %2728 = vmatpush1.msra.mxu0 %v2703
        %2729 = vmatprep.subr.mxu0 0.0
        %2730 = vmatpush1.msra.mxu0 %v2704
        %2731 = vmatprep.subr.mxu0 0.0
        %2732 = vmatpush1.msra.mxu0 %v2705
        %2733 = vmatprep.subr.mxu0 0.0
        %2734 = vmatpush1.msra.mxu0 0.0
        %2735 = vmatprep.subr.mxu0 0.0
        %2736 = vmatpush1.msra.mxu0 0.0
        %2737 = vmatprep.subr.mxu0 0.0
        %2738 = vmatpush1.msra.mxu0 0.0
        %2739 = vmatprep.subr.mxu0 0.0
        %2740 = vmatpush1.msra.mxu0 0.0
        %2741 = vmatprep.subr.mxu0 0.0
        %2742 = vmatpush1.msra.mxu0 0.0
        %2743 = vmatprep.subr.mxu0 0.0
        %2744 = vmatpush1.msra.mxu0 0.0
        %2745 = vmatprep.subr.mxu0 0.0
        %2746 = vmatpush1.msra.mxu0 0.0
        %2747 = vmatprep.subr.mxu0 0.0
        %2748 = vmatpush1.msra.mxu0 0.0
        %2749 = vmatprep.subr.mxu0 0.0
        %2750 = vmatpush1.msra.mxu0 0.0
        %2751 = vmatprep.subr.mxu0 0.0
        %2752 = vmatpush1.msra.mxu0 0.0
        %2753 = vmatprep.subr.mxu0 0.0
        %2754 = vmatpush1.msra.mxu0 0.0
        %2755 = vmatprep.subr.mxu0 0.0
        %2756 = vmatpush1.msra.mxu0 0.0
        %2757 = vmatprep.subr.mxu0 0.0
        %2758 = vmatpush1.msra.mxu0 0.0
        %2759 = vmatprep.subr.mxu0 0.0
        %2760 = vmatpush1.msra.mxu0 0.0
        %2761 = vmatprep.subr.mxu0 0.0
        %2762 = vmatpush1.msra.mxu0 0.0
        %2763 = vmatprep.subr.mxu0 0.0
        %2764 = vmatpush1.msra.mxu0 0.0
        %2765 = vmatprep.subr.mxu0 0.0
        %2766 = vmatpush1.msra.mxu0 0.0
        %2767 = vmatprep.subr.mxu0 0.0
        %2768 = vmatpush1.msra.mxu0 0.0
        %2769 = vmatprep.subr.mxu0 0.0
        %2770 = vmatpush1.msra.mxu0 0.0
        %2771 = vmatprep.subr.mxu0 0.0
        %2772 = vmatpush1.msra.mxu0 0.0
        %2773 = vmatprep.subr.mxu0 0.0
        %2774 = vmatpush1.msra.mxu0 0.0
        %2775 = vmatprep.subr.mxu0 0.0
        %2776 = vmatpush1.msra.mxu0 0.0
        %2777 = vmatprep.subr.mxu0 0.0
        %2778 = vmatpush1.msra.mxu0 0.0
        %2779 = vmatprep.subr.mxu0 0.0
        %2780 = vmatpush1.msra.mxu0 0.0
        %2781 = vmatprep.mubr.f32.mxu0 0.0
        %2782 = vmatmul.mubr.f32.gmra.mrb[0].mxu0 %v2715
        %v2783 = vpop.f32.mrb[0].mxu0
        %v2784 = vadd.f32 %v2711, %v2783
        %v2785 = vpop.f32.mrb[0].mxu0
        %2786 = vdwg.mxu0
        %v2787 = vadd.f32 %v2612, %v2784
        %v2788 = vld [vmem:[%s15] sm:$0x1]
        %v2789 = vld [vmem:[%s16] sm:$0x1]
        %v2790 = vsel %vm618, %v2787, 0.0
        %2791 = vadd.xlane.f32.xlu0 %v2790
        %v2792 = vpop.xlane.xlu0 %2791
        %v2793 = vmul.f32 %v2792, %v2588
        %v2794 = vsub.f32 %v2787, %v2793
        %v2795 = vmul.f32 %v2794, %v2794
        %v2796 = vsel %vm618, %v2795, 0.0
        %2797 = vadd.xlane.f32.xlu0 %v2796
        %v2798 = vpop.xlane.xlu0 %2797
        %v2799 = vmul.f32 %v2798, %v2588
        %v2800 = vadd.f32 %v2799, 1e-05
        %v2801 = vrsqrt.pop %v2800
        %v2802 = vmul.f32 %v2794, %v2801
        %v2804 = vlaneseq
        %v2805 = vshrl.u32 %v2804, 7
        %v2806 = vsub.s32 0, %v2805
        %v2807 = vrot.slane %v2788, %v2806
        %v2809 = vmul.f32 %v2802, %v2807
        %v2811 = vlaneseq
        %v2812 = vshrl.u32 %v2811, 7
        %v2813 = vsub.s32 0, %v2812
        %v2814 = vrot.slane %v2789, %v2813
        %v2816 = vadd.f32 %v2809, %v2814
        %2817 = vst.msk [vmem:[%s605] sm:$0xff] %vm618, %v2816
        %p2818 = scmp.lt.s32.totalorder %s33, 1
        %s2819 = scalar_select %p2818, %s33, 1
        %s2820 = smul.addr %s2819, 8
        %s2821 = scalar_lea.vmem %s17, %s2820
        // Predicated region
        $region105: #{encoder_forward.3} parent=87 // pred_check
          %p2822 = pneg %p413
        $region106: #{encoder_forward.3} parent=87 // pred_check_branch
          %2824 = sbr.rel (%p2822) target = $region108
        $region107: #{encoder_forward.3} parent=87 // pred_region
          _
        $region108: #{encoder_forward.3} parent=87 // pred_fallthru
          _
      $region88: #{encoder_forward.3} parent=5 // pred_fallthru
        _
      %p2825 = scmp.le.s32.totalorder 2, %s28
      // Predicated region
      $region109: #{encoder_forward.3} parent=5 // pred_check
        %p2826 = pneg %p2825
      $region110: #{encoder_forward.3} parent=5 // pred_check_branch
        %2828 = sbr.rel (%p2826) target = $region112
      $region111: #{encoder_forward.3} parent=5 // pred_region
        %s2829 = ssub.s32 %s28, 2
        // Predicated region
        $region113: #{encoder_forward.3} parent=111 // pred_check
          %p2830 = pneg %p419
        $region114: #{encoder_forward.3} parent=111 // pred_check_branch
          %2832 = sbr.rel (%p2830) target = $region116
        $region115: #{encoder_forward.3} parent=111 // pred_region
          %p2833 = scmp.lt.s32.totalorder %s34, 1
          %s2834 = scalar_select %p2833, %s34, 1
          %s2835 = smul.addr %s2834, 8
          %s2836 = scalar_lea.vmem %s17, %s2835
        $region116: #{encoder_forward.3} parent=111 // pred_fallthru
          _
      $region112: #{encoder_forward.3} parent=5 // pred_fallthru
        _
    $region6: #{encoder_forward.3} parent=1 // loop_footer
      %s32 = sadd.s32 1, %s28
    $region7: #{encoder_forward.3} parent=1 // loop_footer_branch
      %27 = sbr.rel target = $region3
    $region8: #{encoder_forward.3} parent=1 // loop_exit
      _
    %2837 = vsyncpa [#allocation3], 1
    %s2838 = scalar_lea.sflag [#allocation3], 1
    %2839 = vsyncpa %s2838, 1
    %2840 = vsyncpa [#allocation5], 1
    %2841 = vsyncpa [#allocation8], 1

</llo_original>
